<compile_context>
chip_gen: v7x
topology: tpu7x:2x2x1
jax: 0.10.0
libtpu: 0.0.40
codegen_flags: <defaults>
</compile_context>

<pallas_src>
import functools

import jax
import jax.numpy as jnp
from jax.experimental import pallas as pl
from jax.experimental.pallas import tpu as pltpu

ATOM_FEATURE_DIM = 16
BOND_FEATURE_DIM = 16


# ----------------------------------------------------------------------------
# Pallas kernel: GraphEncoder.forward for GBLK graphs per grid step.
# ----------------------------------------------------------------------------
def _graph_encoder_kernel(depth, compute_dtype,
                          atom_ref,      # [GBLK, n, A]        f32 VMEM
                          bond_ref,      # [GBLK, n, n, B]     f32 VMEM
                          enc_ref,       # [GBLK, n, n]        int32 VMEM
                          w12a_ref,      # [A, H]  compute_dtype VMEM
                          w12b_ref,      # [B, H]  compute_dtype VMEM
                          w3_ref,        # [H, H]  compute_dtype VMEM
                          uwa_ref,       # [A, H]  compute_dtype VMEM
                          uwh_ref,       # [H, H]  compute_dtype VMEM
                          ub_ref,        # [1, H]  f32 VMEM
                          inv_size_ref,  # [GBLK, 1] f32 VMEM  (1 / size)
                          out_ref):      # [GBLK, H] f32 VMEM
    gblk, n, a_dim = atom_ref.shape
    b_dim = bond_ref.shape[-1]
    h = w3_ref.shape[1]
    m_rows = gblk * n * n
    f32 = jnp.float32
    cd = compute_dtype

    atom2d = atom_ref[...].reshape(gblk * n, a_dim).astype(cd)      # [G*n, A]
    bond2d = bond_ref[...].reshape(m_rows, b_dim).astype(cd)        # [G*n*n, B]

    # Bond mask broadcast to [m_rows, H] ONCE (hoisted out of the depth loop).
    mask_h = jnp.broadcast_to(
        (enc_ref[...] != 0).astype(f32).reshape(gblk, n, n, 1),
        (gblk, n, n, h)).reshape(m_rows, h)

    w12a = w12a_ref[...]        # weights already in compute_dtype (host cast)
    w12b = w12b_ref[...]
    w3 = w3_ref[...]

    # W_12(cat([atomFeature broadcast over i, bondFeature], -1))
    #   == atomFeature[g, j] @ W12_a  +  bondFeature[g, i, j] @ W12_b
    atom_proj = jnp.dot(atom2d, w12a, preferred_element_type=f32)   # [G*n, H]
    bond_proj = jnp.dot(bond2d, w12b, preferred_element_type=f32)   # [G*n*n,H]
    atom_proj_rep = jnp.broadcast_to(
        atom_proj.reshape(gblk, 1, n, h), (gblk, n, n, h)).reshape(m_rows, h)
    w12_out = atom_proj_rep + bond_proj                             # [G*n*n,H]

    # message = relu(w12_out); message[bondEncoding == 0] = 0
    message = jnp.maximum(w12_out, 0.0) * mask_h

    # depth-1 message-passing iterations (sigmoid applied AFTER zeroing, so
    # unconnected entries become 0.5 — matches PyTorch exactly).
    def body(_, msg):
        msg4 = msg.reshape(gblk, n, n, h)
        msg_sum = jnp.sum(msg4, axis=2)                             # [G, n, H]
        # PyTorch broadcast: w3_in[g, i, j] = msg_sum[g, j] - msg[g, i, j]
        msg_sum_rep = jnp.broadcast_to(
            msg_sum.reshape(gblk, 1, n, h),
            (gblk, n, n, h)).reshape(m_rows, h)
        w3_in = msg_sum_rep - msg
        w3_out = jnp.dot(w3_in.astype(cd), w3, preferred_element_type=f32)
        m = jnp.maximum(w12_out + w3_out, 0.0) * mask_h
        # sigmoid = 1 / (1 + exp(-m)) on the EUP (exp + approx reciprocal).
        return pl.reciprocal(1.0 + jnp.exp(-m), approx=True)

    message = jax.lax.fori_loop(0, depth - 1, body, message,
                                unroll=(depth - 1) <= 8)

    # neighbor aggregation + U projection (+ bias) + relu
    msg_nb = jnp.sum(message.reshape(gblk, n, n, h), axis=2)        # [G, n, H]
    msg_nb = msg_nb.reshape(gblk * n, h)
    atom_hidden = jnp.maximum(
        jnp.dot(atom2d, uwa_ref[...], preferred_element_type=f32)
        + jnp.dot(msg_nb.astype(cd), uwh_ref[...], preferred_element_type=f32)
        + ub_ref[...],
        0.0)                                                        # [G*n, H]

    # hidden[g] = atom_hidden[g].sum(0) * (1 / size[g])
    hidden = jnp.sum(atom_hidden.reshape(gblk, n, h), axis=1)       # [G, H]
    out_ref[...] = hidden * inv_size_ref[...]


# ----------------------------------------------------------------------------
# Wrapper: batched over G graphs, GBLK graphs per grid step.
# ----------------------------------------------------------------------------
def graph_encoder_forward(atom_feature, bond_feature, bond_encoding, sizes,
                          params, depth, compute_dtype=jnp.bfloat16,
                          num_blocks=None):
    g_batch, n, a = atom_feature.shape
    b = bond_feature.shape[-1]
    h = params["w3"].shape[1]

    # >=2 grid blocks lets v7x shard across both TensorCores; the graph block
    # (second-to-last dim of the 2-D output) must be a multiple of 8 or cover
    # the whole batch, otherwise fall back to a single big block.
    if num_blocks is None:
        num_blocks = 2 if (g_batch % 2 == 0 and (g_batch // 2) % 8 == 0) else 1
    assert g_batch % num_blocks == 0
    gblk = g_batch // num_blocks

    cd = compute_dtype
    inv_sizes = (1.0 / sizes).astype(jnp.float32).reshape(g_batch, 1)

    # Pre-cast matmul weights once on the host (they stay VMEM-resident
    # across the whole grid); bias stays f32 (added post-accumulation).
    w12a = params["w12a"].astype(cd)
    w12b = params["w12b"].astype(cd)
    w3 = params["w3"].astype(cd)
    u_wa = params["u_wa"].astype(cd)
    u_wh = params["u_wh"].astype(cd)
    u_b = params["u_b"].astype(jnp.float32)

    kernel = functools.partial(_graph_encoder_kernel, depth, cd)
    const = lambda shape: pl.BlockSpec(shape, lambda g: (0,) * len(shape))

    out = pl.pallas_call(
        kernel,
        out_shape=jax.ShapeDtypeStruct((g_batch, h), jnp.float32),
        grid=(num_blocks,),
        in_specs=[
            pl.BlockSpec((gblk, n, a), lambda g: (g, 0, 0)),        # atom
            pl.BlockSpec((gblk, n, n, b), lambda g: (g, 0, 0, 0)),  # bond
            pl.BlockSpec((gblk, n, n), lambda g: (g, 0, 0)),        # bondEnc
            const((a, h)),                                          # W12_a
            const((b, h)),                                          # W12_b
            const((h, h)),                                          # W3
            const((a, h)),                                          # U_wa
            const((h, h)),                                          # U_wh
            const((1, h)),                                          # U_b
            pl.BlockSpec((gblk, 1), lambda g: (g, 0)),              # 1/size
        ],
        out_specs=pl.BlockSpec((gblk, h), lambda g: (g, 0)),
        compiler_params=pltpu.CompilerParams(
            dimension_semantics=("parallel",)),                     # 2 TCs v7x
    )(atom_feature, bond_feature, bond_encoding,
      w12a, w12b, w3, u_wa, u_wh, u_b, inv_sizes)
    return out                                                      # [G, H]


# ----------------------------------------------------------------------------
# Pure-JAX reference (mirrors the PyTorch forward literally, one graph)
# ----------------------------------------------------------------------------
def reference_forward(atom_feature, bond_feature, bond_encoding, size,
                      w12, w3, u_w, u_b, depth):
    n, a = atom_feature.shape
    mask3 = (bond_encoding != 0).astype(jnp.float32)[:, :, None]
    w12_in = jnp.concatenate(
        [jnp.broadcast_to(atom_feature[None], (n, n, a)), bond_feature], axis=2)
    w12_out = w12_in @ w12
    message = jax.nn.relu(w12_out) * mask3
    for _ in range(depth - 1):
        w3_in = message.sum(axis=1)[None, :, :] - message
        message = jax.nn.relu(w12_out + w3_in @ w3) * mask3
        message = jax.nn.sigmoid(message)
    msg_nb = message.sum(axis=1)
    atom_hidden = jax.nn.relu(
        jnp.concatenate([atom_feature, msg_nb], axis=1) @ u_w + u_b)
    return atom_hidden.sum(axis=0) / size


# ----------------------------------------------------------------------------
# Main
# ----------------------------------------------------------------------------
if __name__ == "__main__":
    G = 16                      # graphs per pallas_call (2 blocks of 8)
    n = 8                       # number of atoms (== max_node here)
    A = ATOM_FEATURE_DIM
    B = BOND_FEATURE_DIM
    H = 32                      # hidden_size
    depth = 3

    key = jax.random.PRNGKey(0)
    ks = jax.random.split(key, 7)

    atom_feature = jax.random.normal(ks[0], (G, n, A), jnp.float32)
    bond_feature = jax.random.normal(ks[1], (G, n, n, B), jnp.float32)
    bond_encoding = (jax.random.uniform(ks[2], (G, n, n)) > 0.5).astype(jnp.int32)
    sizes = jnp.full((G,), float(n), jnp.float32)

    # Deterministic parameter init (Linear weights stored as [in, out]).
    w12 = 0.1 * jax.random.normal(ks[3], (A + B, H), jnp.float32)   # W_12 (no bias)
    w3 = 0.1 * jax.random.normal(ks[4], (H, H), jnp.float32)        # W_3  (no bias)
    u_w = 0.1 * jax.random.normal(ks[5], (A + H, H), jnp.float32)   # U weight
    u_b = 0.1 * jax.random.normal(ks[6], (1, H), jnp.float32)       # U bias

    params = dict(
        w12a=w12[:A], w12b=w12[A:],       # W_12 split over [atom | bond] features
        w3=w3,
        u_wa=u_w[:A], u_wh=u_w[A:],       # U split over [atom | message] features
        u_b=u_b,
    )

    # Default compute_dtype is bf16 (MXU-native); accumulation stays f32.
    out = graph_encoder_forward(atom_feature, bond_feature, bond_encoding,
                                sizes, params, depth)
    out = jax.block_until_ready(out)

    ref = jnp.stack([
        reference_forward(atom_feature[g], bond_feature[g], bond_encoding[g],
                          sizes[g], w12, w3, u_w, u_b, depth)
        for g in range(G)])

    assert out.shape == (G, H)
    # bf16 operands + approx-reciprocal sigmoid -> loose-but-meaningful check.
    assert jnp.allclose(out, ref, atol=5e-2, rtol=5e-2), (
        float(jnp.max(jnp.abs(out - ref))))

    print("KERNEL_OK")
</pallas_src>

<mosaic_0001>
module attributes {stable_mosaic.version = 11 : i64} {
  func.func @_graph_encoder_kernel(%arg0: i32, %arg1: memref<8x8x16xf32, #tpu.memory_space<vmem>>, %arg2: memref<8x8x8x16xf32, #tpu.memory_space<vmem>>, %arg3: memref<8x8x8xi32, #tpu.memory_space<vmem>>, %arg4: memref<16x32xbf16, #tpu.memory_space<vmem>>, %arg5: memref<16x32xbf16, #tpu.memory_space<vmem>>, %arg6: memref<32x32xbf16, #tpu.memory_space<vmem>>, %arg7: memref<16x32xbf16, #tpu.memory_space<vmem>>, %arg8: memref<32x32xbf16, #tpu.memory_space<vmem>>, %arg9: memref<1x32xf32, #tpu.memory_space<vmem>>, %arg10: memref<8x1xf32, #tpu.memory_space<vmem>>, %arg11: memref<8x32xf32, #tpu.memory_space<vmem>>) attributes {dimension_semantics = [#tpu.dimension_semantics<parallel>], iteration_bounds = array<i64: 2>, scalar_prefetch = 0 : i64, scratch_operands = 0 : i64, tpu.core_type = #tpu.core_type<tc>, window_params = [{transform_indices = @transform_0, window_bounds = array<i64: 8, 8, 16>}, {transform_indices = @transform_1, window_bounds = array<i64: 8, 8, 8, 16>}, {transform_indices = @transform_2, window_bounds = array<i64: 8, 8, 8>}, {pipeline_mode = #tpu.pipeline_mode<synchronous>, transform_indices = @transform_3, window_bounds = array<i64: 16, 32>}, {pipeline_mode = #tpu.pipeline_mode<synchronous>, transform_indices = @transform_4, window_bounds = array<i64: 16, 32>}, {pipeline_mode = #tpu.pipeline_mode<synchronous>, transform_indices = @transform_5, window_bounds = array<i64: 32, 32>}, {pipeline_mode = #tpu.pipeline_mode<synchronous>, transform_indices = @transform_6, window_bounds = array<i64: 16, 32>}, {pipeline_mode = #tpu.pipeline_mode<synchronous>, transform_indices = @transform_7, window_bounds = array<i64: 32, 32>}, {pipeline_mode = #tpu.pipeline_mode<synchronous>, transform_indices = @transform_8, window_bounds = array<i64: 1, 32>}, {transform_indices = @transform_9, window_bounds = array<i64: 8, 1>}, {transform_indices = @transform_10, window_bounds = array<i64: 8, 32>}]} {
    %c0 = arith.constant 0 : index
    %c0_0 = arith.constant 0 : index
    %c0_1 = arith.constant 0 : index
    %0 = vector.load %arg1[%c0, %c0_0, %c0_1] : memref<8x8x16xf32, #tpu.memory_space<vmem>>, vector<8x8x16xf32>
    %1 = vector.shape_cast %0 : vector<8x8x16xf32> to vector<64x16xf32>
    %2 = arith.truncf %1 : vector<64x16xf32> to vector<64x16xbf16>
    %c0_2 = arith.constant 0 : index
    %c0_3 = arith.constant 0 : index
    %c0_4 = arith.constant 0 : index
    %c0_5 = arith.constant 0 : index
    %3 = vector.load %arg2[%c0_2, %c0_3, %c0_4, %c0_5] : memref<8x8x8x16xf32, #tpu.memory_space<vmem>>, vector<8x8x8x16xf32>
    %4 = vector.shape_cast %3 : vector<8x8x8x16xf32> to vector<512x16xf32>
    %5 = arith.truncf %4 : vector<512x16xf32> to vector<512x16xbf16>
    %c0_6 = arith.constant 0 : index
    %c0_7 = arith.constant 0 : index
    %c0_8 = arith.constant 0 : index
    %6 = vector.load %arg3[%c0_6, %c0_7, %c0_8] : memref<8x8x8xi32, #tpu.memory_space<vmem>>, vector<8x8x8xi32>
    %c0_i32 = arith.constant 0 : i32
    %7 = vector.broadcast %c0_i32 : i32 to vector<8x8x8xi32>
    %8 = arith.cmpi ne, %6, %7 : vector<8x8x8xi32>
    %9 = arith.extui %8 : vector<8x8x8xi1> to vector<8x8x8xi32>
    %10 = arith.sitofp %9 : vector<8x8x8xi32> to vector<8x8x8xf32>
    %11 = vector.shape_cast %10 : vector<8x8x8xf32> to vector<8x8x8x1xf32>
    %12 = vector.shape_cast %11 : vector<8x8x8x1xf32> to vector<8x8x8x1xf32>
    %13 = vector.broadcast %12 : vector<8x8x8x1xf32> to vector<8x8x8x32xf32>
    %14 = vector.shape_cast %13 : vector<8x8x8x32xf32> to vector<512x32xf32>
    %c0_9 = arith.constant 0 : index
    %c0_10 = arith.constant 0 : index
    %15 = vector.load %arg4[%c0_9, %c0_10] : memref<16x32xbf16, #tpu.memory_space<vmem>>, vector<16x32xbf16>
    %c0_11 = arith.constant 0 : index
    %c0_12 = arith.constant 0 : index
    %16 = vector.load %arg5[%c0_11, %c0_12] : memref<16x32xbf16, #tpu.memory_space<vmem>>, vector<16x32xbf16>
    %c0_13 = arith.constant 0 : index
    %c0_14 = arith.constant 0 : index
    %17 = vector.load %arg6[%c0_13, %c0_14] : memref<32x32xbf16, #tpu.memory_space<vmem>>, vector<32x32xbf16>
    %cst = arith.constant dense<0.000000e+00> : vector<64x32xf32>
    %18 = tpu.matmul %2, %15, %cst {dimension_numbers = #tpu.dot_dimension_numbers<[1], [0], [0], [1], [0, 0, 1, 1], [], []>} : vector<64x16xbf16>, vector<16x32xbf16>, vector<64x32xf32> -> vector<64x32xf32>
    %cst_15 = arith.constant dense<0.000000e+00> : vector<512x32xf32>
    %19 = tpu.matmul %5, %16, %cst_15 {dimension_numbers = #tpu.dot_dimension_numbers<[1], [0], [0], [1], [0, 0, 1, 1], [], []>} : vector<512x16xbf16>, vector<16x32xbf16>, vector<512x32xf32> -> vector<512x32xf32>
    %20 = vector.shape_cast %18 : vector<64x32xf32> to vector<8x1x8x32xf32>
    %21 = vector.shape_cast %20 : vector<8x1x8x32xf32> to vector<8x1x8x32xf32>
    %22 = vector.broadcast %21 : vector<8x1x8x32xf32> to vector<8x8x8x32xf32>
    %23 = vector.shape_cast %22 : vector<8x8x8x32xf32> to vector<512x32xf32>
    %24 = arith.addf %23, %19 : vector<512x32xf32>
    %cst_16 = arith.constant 0.000000e+00 : f32
    %25 = vector.broadcast %cst_16 : f32 to vector<512x32xf32>
    %26 = arith.maximumf %24, %25 : vector<512x32xf32>
    %27 = arith.mulf %26, %14 : vector<512x32xf32>
    %c0_i32_17 = arith.constant 0 : i32
    %28 = vector.shape_cast %27 : vector<512x32xf32> to vector<8x8x8x32xf32>
    %cst_18 = arith.constant dense<0.000000e+00> : vector<8x8x32xf32>
    %29 = vector.multi_reduction <add>, %28, %cst_18 [2] : vector<8x8x8x32xf32> to vector<8x8x32xf32>
    %30 = vector.shape_cast %29 : vector<8x8x32xf32> to vector<8x1x8x32xf32>
    %31 = vector.shape_cast %30 : vector<8x1x8x32xf32> to vector<8x1x8x32xf32>
    %32 = vector.broadcast %31 : vector<8x1x8x32xf32> to vector<8x8x8x32xf32>
    %33 = vector.shape_cast %32 : vector<8x8x8x32xf32> to vector<512x32xf32>
    %34 = arith.subf %33, %27 : vector<512x32xf32>
    %35 = arith.truncf %34 : vector<512x32xf32> to vector<512x32xbf16>
    %cst_19 = arith.constant dense<0.000000e+00> : vector<512x32xf32>
    %36 = tpu.matmul %35, %17, %cst_19 {dimension_numbers = #tpu.dot_dimension_numbers<[1], [0], [0], [1], [0, 0, 1, 1], [], []>} : vector<512x32xbf16>, vector<32x32xbf16>, vector<512x32xf32> -> vector<512x32xf32>
    %37 = arith.addf %24, %36 : vector<512x32xf32>
    %cst_20 = arith.constant 0.000000e+00 : f32
    %38 = vector.broadcast %cst_20 : f32 to vector<512x32xf32>
    %39 = arith.maximumf %37, %38 : vector<512x32xf32>
    %40 = arith.mulf %39, %14 : vector<512x32xf32>
    %cst_21 = arith.constant 0.000000e+00 : f32
    %41 = vector.broadcast %cst_21 : f32 to vector<512x32xf32>
    %42 = arith.subf %41, %40 : vector<512x32xf32>
    %43 = math.exp %42 : vector<512x32xf32>
    %cst_22 = arith.constant 1.000000e+00 : f32
    %44 = vector.broadcast %cst_22 : f32 to vector<512x32xf32>
    %45 = arith.addf %44, %43 : vector<512x32xf32>
    %46 = tpu.reciprocal %45 {approx = true} : vector<512x32xf32> -> vector<512x32xf32>
    %c1_i32 = arith.constant 1 : i32
    %47 = vector.shape_cast %46 : vector<512x32xf32> to vector<8x8x8x32xf32>
    %cst_23 = arith.constant dense<0.000000e+00> : vector<8x8x32xf32>
    %48 = vector.multi_reduction <add>, %47, %cst_23 [2] : vector<8x8x8x32xf32> to vector<8x8x32xf32>
    %49 = vector.shape_cast %48 : vector<8x8x32xf32> to vector<8x1x8x32xf32>
    %50 = vector.shape_cast %49 : vector<8x1x8x32xf32> to vector<8x1x8x32xf32>
    %51 = vector.broadcast %50 : vector<8x1x8x32xf32> to vector<8x8x8x32xf32>
    %52 = vector.shape_cast %51 : vector<8x8x8x32xf32> to vector<512x32xf32>
    %53 = arith.subf %52, %46 : vector<512x32xf32>
    %54 = arith.truncf %53 : vector<512x32xf32> to vector<512x32xbf16>
    %cst_24 = arith.constant dense<0.000000e+00> : vector<512x32xf32>
    %55 = tpu.matmul %54, %17, %cst_24 {dimension_numbers = #tpu.dot_dimension_numbers<[1], [0], [0], [1], [0, 0, 1, 1], [], []>} : vector<512x32xbf16>, vector<32x32xbf16>, vector<512x32xf32> -> vector<512x32xf32>
    %56 = arith.addf %24, %55 : vector<512x32xf32>
    %cst_25 = arith.constant 0.000000e+00 : f32
    %57 = vector.broadcast %cst_25 : f32 to vector<512x32xf32>
    %58 = arith.maximumf %56, %57 : vector<512x32xf32>
    %59 = arith.mulf %58, %14 : vector<512x32xf32>
    %cst_26 = arith.constant 0.000000e+00 : f32
    %60 = vector.broadcast %cst_26 : f32 to vector<512x32xf32>
    %61 = arith.subf %60, %59 : vector<512x32xf32>
    %62 = math.exp %61 : vector<512x32xf32>
    %cst_27 = arith.constant 1.000000e+00 : f32
    %63 = vector.broadcast %cst_27 : f32 to vector<512x32xf32>
    %64 = arith.addf %63, %62 : vector<512x32xf32>
    %65 = tpu.reciprocal %64 {approx = true} : vector<512x32xf32> -> vector<512x32xf32>
    %66 = vector.shape_cast %65 : vector<512x32xf32> to vector<8x8x8x32xf32>
    %cst_28 = arith.constant dense<0.000000e+00> : vector<8x8x32xf32>
    %67 = vector.multi_reduction <add>, %66, %cst_28 [2] : vector<8x8x8x32xf32> to vector<8x8x32xf32>
    %68 = vector.shape_cast %67 : vector<8x8x32xf32> to vector<64x32xf32>
    %c0_29 = arith.constant 0 : index
    %c0_30 = arith.constant 0 : index
    %69 = vector.load %arg7[%c0_29, %c0_30] : memref<16x32xbf16, #tpu.memory_space<vmem>>, vector<16x32xbf16>
    %cst_31 = arith.constant dense<0.000000e+00> : vector<64x32xf32>
    %70 = tpu.matmul %2, %69, %cst_31 {dimension_numbers = #tpu.dot_dimension_numbers<[1], [0], [0], [1], [0, 0, 1, 1], [], []>} : vector<64x16xbf16>, vector<16x32xbf16>, vector<64x32xf32> -> vector<64x32xf32>
    %71 = arith.truncf %68 : vector<64x32xf32> to vector<64x32xbf16>
    %c0_32 = arith.constant 0 : index
    %c0_33 = arith.constant 0 : index
    %72 = vector.load %arg8[%c0_32, %c0_33] : memref<32x32xbf16, #tpu.memory_space<vmem>>, vector<32x32xbf16>
    %cst_34 = arith.constant dense<0.000000e+00> : vector<64x32xf32>
    %73 = tpu.matmul %71, %72, %cst_34 {dimension_numbers = #tpu.dot_dimension_numbers<[1], [0], [0], [1], [0, 0, 1, 1], [], []>} : vector<64x32xbf16>, vector<32x32xbf16>, vector<64x32xf32> -> vector<64x32xf32>
    %74 = arith.addf %70, %73 : vector<64x32xf32>
    %c0_35 = arith.constant 0 : index
    %c0_36 = arith.constant 0 : index
    %75 = vector.load %arg9[%c0_35, %c0_36] : memref<1x32xf32, #tpu.memory_space<vmem>>, vector<1x32xf32>
    %76 = vector.broadcast %75 : vector<1x32xf32> to vector<64x32xf32>
    %77 = arith.addf %74, %76 : vector<64x32xf32>
    %cst_37 = arith.constant 0.000000e+00 : f32
    %78 = vector.broadcast %cst_37 : f32 to vector<64x32xf32>
    %79 = arith.maximumf %77, %78 : vector<64x32xf32>
    %80 = vector.shape_cast %79 : vector<64x32xf32> to vector<8x8x32xf32>
    %cst_38 = arith.constant dense<0.000000e+00> : vector<8x32xf32>
    %81 = vector.multi_reduction <add>, %80, %cst_38 [1] : vector<8x8x32xf32> to vector<8x32xf32>
    %c0_39 = arith.constant 0 : index
    %c0_40 = arith.constant 0 : index
    %82 = vector.load %arg10[%c0_39, %c0_40] : memref<8x1xf32, #tpu.memory_space<vmem>>, vector<8x1xf32>
    %83 = vector.broadcast %82 : vector<8x1xf32> to vector<8x32xf32>
    %84 = arith.mulf %81, %83 : vector<8x32xf32>
    %c0_41 = arith.constant 0 : index
    %c0_42 = arith.constant 0 : index
    %85 = vector.load %arg11[%c0_41, %c0_42] : memref<8x32xf32, #tpu.memory_space<vmem>>, vector<8x32xf32>
    tpu.vector_store %arg11[%c0_41, %c0_42], %84 {strides = array<i32>} : memref<8x32xf32, #tpu.memory_space<vmem>>, vector<8x32xf32>,
    return
  }
  func.func @transform_0(%arg0: i32) -> (i32, i32, i32) {
    %c0_i32 = arith.constant 0 : i32
    %c0_i32_0 = arith.constant 0 : i32
    %c0_i32_1 = arith.constant 0 : i32
    return %arg0, %c0_i32, %c0_i32_0 : i32, i32, i32
  }
  func.func @transform_1(%arg0: i32) -> (i32, i32, i32, i32) {
    %c0_i32 = arith.constant 0 : i32
    %c0_i32_0 = arith.constant 0 : i32
    %c0_i32_1 = arith.constant 0 : i32
    %c0_i32_2 = arith.constant 0 : i32
    return %arg0, %c0_i32, %c0_i32_0, %c0_i32_1 : i32, i32, i32, i32
  }
  func.func @transform_2(%arg0: i32) -> (i32, i32, i32) {
    %c0_i32 = arith.constant 0 : i32
    %c0_i32_0 = arith.constant 0 : i32
    %c0_i32_1 = arith.constant 0 : i32
    return %arg0, %c0_i32, %c0_i32_0 : i32, i32, i32
  }
  func.func @transform_3(%arg0: i32) -> (i32, i32) {
    %c0_i32 = arith.constant 0 : i32
    %c0_i32_0 = arith.constant 0 : i32
    %c0_i32_1 = arith.constant 0 : i32
    return %c0_i32, %c0_i32_0 : i32, i32
  }
  func.func @transform_4(%arg0: i32) -> (i32, i32) {
    %c0_i32 = arith.constant 0 : i32
    %c0_i32_0 = arith.constant 0 : i32
    %c0_i32_1 = arith.constant 0 : i32
    return %c0_i32, %c0_i32_0 : i32, i32
  }
  func.func @transform_5(%arg0: i32) -> (i32, i32) {
    %c0_i32 = arith.constant 0 : i32
    %c0_i32_0 = arith.constant 0 : i32
    %c0_i32_1 = arith.constant 0 : i32
    return %c0_i32, %c0_i32_0 : i32, i32
  }
  func.func @transform_6(%arg0: i32) -> (i32, i32) {
    %c0_i32 = arith.constant 0 : i32
    %c0_i32_0 = arith.constant 0 : i32
    %c0_i32_1 = arith.constant 0 : i32
    return %c0_i32, %c0_i32_0 : i32, i32
  }
  func.func @transform_7(%arg0: i32) -> (i32, i32) {
    %c0_i32 = arith.constant 0 : i32
    %c0_i32_0 = arith.constant 0 : i32
    %c0_i32_1 = arith.constant 0 : i32
    return %c0_i32, %c0_i32_0 : i32, i32
  }
  func.func @transform_8(%arg0: i32) -> (i32, i32) {
    %c0_i32 = arith.constant 0 : i32
    %c0_i32_0 = arith.constant 0 : i32
    %c0_i32_1 = arith.constant 0 : i32
    return %c0_i32, %c0_i32_0 : i32, i32
  }
  func.func @transform_9(%arg0: i32) -> (i32, i32) {
    %c0_i32 = arith.constant 0 : i32
    %c0_i32_0 = arith.constant 0 : i32
    return %arg0, %c0_i32 : i32, i32
  }
  func.func @transform_10(%arg0: i32) -> (i32, i32) {
    %c0_i32 = arith.constant 0 : i32
    %c0_i32_0 = arith.constant 0 : i32
    return %arg0, %c0_i32 : i32, i32
  }
}

</mosaic_0001>

<llo_original>
// kernel: tpu_custom_call.1
$region0: #{tpu_custom_call.1}
  #allocation0 [shape = 'u32[]', space=smem, size = 0x4, offset = 0x4, fixed_abs, tag = 'smem constant byte address 0x4 - core index']
  #allocation1 [shape = 'u32[144,128]{1,0:T(1,128)}', space=vmem, size = 0x12000, scoped, tag = 'internal scratch']
  %s0 = inlined_call_operand.vmem [shape: f32[16,8,16], index: 0, kind: input, shape index: {}]
  %s1 = inlined_call_operand.hbm [shape: f32[16,8,8,16], index: 1, kind: input, shape index: {}]
  %s2 = inlined_call_operand.vmem [shape: s32[16,8,8], index: 2, kind: input, shape index: {}]
  %s3 = inlined_call_operand.vmem [shape: bf16[16,32], index: 3, kind: input, shape index: {}]
  %s4 = inlined_call_operand.vmem [shape: bf16[16,32], index: 4, kind: input, shape index: {}]
  %s5 = inlined_call_operand.vmem [shape: bf16[32,32], index: 5, kind: input, shape index: {}]
  %s6 = inlined_call_operand.vmem [shape: bf16[16,32], index: 6, kind: input, shape index: {}]
  %s7 = inlined_call_operand.vmem [shape: bf16[32,32], index: 7, kind: input, shape index: {}]
  %s8 = inlined_call_operand.vmem [shape: f32[1,32], index: 8, kind: input, shape index: {}]
  %s9 = inlined_call_operand.vmem [shape: f32[16,1], index: 9, kind: input, shape index: {}]
  %s10 = inlined_call_operand.hbm [shape: f32[16,32], index: 10, kind: output, shape index: {}]
  %s11 = sld [smem:[#allocation0]]
  $region77: #{tpu_custom_call.1} parent=0
    _
  %s13 = ssub.s32 1, %s11
  %s14 = scalar_select 0, %s13, %s11
  $region1: #{tpu_custom_call.1} parent=0
    #allocation2 [shape = 'u8[524288]{0}', space=vmem, size = 0x80000, scoped, tag = 'input window, operand 1']
    #allocation3 [shape = 's32[2]{0}', space=sflag, size = 0x8, scoped, tag = 'scoped memory for tpu_custom_call.1']
    #allocation4 [shape = 's32[2]{0}', space=sflag, size = 0x8, scoped, tag = 'scoped memory for tpu_custom_call.1']
    #allocation5 [shape = 'u8[8192]{0}', space=vmem, size = 0x2000, scoped, tag = 'output window, operand 0']
    %15 = vsyncpa [#allocation3], 0
    %s16 = scalar_lea.sflag [#allocation3], 1
    %17 = vsyncpa %s16, 0
    %18 = vsyncpa [#allocation4], 0
    %s19 = scalar_lea.sflag [#allocation4], 1
    %20 = vsyncpa %s19, 0
    loop: start=0, step=1, limit=4
    $region2: #{tpu_custom_call.1} parent=1 // loop_pre_header
      _
    $region3: #{tpu_custom_call.1} parent=1 // loop_header
      %s22 = sphi 0, %s26
      %p23 = scmp.ge.s32.totalorder %s22, 4
      %s32 = sphi 0, %s34
      %s35 = sphi 0, %s32
      %s36 = sphi 0, %s35
      %s52 = sphi 0, %s36
      %s58 = sphi 0, %s60
      %s61 = sphi 0, %s58
      %s62 = sphi 0, %s61
      %s78 = sphi 0, %s62
      %s84 = sphi 0, %s86
      %s87 = sphi 0, %s84
      %s88 = sphi 0, %s87
      %s104 = sphi 0, %s88
      %s108 = sphi 0, %s108
      %s110 = sphi 0, %s108
      %s111 = sphi 0, %s110
      %s125 = sphi 0, %s111
      %s129 = sphi 0, %s129
      %s131 = sphi 0, %s129
      %s132 = sphi 0, %s131
      %s146 = sphi 0, %s132
      %s150 = sphi 0, %s150
      %s152 = sphi 0, %s150
      %s153 = sphi 0, %s152
      %s167 = sphi 0, %s153
      %s171 = sphi 0, %s171
      %s173 = sphi 0, %s171
      %s174 = sphi 0, %s173
      %s188 = sphi 0, %s174
      %s192 = sphi 0, %s192
      %s194 = sphi 0, %s192
      %s195 = sphi 0, %s194
      %s209 = sphi 0, %s195
      %s213 = sphi 0, %s213
      %s215 = sphi 0, %s213
      %s216 = sphi 0, %s215
      %s230 = sphi 0, %s216
      %s236 = sphi 0, %s238
      %s239 = sphi 0, %s236
      %s240 = sphi 0, %s239
      %s256 = sphi 0, %s240
      %s262 = sphi 0, %s264
      %s265 = sphi 0, %s262
      %s266 = sphi 0, %s265
      %s282 = sphi 0, %s266
    $region4: #{tpu_custom_call.1} parent=1 // loop_header_branch
      %25 = sbr.rel (%p23) target = $region8
    $region5: #{tpu_custom_call.1} parent=1 // loop_body
      %s27 = ssub.s32 %s22, 1
      %s28 = ssub.s32 %s22, 2
      %s29 = sadd.s32 %s22, 1
      %s30 = ssub.s32 %s22, %s29
      %p31 = scmp.eq.s32.totalorder %s30, 0
      %s33 = sadd.s32 %s32, 1
      %s34 = scalar_select %p31, %s32, %s33
      %p37 = pneg %p31
      %p38 = scmp.eq.s32.totalorder %s22, 1
      %p39 = por %p37, %p38
      %p40 = scmp.ne.s32.totalorder %s32, %s35
      %p41 = scmp.eq.s32.totalorder %s22, 0
      %p42 = por %p40, %p41
      %p43 = scmp.ne.s32.totalorder %s32, %s35
      %p44 = scmp.eq.s32.totalorder %s27, 1
      %p45 = por %p43, %p44
      %p46 = scmp.ne.s32.totalorder %s35, %s36
      %p47 = scmp.eq.s32.totalorder %s27, 0
      %p48 = por %p46, %p47
      %p49 = scmp.ne.s32.totalorder %s35, %s36
      %p50 = scmp.eq.s32.totalorder %s28, 1
      %p51 = por %p49, %p50
      %p53 = scmp.ne.s32.totalorder %s36, %s52
      %p54 = scmp.eq.s32.totalorder %s28, 0
      %p55 = por %p53, %p54
      %s56 = ssub.s32 %s22, %s29
      %p57 = scmp.eq.s32.totalorder %s56, 0
      %s59 = sadd.s32 %s58, 1
      %s60 = scalar_select %p57, %s58, %s59
      %p63 = pneg %p57
      %p64 = scmp.eq.s32.totalorder %s22, 1
      %p65 = por %p63, %p64
      %p66 = scmp.ne.s32.totalorder %s58, %s61
      %p67 = scmp.eq.s32.totalorder %s22, 0
      %p68 = por %p66, %p67
      %p69 = scmp.ne.s32.totalorder %s58, %s61
      %p70 = scmp.eq.s32.totalorder %s27, 1
      %p71 = por %p69, %p70
      %p72 = scmp.ne.s32.totalorder %s61, %s62
      %p73 = scmp.eq.s32.totalorder %s27, 0
      %p74 = por %p72, %p73
      %p75 = scmp.ne.s32.totalorder %s61, %s62
      %p76 = scmp.eq.s32.totalorder %s28, 1
      %p77 = por %p75, %p76
      %p79 = scmp.ne.s32.totalorder %s62, %s78
      %p80 = scmp.eq.s32.totalorder %s28, 0
      %p81 = por %p79, %p80
      %s82 = ssub.s32 %s22, %s29
      %p83 = scmp.eq.s32.totalorder %s82, 0
      %s85 = sadd.s32 %s84, 1
      %s86 = scalar_select %p83, %s84, %s85
      %p89 = pneg %p83
      %p90 = scmp.eq.s32.totalorder %s22, 1
      %p91 = por %p89, %p90
      %p92 = scmp.ne.s32.totalorder %s84, %s87
      %p93 = scmp.eq.s32.totalorder %s22, 0
      %p94 = por %p92, %p93
      %p95 = scmp.ne.s32.totalorder %s84, %s87
      %p96 = scmp.eq.s32.totalorder %s27, 1
      %p97 = por %p95, %p96
      %p98 = scmp.ne.s32.totalorder %s87, %s88
      %p99 = scmp.eq.s32.totalorder %s27, 0
      %p100 = por %p98, %p99
      %p101 = scmp.ne.s32.totalorder %s87, %s88
      %p102 = scmp.eq.s32.totalorder %s28, 1
      %p103 = por %p101, %p102
      %p105 = scmp.ne.s32.totalorder %s88, %s104
      %p106 = scmp.eq.s32.totalorder %s28, 0
      %p107 = por %p105, %p106
      %s109 = sadd.s32 %s108, 1
      %p112 = scmp.eq.s32.totalorder %s22, 1
      %p113 = scmp.ne.s32.totalorder %s108, %s110
      %p114 = scmp.eq.s32.totalorder %s22, 0
      %p115 = por %p113, %p114
      %p116 = scmp.ne.s32.totalorder %s108, %s110
      %p117 = scmp.eq.s32.totalorder %s27, 1
      %p118 = por %p116, %p117
      %p119 = scmp.ne.s32.totalorder %s110, %s111
      %p120 = scmp.eq.s32.totalorder %s27, 0
      %p121 = por %p119, %p120
      %p122 = scmp.ne.s32.totalorder %s110, %s111
      %p123 = scmp.eq.s32.totalorder %s28, 1
      %p124 = por %p122, %p123
      %p126 = scmp.ne.s32.totalorder %s111, %s125
      %p127 = scmp.eq.s32.totalorder %s28, 0
      %p128 = por %p126, %p127
      %s130 = sadd.s32 %s129, 1
      %p133 = scmp.eq.s32.totalorder %s22, 1
      %p134 = scmp.ne.s32.totalorder %s129, %s131
      %p135 = scmp.eq.s32.totalorder %s22, 0
      %p136 = por %p134, %p135
      %p137 = scmp.ne.s32.totalorder %s129, %s131
      %p138 = scmp.eq.s32.totalorder %s27, 1
      %p139 = por %p137, %p138
      %p140 = scmp.ne.s32.totalorder %s131, %s132
      %p141 = scmp.eq.s32.totalorder %s27, 0
      %p142 = por %p140, %p141
      %p143 = scmp.ne.s32.totalorder %s131, %s132
      %p144 = scmp.eq.s32.totalorder %s28, 1
      %p145 = por %p143, %p144
      %p147 = scmp.ne.s32.totalorder %s132, %s146
      %p148 = scmp.eq.s32.totalorder %s28, 0
      %p149 = por %p147, %p148
      %s151 = sadd.s32 %s150, 1
      %p154 = scmp.eq.s32.totalorder %s22, 1
      %p155 = scmp.ne.s32.totalorder %s150, %s152
      %p156 = scmp.eq.s32.totalorder %s22, 0
      %p157 = por %p155, %p156
      %p158 = scmp.ne.s32.totalorder %s150, %s152
      %p159 = scmp.eq.s32.totalorder %s27, 1
      %p160 = por %p158, %p159
      %p161 = scmp.ne.s32.totalorder %s152, %s153
      %p162 = scmp.eq.s32.totalorder %s27, 0
      %p163 = por %p161, %p162
      %p164 = scmp.ne.s32.totalorder %s152, %s153
      %p165 = scmp.eq.s32.totalorder %s28, 1
      %p166 = por %p164, %p165
      %p168 = scmp.ne.s32.totalorder %s153, %s167
      %p169 = scmp.eq.s32.totalorder %s28, 0
      %p170 = por %p168, %p169
      %s172 = sadd.s32 %s171, 1
      %p175 = scmp.eq.s32.totalorder %s22, 1
      %p176 = scmp.ne.s32.totalorder %s171, %s173
      %p177 = scmp.eq.s32.totalorder %s22, 0
      %p178 = por %p176, %p177
      %p179 = scmp.ne.s32.totalorder %s171, %s173
      %p180 = scmp.eq.s32.totalorder %s27, 1
      %p181 = por %p179, %p180
      %p182 = scmp.ne.s32.totalorder %s173, %s174
      %p183 = scmp.eq.s32.totalorder %s27, 0
      %p184 = por %p182, %p183
      %p185 = scmp.ne.s32.totalorder %s173, %s174
      %p186 = scmp.eq.s32.totalorder %s28, 1
      %p187 = por %p185, %p186
      %p189 = scmp.ne.s32.totalorder %s174, %s188
      %p190 = scmp.eq.s32.totalorder %s28, 0
      %p191 = por %p189, %p190
      %s193 = sadd.s32 %s192, 1
      %p196 = scmp.eq.s32.totalorder %s22, 1
      %p197 = scmp.ne.s32.totalorder %s192, %s194
      %p198 = scmp.eq.s32.totalorder %s22, 0
      %p199 = por %p197, %p198
      %p200 = scmp.ne.s32.totalorder %s192, %s194
      %p201 = scmp.eq.s32.totalorder %s27, 1
      %p202 = por %p200, %p201
      %p203 = scmp.ne.s32.totalorder %s194, %s195
      %p204 = scmp.eq.s32.totalorder %s27, 0
      %p205 = por %p203, %p204
      %p206 = scmp.ne.s32.totalorder %s194, %s195
      %p207 = scmp.eq.s32.totalorder %s28, 1
      %p208 = por %p206, %p207
      %p210 = scmp.ne.s32.totalorder %s195, %s209
      %p211 = scmp.eq.s32.totalorder %s28, 0
      %p212 = por %p210, %p211
      %s214 = sadd.s32 %s213, 1
      %p217 = scmp.eq.s32.totalorder %s22, 1
      %p218 = scmp.ne.s32.totalorder %s213, %s215
      %p219 = scmp.eq.s32.totalorder %s22, 0
      %p220 = por %p218, %p219
      %p221 = scmp.ne.s32.totalorder %s213, %s215
      %p222 = scmp.eq.s32.totalorder %s27, 1
      %p223 = por %p221, %p222
      %p224 = scmp.ne.s32.totalorder %s215, %s216
      %p225 = scmp.eq.s32.totalorder %s27, 0
      %p226 = por %p224, %p225
      %p227 = scmp.ne.s32.totalorder %s215, %s216
      %p228 = scmp.eq.s32.totalorder %s28, 1
      %p229 = por %p227, %p228
      %p231 = scmp.ne.s32.totalorder %s216, %s230
      %p232 = scmp.eq.s32.totalorder %s28, 0
      %p233 = por %p231, %p232
      %s234 = ssub.s32 %s22, %s29
      %p235 = scmp.eq.s32.totalorder %s234, 0
      %s237 = sadd.s32 %s236, 1
      %s238 = scalar_select %p235, %s236, %s237
      %p241 = pneg %p235
      %p242 = scmp.eq.s32.totalorder %s22, 1
      %p243 = por %p241, %p242
      %p244 = scmp.ne.s32.totalorder %s236, %s239
      %p245 = scmp.eq.s32.totalorder %s22, 0
      %p246 = por %p244, %p245
      %p247 = scmp.ne.s32.totalorder %s236, %s239
      %p248 = scmp.eq.s32.totalorder %s27, 1
      %p249 = por %p247, %p248
      %p250 = scmp.ne.s32.totalorder %s239, %s240
      %p251 = scmp.eq.s32.totalorder %s27, 0
      %p252 = por %p250, %p251
      %p253 = scmp.ne.s32.totalorder %s239, %s240
      %p254 = scmp.eq.s32.totalorder %s28, 1
      %p255 = por %p253, %p254
      %p257 = scmp.ne.s32.totalorder %s240, %s256
      %p258 = scmp.eq.s32.totalorder %s28, 0
      %p259 = por %p257, %p258
      %s260 = ssub.s32 %s22, %s29
      %p261 = scmp.eq.s32.totalorder %s260, 0
      %s263 = sadd.s32 %s262, 1
      %s264 = scalar_select %p261, %s262, %s263
      %p267 = pneg %p261
      %p268 = scmp.eq.s32.totalorder %s22, 1
      %p269 = por %p267, %p268
      %p270 = scmp.ne.s32.totalorder %s262, %s265
      %p271 = scmp.eq.s32.totalorder %s22, 0
      %p272 = por %p270, %p271
      %p273 = scmp.ne.s32.totalorder %s262, %s265
      %p274 = scmp.eq.s32.totalorder %s27, 1
      %p275 = por %p273, %p274
      %p276 = scmp.ne.s32.totalorder %s265, %s266
      %p277 = scmp.eq.s32.totalorder %s27, 0
      %p278 = por %p276, %p277
      %p279 = scmp.ne.s32.totalorder %s265, %s266
      %p280 = scmp.eq.s32.totalorder %s28, 1
      %p281 = por %p279, %p280
      %p283 = scmp.ne.s32.totalorder %s266, %s282
      %p284 = scmp.eq.s32.totalorder %s28, 0
      %p285 = por %p283, %p284
      %p286 = scmp.le.s32.totalorder 1, %s22
      %p287 = scmp.lt.s32.totalorder %s22, 3
      %p288 = pnand %p286, %p287
      %p289 = pneg %p288
      // Predicated region
      $region9: #{tpu_custom_call.1} parent=5 // pred_check
        _
      $region10: #{tpu_custom_call.1} parent=5 // pred_check_branch
        %291 = sbr.rel (%p288) target = $region12
      $region11: #{tpu_custom_call.1} parent=5 // pred_region
        %s292 = ssub.s32 %s22, 1
        // Predicated region
        $region13: #{tpu_custom_call.1} parent=11 // pred_check
          %p293 = pneg %p121
        $region14: #{tpu_custom_call.1} parent=11 // pred_check_branch
          %295 = sbr.rel (%p293) target = $region16
        $region15: #{tpu_custom_call.1} parent=11 // pred_region
          _
        $region16: #{tpu_custom_call.1} parent=11 // pred_fallthru
          _
        // Predicated region
        $region17: #{tpu_custom_call.1} parent=11 // pred_check
          %p296 = pneg %p142
        $region18: #{tpu_custom_call.1} parent=11 // pred_check_branch
          %298 = sbr.rel (%p296) target = $region20
        $region19: #{tpu_custom_call.1} parent=11 // pred_region
          _
        $region20: #{tpu_custom_call.1} parent=11 // pred_fallthru
          _
        // Predicated region
        $region21: #{tpu_custom_call.1} parent=11 // pred_check
          %p299 = pneg %p163
        $region22: #{tpu_custom_call.1} parent=11 // pred_check_branch
          %301 = sbr.rel (%p299) target = $region24
        $region23: #{tpu_custom_call.1} parent=11 // pred_region
          _
        $region24: #{tpu_custom_call.1} parent=11 // pred_fallthru
          _
        // Predicated region
        $region25: #{tpu_custom_call.1} parent=11 // pred_check
          %p302 = pneg %p184
        $region26: #{tpu_custom_call.1} parent=11 // pred_check_branch
          %304 = sbr.rel (%p302) target = $region28
        $region27: #{tpu_custom_call.1} parent=11 // pred_region
          _
        $region28: #{tpu_custom_call.1} parent=11 // pred_fallthru
          _
        // Predicated region
        $region29: #{tpu_custom_call.1} parent=11 // pred_check
          %p305 = pneg %p205
        $region30: #{tpu_custom_call.1} parent=11 // pred_check_branch
          %307 = sbr.rel (%p305) target = $region32
        $region31: #{tpu_custom_call.1} parent=11 // pred_region
          _
        $region32: #{tpu_custom_call.1} parent=11 // pred_fallthru
          _
        // Predicated region
        $region33: #{tpu_custom_call.1} parent=11 // pred_check
          %p308 = pneg %p226
        $region34: #{tpu_custom_call.1} parent=11 // pred_check_branch
          %310 = sbr.rel (%p308) target = $region36
        $region35: #{tpu_custom_call.1} parent=11 // pred_region
          _
        $region36: #{tpu_custom_call.1} parent=11 // pred_fallthru
          _
      $region12: #{tpu_custom_call.1} parent=5 // pred_fallthru
        _
      %p311 = scmp.lt.s32.totalorder %s22, 2
      // Predicated region
      $region37: #{tpu_custom_call.1} parent=5 // pred_check
        %p312 = pneg %p311
      $region38: #{tpu_custom_call.1} parent=5 // pred_check_branch
        %314 = sbr.rel (%p312) target = $region40
      $region39: #{tpu_custom_call.1} parent=5 // pred_region
        // Predicated region
        $region41: #{tpu_custom_call.1} parent=39 // pred_check
          %p315 = pneg %p42
        $region42: #{tpu_custom_call.1} parent=39 // pred_check_branch
          %317 = sbr.rel (%p315) target = $region44
        $region43: #{tpu_custom_call.1} parent=39 // pred_region
          %s318 = smul.u32 8, %s22
          %p319 = scmp.lt.s32.totalorder %s318, 15
          %s320 = scalar_select %p319, %s318, 15
          %s321 = smul.addr %s320, 8
          %s322 = scalar_lea.vmem %s0, %s321
          %s323 = smul.u32 8, %s22
        $region44: #{tpu_custom_call.1} parent=39 // pred_fallthru
          _
        // Predicated region
        $region45: #{tpu_custom_call.1} parent=39 // pred_check
          %p324 = pneg %p68
        $region46: #{tpu_custom_call.1} parent=39 // pred_check_branch
          %326 = sbr.rel (%p324) target = $region48
        $region47: #{tpu_custom_call.1} parent=39 // pred_region
          %s327 = sand.u32 %s58, 1
          %s328 = scalar_lea.sflag [#allocation3], %s327
          %s329 = sand.u32 %s58, 1
          %s330 = smul.addr %s329, 512
          %s331 = scalar_lea.vmem [#allocation2], %s330
          %s332 = smul.u32 8, %s22
          %s334 = ssub.s32 8192, 8192
          %335 = vsyncadd %s328, %s334
          %s336 = smul.addr %s332, 8
          %s337 = smul.addr %s336, 128
          %s338 = scalar_lea.hbm %s1, %s337
          %s339 = sshll.u32 %s331, 4
          %s340 = int_to_ptr.vmem [resolvable:$true] %s339
          %345 = dma.hbm_to_vmem [thread:$0]  %s338, 8192, %s340, %s328, 128, 128, 8
        $region48: #{tpu_custom_call.1} parent=39 // pred_fallthru
          _
        // Predicated region
        $region49: #{tpu_custom_call.1} parent=39 // pred_check
          %p346 = pneg %p94
        $region50: #{tpu_custom_call.1} parent=39 // pred_check_branch
          %348 = sbr.rel (%p346) target = $region52
        $region51: #{tpu_custom_call.1} parent=39 // pred_region
          %s349 = smul.u32 8, %s22
          %p350 = scmp.lt.s32.totalorder %s349, 15
          %s351 = scalar_select %p350, %s349, 15
          %s352 = smul.addr %s351, 8
          %s353 = scalar_lea.vmem %s2, %s352
          %s354 = smul.u32 8, %s22
        $region52: #{tpu_custom_call.1} parent=39 // pred_fallthru
          _
        // Predicated region
        $region53: #{tpu_custom_call.1} parent=39 // pred_check
          %p355 = pneg %p246
        $region54: #{tpu_custom_call.1} parent=39 // pred_check_branch
          %357 = sbr.rel (%p355) target = $region56
        $region55: #{tpu_custom_call.1} parent=39 // pred_region
          %p358 = scmp.lt.s32.totalorder %s22, 1
          %s359 = scalar_select %p358, %s22, 1
          %s360 = smul.addr %s359, 8
          %s361 = scalar_lea.vmem %s9, %s360
        $region56: #{tpu_custom_call.1} parent=39 // pred_fallthru
          _
      $region40: #{tpu_custom_call.1} parent=5 // pred_fallthru
        _
      %p362 = scmp.le.s32.totalorder 1, %s22
      %p363 = scmp.lt.s32.totalorder %s22, 3
      %p364 = pnand %p362, %p363
      %p365 = pneg %p364
      // Predicated region
      $region57: #{tpu_custom_call.1} parent=5 // pred_check
        _
      $region58: #{tpu_custom_call.1} parent=5 // pred_check_branch
        %367 = sbr.rel (%p364) target = $region60
      $region59: #{tpu_custom_call.1} parent=5 // pred_region
        %s368 = ssub.s32 %s22, 1
        %s369 = sand.u32 %s61, 1
        %s370 = scalar_lea.sflag [#allocation3], %s369
        %s371 = sand.u32 %s61, 1
        %s372 = smul.addr %s371, 512
        %s373 = scalar_lea.vmem [#allocation2], %s372
        // Predicated region
        $region61: #{tpu_custom_call.1} parent=59 // pred_check
          %p374 = pneg %p74
        $region62: #{tpu_custom_call.1} parent=59 // pred_check_branch
          %376 = sbr.rel (%p374) target = $region64
        $region63: #{tpu_custom_call.1} parent=59 // pred_region
          %377 = dma.done %s370, 8192
        $region64: #{tpu_custom_call.1} parent=59 // pred_fallthru
          _
        %s378 = smul.u32 8, %s27
        %p379 = scmp.lt.s32.totalorder %s378, 15
        %s380 = scalar_select %p379, %s378, 15
        %s381 = smul.addr %s380, 8
        %s382 = scalar_lea.vmem %s0, %s381
        %p383 = pneg %p48
        %p384 = pneg %p45
        %s385 = sand.u32 %s61, 1
        %s386 = scalar_lea.sflag [#allocation3], %s385
        %s387 = sand.u32 %s61, 1
        %s388 = smul.addr %s387, 512
        %s389 = scalar_lea.vmem [#allocation2], %s388
        %p390 = pneg %p74
        %p391 = pneg %p71
        %s392 = smul.u32 8, %s27
        %p393 = scmp.lt.s32.totalorder %s392, 15
        %s394 = scalar_select %p393, %s392, 15
        %s395 = smul.addr %s394, 8
        %s396 = scalar_lea.vmem %s2, %s395
        %p397 = pneg %p100
        %p398 = pneg %p97
        %p399 = pneg %p121
        %p400 = pneg %p118
        %p401 = pneg %p142
        %p402 = pneg %p139
        %p403 = pneg %p163
        %p404 = pneg %p160
        %p405 = pneg %p184
        %p406 = pneg %p181
        %p407 = pneg %p205
        %p408 = pneg %p202
        %p409 = pneg %p226
        %p410 = pneg %p223
        %p411 = scmp.lt.s32.totalorder %s27, 1
        %s412 = scalar_select %p411, %s27, 1
        %s413 = smul.addr %s412, 8
        %s414 = scalar_lea.vmem %s9, %s413
        %p415 = pneg %p252
        %p416 = pneg %p249
        %p417 = pneg %p278
        %p418 = pneg %p275
        %s419 = sand.u32 %s265, 1
        %s420 = scalar_lea.sflag [#allocation4], %s419
        %s421 = sand.u32 %s265, 1
        %s422 = smul.addr %s421, 8
        %s423 = scalar_lea.vmem [#allocation5], %s422
        %s424 = smul.u32 8, %s27
        %p425 = scmp.lt.s32.totalorder %s424, 15
        %s426 = scalar_select %p425, %s424, 15
        %s427 = smul.addr %s426, 8
        %s428 = scalar_lea.vmem %s0, %s427
        %s429 = smul.u32 8, %s27
        %s430 = smul.u32 8, %s27
        %s431 = smul.u32 8, %s27
        %p432 = scmp.lt.s32.totalorder %s431, 15
        %s433 = scalar_select %p432, %s431, 15
        %s434 = smul.addr %s433, 8
        %s435 = scalar_lea.vmem %s2, %s434
        %s436 = smul.u32 8, %s27
        %p437 = scmp.lt.s32.totalorder %s27, 1
        %s438 = scalar_select %p437, %s27, 1
        %s439 = smul.addr %s438, 8
        %s440 = scalar_lea.vmem %s9, %s439
        %v442 = vld [vmem:[%s428] sm:$0xff]
        %v443 = vld [vmem:[%s428 + $0x8] sm:$0xff]
        %v444 = vld [vmem:[%s428 + $0x10] sm:$0xff]
        %v445 = vld [vmem:[%s428 + $0x18] sm:$0xff]
        %v446 = vld [vmem:[%s428 + $0x20] sm:$0xff]
        %v447 = vld [vmem:[%s428 + $0x28] sm:$0xff]
        %v448 = vld [vmem:[%s428 + $0x30] sm:$0xff]
        %v449 = vld [vmem:[%s428 + $0x38] sm:$0xff]
        %v450 = vpack.c.bf16 %v443, %v442
        %v451 = vpack.c.bf16 %v445, %v444
        %v452 = vpack.c.bf16 %v447, %v446
        %v453 = vpack.c.bf16 %v449, %v448
        %v454 = vld [vmem:[%s373] sm:$0xff]
        %v455 = vld [vmem:[%s373 + $0x8] sm:$0xff]
        %v456 = vld [vmem:[%s373 + $0x10] sm:$0xff]
        %v457 = vld [vmem:[%s373 + $0x18] sm:$0xff]
        %v458 = vld [vmem:[%s373 + $0x20] sm:$0xff]
        %v459 = vld [vmem:[%s373 + $0x28] sm:$0xff]
        %v460 = vld [vmem:[%s373 + $0x30] sm:$0xff]
        %v461 = vld [vmem:[%s373 + $0x38] sm:$0xff]
        %v462 = vld [vmem:[%s373 + $0x40] sm:$0xff]
        %v463 = vld [vmem:[%s373 + $0x48] sm:$0xff]
        %v464 = vld [vmem:[%s373 + $0x50] sm:$0xff]
        %v465 = vld [vmem:[%s373 + $0x58] sm:$0xff]
        %v466 = vld [vmem:[%s373 + $0x60] sm:$0xff]
        %v467 = vld [vmem:[%s373 + $0x68] sm:$0xff]
        %v468 = vld [vmem:[%s373 + $0x70] sm:$0xff]
        %v469 = vld [vmem:[%s373 + $0x78] sm:$0xff]
        %v470 = vld [vmem:[%s373 + $0x80] sm:$0xff]
        %v471 = vld [vmem:[%s373 + $0x88] sm:$0xff]
        %v472 = vld [vmem:[%s373 + $0x90] sm:$0xff]
        %v473 = vld [vmem:[%s373 + $0x98] sm:$0xff]
        %v474 = vld [vmem:[%s373 + $0xa0] sm:$0xff]
        %v475 = vld [vmem:[%s373 + $0xa8] sm:$0xff]
        %v476 = vld [vmem:[%s373 + $0xb0] sm:$0xff]
        %v477 = vld [vmem:[%s373 + $0xb8] sm:$0xff]
        %v478 = vld [vmem:[%s373 + $0xc0] sm:$0xff]
        %v479 = vld [vmem:[%s373 + $0xc8] sm:$0xff]
        %v480 = vld [vmem:[%s373 + $0xd0] sm:$0xff]
        %v481 = vld [vmem:[%s373 + $0xd8] sm:$0xff]
        %v482 = vld [vmem:[%s373 + $0xe0] sm:$0xff]
        %v483 = vld [vmem:[%s373 + $0xe8] sm:$0xff]
        %v484 = vld [vmem:[%s373 + $0xf0] sm:$0xff]
        %v485 = vld [vmem:[%s373 + $0xf8] sm:$0xff]
        %v486 = vld [vmem:[%s373 + $0x100] sm:$0xff]
        %v487 = vld [vmem:[%s373 + $0x108] sm:$0xff]
        %v488 = vld [vmem:[%s373 + $0x110] sm:$0xff]
        %v489 = vld [vmem:[%s373 + $0x118] sm:$0xff]
        %v490 = vld [vmem:[%s373 + $0x120] sm:$0xff]
        %v491 = vld [vmem:[%s373 + $0x128] sm:$0xff]
        %v492 = vld [vmem:[%s373 + $0x130] sm:$0xff]
        %v493 = vld [vmem:[%s373 + $0x138] sm:$0xff]
        %v494 = vld [vmem:[%s373 + $0x140] sm:$0xff]
        %v495 = vld [vmem:[%s373 + $0x148] sm:$0xff]
        %v496 = vld [vmem:[%s373 + $0x150] sm:$0xff]
        %v497 = vld [vmem:[%s373 + $0x158] sm:$0xff]
        %v498 = vld [vmem:[%s373 + $0x160] sm:$0xff]
        %v499 = vld [vmem:[%s373 + $0x168] sm:$0xff]
        %v500 = vld [vmem:[%s373 + $0x170] sm:$0xff]
        %v501 = vld [vmem:[%s373 + $0x178] sm:$0xff]
        %v502 = vld [vmem:[%s373 + $0x180] sm:$0xff]
        %v503 = vld [vmem:[%s373 + $0x188] sm:$0xff]
        %v504 = vld [vmem:[%s373 + $0x190] sm:$0xff]
        %v505 = vld [vmem:[%s373 + $0x198] sm:$0xff]
        %v506 = vld [vmem:[%s373 + $0x1a0] sm:$0xff]
        %v507 = vld [vmem:[%s373 + $0x1a8] sm:$0xff]
        %v508 = vld [vmem:[%s373 + $0x1b0] sm:$0xff]
        %v509 = vld [vmem:[%s373 + $0x1b8] sm:$0xff]
        %v510 = vld [vmem:[%s373 + $0x1c0] sm:$0xff]
        %v511 = vld [vmem:[%s373 + $0x1c8] sm:$0xff]
        %v512 = vld [vmem:[%s373 + $0x1d0] sm:$0xff]
        %v513 = vld [vmem:[%s373 + $0x1d8] sm:$0xff]
        %v514 = vld [vmem:[%s373 + $0x1e0] sm:$0xff]
        %v515 = vld [vmem:[%s373 + $0x1e8] sm:$0xff]
        %v516 = vld [vmem:[%s373 + $0x1f0] sm:$0xff]
        %v517 = vld [vmem:[%s373 + $0x1f8] sm:$0xff]
        %v518 = vpack.c.bf16 %v455, %v454
        %v519 = vpack.c.bf16 %v457, %v456
        %v520 = vpack.c.bf16 %v459, %v458
        %v521 = vpack.c.bf16 %v461, %v460
        %v522 = vpack.c.bf16 %v463, %v462
        %v523 = vpack.c.bf16 %v465, %v464
        %v524 = vpack.c.bf16 %v467, %v466
        %v525 = vpack.c.bf16 %v469, %v468
        %v526 = vpack.c.bf16 %v471, %v470
        %v527 = vpack.c.bf16 %v473, %v472
        %v528 = vpack.c.bf16 %v475, %v474
        %v529 = vpack.c.bf16 %v477, %v476
        %v530 = vpack.c.bf16 %v479, %v478
        %v531 = vpack.c.bf16 %v481, %v480
        %v532 = vpack.c.bf16 %v483, %v482
        %v533 = vpack.c.bf16 %v485, %v484
        %v534 = vpack.c.bf16 %v487, %v486
        %v535 = vpack.c.bf16 %v489, %v488
        %v536 = vpack.c.bf16 %v491, %v490
        %v537 = vpack.c.bf16 %v493, %v492
        %v538 = vpack.c.bf16 %v495, %v494
        %v539 = vpack.c.bf16 %v497, %v496
        %v540 = vpack.c.bf16 %v499, %v498
        %v541 = vpack.c.bf16 %v501, %v500
        %v542 = vpack.c.bf16 %v503, %v502
        %v543 = vpack.c.bf16 %v505, %v504
        %v544 = vpack.c.bf16 %v507, %v506
        %v545 = vpack.c.bf16 %v509, %v508
        %v546 = vpack.c.bf16 %v511, %v510
        %v547 = vpack.c.bf16 %v513, %v512
        %v548 = vpack.c.bf16 %v515, %v514
        %v549 = vpack.c.bf16 %v517, %v516
        %v550 = vld [vmem:[%s435] sm:$0xff]
        %v551 = vld [vmem:[%s435 + $0x8] sm:$0xff]
        %v552 = vld [vmem:[%s435 + $0x10] sm:$0xff]
        %v553 = vld [vmem:[%s435 + $0x18] sm:$0xff]
        %v554 = vld [vmem:[%s435 + $0x20] sm:$0xff]
        %v555 = vld [vmem:[%s435 + $0x28] sm:$0xff]
        %v556 = vld [vmem:[%s435 + $0x30] sm:$0xff]
        %v557 = vld [vmem:[%s435 + $0x38] sm:$0xff]
        %vm558 = vcmp.ne.s32.totalorder %v550, 0
        %vm559 = vcmp.ne.s32.totalorder %v551, 0
        %vm560 = vcmp.ne.s32.totalorder %v552, 0
        %vm561 = vcmp.ne.s32.totalorder %v553, 0
        %vm562 = vcmp.ne.s32.totalorder %v554, 0
        %vm563 = vcmp.ne.s32.totalorder %v555, 0
        %vm564 = vcmp.ne.s32.totalorder %v556, 0
        %vm565 = vcmp.ne.s32.totalorder %v557, 0
        %v566 = vsel %vm558, 1, 0
        %v567 = vsel %vm559, 1, 0
        %v568 = vsel %vm560, 1, 0
        %v569 = vsel %vm561, 1, 0
        %v570 = vsel %vm562, 1, 0
        %v571 = vsel %vm563, 1, 0
        %v572 = vsel %vm564, 1, 0
        %v573 = vsel %vm565, 1, 0
        %v574 = vcvt.s32.f32 %v566
        %v575 = vcvt.s32.f32 %v567
        %v576 = vcvt.s32.f32 %v568
        %v577 = vcvt.s32.f32 %v569
        %v578 = vcvt.s32.f32 %v570
        %v579 = vcvt.s32.f32 %v571
        %v580 = vcvt.s32.f32 %v572
        %v581 = vcvt.s32.f32 %v573
        %v582 = vlaneseq
        %v583 = vshrl.u32 %v582, 7
        %v584 = vsub.s32 0, %v583
        %v585 = vrot.slane %v574, %v584
        %587 = vbcast.lane.b32.xlu0 %v585, 256
        %v588 = vpop.permute.xlu0 %587
        %v589 = vlaneseq
        %v590 = vshrl.u32 %v589, 7
        %v591 = vsub.s32 1, %v590
        %v592 = vrot.slane %v574, %v591
        %594 = vbcast.lane.b32.xlu0 %v592, 256
        %v595 = vpop.permute.xlu0 %594
        %v596 = vlaneseq
        %v597 = vshrl.u32 %v596, 7
        %v598 = vsub.s32 2, %v597
        %v599 = vrot.slane %v574, %v598
        %601 = vbcast.lane.b32.xlu0 %v599, 256
        %v602 = vpop.permute.xlu0 %601
        %v603 = vlaneseq
        %v604 = vshrl.u32 %v603, 7
        %v605 = vsub.s32 3, %v604
        %v606 = vrot.slane %v574, %v605
        %608 = vbcast.lane.b32.xlu0 %v606, 256
        %v609 = vpop.permute.xlu0 %608
        %v610 = vlaneseq
        %v611 = vshrl.u32 %v610, 7
        %v612 = vsub.s32 4, %v611
        %v613 = vrot.slane %v574, %v612
        %615 = vbcast.lane.b32.xlu0 %v613, 256
        %v616 = vpop.permute.xlu0 %615
        %v617 = vlaneseq
        %v618 = vshrl.u32 %v617, 7
        %v619 = vsub.s32 5, %v618
        %v620 = vrot.slane %v574, %v619
        %622 = vbcast.lane.b32.xlu0 %v620, 256
        %v623 = vpop.permute.xlu0 %622
        %v624 = vlaneseq
        %v625 = vshrl.u32 %v624, 7
        %v626 = vsub.s32 6, %v625
        %v627 = vrot.slane %v574, %v626
        %629 = vbcast.lane.b32.xlu0 %v627, 256
        %v630 = vpop.permute.xlu0 %629
        %v631 = vlaneseq
        %v632 = vshrl.u32 %v631, 7
        %v633 = vsub.s32 7, %v632
        %v634 = vrot.slane %v574, %v633
        %636 = vbcast.lane.b32.xlu0 %v634, 256
        %v637 = vpop.permute.xlu0 %636
        %v638 = vlaneseq
        %v639 = vshrl.u32 %v638, 7
        %v640 = vsub.s32 0, %v639
        %v641 = vrot.slane %v575, %v640
        %643 = vbcast.lane.b32.xlu0 %v641, 256
        %v644 = vpop.permute.xlu0 %643
        %v645 = vlaneseq
        %v646 = vshrl.u32 %v645, 7
        %v647 = vsub.s32 1, %v646
        %v648 = vrot.slane %v575, %v647
        %650 = vbcast.lane.b32.xlu0 %v648, 256
        %v651 = vpop.permute.xlu0 %650
        %v652 = vlaneseq
        %v653 = vshrl.u32 %v652, 7
        %v654 = vsub.s32 2, %v653
        %v655 = vrot.slane %v575, %v654
        %657 = vbcast.lane.b32.xlu0 %v655, 256
        %v658 = vpop.permute.xlu0 %657
        %v659 = vlaneseq
        %v660 = vshrl.u32 %v659, 7
        %v661 = vsub.s32 3, %v660
        %v662 = vrot.slane %v575, %v661
        %664 = vbcast.lane.b32.xlu0 %v662, 256
        %v665 = vpop.permute.xlu0 %664
        %v666 = vlaneseq
        %v667 = vshrl.u32 %v666, 7
        %v668 = vsub.s32 4, %v667
        %v669 = vrot.slane %v575, %v668
        %671 = vbcast.lane.b32.xlu0 %v669, 256
        %v672 = vpop.permute.xlu0 %671
        %v673 = vlaneseq
        %v674 = vshrl.u32 %v673, 7
        %v675 = vsub.s32 5, %v674
        %v676 = vrot.slane %v575, %v675
        %678 = vbcast.lane.b32.xlu0 %v676, 256
        %v679 = vpop.permute.xlu0 %678
        %v680 = vlaneseq
        %v681 = vshrl.u32 %v680, 7
        %v682 = vsub.s32 6, %v681
        %v683 = vrot.slane %v575, %v682
        %685 = vbcast.lane.b32.xlu0 %v683, 256
        %v686 = vpop.permute.xlu0 %685
        %v687 = vlaneseq
        %v688 = vshrl.u32 %v687, 7
        %v689 = vsub.s32 7, %v688
        %v690 = vrot.slane %v575, %v689
        %692 = vbcast.lane.b32.xlu0 %v690, 256
        %v693 = vpop.permute.xlu0 %692
        %v694 = vlaneseq
        %v695 = vshrl.u32 %v694, 7
        %v696 = vsub.s32 0, %v695
        %v697 = vrot.slane %v576, %v696
        %699 = vbcast.lane.b32.xlu0 %v697, 256
        %v700 = vpop.permute.xlu0 %699
        %v701 = vlaneseq
        %v702 = vshrl.u32 %v701, 7
        %v703 = vsub.s32 1, %v702
        %v704 = vrot.slane %v576, %v703
        %706 = vbcast.lane.b32.xlu0 %v704, 256
        %v707 = vpop.permute.xlu0 %706
        %v708 = vlaneseq
        %v709 = vshrl.u32 %v708, 7
        %v710 = vsub.s32 2, %v709
        %v711 = vrot.slane %v576, %v710
        %713 = vbcast.lane.b32.xlu0 %v711, 256
        %v714 = vpop.permute.xlu0 %713
        %v715 = vlaneseq
        %v716 = vshrl.u32 %v715, 7
        %v717 = vsub.s32 3, %v716
        %v718 = vrot.slane %v576, %v717
        %720 = vbcast.lane.b32.xlu0 %v718, 256
        %v721 = vpop.permute.xlu0 %720
        %v722 = vlaneseq
        %v723 = vshrl.u32 %v722, 7
        %v724 = vsub.s32 4, %v723
        %v725 = vrot.slane %v576, %v724
        %727 = vbcast.lane.b32.xlu0 %v725, 256
        %v728 = vpop.permute.xlu0 %727
        %v729 = vlaneseq
        %v730 = vshrl.u32 %v729, 7
        %v731 = vsub.s32 5, %v730
        %v732 = vrot.slane %v576, %v731
        %734 = vbcast.lane.b32.xlu0 %v732, 256
        %v735 = vpop.permute.xlu0 %734
        %v736 = vlaneseq
        %v737 = vshrl.u32 %v736, 7
        %v738 = vsub.s32 6, %v737
        %v739 = vrot.slane %v576, %v738
        %741 = vbcast.lane.b32.xlu0 %v739, 256
        %v742 = vpop.permute.xlu0 %741
        %v743 = vlaneseq
        %v744 = vshrl.u32 %v743, 7
        %v745 = vsub.s32 7, %v744
        %v746 = vrot.slane %v576, %v745
        %748 = vbcast.lane.b32.xlu0 %v746, 256
        %v749 = vpop.permute.xlu0 %748
        %v750 = vlaneseq
        %v751 = vshrl.u32 %v750, 7
        %v752 = vsub.s32 0, %v751
        %v753 = vrot.slane %v577, %v752
        %755 = vbcast.lane.b32.xlu0 %v753, 256
        %v756 = vpop.permute.xlu0 %755
        %v757 = vlaneseq
        %v758 = vshrl.u32 %v757, 7
        %v759 = vsub.s32 1, %v758
        %v760 = vrot.slane %v577, %v759
        %762 = vbcast.lane.b32.xlu0 %v760, 256
        %v763 = vpop.permute.xlu0 %762
        %v764 = vlaneseq
        %v765 = vshrl.u32 %v764, 7
        %v766 = vsub.s32 2, %v765
        %v767 = vrot.slane %v577, %v766
        %769 = vbcast.lane.b32.xlu0 %v767, 256
        %v770 = vpop.permute.xlu0 %769
        %v771 = vlaneseq
        %v772 = vshrl.u32 %v771, 7
        %v773 = vsub.s32 3, %v772
        %v774 = vrot.slane %v577, %v773
        %776 = vbcast.lane.b32.xlu0 %v774, 256
        %v777 = vpop.permute.xlu0 %776
        %v778 = vlaneseq
        %v779 = vshrl.u32 %v778, 7
        %v780 = vsub.s32 4, %v779
        %v781 = vrot.slane %v577, %v780
        %783 = vbcast.lane.b32.xlu0 %v781, 256
        %v784 = vpop.permute.xlu0 %783
        %v785 = vlaneseq
        %v786 = vshrl.u32 %v785, 7
        %v787 = vsub.s32 5, %v786
        %v788 = vrot.slane %v577, %v787
        %790 = vbcast.lane.b32.xlu0 %v788, 256
        %v791 = vpop.permute.xlu0 %790
        %v792 = vlaneseq
        %v793 = vshrl.u32 %v792, 7
        %v794 = vsub.s32 6, %v793
        %v795 = vrot.slane %v577, %v794
        %797 = vbcast.lane.b32.xlu0 %v795, 256
        %v798 = vpop.permute.xlu0 %797
        %v799 = vlaneseq
        %v800 = vshrl.u32 %v799, 7
        %v801 = vsub.s32 7, %v800
        %v802 = vrot.slane %v577, %v801
        %804 = vbcast.lane.b32.xlu0 %v802, 256
        %v805 = vpop.permute.xlu0 %804
        %v806 = vlaneseq
        %v807 = vshrl.u32 %v806, 7
        %v808 = vsub.s32 0, %v807
        %v809 = vrot.slane %v578, %v808
        %811 = vbcast.lane.b32.xlu0 %v809, 256
        %v812 = vpop.permute.xlu0 %811
        %v813 = vlaneseq
        %v814 = vshrl.u32 %v813, 7
        %v815 = vsub.s32 1, %v814
        %v816 = vrot.slane %v578, %v815
        %818 = vbcast.lane.b32.xlu0 %v816, 256
        %v819 = vpop.permute.xlu0 %818
        %v820 = vlaneseq
        %v821 = vshrl.u32 %v820, 7
        %v822 = vsub.s32 2, %v821
        %v823 = vrot.slane %v578, %v822
        %825 = vbcast.lane.b32.xlu0 %v823, 256
        %v826 = vpop.permute.xlu0 %825
        %v827 = vlaneseq
        %v828 = vshrl.u32 %v827, 7
        %v829 = vsub.s32 3, %v828
        %v830 = vrot.slane %v578, %v829
        %832 = vbcast.lane.b32.xlu0 %v830, 256
        %v833 = vpop.permute.xlu0 %832
        %v834 = vlaneseq
        %v835 = vshrl.u32 %v834, 7
        %v836 = vsub.s32 4, %v835
        %v837 = vrot.slane %v578, %v836
        %839 = vbcast.lane.b32.xlu0 %v837, 256
        %v840 = vpop.permute.xlu0 %839
        %v841 = vlaneseq
        %v842 = vshrl.u32 %v841, 7
        %v843 = vsub.s32 5, %v842
        %v844 = vrot.slane %v578, %v843
        %846 = vbcast.lane.b32.xlu0 %v844, 256
        %v847 = vpop.permute.xlu0 %846
        %v848 = vlaneseq
        %v849 = vshrl.u32 %v848, 7
        %v850 = vsub.s32 6, %v849
        %v851 = vrot.slane %v578, %v850
        %853 = vbcast.lane.b32.xlu0 %v851, 256
        %v854 = vpop.permute.xlu0 %853
        %v855 = vlaneseq
        %v856 = vshrl.u32 %v855, 7
        %v857 = vsub.s32 7, %v856
        %v858 = vrot.slane %v578, %v857
        %860 = vbcast.lane.b32.xlu0 %v858, 256
        %v861 = vpop.permute.xlu0 %860
        %v862 = vlaneseq
        %v863 = vshrl.u32 %v862, 7
        %v864 = vsub.s32 0, %v863
        %v865 = vrot.slane %v579, %v864
        %867 = vbcast.lane.b32.xlu0 %v865, 256
        %v868 = vpop.permute.xlu0 %867
        %v869 = vlaneseq
        %v870 = vshrl.u32 %v869, 7
        %v871 = vsub.s32 1, %v870
        %v872 = vrot.slane %v579, %v871
        %874 = vbcast.lane.b32.xlu0 %v872, 256
        %v875 = vpop.permute.xlu0 %874
        %v876 = vlaneseq
        %v877 = vshrl.u32 %v876, 7
        %v878 = vsub.s32 2, %v877
        %v879 = vrot.slane %v579, %v878
        %881 = vbcast.lane.b32.xlu0 %v879, 256
        %v882 = vpop.permute.xlu0 %881
        %v883 = vlaneseq
        %v884 = vshrl.u32 %v883, 7
        %v885 = vsub.s32 3, %v884
        %v886 = vrot.slane %v579, %v885
        %888 = vbcast.lane.b32.xlu0 %v886, 256
        %v889 = vpop.permute.xlu0 %888
        %v890 = vlaneseq
        %v891 = vshrl.u32 %v890, 7
        %v892 = vsub.s32 4, %v891
        %v893 = vrot.slane %v579, %v892
        %895 = vbcast.lane.b32.xlu0 %v893, 256
        %v896 = vpop.permute.xlu0 %895
        %v897 = vlaneseq
        %v898 = vshrl.u32 %v897, 7
        %v899 = vsub.s32 5, %v898
        %v900 = vrot.slane %v579, %v899
        %902 = vbcast.lane.b32.xlu0 %v900, 256
        %v903 = vpop.permute.xlu0 %902
        %v904 = vlaneseq
        %v905 = vshrl.u32 %v904, 7
        %v906 = vsub.s32 6, %v905
        %v907 = vrot.slane %v579, %v906
        %909 = vbcast.lane.b32.xlu0 %v907, 256
        %v910 = vpop.permute.xlu0 %909
        %v911 = vlaneseq
        %v912 = vshrl.u32 %v911, 7
        %v913 = vsub.s32 7, %v912
        %v914 = vrot.slane %v579, %v913
        %916 = vbcast.lane.b32.xlu0 %v914, 256
        %v917 = vpop.permute.xlu0 %916
        %v918 = vlaneseq
        %v919 = vshrl.u32 %v918, 7
        %v920 = vsub.s32 0, %v919
        %v921 = vrot.slane %v580, %v920
        %923 = vbcast.lane.b32.xlu0 %v921, 256
        %v924 = vpop.permute.xlu0 %923
        %v925 = vlaneseq
        %v926 = vshrl.u32 %v925, 7
        %v927 = vsub.s32 1, %v926
        %v928 = vrot.slane %v580, %v927
        %930 = vbcast.lane.b32.xlu0 %v928, 256
        %v931 = vpop.permute.xlu0 %930
        %v932 = vlaneseq
        %v933 = vshrl.u32 %v932, 7
        %v934 = vsub.s32 2, %v933
        %v935 = vrot.slane %v580, %v934
        %937 = vbcast.lane.b32.xlu0 %v935, 256
        %v938 = vpop.permute.xlu0 %937
        %v939 = vlaneseq
        %v940 = vshrl.u32 %v939, 7
        %v941 = vsub.s32 3, %v940
        %v942 = vrot.slane %v580, %v941
        %944 = vbcast.lane.b32.xlu0 %v942, 256
        %v945 = vpop.permute.xlu0 %944
        %v946 = vlaneseq
        %v947 = vshrl.u32 %v946, 7
        %v948 = vsub.s32 4, %v947
        %v949 = vrot.slane %v580, %v948
        %951 = vbcast.lane.b32.xlu0 %v949, 256
        %v952 = vpop.permute.xlu0 %951
        %v953 = vlaneseq
        %v954 = vshrl.u32 %v953, 7
        %v955 = vsub.s32 5, %v954
        %v956 = vrot.slane %v580, %v955
        %958 = vbcast.lane.b32.xlu0 %v956, 256
        %v959 = vpop.permute.xlu0 %958
        %v960 = vlaneseq
        %v961 = vshrl.u32 %v960, 7
        %v962 = vsub.s32 6, %v961
        %v963 = vrot.slane %v580, %v962
        %965 = vbcast.lane.b32.xlu0 %v963, 256
        %v966 = vpop.permute.xlu0 %965
        %v967 = vlaneseq
        %v968 = vshrl.u32 %v967, 7
        %v969 = vsub.s32 7, %v968
        %v970 = vrot.slane %v580, %v969
        %972 = vbcast.lane.b32.xlu0 %v970, 256
        %v973 = vpop.permute.xlu0 %972
        %v974 = vlaneseq
        %v975 = vshrl.u32 %v974, 7
        %v976 = vsub.s32 0, %v975
        %v977 = vrot.slane %v581, %v976
        %979 = vbcast.lane.b32.xlu0 %v977, 256
        %v980 = vpop.permute.xlu0 %979
        %v981 = vlaneseq
        %v982 = vshrl.u32 %v981, 7
        %v983 = vsub.s32 1, %v982
        %v984 = vrot.slane %v581, %v983
        %986 = vbcast.lane.b32.xlu0 %v984, 256
        %v987 = vpop.permute.xlu0 %986
        %v988 = vlaneseq
        %v989 = vshrl.u32 %v988, 7
        %v990 = vsub.s32 2, %v989
        %v991 = vrot.slane %v581, %v990
        %993 = vbcast.lane.b32.xlu0 %v991, 256
        %v994 = vpop.permute.xlu0 %993
        %v995 = vlaneseq
        %v996 = vshrl.u32 %v995, 7
        %v997 = vsub.s32 3, %v996
        %v998 = vrot.slane %v581, %v997
        %1000 = vbcast.lane.b32.xlu0 %v998, 256
        %v1001 = vpop.permute.xlu0 %1000
        %v1002 = vlaneseq
        %v1003 = vshrl.u32 %v1002, 7
        %v1004 = vsub.s32 4, %v1003
        %v1005 = vrot.slane %v581, %v1004
        %1007 = vbcast.lane.b32.xlu0 %v1005, 256
        %v1008 = vpop.permute.xlu0 %1007
        %v1009 = vlaneseq
        %v1010 = vshrl.u32 %v1009, 7
        %v1011 = vsub.s32 5, %v1010
        %v1012 = vrot.slane %v581, %v1011
        %1014 = vbcast.lane.b32.xlu0 %v1012, 256
        %v1015 = vpop.permute.xlu0 %1014
        %v1016 = vlaneseq
        %v1017 = vshrl.u32 %v1016, 7
        %v1018 = vsub.s32 6, %v1017
        %v1019 = vrot.slane %v581, %v1018
        %1021 = vbcast.lane.b32.xlu0 %v1019, 256
        %v1022 = vpop.permute.xlu0 %1021
        %v1023 = vlaneseq
        %v1024 = vshrl.u32 %v1023, 7
        %v1025 = vsub.s32 7, %v1024
        %v1026 = vrot.slane %v581, %v1025
        %1028 = vbcast.lane.b32.xlu0 %v1026, 256
        %v1029 = vpop.permute.xlu0 %1028
        %v1030 = vld [vmem:[%s3] sm:$0xf]
        %v1031 = vld [vmem:[%s3 + $0x4] sm:$0xf]
        %v1032 = vld [vmem:[%s4] sm:$0xf]
        %v1033 = vld [vmem:[%s4 + $0x4] sm:$0xf]
        %v1034 = vld [vmem:[%s5] sm:$0xf]
        %v1035 = vld [vmem:[%s5 + $0x4] sm:$0xf]
        %v1036 = vld [vmem:[%s5 + $0x8] sm:$0xf]
        %v1037 = vld [vmem:[%s5 + $0xc] sm:$0xf]
        %v1040 = vunpack.c.l.b16 %v1030
        %v1041 = vunpack.c.l.b16 %v1031
        %v1042 = vpack.c.b16 %v1041, %v1040
        %vm1044 = vcmask 130048
        %v1046 = vsel %vm1044, %v450, 0
        %v1049 = vsel %vm1044, %v451, 0
        %v1052 = vsel %vm1044, %v452, 0
        %v1055 = vsel %vm1044, %v453, 0
        %1057 = vmatprep.subr.bf16.mxu0 0
        %1058 = vmatpush1.bf16.msra.mxu0 %v1042
        %1059 = vmatprep.subr.bf16.mxu0 0
        %1060 = vmatpush1.bf16.msra.mxu0 0
        %1061 = vmatprep.subr.bf16.mxu0 0
        %1062 = vmatpush1.bf16.msra.mxu0 0
        %1063 = vmatprep.subr.bf16.mxu0 0
        %1064 = vmatpush1.bf16.msra.mxu0 0
        %1065 = vmatprep.subr.bf16.mxu0 0
        %1066 = vmatpush1.bf16.msra.mxu0 0
        %1067 = vmatprep.subr.bf16.mxu0 0
        %1068 = vmatpush1.bf16.msra.mxu0 0
        %1069 = vmatprep.subr.bf16.mxu0 0
        %1070 = vmatpush1.bf16.msra.mxu0 0
        %1071 = vmatprep.subr.bf16.mxu0 0
        %1072 = vmatpush1.bf16.msra.mxu0 0
        %1073 = vmatprep.subr.bf16.mxu0 0
        %1074 = vmatpush1.bf16.msra.mxu0 0
        %1075 = vmatprep.subr.bf16.mxu0 0
        %1076 = vmatpush1.bf16.msra.mxu0 0
        %1077 = vmatprep.subr.bf16.mxu0 0
        %1078 = vmatpush1.bf16.msra.mxu0 0
        %1079 = vmatprep.subr.bf16.mxu0 0
        %1080 = vmatpush1.bf16.msra.mxu0 0
        %1081 = vmatprep.subr.bf16.mxu0 0
        %1082 = vmatpush1.bf16.msra.mxu0 0
        %1083 = vmatprep.subr.bf16.mxu0 0
        %1084 = vmatpush1.bf16.msra.mxu0 0
        %1085 = vmatprep.subr.bf16.mxu0 0
        %1086 = vmatpush1.bf16.msra.mxu0 0
        %1087 = vmatprep.subr.bf16.mxu0 0
        %1088 = vmatpush1.bf16.msra.mxu0 0
        %1089 = vmatprep.mubr.bf16.mxu0 0
        %1090 = vmatmul.mubr.bf16.gmra.mrb[0].mxu0 %v1046
        %v1091 = vpop.f32.mrb[0].mxu0
        %v1092 = vadd.f32 0.0, %v1091
        %v1093 = vpop.f32.mrb[0].mxu0
        %v1094 = vpop.f32.mrb[0].mxu0
        %v1095 = vadd.f32 0.0, %v1094
        %v1096 = vpop.f32.mrb[0].mxu0
        %1097 = vmatprep.mubr.bf16.mxu0 0
        %1098 = vmatmul.mubr.bf16.gmra.mrb[0].mxu0 %v1049
        %v1099 = vpop.f32.mrb[0].mxu0
        %v1100 = vadd.f32 0.0, %v1099
        %v1101 = vpop.f32.mrb[0].mxu0
        %v1102 = vpop.f32.mrb[0].mxu0
        %v1103 = vadd.f32 0.0, %v1102
        %v1104 = vpop.f32.mrb[0].mxu0
        %1105 = vmatprep.mubr.bf16.mxu0 0
        %1106 = vmatmul.mubr.bf16.gmra.mrb[0].mxu0 %v1052
        %v1107 = vpop.f32.mrb[0].mxu0
        %v1108 = vadd.f32 0.0, %v1107
        %v1109 = vpop.f32.mrb[0].mxu0
        %v1110 = vpop.f32.mrb[0].mxu0
        %v1111 = vadd.f32 0.0, %v1110
        %v1112 = vpop.f32.mrb[0].mxu0
        %1113 = vmatprep.mubr.bf16.mxu0 0
        %1114 = vmatmul.mubr.bf16.gmra.mrb[0].mxu0 %v1055
        %v1115 = vpop.f32.mrb[0].mxu0
        %v1116 = vadd.f32 0.0, %v1115
        %v1117 = vpop.f32.mrb[0].mxu0
        %v1118 = vpop.f32.mrb[0].mxu0
        %v1119 = vadd.f32 0.0, %v1118
        %v1120 = vpop.f32.mrb[0].mxu0
        %1121 = vdwg.mxu0
        %v1124 = vunpack.c.l.b16 %v1032
        %v1125 = vunpack.c.l.b16 %v1033
        %v1126 = vpack.c.b16 %v1125, %v1124
        %v1129 = vsel %vm1044, %v518, 0
        %v1132 = vsel %vm1044, %v519, 0
        %v1135 = vsel %vm1044, %v520, 0
        %v1138 = vsel %vm1044, %v521, 0
        %v1141 = vsel %vm1044, %v522, 0
        %v1144 = vsel %vm1044, %v523, 0
        %v1147 = vsel %vm1044, %v524, 0
        %v1150 = vsel %vm1044, %v525, 0
        %v1153 = vsel %vm1044, %v526, 0
        %v1156 = vsel %vm1044, %v527, 0
        %v1159 = vsel %vm1044, %v528, 0
        %v1162 = vsel %vm1044, %v529, 0
        %v1165 = vsel %vm1044, %v530, 0
        %v1168 = vsel %vm1044, %v531, 0
        %v1171 = vsel %vm1044, %v532, 0
        %v1174 = vsel %vm1044, %v533, 0
        %v1177 = vsel %vm1044, %v534, 0
        %v1180 = vsel %vm1044, %v535, 0
        %v1183 = vsel %vm1044, %v536, 0
        %v1186 = vsel %vm1044, %v537, 0
        %v1189 = vsel %vm1044, %v538, 0
        %v1192 = vsel %vm1044, %v539, 0
        %v1195 = vsel %vm1044, %v540, 0
        %v1198 = vsel %vm1044, %v541, 0
        %v1201 = vsel %vm1044, %v542, 0
        %v1204 = vsel %vm1044, %v543, 0
        %v1207 = vsel %vm1044, %v544, 0
        %v1210 = vsel %vm1044, %v545, 0
        %v1213 = vsel %vm1044, %v546, 0
        %v1216 = vsel %vm1044, %v547, 0
        %v1219 = vsel %vm1044, %v548, 0
        %v1222 = vsel %vm1044, %v549, 0
        %1224 = vmatprep.subr.bf16.mxu0 0
        %1225 = vmatpush1.bf16.msra.mxu0 %v1126
        %1226 = vmatprep.subr.bf16.mxu0 0
        %1227 = vmatpush1.bf16.msra.mxu0 0
        %1228 = vmatprep.subr.bf16.mxu0 0
        %1229 = vmatpush1.bf16.msra.mxu0 0
        %1230 = vmatprep.subr.bf16.mxu0 0
        %1231 = vmatpush1.bf16.msra.mxu0 0
        %1232 = vmatprep.subr.bf16.mxu0 0
        %1233 = vmatpush1.bf16.msra.mxu0 0
        %1234 = vmatprep.subr.bf16.mxu0 0
        %1235 = vmatpush1.bf16.msra.mxu0 0
        %1236 = vmatprep.subr.bf16.mxu0 0
        %1237 = vmatpush1.bf16.msra.mxu0 0
        %1238 = vmatprep.subr.bf16.mxu0 0
        %1239 = vmatpush1.bf16.msra.mxu0 0
        %1240 = vmatprep.subr.bf16.mxu0 0
        %1241 = vmatpush1.bf16.msra.mxu0 0
        %1242 = vmatprep.subr.bf16.mxu0 0
        %1243 = vmatpush1.bf16.msra.mxu0 0
        %1244 = vmatprep.subr.bf16.mxu0 0
        %1245 = vmatpush1.bf16.msra.mxu0 0
        %1246 = vmatprep.subr.bf16.mxu0 0
        %1247 = vmatpush1.bf16.msra.mxu0 0
        %1248 = vmatprep.subr.bf16.mxu0 0
        %1249 = vmatpush1.bf16.msra.mxu0 0
        %1250 = vmatprep.subr.bf16.mxu0 0
        %1251 = vmatpush1.bf16.msra.mxu0 0
        %1252 = vmatprep.subr.bf16.mxu0 0
        %1253 = vmatpush1.bf16.msra.mxu0 0
        %1254 = vmatprep.subr.bf16.mxu0 0
        %1255 = vmatpush1.bf16.msra.mxu0 0
        %1256 = vmatprep.mubr.bf16.mxu0 0
        %1257 = vmatmul.mubr.bf16.gmra.mrb[0].mxu0 %v1129
        %v1258 = vpop.f32.mrb[0].mxu0
        %v1259 = vadd.f32 0.0, %v1258
        %v1260 = vpop.f32.mrb[0].mxu0
        %v1261 = vpop.f32.mrb[0].mxu0
        %v1262 = vadd.f32 0.0, %v1261
        %v1263 = vpop.f32.mrb[0].mxu0
        %1264 = vmatprep.mubr.bf16.mxu0 0
        %1265 = vmatmul.mubr.bf16.gmra.mrb[0].mxu0 %v1132
        %v1266 = vpop.f32.mrb[0].mxu0
        %v1267 = vadd.f32 0.0, %v1266
        %v1268 = vpop.f32.mrb[0].mxu0
        %v1269 = vpop.f32.mrb[0].mxu0
        %v1270 = vadd.f32 0.0, %v1269
        %v1271 = vpop.f32.mrb[0].mxu0
        %1272 = vmatprep.mubr.bf16.mxu0 0
        %1273 = vmatmul.mubr.bf16.gmra.mrb[0].mxu0 %v1135
        %v1274 = vpop.f32.mrb[0].mxu0
        %v1275 = vadd.f32 0.0, %v1274
        %v1276 = vpop.f32.mrb[0].mxu0
        %v1277 = vpop.f32.mrb[0].mxu0
        %v1278 = vadd.f32 0.0, %v1277
        %v1279 = vpop.f32.mrb[0].mxu0
        %1280 = vmatprep.mubr.bf16.mxu0 0
        %1281 = vmatmul.mubr.bf16.gmra.mrb[0].mxu0 %v1138
        %v1282 = vpop.f32.mrb[0].mxu0
        %v1283 = vadd.f32 0.0, %v1282
        %v1284 = vpop.f32.mrb[0].mxu0
        %v1285 = vpop.f32.mrb[0].mxu0
        %v1286 = vadd.f32 0.0, %v1285
        %v1287 = vpop.f32.mrb[0].mxu0
        %1288 = vmatprep.mubr.bf16.mxu0 0
        %1289 = vmatmul.mubr.bf16.gmra.mrb[0].mxu0 %v1141
        %v1290 = vpop.f32.mrb[0].mxu0
        %v1291 = vadd.f32 0.0, %v1290
        %v1292 = vpop.f32.mrb[0].mxu0
        %v1293 = vpop.f32.mrb[0].mxu0
        %v1294 = vadd.f32 0.0, %v1293
        %v1295 = vpop.f32.mrb[0].mxu0
        %1296 = vmatprep.mubr.bf16.mxu0 0
        %1297 = vmatmul.mubr.bf16.gmra.mrb[0].mxu0 %v1144
        %v1298 = vpop.f32.mrb[0].mxu0
        %v1299 = vadd.f32 0.0, %v1298
        %v1300 = vpop.f32.mrb[0].mxu0
        %v1301 = vpop.f32.mrb[0].mxu0
        %v1302 = vadd.f32 0.0, %v1301
        %v1303 = vpop.f32.mrb[0].mxu0
        %1304 = vmatprep.mubr.bf16.mxu0 0
        %1305 = vmatmul.mubr.bf16.gmra.mrb[0].mxu0 %v1147
        %v1306 = vpop.f32.mrb[0].mxu0
        %v1307 = vadd.f32 0.0, %v1306
        %v1308 = vpop.f32.mrb[0].mxu0
        %v1309 = vpop.f32.mrb[0].mxu0
        %v1310 = vadd.f32 0.0, %v1309
        %v1311 = vpop.f32.mrb[0].mxu0
        %1312 = vmatprep.mubr.bf16.mxu0 0
        %1313 = vmatmul.mubr.bf16.gmra.mrb[0].mxu0 %v1150
        %v1314 = vpop.f32.mrb[0].mxu0
        %v1315 = vadd.f32 0.0, %v1314
        %v1316 = vpop.f32.mrb[0].mxu0
        %v1317 = vpop.f32.mrb[0].mxu0
        %v1318 = vadd.f32 0.0, %v1317
        %v1319 = vpop.f32.mrb[0].mxu0
        %1320 = vmatprep.mubr.bf16.mxu0 0
        %1321 = vmatmul.mubr.bf16.gmra.mrb[0].mxu0 %v1153
        %v1322 = vpop.f32.mrb[0].mxu0
        %v1323 = vadd.f32 0.0, %v1322
        %v1324 = vpop.f32.mrb[0].mxu0
        %v1325 = vpop.f32.mrb[0].mxu0
        %v1326 = vadd.f32 0.0, %v1325
        %v1327 = vpop.f32.mrb[0].mxu0
        %1328 = vmatprep.mubr.bf16.mxu0 0
        %1329 = vmatmul.mubr.bf16.gmra.mrb[0].mxu0 %v1156
        %v1330 = vpop.f32.mrb[0].mxu0
        %v1331 = vadd.f32 0.0, %v1330
        %v1332 = vpop.f32.mrb[0].mxu0
        %v1333 = vpop.f32.mrb[0].mxu0
        %v1334 = vadd.f32 0.0, %v1333
        %v1335 = vpop.f32.mrb[0].mxu0
        %1336 = vmatprep.mubr.bf16.mxu0 0
        %1337 = vmatmul.mubr.bf16.gmra.mrb[0].mxu0 %v1159
        %v1338 = vpop.f32.mrb[0].mxu0
        %v1339 = vadd.f32 0.0, %v1338
        %v1340 = vpop.f32.mrb[0].mxu0
        %v1341 = vpop.f32.mrb[0].mxu0
        %v1342 = vadd.f32 0.0, %v1341
        %v1343 = vpop.f32.mrb[0].mxu0
        %1344 = vmatprep.mubr.bf16.mxu0 0
        %1345 = vmatmul.mubr.bf16.gmra.mrb[0].mxu0 %v1162
        %v1346 = vpop.f32.mrb[0].mxu0
        %v1347 = vadd.f32 0.0, %v1346
        %v1348 = vpop.f32.mrb[0].mxu0
        %v1349 = vpop.f32.mrb[0].mxu0
        %v1350 = vadd.f32 0.0, %v1349
        %v1351 = vpop.f32.mrb[0].mxu0
        %1352 = vmatprep.mubr.bf16.mxu0 0
        %1353 = vmatmul.mubr.bf16.gmra.mrb[0].mxu0 %v1165
        %v1354 = vpop.f32.mrb[0].mxu0
        %v1355 = vadd.f32 0.0, %v1354
        %v1356 = vpop.f32.mrb[0].mxu0
        %v1357 = vpop.f32.mrb[0].mxu0
        %v1358 = vadd.f32 0.0, %v1357
        %v1359 = vpop.f32.mrb[0].mxu0
        %1360 = vmatprep.mubr.bf16.mxu0 0
        %1361 = vmatmul.mubr.bf16.gmra.mrb[0].mxu0 %v1168
        %v1362 = vpop.f32.mrb[0].mxu0
        %v1363 = vadd.f32 0.0, %v1362
        %v1364 = vpop.f32.mrb[0].mxu0
        %v1365 = vpop.f32.mrb[0].mxu0
        %v1366 = vadd.f32 0.0, %v1365
        %v1367 = vpop.f32.mrb[0].mxu0
        %1368 = vmatprep.mubr.bf16.mxu0 0
        %1369 = vmatmul.mubr.bf16.gmra.mrb[0].mxu0 %v1171
        %v1370 = vpop.f32.mrb[0].mxu0
        %v1371 = vadd.f32 0.0, %v1370
        %v1372 = vpop.f32.mrb[0].mxu0
        %v1373 = vpop.f32.mrb[0].mxu0
        %v1374 = vadd.f32 0.0, %v1373
        %v1375 = vpop.f32.mrb[0].mxu0
        %1376 = vmatprep.mubr.bf16.mxu0 0
        %1377 = vmatmul.mubr.bf16.gmra.mrb[0].mxu0 %v1174
        %v1378 = vpop.f32.mrb[0].mxu0
        %v1379 = vadd.f32 0.0, %v1378
        %v1380 = vpop.f32.mrb[0].mxu0
        %v1381 = vpop.f32.mrb[0].mxu0
        %v1382 = vadd.f32 0.0, %v1381
        %v1383 = vpop.f32.mrb[0].mxu0
        %1384 = vmatprep.mubr.bf16.mxu0 0
        %1385 = vmatmul.mubr.bf16.gmra.mrb[0].mxu0 %v1177
        %v1386 = vpop.f32.mrb[0].mxu0
        %v1387 = vadd.f32 0.0, %v1386
        %v1388 = vpop.f32.mrb[0].mxu0
        %v1389 = vpop.f32.mrb[0].mxu0
        %v1390 = vadd.f32 0.0, %v1389
        %v1391 = vpop.f32.mrb[0].mxu0
        %1392 = vmatprep.mubr.bf16.mxu0 0
        %1393 = vmatmul.mubr.bf16.gmra.mrb[0].mxu0 %v1180
        %v1394 = vpop.f32.mrb[0].mxu0
        %v1395 = vadd.f32 0.0, %v1394
        %v1396 = vpop.f32.mrb[0].mxu0
        %v1397 = vpop.f32.mrb[0].mxu0
        %v1398 = vadd.f32 0.0, %v1397
        %v1399 = vpop.f32.mrb[0].mxu0
        %1400 = vmatprep.mubr.bf16.mxu0 0
        %1401 = vmatmul.mubr.bf16.gmra.mrb[0].mxu0 %v1183
        %v1402 = vpop.f32.mrb[0].mxu0
        %v1403 = vadd.f32 0.0, %v1402
        %v1404 = vpop.f32.mrb[0].mxu0
        %v1405 = vpop.f32.mrb[0].mxu0
        %v1406 = vadd.f32 0.0, %v1405
        %v1407 = vpop.f32.mrb[0].mxu0
        %1408 = vmatprep.mubr.bf16.mxu0 0
        %1409 = vmatmul.mubr.bf16.gmra.mrb[0].mxu0 %v1186
        %v1410 = vpop.f32.mrb[0].mxu0
        %v1411 = vadd.f32 0.0, %v1410
        %v1412 = vpop.f32.mrb[0].mxu0
        %v1413 = vpop.f32.mrb[0].mxu0
        %v1414 = vadd.f32 0.0, %v1413
        %v1415 = vpop.f32.mrb[0].mxu0
        %1416 = vmatprep.mubr.bf16.mxu0 0
        %1417 = vmatmul.mubr.bf16.gmra.mrb[0].mxu0 %v1189
        %v1418 = vpop.f32.mrb[0].mxu0
        %v1419 = vadd.f32 0.0, %v1418
        %v1420 = vpop.f32.mrb[0].mxu0
        %v1421 = vpop.f32.mrb[0].mxu0
        %v1422 = vadd.f32 0.0, %v1421
        %v1423 = vpop.f32.mrb[0].mxu0
        %1424 = vmatprep.mubr.bf16.mxu0 0
        %1425 = vmatmul.mubr.bf16.gmra.mrb[0].mxu0 %v1192
        %v1426 = vpop.f32.mrb[0].mxu0
        %v1427 = vadd.f32 0.0, %v1426
        %v1428 = vpop.f32.mrb[0].mxu0
        %v1429 = vpop.f32.mrb[0].mxu0
        %v1430 = vadd.f32 0.0, %v1429
        %v1431 = vpop.f32.mrb[0].mxu0
        %1432 = vmatprep.mubr.bf16.mxu0 0
        %1433 = vmatmul.mubr.bf16.gmra.mrb[0].mxu0 %v1195
        %v1434 = vpop.f32.mrb[0].mxu0
        %v1435 = vadd.f32 0.0, %v1434
        %v1436 = vpop.f32.mrb[0].mxu0
        %v1437 = vpop.f32.mrb[0].mxu0
        %v1438 = vadd.f32 0.0, %v1437
        %v1439 = vpop.f32.mrb[0].mxu0
        %1440 = vmatprep.mubr.bf16.mxu0 0
        %1441 = vmatmul.mubr.bf16.gmra.mrb[0].mxu0 %v1198
        %v1442 = vpop.f32.mrb[0].mxu0
        %v1443 = vadd.f32 0.0, %v1442
        %v1444 = vpop.f32.mrb[0].mxu0
        %v1445 = vpop.f32.mrb[0].mxu0
        %v1446 = vadd.f32 0.0, %v1445
        %v1447 = vpop.f32.mrb[0].mxu0
        %1448 = vmatprep.mubr.bf16.mxu0 0
        %1449 = vmatmul.mubr.bf16.gmra.mrb[0].mxu0 %v1201
        %v1450 = vpop.f32.mrb[0].mxu0
        %v1451 = vadd.f32 0.0, %v1450
        %v1452 = vpop.f32.mrb[0].mxu0
        %v1453 = vpop.f32.mrb[0].mxu0
        %v1454 = vadd.f32 0.0, %v1453
        %v1455 = vpop.f32.mrb[0].mxu0
        %1456 = vmatprep.mubr.bf16.mxu0 0
        %1457 = vmatmul.mubr.bf16.gmra.mrb[0].mxu0 %v1204
        %v1458 = vpop.f32.mrb[0].mxu0
        %v1459 = vadd.f32 0.0, %v1458
        %v1460 = vpop.f32.mrb[0].mxu0
        %v1461 = vpop.f32.mrb[0].mxu0
        %v1462 = vadd.f32 0.0, %v1461
        %v1463 = vpop.f32.mrb[0].mxu0
        %1464 = vmatprep.mubr.bf16.mxu0 0
        %1465 = vmatmul.mubr.bf16.gmra.mrb[0].mxu0 %v1207
        %v1466 = vpop.f32.mrb[0].mxu0
        %v1467 = vadd.f32 0.0, %v1466
        %v1468 = vpop.f32.mrb[0].mxu0
        %v1469 = vpop.f32.mrb[0].mxu0
        %v1470 = vadd.f32 0.0, %v1469
        %v1471 = vpop.f32.mrb[0].mxu0
        %1472 = vmatprep.mubr.bf16.mxu0 0
        %1473 = vmatmul.mubr.bf16.gmra.mrb[0].mxu0 %v1210
        %v1474 = vpop.f32.mrb[0].mxu0
        %v1475 = vadd.f32 0.0, %v1474
        %v1476 = vpop.f32.mrb[0].mxu0
        %v1477 = vpop.f32.mrb[0].mxu0
        %v1478 = vadd.f32 0.0, %v1477
        %v1479 = vpop.f32.mrb[0].mxu0
        %1480 = vmatprep.mubr.bf16.mxu0 0
        %1481 = vmatmul.mubr.bf16.gmra.mrb[0].mxu0 %v1213
        %v1482 = vpop.f32.mrb[0].mxu0
        %v1483 = vadd.f32 0.0, %v1482
        %v1484 = vpop.f32.mrb[0].mxu0
        %v1485 = vpop.f32.mrb[0].mxu0
        %v1486 = vadd.f32 0.0, %v1485
        %v1487 = vpop.f32.mrb[0].mxu0
        %1488 = vmatprep.mubr.bf16.mxu0 0
        %1489 = vmatmul.mubr.bf16.gmra.mrb[0].mxu0 %v1216
        %v1490 = vpop.f32.mrb[0].mxu0
        %v1491 = vadd.f32 0.0, %v1490
        %v1492 = vpop.f32.mrb[0].mxu0
        %v1493 = vpop.f32.mrb[0].mxu0
        %v1494 = vadd.f32 0.0, %v1493
        %v1495 = vpop.f32.mrb[0].mxu0
        %1496 = vmatprep.mubr.bf16.mxu0 0
        %1497 = vmatmul.mubr.bf16.gmra.mrb[0].mxu0 %v1219
        %v1498 = vpop.f32.mrb[0].mxu0
        %v1499 = vadd.f32 0.0, %v1498
        %v1500 = vpop.f32.mrb[0].mxu0
        %v1501 = vpop.f32.mrb[0].mxu0
        %v1502 = vadd.f32 0.0, %v1501
        %v1503 = vpop.f32.mrb[0].mxu0
        %1504 = vmatprep.mubr.bf16.mxu0 0
        %1505 = vmatmul.mubr.bf16.gmra.mrb[0].mxu0 %v1222
        %v1506 = vpop.f32.mrb[0].mxu0
        %v1507 = vadd.f32 0.0, %v1506
        %v1508 = vpop.f32.mrb[0].mxu0
        %v1509 = vpop.f32.mrb[0].mxu0
        %v1510 = vadd.f32 0.0, %v1509
        %v1511 = vpop.f32.mrb[0].mxu0
        %1512 = vdwg.mxu0
        %v1513 = vadd.f32 %v1092, %v1259
        %v1514 = vadd.f32 %v1092, %v1262
        %v1515 = vadd.f32 %v1092, %v1267
        %v1516 = vadd.f32 %v1092, %v1270
        %v1517 = vadd.f32 %v1092, %v1275
        %v1518 = vadd.f32 %v1092, %v1278
        %v1519 = vadd.f32 %v1092, %v1283
        %v1520 = vadd.f32 %v1092, %v1286
        %v1521 = vadd.f32 %v1095, %v1291
        %v1522 = vadd.f32 %v1095, %v1294
        %v1523 = vadd.f32 %v1095, %v1299
        %v1524 = vadd.f32 %v1095, %v1302
        %v1525 = vadd.f32 %v1095, %v1307
        %v1526 = vadd.f32 %v1095, %v1310
        %v1527 = vadd.f32 %v1095, %v1315
        %v1528 = vadd.f32 %v1095, %v1318
        %v1529 = vadd.f32 %v1100, %v1323
        %v1530 = vadd.f32 %v1100, %v1326
        %v1531 = vadd.f32 %v1100, %v1331
        %v1532 = vadd.f32 %v1100, %v1334
        %v1533 = vadd.f32 %v1100, %v1339
        %v1534 = vadd.f32 %v1100, %v1342
        %v1535 = vadd.f32 %v1100, %v1347
        %v1536 = vadd.f32 %v1100, %v1350
        %v1537 = vadd.f32 %v1103, %v1355
        %v1538 = vadd.f32 %v1103, %v1358
        %v1539 = vadd.f32 %v1103, %v1363
        %v1540 = vadd.f32 %v1103, %v1366
        %v1541 = vadd.f32 %v1103, %v1371
        %v1542 = vadd.f32 %v1103, %v1374
        %v1543 = vadd.f32 %v1103, %v1379
        %v1544 = vadd.f32 %v1103, %v1382
        %v1545 = vadd.f32 %v1108, %v1387
        %v1546 = vadd.f32 %v1108, %v1390
        %v1547 = vadd.f32 %v1108, %v1395
        %v1548 = vadd.f32 %v1108, %v1398
        %v1549 = vadd.f32 %v1108, %v1403
        %v1550 = vadd.f32 %v1108, %v1406
        %v1551 = vadd.f32 %v1108, %v1411
        %v1552 = vadd.f32 %v1108, %v1414
        %v1553 = vadd.f32 %v1111, %v1419
        %v1554 = vadd.f32 %v1111, %v1422
        %v1555 = vadd.f32 %v1111, %v1427
        %v1556 = vadd.f32 %v1111, %v1430
        %v1557 = vadd.f32 %v1111, %v1435
        %v1558 = vadd.f32 %v1111, %v1438
        %v1559 = vadd.f32 %v1111, %v1443
        %v1560 = vadd.f32 %v1111, %v1446
        %v1561 = vadd.f32 %v1116, %v1451
        %v1562 = vadd.f32 %v1116, %v1454
        %v1563 = vadd.f32 %v1116, %v1459
        %v1564 = vadd.f32 %v1116, %v1462
        %v1565 = vadd.f32 %v1116, %v1467
        %v1566 = vadd.f32 %v1116, %v1470
        %v1567 = vadd.f32 %v1116, %v1475
        %v1568 = vadd.f32 %v1116, %v1478
        %v1569 = vadd.f32 %v1119, %v1483
        %v1570 = vadd.f32 %v1119, %v1486
        %v1571 = vadd.f32 %v1119, %v1491
        %v1572 = vadd.f32 %v1119, %v1494
        %v1573 = vadd.f32 %v1119, %v1499
        %v1574 = vadd.f32 %v1119, %v1502
        %v1575 = vadd.f32 %v1119, %v1507
        %v1576 = vadd.f32 %v1119, %v1510
        %v1577 = vmax.f32 %v1513, 0.0
        %v1578 = vmax.f32 %v1514, 0.0
        %v1579 = vmax.f32 %v1515, 0.0
        %v1580 = vmax.f32 %v1516, 0.0
        %v1581 = vmax.f32 %v1517, 0.0
        %v1582 = vmax.f32 %v1518, 0.0
        %v1583 = vmax.f32 %v1519, 0.0
        %v1584 = vmax.f32 %v1520, 0.0
        %v1585 = vmax.f32 %v1521, 0.0
        %v1586 = vmax.f32 %v1522, 0.0
        %v1587 = vmax.f32 %v1523, 0.0
        %v1588 = vmax.f32 %v1524, 0.0
        %v1589 = vmax.f32 %v1525, 0.0
        %v1590 = vmax.f32 %v1526, 0.0
        %v1591 = vmax.f32 %v1527, 0.0
        %v1592 = vmax.f32 %v1528, 0.0
        %v1593 = vmax.f32 %v1529, 0.0
        %v1594 = vmax.f32 %v1530, 0.0
        %v1595 = vmax.f32 %v1531, 0.0
        %v1596 = vmax.f32 %v1532, 0.0
        %v1597 = vmax.f32 %v1533, 0.0
        %v1598 = vmax.f32 %v1534, 0.0
        %v1599 = vmax.f32 %v1535, 0.0
        %v1600 = vmax.f32 %v1536, 0.0
        %v1601 = vmax.f32 %v1537, 0.0
        %v1602 = vmax.f32 %v1538, 0.0
        %v1603 = vmax.f32 %v1539, 0.0
        %v1604 = vmax.f32 %v1540, 0.0
        %v1605 = vmax.f32 %v1541, 0.0
        %v1606 = vmax.f32 %v1542, 0.0
        %v1607 = vmax.f32 %v1543, 0.0
        %v1608 = vmax.f32 %v1544, 0.0
        %v1609 = vmax.f32 %v1545, 0.0
        %v1610 = vmax.f32 %v1546, 0.0
        %v1611 = vmax.f32 %v1547, 0.0
        %v1612 = vmax.f32 %v1548, 0.0
        %v1613 = vmax.f32 %v1549, 0.0
        %v1614 = vmax.f32 %v1550, 0.0
        %v1615 = vmax.f32 %v1551, 0.0
        %v1616 = vmax.f32 %v1552, 0.0
        %v1617 = vmax.f32 %v1553, 0.0
        %v1618 = vmax.f32 %v1554, 0.0
        %v1619 = vmax.f32 %v1555, 0.0
        %v1620 = vmax.f32 %v1556, 0.0
        %v1621 = vmax.f32 %v1557, 0.0
        %v1622 = vmax.f32 %v1558, 0.0
        %v1623 = vmax.f32 %v1559, 0.0
        %v1624 = vmax.f32 %v1560, 0.0
        %v1625 = vmax.f32 %v1561, 0.0
        %v1626 = vmax.f32 %v1562, 0.0
        %v1627 = vmax.f32 %v1563, 0.0
        %v1628 = vmax.f32 %v1564, 0.0
        %v1629 = vmax.f32 %v1565, 0.0
        %v1630 = vmax.f32 %v1566, 0.0
        %v1631 = vmax.f32 %v1567, 0.0
        %v1632 = vmax.f32 %v1568, 0.0
        %v1633 = vmax.f32 %v1569, 0.0
        %v1634 = vmax.f32 %v1570, 0.0
        %v1635 = vmax.f32 %v1571, 0.0
        %v1636 = vmax.f32 %v1572, 0.0
        %v1637 = vmax.f32 %v1573, 0.0
        %v1638 = vmax.f32 %v1574, 0.0
        %v1639 = vmax.f32 %v1575, 0.0
        %v1640 = vmax.f32 %v1576, 0.0
        %v1641 = vmul.f32 %v1577, %v588
        %v1642 = vmul.f32 %v1578, %v595
        %v1643 = vmul.f32 %v1579, %v602
        %v1644 = vmul.f32 %v1580, %v609
        %v1645 = vmul.f32 %v1581, %v616
        %v1646 = vmul.f32 %v1582, %v623
        %v1647 = vmul.f32 %v1583, %v630
        %v1648 = vmul.f32 %v1584, %v637
        %v1649 = vmul.f32 %v1585, %v644
        %v1650 = vmul.f32 %v1586, %v651
        %v1651 = vmul.f32 %v1587, %v658
        %v1652 = vmul.f32 %v1588, %v665
        %v1653 = vmul.f32 %v1589, %v672
        %v1654 = vmul.f32 %v1590, %v679
        %v1655 = vmul.f32 %v1591, %v686
        %v1656 = vmul.f32 %v1592, %v693
        %v1657 = vmul.f32 %v1593, %v700
        %v1658 = vmul.f32 %v1594, %v707
        %v1659 = vmul.f32 %v1595, %v714
        %v1660 = vmul.f32 %v1596, %v721
        %v1661 = vmul.f32 %v1597, %v728
        %v1662 = vmul.f32 %v1598, %v735
        %v1663 = vmul.f32 %v1599, %v742
        %v1664 = vmul.f32 %v1600, %v749
        %v1665 = vmul.f32 %v1601, %v756
        %v1666 = vmul.f32 %v1602, %v763
        %v1667 = vmul.f32 %v1603, %v770
        %v1668 = vmul.f32 %v1604, %v777
        %v1669 = vmul.f32 %v1605, %v784
        %v1670 = vmul.f32 %v1606, %v791
        %v1671 = vmul.f32 %v1607, %v798
        %v1672 = vmul.f32 %v1608, %v805
        %v1673 = vmul.f32 %v1609, %v812
        %v1674 = vmul.f32 %v1610, %v819
        %v1675 = vmul.f32 %v1611, %v826
        %v1676 = vmul.f32 %v1612, %v833
        %v1677 = vmul.f32 %v1613, %v840
        %v1678 = vmul.f32 %v1614, %v847
        %v1679 = vmul.f32 %v1615, %v854
        %v1680 = vmul.f32 %v1616, %v861
        %v1681 = vmul.f32 %v1617, %v868
        %v1682 = vmul.f32 %v1618, %v875
        %v1683 = vmul.f32 %v1619, %v882
        %v1684 = vmul.f32 %v1620, %v889
        %v1685 = vmul.f32 %v1621, %v896
        %v1686 = vmul.f32 %v1622, %v903
        %v1687 = vmul.f32 %v1623, %v910
        %v1688 = vmul.f32 %v1624, %v917
        %v1689 = vmul.f32 %v1625, %v924
        %v1690 = vmul.f32 %v1626, %v931
        %v1691 = vmul.f32 %v1627, %v938
        %v1692 = vmul.f32 %v1628, %v945
        %v1693 = vmul.f32 %v1629, %v952
        %v1694 = vmul.f32 %v1630, %v959
        %v1695 = vmul.f32 %v1631, %v966
        %v1696 = vmul.f32 %v1632, %v973
        %v1697 = vmul.f32 %v1633, %v980
        %v1698 = vmul.f32 %v1634, %v987
        %v1699 = vmul.f32 %v1635, %v994
        %v1700 = vmul.f32 %v1636, %v1001
        %v1701 = vmul.f32 %v1637, %v1008
        %v1702 = vmul.f32 %v1638, %v1015
        %v1703 = vmul.f32 %v1639, %v1022
        %v1704 = vmul.f32 %v1640, %v1029
        %vm1705 = vcmask 261120
        %v1706 = vsel %vm1705, %v1641, 0.0
        %v1707 = vrot.slane %v1706, 4
        %v1708 = vadd.f32 %v1706, %v1707
        %v1709 = vrot.slane %v1708, 2
        %v1710 = vadd.f32 %v1708, %v1709
        %v1711 = vrot.slane %v1710, 1
        %v1712 = vadd.f32 %v1710, %v1711
        %v1713 = vsel %vm1705, %v1642, 0.0
        %v1714 = vrot.slane %v1713, 4
        %v1715 = vadd.f32 %v1713, %v1714
        %v1716 = vrot.slane %v1715, 2
        %v1717 = vadd.f32 %v1715, %v1716
        %v1718 = vrot.slane %v1717, 1
        %v1719 = vadd.f32 %v1717, %v1718
        %v1720 = vsel %vm1705, %v1643, 0.0
        %v1721 = vrot.slane %v1720, 4
        %v1722 = vadd.f32 %v1720, %v1721
        %v1723 = vrot.slane %v1722, 2
        %v1724 = vadd.f32 %v1722, %v1723
        %v1725 = vrot.slane %v1724, 1
        %v1726 = vadd.f32 %v1724, %v1725
        %v1727 = vsel %vm1705, %v1644, 0.0
        %v1728 = vrot.slane %v1727, 4
        %v1729 = vadd.f32 %v1727, %v1728
        %v1730 = vrot.slane %v1729, 2
        %v1731 = vadd.f32 %v1729, %v1730
        %v1732 = vrot.slane %v1731, 1
        %v1733 = vadd.f32 %v1731, %v1732
        %v1734 = vsel %vm1705, %v1645, 0.0
        %v1735 = vrot.slane %v1734, 4
        %v1736 = vadd.f32 %v1734, %v1735
        %v1737 = vrot.slane %v1736, 2
        %v1738 = vadd.f32 %v1736, %v1737
        %v1739 = vrot.slane %v1738, 1
        %v1740 = vadd.f32 %v1738, %v1739
        %v1741 = vsel %vm1705, %v1646, 0.0
        %v1742 = vrot.slane %v1741, 4
        %v1743 = vadd.f32 %v1741, %v1742
        %v1744 = vrot.slane %v1743, 2
        %v1745 = vadd.f32 %v1743, %v1744
        %v1746 = vrot.slane %v1745, 1
        %v1747 = vadd.f32 %v1745, %v1746
        %v1748 = vsel %vm1705, %v1647, 0.0
        %v1749 = vrot.slane %v1748, 4
        %v1750 = vadd.f32 %v1748, %v1749
        %v1751 = vrot.slane %v1750, 2
        %v1752 = vadd.f32 %v1750, %v1751
        %v1753 = vrot.slane %v1752, 1
        %v1754 = vadd.f32 %v1752, %v1753
        %v1755 = vsel %vm1705, %v1648, 0.0
        %v1756 = vrot.slane %v1755, 4
        %v1757 = vadd.f32 %v1755, %v1756
        %v1758 = vrot.slane %v1757, 2
        %v1759 = vadd.f32 %v1757, %v1758
        %v1760 = vrot.slane %v1759, 1
        %v1761 = vadd.f32 %v1759, %v1760
        %v1762 = vsel %vm1705, %v1649, 0.0
        %v1763 = vrot.slane %v1762, 4
        %v1764 = vadd.f32 %v1762, %v1763
        %v1765 = vrot.slane %v1764, 2
        %v1766 = vadd.f32 %v1764, %v1765
        %v1767 = vrot.slane %v1766, 1
        %v1768 = vadd.f32 %v1766, %v1767
        %v1769 = vsel %vm1705, %v1650, 0.0
        %v1770 = vrot.slane %v1769, 4
        %v1771 = vadd.f32 %v1769, %v1770
        %v1772 = vrot.slane %v1771, 2
        %v1773 = vadd.f32 %v1771, %v1772
        %v1774 = vrot.slane %v1773, 1
        %v1775 = vadd.f32 %v1773, %v1774
        %v1776 = vsel %vm1705, %v1651, 0.0
        %v1777 = vrot.slane %v1776, 4
        %v1778 = vadd.f32 %v1776, %v1777
        %v1779 = vrot.slane %v1778, 2
        %v1780 = vadd.f32 %v1778, %v1779
        %v1781 = vrot.slane %v1780, 1
        %v1782 = vadd.f32 %v1780, %v1781
        %v1783 = vsel %vm1705, %v1652, 0.0
        %v1784 = vrot.slane %v1783, 4
        %v1785 = vadd.f32 %v1783, %v1784
        %v1786 = vrot.slane %v1785, 2
        %v1787 = vadd.f32 %v1785, %v1786
        %v1788 = vrot.slane %v1787, 1
        %v1789 = vadd.f32 %v1787, %v1788
        %v1790 = vsel %vm1705, %v1653, 0.0
        %v1791 = vrot.slane %v1790, 4
        %v1792 = vadd.f32 %v1790, %v1791
        %v1793 = vrot.slane %v1792, 2
        %v1794 = vadd.f32 %v1792, %v1793
        %v1795 = vrot.slane %v1794, 1
        %v1796 = vadd.f32 %v1794, %v1795
        %v1797 = vsel %vm1705, %v1654, 0.0
        %v1798 = vrot.slane %v1797, 4
        %v1799 = vadd.f32 %v1797, %v1798
        %v1800 = vrot.slane %v1799, 2
        %v1801 = vadd.f32 %v1799, %v1800
        %v1802 = vrot.slane %v1801, 1
        %v1803 = vadd.f32 %v1801, %v1802
        %v1804 = vsel %vm1705, %v1655, 0.0
        %v1805 = vrot.slane %v1804, 4
        %v1806 = vadd.f32 %v1804, %v1805
        %v1807 = vrot.slane %v1806, 2
        %v1808 = vadd.f32 %v1806, %v1807
        %v1809 = vrot.slane %v1808, 1
        %v1810 = vadd.f32 %v1808, %v1809
        %v1811 = vsel %vm1705, %v1656, 0.0
        %v1812 = vrot.slane %v1811, 4
        %v1813 = vadd.f32 %v1811, %v1812
        %v1814 = vrot.slane %v1813, 2
        %v1815 = vadd.f32 %v1813, %v1814
        %v1816 = vrot.slane %v1815, 1
        %v1817 = vadd.f32 %v1815, %v1816
        %v1818 = vsel %vm1705, %v1657, 0.0
        %v1819 = vrot.slane %v1818, 4
        %v1820 = vadd.f32 %v1818, %v1819
        %v1821 = vrot.slane %v1820, 2
        %v1822 = vadd.f32 %v1820, %v1821
        %v1823 = vrot.slane %v1822, 1
        %v1824 = vadd.f32 %v1822, %v1823
        %v1825 = vsel %vm1705, %v1658, 0.0
        %v1826 = vrot.slane %v1825, 4
        %v1827 = vadd.f32 %v1825, %v1826
        %v1828 = vrot.slane %v1827, 2
        %v1829 = vadd.f32 %v1827, %v1828
        %v1830 = vrot.slane %v1829, 1
        %v1831 = vadd.f32 %v1829, %v1830
        %v1832 = vsel %vm1705, %v1659, 0.0
        %v1833 = vrot.slane %v1832, 4
        %v1834 = vadd.f32 %v1832, %v1833
        %v1835 = vrot.slane %v1834, 2
        %v1836 = vadd.f32 %v1834, %v1835
        %v1837 = vrot.slane %v1836, 1
        %v1838 = vadd.f32 %v1836, %v1837
        %v1839 = vsel %vm1705, %v1660, 0.0
        %v1840 = vrot.slane %v1839, 4
        %v1841 = vadd.f32 %v1839, %v1840
        %v1842 = vrot.slane %v1841, 2
        %v1843 = vadd.f32 %v1841, %v1842
        %v1844 = vrot.slane %v1843, 1
        %v1845 = vadd.f32 %v1843, %v1844
        %v1846 = vsel %vm1705, %v1661, 0.0
        %v1847 = vrot.slane %v1846, 4
        %v1848 = vadd.f32 %v1846, %v1847
        %v1849 = vrot.slane %v1848, 2
        %v1850 = vadd.f32 %v1848, %v1849
        %v1851 = vrot.slane %v1850, 1
        %v1852 = vadd.f32 %v1850, %v1851
        %v1853 = vsel %vm1705, %v1662, 0.0
        %v1854 = vrot.slane %v1853, 4
        %v1855 = vadd.f32 %v1853, %v1854
        %v1856 = vrot.slane %v1855, 2
        %v1857 = vadd.f32 %v1855, %v1856
        %v1858 = vrot.slane %v1857, 1
        %v1859 = vadd.f32 %v1857, %v1858
        %v1860 = vsel %vm1705, %v1663, 0.0
        %v1861 = vrot.slane %v1860, 4
        %v1862 = vadd.f32 %v1860, %v1861
        %v1863 = vrot.slane %v1862, 2
        %v1864 = vadd.f32 %v1862, %v1863
        %v1865 = vrot.slane %v1864, 1
        %v1866 = vadd.f32 %v1864, %v1865
        %v1867 = vsel %vm1705, %v1664, 0.0
        %v1868 = vrot.slane %v1867, 4
        %v1869 = vadd.f32 %v1867, %v1868
        %v1870 = vrot.slane %v1869, 2
        %v1871 = vadd.f32 %v1869, %v1870
        %v1872 = vrot.slane %v1871, 1
        %v1873 = vadd.f32 %v1871, %v1872
        %v1874 = vsel %vm1705, %v1665, 0.0
        %v1875 = vrot.slane %v1874, 4
        %v1876 = vadd.f32 %v1874, %v1875
        %v1877 = vrot.slane %v1876, 2
        %v1878 = vadd.f32 %v1876, %v1877
        %v1879 = vrot.slane %v1878, 1
        %v1880 = vadd.f32 %v1878, %v1879
        %v1881 = vsel %vm1705, %v1666, 0.0
        %v1882 = vrot.slane %v1881, 4
        %v1883 = vadd.f32 %v1881, %v1882
        %v1884 = vrot.slane %v1883, 2
        %v1885 = vadd.f32 %v1883, %v1884
        %v1886 = vrot.slane %v1885, 1
        %v1887 = vadd.f32 %v1885, %v1886
        %v1888 = vsel %vm1705, %v1667, 0.0
        %v1889 = vrot.slane %v1888, 4
        %v1890 = vadd.f32 %v1888, %v1889
        %v1891 = vrot.slane %v1890, 2
        %v1892 = vadd.f32 %v1890, %v1891
        %v1893 = vrot.slane %v1892, 1
        %v1894 = vadd.f32 %v1892, %v1893
        %v1895 = vsel %vm1705, %v1668, 0.0
        %v1896 = vrot.slane %v1895, 4
        %v1897 = vadd.f32 %v1895, %v1896
        %v1898 = vrot.slane %v1897, 2
        %v1899 = vadd.f32 %v1897, %v1898
        %v1900 = vrot.slane %v1899, 1
        %v1901 = vadd.f32 %v1899, %v1900
        %v1902 = vsel %vm1705, %v1669, 0.0
        %v1903 = vrot.slane %v1902, 4
        %v1904 = vadd.f32 %v1902, %v1903
        %v1905 = vrot.slane %v1904, 2
        %v1906 = vadd.f32 %v1904, %v1905
        %v1907 = vrot.slane %v1906, 1
        %v1908 = vadd.f32 %v1906, %v1907
        %v1909 = vsel %vm1705, %v1670, 0.0
        %v1910 = vrot.slane %v1909, 4
        %v1911 = vadd.f32 %v1909, %v1910
        %v1912 = vrot.slane %v1911, 2
        %v1913 = vadd.f32 %v1911, %v1912
        %v1914 = vrot.slane %v1913, 1
        %v1915 = vadd.f32 %v1913, %v1914
        %v1916 = vsel %vm1705, %v1671, 0.0
        %v1917 = vrot.slane %v1916, 4
        %v1918 = vadd.f32 %v1916, %v1917
        %v1919 = vrot.slane %v1918, 2
        %v1920 = vadd.f32 %v1918, %v1919
        %v1921 = vrot.slane %v1920, 1
        %v1922 = vadd.f32 %v1920, %v1921
        %v1923 = vsel %vm1705, %v1672, 0.0
        %v1924 = vrot.slane %v1923, 4
        %v1925 = vadd.f32 %v1923, %v1924
        %v1926 = vrot.slane %v1925, 2
        %v1927 = vadd.f32 %v1925, %v1926
        %v1928 = vrot.slane %v1927, 1
        %v1929 = vadd.f32 %v1927, %v1928
        %v1930 = vsel %vm1705, %v1673, 0.0
        %v1931 = vrot.slane %v1930, 4
        %v1932 = vadd.f32 %v1930, %v1931
        %v1933 = vrot.slane %v1932, 2
        %v1934 = vadd.f32 %v1932, %v1933
        %v1935 = vrot.slane %v1934, 1
        %v1936 = vadd.f32 %v1934, %v1935
        %v1937 = vsel %vm1705, %v1674, 0.0
        %v1938 = vrot.slane %v1937, 4
        %v1939 = vadd.f32 %v1937, %v1938
        %v1940 = vrot.slane %v1939, 2
        %v1941 = vadd.f32 %v1939, %v1940
        %v1942 = vrot.slane %v1941, 1
        %v1943 = vadd.f32 %v1941, %v1942
        %v1944 = vsel %vm1705, %v1675, 0.0
        %v1945 = vrot.slane %v1944, 4
        %v1946 = vadd.f32 %v1944, %v1945
        %v1947 = vrot.slane %v1946, 2
        %v1948 = vadd.f32 %v1946, %v1947
        %v1949 = vrot.slane %v1948, 1
        %v1950 = vadd.f32 %v1948, %v1949
        %v1951 = vsel %vm1705, %v1676, 0.0
        %v1952 = vrot.slane %v1951, 4
        %v1953 = vadd.f32 %v1951, %v1952
        %v1954 = vrot.slane %v1953, 2
        %v1955 = vadd.f32 %v1953, %v1954
        %v1956 = vrot.slane %v1955, 1
        %v1957 = vadd.f32 %v1955, %v1956
        %v1958 = vsel %vm1705, %v1677, 0.0
        %v1959 = vrot.slane %v1958, 4
        %v1960 = vadd.f32 %v1958, %v1959
        %v1961 = vrot.slane %v1960, 2
        %v1962 = vadd.f32 %v1960, %v1961
        %v1963 = vrot.slane %v1962, 1
        %v1964 = vadd.f32 %v1962, %v1963
        %v1965 = vsel %vm1705, %v1678, 0.0
        %v1966 = vrot.slane %v1965, 4
        %v1967 = vadd.f32 %v1965, %v1966
        %v1968 = vrot.slane %v1967, 2
        %v1969 = vadd.f32 %v1967, %v1968
        %v1970 = vrot.slane %v1969, 1
        %v1971 = vadd.f32 %v1969, %v1970
        %v1972 = vsel %vm1705, %v1679, 0.0
        %v1973 = vrot.slane %v1972, 4
        %v1974 = vadd.f32 %v1972, %v1973
        %v1975 = vrot.slane %v1974, 2
        %v1976 = vadd.f32 %v1974, %v1975
        %v1977 = vrot.slane %v1976, 1
        %v1978 = vadd.f32 %v1976, %v1977
        %v1979 = vsel %vm1705, %v1680, 0.0
        %v1980 = vrot.slane %v1979, 4
        %v1981 = vadd.f32 %v1979, %v1980
        %v1982 = vrot.slane %v1981, 2
        %v1983 = vadd.f32 %v1981, %v1982
        %v1984 = vrot.slane %v1983, 1
        %v1985 = vadd.f32 %v1983, %v1984
        %v1986 = vsel %vm1705, %v1681, 0.0
        %v1987 = vrot.slane %v1986, 4
        %v1988 = vadd.f32 %v1986, %v1987
        %v1989 = vrot.slane %v1988, 2
        %v1990 = vadd.f32 %v1988, %v1989
        %v1991 = vrot.slane %v1990, 1
        %v1992 = vadd.f32 %v1990, %v1991
        %v1993 = vsel %vm1705, %v1682, 0.0
        %v1994 = vrot.slane %v1993, 4
        %v1995 = vadd.f32 %v1993, %v1994
        %v1996 = vrot.slane %v1995, 2
        %v1997 = vadd.f32 %v1995, %v1996
        %v1998 = vrot.slane %v1997, 1
        %v1999 = vadd.f32 %v1997, %v1998
        %v2000 = vsel %vm1705, %v1683, 0.0
        %v2001 = vrot.slane %v2000, 4
        %v2002 = vadd.f32 %v2000, %v2001
        %v2003 = vrot.slane %v2002, 2
        %v2004 = vadd.f32 %v2002, %v2003
        %v2005 = vrot.slane %v2004, 1
        %v2006 = vadd.f32 %v2004, %v2005
        %v2007 = vsel %vm1705, %v1684, 0.0
        %v2008 = vrot.slane %v2007, 4
        %v2009 = vadd.f32 %v2007, %v2008
        %v2010 = vrot.slane %v2009, 2
        %v2011 = vadd.f32 %v2009, %v2010
        %v2012 = vrot.slane %v2011, 1
        %v2013 = vadd.f32 %v2011, %v2012
        %v2014 = vsel %vm1705, %v1685, 0.0
        %v2015 = vrot.slane %v2014, 4
        %v2016 = vadd.f32 %v2014, %v2015
        %v2017 = vrot.slane %v2016, 2
        %v2018 = vadd.f32 %v2016, %v2017
        %v2019 = vrot.slane %v2018, 1
        %v2020 = vadd.f32 %v2018, %v2019
        %v2021 = vsel %vm1705, %v1686, 0.0
        %v2022 = vrot.slane %v2021, 4
        %v2023 = vadd.f32 %v2021, %v2022
        %v2024 = vrot.slane %v2023, 2
        %v2025 = vadd.f32 %v2023, %v2024
        %v2026 = vrot.slane %v2025, 1
        %v2027 = vadd.f32 %v2025, %v2026
        %v2028 = vsel %vm1705, %v1687, 0.0
        %v2029 = vrot.slane %v2028, 4
        %v2030 = vadd.f32 %v2028, %v2029
        %v2031 = vrot.slane %v2030, 2
        %v2032 = vadd.f32 %v2030, %v2031
        %v2033 = vrot.slane %v2032, 1
        %v2034 = vadd.f32 %v2032, %v2033
        %v2035 = vsel %vm1705, %v1688, 0.0
        %v2036 = vrot.slane %v2035, 4
        %v2037 = vadd.f32 %v2035, %v2036
        %v2038 = vrot.slane %v2037, 2
        %v2039 = vadd.f32 %v2037, %v2038
        %v2040 = vrot.slane %v2039, 1
        %v2041 = vadd.f32 %v2039, %v2040
        %v2042 = vsel %vm1705, %v1689, 0.0
        %v2043 = vrot.slane %v2042, 4
        %v2044 = vadd.f32 %v2042, %v2043
        %v2045 = vrot.slane %v2044, 2
        %v2046 = vadd.f32 %v2044, %v2045
        %v2047 = vrot.slane %v2046, 1
        %v2048 = vadd.f32 %v2046, %v2047
        %v2049 = vsel %vm1705, %v1690, 0.0
        %v2050 = vrot.slane %v2049, 4
        %v2051 = vadd.f32 %v2049, %v2050
        %v2052 = vrot.slane %v2051, 2
        %v2053 = vadd.f32 %v2051, %v2052
        %v2054 = vrot.slane %v2053, 1
        %v2055 = vadd.f32 %v2053, %v2054
        %v2056 = vsel %vm1705, %v1691, 0.0
        %v2057 = vrot.slane %v2056, 4
        %v2058 = vadd.f32 %v2056, %v2057
        %v2059 = vrot.slane %v2058, 2
        %v2060 = vadd.f32 %v2058, %v2059
        %v2061 = vrot.slane %v2060, 1
        %v2062 = vadd.f32 %v2060, %v2061
        %v2063 = vsel %vm1705, %v1692, 0.0
        %v2064 = vrot.slane %v2063, 4
        %v2065 = vadd.f32 %v2063, %v2064
        %v2066 = vrot.slane %v2065, 2
        %v2067 = vadd.f32 %v2065, %v2066
        %v2068 = vrot.slane %v2067, 1
        %v2069 = vadd.f32 %v2067, %v2068
        %v2070 = vsel %vm1705, %v1693, 0.0
        %v2071 = vrot.slane %v2070, 4
        %v2072 = vadd.f32 %v2070, %v2071
        %v2073 = vrot.slane %v2072, 2
        %v2074 = vadd.f32 %v2072, %v2073
        %v2075 = vrot.slane %v2074, 1
        %v2076 = vadd.f32 %v2074, %v2075
        %v2077 = vsel %vm1705, %v1694, 0.0
        %v2078 = vrot.slane %v2077, 4
        %v2079 = vadd.f32 %v2077, %v2078
        %v2080 = vrot.slane %v2079, 2
        %v2081 = vadd.f32 %v2079, %v2080
        %v2082 = vrot.slane %v2081, 1
        %v2083 = vadd.f32 %v2081, %v2082
        %v2084 = vsel %vm1705, %v1695, 0.0
        %v2085 = vrot.slane %v2084, 4
        %v2086 = vadd.f32 %v2084, %v2085
        %v2087 = vrot.slane %v2086, 2
        %v2088 = vadd.f32 %v2086, %v2087
        %v2089 = vrot.slane %v2088, 1
        %v2090 = vadd.f32 %v2088, %v2089
        %v2091 = vsel %vm1705, %v1696, 0.0
        %v2092 = vrot.slane %v2091, 4
        %v2093 = vadd.f32 %v2091, %v2092
        %v2094 = vrot.slane %v2093, 2
        %v2095 = vadd.f32 %v2093, %v2094
        %v2096 = vrot.slane %v2095, 1
        %v2097 = vadd.f32 %v2095, %v2096
        %v2098 = vsel %vm1705, %v1697, 0.0
        %v2099 = vrot.slane %v2098, 4
        %v2100 = vadd.f32 %v2098, %v2099
        %v2101 = vrot.slane %v2100, 2
        %v2102 = vadd.f32 %v2100, %v2101
        %v2103 = vrot.slane %v2102, 1
        %v2104 = vadd.f32 %v2102, %v2103
        %v2105 = vsel %vm1705, %v1698, 0.0
        %v2106 = vrot.slane %v2105, 4
        %v2107 = vadd.f32 %v2105, %v2106
        %v2108 = vrot.slane %v2107, 2
        %v2109 = vadd.f32 %v2107, %v2108
        %v2110 = vrot.slane %v2109, 1
        %v2111 = vadd.f32 %v2109, %v2110
        %v2112 = vsel %vm1705, %v1699, 0.0
        %v2113 = vrot.slane %v2112, 4
        %v2114 = vadd.f32 %v2112, %v2113
        %v2115 = vrot.slane %v2114, 2
        %v2116 = vadd.f32 %v2114, %v2115
        %v2117 = vrot.slane %v2116, 1
        %v2118 = vadd.f32 %v2116, %v2117
        %v2119 = vsel %vm1705, %v1700, 0.0
        %v2120 = vrot.slane %v2119, 4
        %v2121 = vadd.f32 %v2119, %v2120
        %v2122 = vrot.slane %v2121, 2
        %v2123 = vadd.f32 %v2121, %v2122
        %v2124 = vrot.slane %v2123, 1
        %v2125 = vadd.f32 %v2123, %v2124
        %v2126 = vsel %vm1705, %v1701, 0.0
        %v2127 = vrot.slane %v2126, 4
        %v2128 = vadd.f32 %v2126, %v2127
        %v2129 = vrot.slane %v2128, 2
        %v2130 = vadd.f32 %v2128, %v2129
        %v2131 = vrot.slane %v2130, 1
        %v2132 = vadd.f32 %v2130, %v2131
        %v2133 = vsel %vm1705, %v1702, 0.0
        %v2134 = vrot.slane %v2133, 4
        %v2135 = vadd.f32 %v2133, %v2134
        %v2136 = vrot.slane %v2135, 2
        %v2137 = vadd.f32 %v2135, %v2136
        %v2138 = vrot.slane %v2137, 1
        %v2139 = vadd.f32 %v2137, %v2138
        %v2140 = vsel %vm1705, %v1703, 0.0
        %v2141 = vrot.slane %v2140, 4
        %v2142 = vadd.f32 %v2140, %v2141
        %v2143 = vrot.slane %v2142, 2
        %v2144 = vadd.f32 %v2142, %v2143
        %v2145 = vrot.slane %v2144, 1
        %v2146 = vadd.f32 %v2144, %v2145
        %v2147 = vsel %vm1705, %v1704, 0.0
        %v2148 = vrot.slane %v2147, 4
        %v2149 = vadd.f32 %v2147, %v2148
        %v2150 = vrot.slane %v2149, 2
        %v2151 = vadd.f32 %v2149, %v2150
        %v2152 = vrot.slane %v2151, 1
        %v2153 = vadd.f32 %v2151, %v2152
        %v2218 = vrot.slane %v1641, 1
        %v2219 = vrot.slane %v1641, 2
        %v2220 = vrot.slane %v1641, 3
        %v2221 = vrot.slane %v1641, 4
        %v2222 = vrot.slane %v1641, 5
        %v2223 = vrot.slane %v1641, 6
        %v2224 = vrot.slane %v1641, 7
        %v2225 = vrot.slane %v1642, 1
        %v2226 = vrot.slane %v1642, 2
        %v2227 = vrot.slane %v1642, 3
        %v2228 = vrot.slane %v1642, 4
        %v2229 = vrot.slane %v1642, 5
        %v2230 = vrot.slane %v1642, 6
        %v2231 = vrot.slane %v1642, 7
        %v2232 = vrot.slane %v1643, 1
        %v2233 = vrot.slane %v1643, 2
        %v2234 = vrot.slane %v1643, 3
        %v2235 = vrot.slane %v1643, 4
        %v2236 = vrot.slane %v1643, 5
        %v2237 = vrot.slane %v1643, 6
        %v2238 = vrot.slane %v1643, 7
        %v2239 = vrot.slane %v1644, 1
        %v2240 = vrot.slane %v1644, 2
        %v2241 = vrot.slane %v1644, 3
        %v2242 = vrot.slane %v1644, 4
        %v2243 = vrot.slane %v1644, 5
        %v2244 = vrot.slane %v1644, 6
        %v2245 = vrot.slane %v1644, 7
        %v2246 = vrot.slane %v1645, 1
        %v2247 = vrot.slane %v1645, 2
        %v2248 = vrot.slane %v1645, 3
        %v2249 = vrot.slane %v1645, 4
        %v2250 = vrot.slane %v1645, 5
        %v2251 = vrot.slane %v1645, 6
        %v2252 = vrot.slane %v1645, 7
        %v2253 = vrot.slane %v1646, 1
        %v2254 = vrot.slane %v1646, 2
        %v2255 = vrot.slane %v1646, 3
        %v2256 = vrot.slane %v1646, 4
        %v2257 = vrot.slane %v1646, 5
        %v2258 = vrot.slane %v1646, 6
        %v2259 = vrot.slane %v1646, 7
        %v2260 = vrot.slane %v1647, 1
        %v2261 = vrot.slane %v1647, 2
        %v2262 = vrot.slane %v1647, 3
        %v2263 = vrot.slane %v1647, 4
        %v2264 = vrot.slane %v1647, 5
        %v2265 = vrot.slane %v1647, 6
        %v2266 = vrot.slane %v1647, 7
        %v2267 = vrot.slane %v1648, 1
        %v2268 = vrot.slane %v1648, 2
        %v2269 = vrot.slane %v1648, 3
        %v2270 = vrot.slane %v1648, 4
        %v2271 = vrot.slane %v1648, 5
        %v2272 = vrot.slane %v1648, 6
        %v2273 = vrot.slane %v1648, 7
        %v2274 = vrot.slane %v1649, 1
        %v2275 = vrot.slane %v1649, 2
        %v2276 = vrot.slane %v1649, 3
        %v2277 = vrot.slane %v1649, 4
        %v2278 = vrot.slane %v1649, 5
        %v2279 = vrot.slane %v1649, 6
        %v2280 = vrot.slane %v1649, 7
        %v2281 = vrot.slane %v1650, 1
        %v2282 = vrot.slane %v1650, 2
        %v2283 = vrot.slane %v1650, 3
        %v2284 = vrot.slane %v1650, 4
        %v2285 = vrot.slane %v1650, 5
        %v2286 = vrot.slane %v1650, 6
        %v2287 = vrot.slane %v1650, 7
        %v2288 = vrot.slane %v1651, 1
        %v2289 = vrot.slane %v1651, 2
        %v2290 = vrot.slane %v1651, 3
        %v2291 = vrot.slane %v1651, 4
        %v2292 = vrot.slane %v1651, 5
        %v2293 = vrot.slane %v1651, 6
        %v2294 = vrot.slane %v1651, 7
        %v2295 = vrot.slane %v1652, 1
        %v2296 = vrot.slane %v1652, 2
        %v2297 = vrot.slane %v1652, 3
        %v2298 = vrot.slane %v1652, 4
        %v2299 = vrot.slane %v1652, 5
        %v2300 = vrot.slane %v1652, 6
        %v2301 = vrot.slane %v1652, 7
        %v2302 = vrot.slane %v1653, 1
        %v2303 = vrot.slane %v1653, 2
        %v2304 = vrot.slane %v1653, 3
        %v2305 = vrot.slane %v1653, 4
        %v2306 = vrot.slane %v1653, 5
        %v2307 = vrot.slane %v1653, 6
        %v2308 = vrot.slane %v1653, 7
        %v2309 = vrot.slane %v1654, 1
        %v2310 = vrot.slane %v1654, 2
        %v2311 = vrot.slane %v1654, 3
        %v2312 = vrot.slane %v1654, 4
        %v2313 = vrot.slane %v1654, 5
        %v2314 = vrot.slane %v1654, 6
        %v2315 = vrot.slane %v1654, 7
        %v2316 = vrot.slane %v1655, 1
        %v2317 = vrot.slane %v1655, 2
        %v2318 = vrot.slane %v1655, 3
        %v2319 = vrot.slane %v1655, 4
        %v2320 = vrot.slane %v1655, 5
        %v2321 = vrot.slane %v1655, 6
        %v2322 = vrot.slane %v1655, 7
        %v2323 = vrot.slane %v1656, 1
        %v2324 = vrot.slane %v1656, 2
        %v2325 = vrot.slane %v1656, 3
        %v2326 = vrot.slane %v1656, 4
        %v2327 = vrot.slane %v1656, 5
        %v2328 = vrot.slane %v1656, 6
        %v2329 = vrot.slane %v1656, 7
        %v2330 = vrot.slane %v1657, 1
        %v2331 = vrot.slane %v1657, 2
        %v2332 = vrot.slane %v1657, 3
        %v2333 = vrot.slane %v1657, 4
        %v2334 = vrot.slane %v1657, 5
        %v2335 = vrot.slane %v1657, 6
        %v2336 = vrot.slane %v1657, 7
        %v2337 = vrot.slane %v1658, 1
        %v2338 = vrot.slane %v1658, 2
        %v2339 = vrot.slane %v1658, 3
        %v2340 = vrot.slane %v1658, 4
        %v2341 = vrot.slane %v1658, 5
        %v2342 = vrot.slane %v1658, 6
        %v2343 = vrot.slane %v1658, 7
        %v2344 = vrot.slane %v1659, 1
        %v2345 = vrot.slane %v1659, 2
        %v2346 = vrot.slane %v1659, 3
        %v2347 = vrot.slane %v1659, 4
        %v2348 = vrot.slane %v1659, 5
        %v2349 = vrot.slane %v1659, 6
        %v2350 = vrot.slane %v1659, 7
        %v2351 = vrot.slane %v1660, 1
        %v2352 = vrot.slane %v1660, 2
        %v2353 = vrot.slane %v1660, 3
        %v2354 = vrot.slane %v1660, 4
        %v2355 = vrot.slane %v1660, 5
        %v2356 = vrot.slane %v1660, 6
        %v2357 = vrot.slane %v1660, 7
        %v2358 = vrot.slane %v1661, 1
        %v2359 = vrot.slane %v1661, 2
        %v2360 = vrot.slane %v1661, 3
        %v2361 = vrot.slane %v1661, 4
        %v2362 = vrot.slane %v1661, 5
        %v2363 = vrot.slane %v1661, 6
        %v2364 = vrot.slane %v1661, 7
        %v2365 = vrot.slane %v1662, 1
        %v2366 = vrot.slane %v1662, 2
        %v2367 = vrot.slane %v1662, 3
        %v2368 = vrot.slane %v1662, 4
        %v2369 = vrot.slane %v1662, 5
        %v2370 = vrot.slane %v1662, 6
        %v2371 = vrot.slane %v1662, 7
        %v2372 = vrot.slane %v1663, 1
        %v2373 = vrot.slane %v1663, 2
        %v2374 = vrot.slane %v1663, 3
        %v2375 = vrot.slane %v1663, 4
        %v2376 = vrot.slane %v1663, 5
        %v2377 = vrot.slane %v1663, 6
        %v2378 = vrot.slane %v1663, 7
        %v2379 = vrot.slane %v1664, 1
        %v2380 = vrot.slane %v1664, 2
        %v2381 = vrot.slane %v1664, 3
        %v2382 = vrot.slane %v1664, 4
        %v2383 = vrot.slane %v1664, 5
        %v2384 = vrot.slane %v1664, 6
        %v2385 = vrot.slane %v1664, 7
        %v2386 = vrot.slane %v1665, 1
        %v2387 = vrot.slane %v1665, 2
        %v2388 = vrot.slane %v1665, 3
        %v2389 = vrot.slane %v1665, 4
        %v2390 = vrot.slane %v1665, 5
        %v2391 = vrot.slane %v1665, 6
        %v2392 = vrot.slane %v1665, 7
        %v2393 = vrot.slane %v1666, 1
        %v2394 = vrot.slane %v1666, 2
        %v2395 = vrot.slane %v1666, 3
        %v2396 = vrot.slane %v1666, 4
        %v2397 = vrot.slane %v1666, 5
        %v2398 = vrot.slane %v1666, 6
        %v2399 = vrot.slane %v1666, 7
        %v2400 = vrot.slane %v1667, 1
        %v2401 = vrot.slane %v1667, 2
        %v2402 = vrot.slane %v1667, 3
        %v2403 = vrot.slane %v1667, 4
        %v2404 = vrot.slane %v1667, 5
        %v2405 = vrot.slane %v1667, 6
        %v2406 = vrot.slane %v1667, 7
        %v2407 = vrot.slane %v1668, 1
        %v2408 = vrot.slane %v1668, 2
        %v2409 = vrot.slane %v1668, 3
        %v2410 = vrot.slane %v1668, 4
        %v2411 = vrot.slane %v1668, 5
        %v2412 = vrot.slane %v1668, 6
        %v2413 = vrot.slane %v1668, 7
        %v2414 = vrot.slane %v1669, 1
        %v2415 = vrot.slane %v1669, 2
        %v2416 = vrot.slane %v1669, 3
        %v2417 = vrot.slane %v1669, 4
        %v2418 = vrot.slane %v1669, 5
        %v2419 = vrot.slane %v1669, 6
        %v2420 = vrot.slane %v1669, 7
        %v2421 = vrot.slane %v1670, 1
        %v2422 = vrot.slane %v1670, 2
        %v2423 = vrot.slane %v1670, 3
        %v2424 = vrot.slane %v1670, 4
        %v2425 = vrot.slane %v1670, 5
        %v2426 = vrot.slane %v1670, 6
        %v2427 = vrot.slane %v1670, 7
        %v2428 = vrot.slane %v1671, 1
        %v2429 = vrot.slane %v1671, 2
        %v2430 = vrot.slane %v1671, 3
        %v2431 = vrot.slane %v1671, 4
        %v2432 = vrot.slane %v1671, 5
        %v2433 = vrot.slane %v1671, 6
        %v2434 = vrot.slane %v1671, 7
        %v2435 = vrot.slane %v1672, 1
        %v2436 = vrot.slane %v1672, 2
        %v2437 = vrot.slane %v1672, 3
        %v2438 = vrot.slane %v1672, 4
        %v2439 = vrot.slane %v1672, 5
        %v2440 = vrot.slane %v1672, 6
        %v2441 = vrot.slane %v1672, 7
        %v2442 = vrot.slane %v1673, 1
        %v2443 = vrot.slane %v1673, 2
        %v2444 = vrot.slane %v1673, 3
        %v2445 = vrot.slane %v1673, 4
        %v2446 = vrot.slane %v1673, 5
        %v2447 = vrot.slane %v1673, 6
        %v2448 = vrot.slane %v1673, 7
        %v2449 = vrot.slane %v1674, 1
        %v2450 = vrot.slane %v1674, 2
        %v2451 = vrot.slane %v1674, 3
        %v2452 = vrot.slane %v1674, 4
        %v2453 = vrot.slane %v1674, 5
        %v2454 = vrot.slane %v1674, 6
        %v2455 = vrot.slane %v1674, 7
        %v2456 = vrot.slane %v1675, 1
        %v2457 = vrot.slane %v1675, 2
        %v2458 = vrot.slane %v1675, 3
        %v2459 = vrot.slane %v1675, 4
        %v2460 = vrot.slane %v1675, 5
        %v2461 = vrot.slane %v1675, 6
        %v2462 = vrot.slane %v1675, 7
        %v2463 = vrot.slane %v1676, 1
        %v2464 = vrot.slane %v1676, 2
        %v2465 = vrot.slane %v1676, 3
        %v2466 = vrot.slane %v1676, 4
        %v2467 = vrot.slane %v1676, 5
        %v2468 = vrot.slane %v1676, 6
        %v2469 = vrot.slane %v1676, 7
        %v2470 = vrot.slane %v1677, 1
        %v2471 = vrot.slane %v1677, 2
        %v2472 = vrot.slane %v1677, 3
        %v2473 = vrot.slane %v1677, 4
        %v2474 = vrot.slane %v1677, 5
        %v2475 = vrot.slane %v1677, 6
        %v2476 = vrot.slane %v1677, 7
        %v2477 = vrot.slane %v1678, 1
        %v2478 = vrot.slane %v1678, 2
        %v2479 = vrot.slane %v1678, 3
        %v2480 = vrot.slane %v1678, 4
        %v2481 = vrot.slane %v1678, 5
        %v2482 = vrot.slane %v1678, 6
        %v2483 = vrot.slane %v1678, 7
        %v2484 = vrot.slane %v1679, 1
        %v2485 = vrot.slane %v1679, 2
        %v2486 = vrot.slane %v1679, 3
        %v2487 = vrot.slane %v1679, 4
        %v2488 = vrot.slane %v1679, 5
        %v2489 = vrot.slane %v1679, 6
        %v2490 = vrot.slane %v1679, 7
        %v2491 = vrot.slane %v1680, 1
        %v2492 = vrot.slane %v1680, 2
        %v2493 = vrot.slane %v1680, 3
        %v2494 = vrot.slane %v1680, 4
        %v2495 = vrot.slane %v1680, 5
        %v2496 = vrot.slane %v1680, 6
        %v2497 = vrot.slane %v1680, 7
        %v2498 = vrot.slane %v1681, 1
        %v2499 = vrot.slane %v1681, 2
        %v2500 = vrot.slane %v1681, 3
        %v2501 = vrot.slane %v1681, 4
        %v2502 = vrot.slane %v1681, 5
        %v2503 = vrot.slane %v1681, 6
        %v2504 = vrot.slane %v1681, 7
        %v2505 = vrot.slane %v1682, 1
        %v2506 = vrot.slane %v1682, 2
        %v2507 = vrot.slane %v1682, 3
        %v2508 = vrot.slane %v1682, 4
        %v2509 = vrot.slane %v1682, 5
        %v2510 = vrot.slane %v1682, 6
        %v2511 = vrot.slane %v1682, 7
        %v2512 = vrot.slane %v1683, 1
        %v2513 = vrot.slane %v1683, 2
        %v2514 = vrot.slane %v1683, 3
        %v2515 = vrot.slane %v1683, 4
        %v2516 = vrot.slane %v1683, 5
        %v2517 = vrot.slane %v1683, 6
        %v2518 = vrot.slane %v1683, 7
        %v2519 = vrot.slane %v1684, 1
        %v2520 = vrot.slane %v1684, 2
        %v2521 = vrot.slane %v1684, 3
        %v2522 = vrot.slane %v1684, 4
        %v2523 = vrot.slane %v1684, 5
        %v2524 = vrot.slane %v1684, 6
        %v2525 = vrot.slane %v1684, 7
        %v2526 = vrot.slane %v1685, 1
        %v2527 = vrot.slane %v1685, 2
        %v2528 = vrot.slane %v1685, 3
        %v2529 = vrot.slane %v1685, 4
        %v2530 = vrot.slane %v1685, 5
        %v2531 = vrot.slane %v1685, 6
        %v2532 = vrot.slane %v1685, 7
        %v2533 = vrot.slane %v1686, 1
        %v2534 = vrot.slane %v1686, 2
        %v2535 = vrot.slane %v1686, 3
        %v2536 = vrot.slane %v1686, 4
        %v2537 = vrot.slane %v1686, 5
        %v2538 = vrot.slane %v1686, 6
        %v2539 = vrot.slane %v1686, 7
        %v2540 = vrot.slane %v1687, 1
        %v2541 = vrot.slane %v1687, 2
        %v2542 = vrot.slane %v1687, 3
        %v2543 = vrot.slane %v1687, 4
        %v2544 = vrot.slane %v1687, 5
        %v2545 = vrot.slane %v1687, 6
        %v2546 = vrot.slane %v1687, 7
        %v2547 = vrot.slane %v1688, 1
        %v2548 = vrot.slane %v1688, 2
        %v2549 = vrot.slane %v1688, 3
        %v2550 = vrot.slane %v1688, 4
        %v2551 = vrot.slane %v1688, 5
        %v2552 = vrot.slane %v1688, 6
        %v2553 = vrot.slane %v1688, 7
        %v2554 = vrot.slane %v1689, 1
        %v2555 = vrot.slane %v1689, 2
        %v2556 = vrot.slane %v1689, 3
        %v2557 = vrot.slane %v1689, 4
        %v2558 = vrot.slane %v1689, 5
        %v2559 = vrot.slane %v1689, 6
        %v2560 = vrot.slane %v1689, 7
        %v2561 = vrot.slane %v1690, 1
        %v2562 = vrot.slane %v1690, 2
        %v2563 = vrot.slane %v1690, 3
        %v2564 = vrot.slane %v1690, 4
        %v2565 = vrot.slane %v1690, 5
        %v2566 = vrot.slane %v1690, 6
        %v2567 = vrot.slane %v1690, 7
        %v2568 = vrot.slane %v1691, 1
        %v2569 = vrot.slane %v1691, 2
        %v2570 = vrot.slane %v1691, 3
        %v2571 = vrot.slane %v1691, 4
        %v2572 = vrot.slane %v1691, 5
        %v2573 = vrot.slane %v1691, 6
        %v2574 = vrot.slane %v1691, 7
        %v2575 = vrot.slane %v1692, 1
        %v2576 = vrot.slane %v1692, 2
        %v2577 = vrot.slane %v1692, 3
        %v2578 = vrot.slane %v1692, 4
        %v2579 = vrot.slane %v1692, 5
        %v2580 = vrot.slane %v1692, 6
        %v2581 = vrot.slane %v1692, 7
        %v2582 = vrot.slane %v1693, 1
        %v2583 = vrot.slane %v1693, 2
        %v2584 = vrot.slane %v1693, 3
        %v2585 = vrot.slane %v1693, 4
        %v2586 = vrot.slane %v1693, 5
        %v2587 = vrot.slane %v1693, 6
        %v2588 = vrot.slane %v1693, 7
        %v2589 = vrot.slane %v1694, 1
        %v2590 = vrot.slane %v1694, 2
        %v2591 = vrot.slane %v1694, 3
        %v2592 = vrot.slane %v1694, 4
        %v2593 = vrot.slane %v1694, 5
        %v2594 = vrot.slane %v1694, 6
        %v2595 = vrot.slane %v1694, 7
        %v2596 = vrot.slane %v1695, 1
        %v2597 = vrot.slane %v1695, 2
        %v2598 = vrot.slane %v1695, 3
        %v2599 = vrot.slane %v1695, 4
        %v2600 = vrot.slane %v1695, 5
        %v2601 = vrot.slane %v1695, 6
        %v2602 = vrot.slane %v1695, 7
        %v2603 = vrot.slane %v1696, 1
        %v2604 = vrot.slane %v1696, 2
        %v2605 = vrot.slane %v1696, 3
        %v2606 = vrot.slane %v1696, 4
        %v2607 = vrot.slane %v1696, 5
        %v2608 = vrot.slane %v1696, 6
        %v2609 = vrot.slane %v1696, 7
        %v2610 = vrot.slane %v1697, 1
        %v2611 = vrot.slane %v1697, 2
        %v2612 = vrot.slane %v1697, 3
        %v2613 = vrot.slane %v1697, 4
        %v2614 = vrot.slane %v1697, 5
        %v2615 = vrot.slane %v1697, 6
        %v2616 = vrot.slane %v1697, 7
        %v2617 = vrot.slane %v1698, 1
        %v2618 = vrot.slane %v1698, 2
        %v2619 = vrot.slane %v1698, 3
        %v2620 = vrot.slane %v1698, 4
        %v2621 = vrot.slane %v1698, 5
        %v2622 = vrot.slane %v1698, 6
        %v2623 = vrot.slane %v1698, 7
        %v2624 = vrot.slane %v1699, 1
        %v2625 = vrot.slane %v1699, 2
        %v2626 = vrot.slane %v1699, 3
        %v2627 = vrot.slane %v1699, 4
        %v2628 = vrot.slane %v1699, 5
        %v2629 = vrot.slane %v1699, 6
        %v2630 = vrot.slane %v1699, 7
        %v2631 = vrot.slane %v1700, 1
        %v2632 = vrot.slane %v1700, 2
        %v2633 = vrot.slane %v1700, 3
        %v2634 = vrot.slane %v1700, 4
        %v2635 = vrot.slane %v1700, 5
        %v2636 = vrot.slane %v1700, 6
        %v2637 = vrot.slane %v1700, 7
        %v2638 = vrot.slane %v1701, 1
        %v2639 = vrot.slane %v1701, 2
        %v2640 = vrot.slane %v1701, 3
        %v2641 = vrot.slane %v1701, 4
        %v2642 = vrot.slane %v1701, 5
        %v2643 = vrot.slane %v1701, 6
        %v2644 = vrot.slane %v1701, 7
        %v2645 = vrot.slane %v1702, 1
        %v2646 = vrot.slane %v1702, 2
        %v2647 = vrot.slane %v1702, 3
        %v2648 = vrot.slane %v1702, 4
        %v2649 = vrot.slane %v1702, 5
        %v2650 = vrot.slane %v1702, 6
        %v2651 = vrot.slane %v1702, 7
        %v2652 = vrot.slane %v1703, 1
        %v2653 = vrot.slane %v1703, 2
        %v2654 = vrot.slane %v1703, 3
        %v2655 = vrot.slane %v1703, 4
        %v2656 = vrot.slane %v1703, 5
        %v2657 = vrot.slane %v1703, 6
        %v2658 = vrot.slane %v1703, 7
        %v2659 = vrot.slane %v1704, 1
        %v2660 = vrot.slane %v1704, 2
        %v2661 = vrot.slane %v1704, 3
        %v2662 = vrot.slane %v1704, 4
        %v2663 = vrot.slane %v1704, 5
        %v2664 = vrot.slane %v1704, 6
        %v2665 = vrot.slane %v1704, 7
        %v3178 = vsub.f32 %v1712, %v1641
        %v3179 = vsub.f32 %v1719, %v2218
        %v3180 = vsub.f32 %v1726, %v2219
        %v3181 = vsub.f32 %v1733, %v2220
        %v3182 = vsub.f32 %v1740, %v2221
        %v3183 = vsub.f32 %v1747, %v2222
        %v3184 = vsub.f32 %v1754, %v2223
        %v3185 = vsub.f32 %v1761, %v2224
        %v3186 = vsub.f32 %v1712, %v1642
        %v3187 = vsub.f32 %v1719, %v2225
        %v3188 = vsub.f32 %v1726, %v2226
        %v3189 = vsub.f32 %v1733, %v2227
        %v3190 = vsub.f32 %v1740, %v2228
        %v3191 = vsub.f32 %v1747, %v2229
        %v3192 = vsub.f32 %v1754, %v2230
        %v3193 = vsub.f32 %v1761, %v2231
        %v3194 = vsub.f32 %v1712, %v1643
        %v3195 = vsub.f32 %v1719, %v2232
        %v3196 = vsub.f32 %v1726, %v2233
        %v3197 = vsub.f32 %v1733, %v2234
        %v3198 = vsub.f32 %v1740, %v2235
        %v3199 = vsub.f32 %v1747, %v2236
        %v3200 = vsub.f32 %v1754, %v2237
        %v3201 = vsub.f32 %v1761, %v2238
        %v3202 = vsub.f32 %v1712, %v1644
        %v3203 = vsub.f32 %v1719, %v2239
        %v3204 = vsub.f32 %v1726, %v2240
        %v3205 = vsub.f32 %v1733, %v2241
        %v3206 = vsub.f32 %v1740, %v2242
        %v3207 = vsub.f32 %v1747, %v2243
        %v3208 = vsub.f32 %v1754, %v2244
        %v3209 = vsub.f32 %v1761, %v2245
        %v3210 = vsub.f32 %v1712, %v1645
        %v3211 = vsub.f32 %v1719, %v2246
        %v3212 = vsub.f32 %v1726, %v2247
        %v3213 = vsub.f32 %v1733, %v2248
        %v3214 = vsub.f32 %v1740, %v2249
        %v3215 = vsub.f32 %v1747, %v2250
        %v3216 = vsub.f32 %v1754, %v2251
        %v3217 = vsub.f32 %v1761, %v2252
        %v3218 = vsub.f32 %v1712, %v1646
        %v3219 = vsub.f32 %v1719, %v2253
        %v3220 = vsub.f32 %v1726, %v2254
        %v3221 = vsub.f32 %v1733, %v2255
        %v3222 = vsub.f32 %v1740, %v2256
        %v3223 = vsub.f32 %v1747, %v2257
        %v3224 = vsub.f32 %v1754, %v2258
        %v3225 = vsub.f32 %v1761, %v2259
        %v3226 = vsub.f32 %v1712, %v1647
        %v3227 = vsub.f32 %v1719, %v2260
        %v3228 = vsub.f32 %v1726, %v2261
        %v3229 = vsub.f32 %v1733, %v2262
        %v3230 = vsub.f32 %v1740, %v2263
        %v3231 = vsub.f32 %v1747, %v2264
        %v3232 = vsub.f32 %v1754, %v2265
        %v3233 = vsub.f32 %v1761, %v2266
        %v3234 = vsub.f32 %v1712, %v1648
        %v3235 = vsub.f32 %v1719, %v2267
        %v3236 = vsub.f32 %v1726, %v2268
        %v3237 = vsub.f32 %v1733, %v2269
        %v3238 = vsub.f32 %v1740, %v2270
        %v3239 = vsub.f32 %v1747, %v2271
        %v3240 = vsub.f32 %v1754, %v2272
        %v3241 = vsub.f32 %v1761, %v2273
        %v3242 = vsub.f32 %v1768, %v1649
        %v3243 = vsub.f32 %v1775, %v2274
        %v3244 = vsub.f32 %v1782, %v2275
        %v3245 = vsub.f32 %v1789, %v2276
        %v3246 = vsub.f32 %v1796, %v2277
        %v3247 = vsub.f32 %v1803, %v2278
        %v3248 = vsub.f32 %v1810, %v2279
        %v3249 = vsub.f32 %v1817, %v2280
        %v3250 = vsub.f32 %v1768, %v1650
        %v3251 = vsub.f32 %v1775, %v2281
        %v3252 = vsub.f32 %v1782, %v2282
        %v3253 = vsub.f32 %v1789, %v2283
        %v3254 = vsub.f32 %v1796, %v2284
        %v3255 = vsub.f32 %v1803, %v2285
        %v3256 = vsub.f32 %v1810, %v2286
        %v3257 = vsub.f32 %v1817, %v2287
        %v3258 = vsub.f32 %v1768, %v1651
        %v3259 = vsub.f32 %v1775, %v2288
        %v3260 = vsub.f32 %v1782, %v2289
        %v3261 = vsub.f32 %v1789, %v2290
        %v3262 = vsub.f32 %v1796, %v2291
        %v3263 = vsub.f32 %v1803, %v2292
        %v3264 = vsub.f32 %v1810, %v2293
        %v3265 = vsub.f32 %v1817, %v2294
        %v3266 = vsub.f32 %v1768, %v1652
        %v3267 = vsub.f32 %v1775, %v2295
        %v3268 = vsub.f32 %v1782, %v2296
        %v3269 = vsub.f32 %v1789, %v2297
        %v3270 = vsub.f32 %v1796, %v2298
        %v3271 = vsub.f32 %v1803, %v2299
        %v3272 = vsub.f32 %v1810, %v2300
        %v3273 = vsub.f32 %v1817, %v2301
        %v3274 = vsub.f32 %v1768, %v1653
        %v3275 = vsub.f32 %v1775, %v2302
        %v3276 = vsub.f32 %v1782, %v2303
        %v3277 = vsub.f32 %v1789, %v2304
        %v3278 = vsub.f32 %v1796, %v2305
        %v3279 = vsub.f32 %v1803, %v2306
        %v3280 = vsub.f32 %v1810, %v2307
        %v3281 = vsub.f32 %v1817, %v2308
        %v3282 = vsub.f32 %v1768, %v1654
        %v3283 = vsub.f32 %v1775, %v2309
        %v3284 = vsub.f32 %v1782, %v2310
        %v3285 = vsub.f32 %v1789, %v2311
        %v3286 = vsub.f32 %v1796, %v2312
        %v3287 = vsub.f32 %v1803, %v2313
        %v3288 = vsub.f32 %v1810, %v2314
        %v3289 = vsub.f32 %v1817, %v2315
        %v3290 = vsub.f32 %v1768, %v1655
        %v3291 = vsub.f32 %v1775, %v2316
        %v3292 = vsub.f32 %v1782, %v2317
        %v3293 = vsub.f32 %v1789, %v2318
        %v3294 = vsub.f32 %v1796, %v2319
        %v3295 = vsub.f32 %v1803, %v2320
        %v3296 = vsub.f32 %v1810, %v2321
        %v3297 = vsub.f32 %v1817, %v2322
        %v3298 = vsub.f32 %v1768, %v1656
        %v3299 = vsub.f32 %v1775, %v2323
        %v3300 = vsub.f32 %v1782, %v2324
        %v3301 = vsub.f32 %v1789, %v2325
        %v3302 = vsub.f32 %v1796, %v2326
        %v3303 = vsub.f32 %v1803, %v2327
        %v3304 = vsub.f32 %v1810, %v2328
        %v3305 = vsub.f32 %v1817, %v2329
        %v3306 = vsub.f32 %v1824, %v1657
        %v3307 = vsub.f32 %v1831, %v2330
        %v3308 = vsub.f32 %v1838, %v2331
        %v3309 = vsub.f32 %v1845, %v2332
        %v3310 = vsub.f32 %v1852, %v2333
        %v3311 = vsub.f32 %v1859, %v2334
        %v3312 = vsub.f32 %v1866, %v2335
        %v3313 = vsub.f32 %v1873, %v2336
        %v3314 = vsub.f32 %v1824, %v1658
        %v3315 = vsub.f32 %v1831, %v2337
        %v3316 = vsub.f32 %v1838, %v2338
        %v3317 = vsub.f32 %v1845, %v2339
        %v3318 = vsub.f32 %v1852, %v2340
        %v3319 = vsub.f32 %v1859, %v2341
        %v3320 = vsub.f32 %v1866, %v2342
        %v3321 = vsub.f32 %v1873, %v2343
        %v3322 = vsub.f32 %v1824, %v1659
        %v3323 = vsub.f32 %v1831, %v2344
        %v3324 = vsub.f32 %v1838, %v2345
        %v3325 = vsub.f32 %v1845, %v2346
        %v3326 = vsub.f32 %v1852, %v2347
        %v3327 = vsub.f32 %v1859, %v2348
        %v3328 = vsub.f32 %v1866, %v2349
        %v3329 = vsub.f32 %v1873, %v2350
        %v3330 = vsub.f32 %v1824, %v1660
        %v3331 = vsub.f32 %v1831, %v2351
        %v3332 = vsub.f32 %v1838, %v2352
        %v3333 = vsub.f32 %v1845, %v2353
        %v3334 = vsub.f32 %v1852, %v2354
        %v3335 = vsub.f32 %v1859, %v2355
        %v3336 = vsub.f32 %v1866, %v2356
        %v3337 = vsub.f32 %v1873, %v2357
        %v3338 = vsub.f32 %v1824, %v1661
        %v3339 = vsub.f32 %v1831, %v2358
        %v3340 = vsub.f32 %v1838, %v2359
        %v3341 = vsub.f32 %v1845, %v2360
        %v3342 = vsub.f32 %v1852, %v2361
        %v3343 = vsub.f32 %v1859, %v2362
        %v3344 = vsub.f32 %v1866, %v2363
        %v3345 = vsub.f32 %v1873, %v2364
        %v3346 = vsub.f32 %v1824, %v1662
        %v3347 = vsub.f32 %v1831, %v2365
        %v3348 = vsub.f32 %v1838, %v2366
        %v3349 = vsub.f32 %v1845, %v2367
        %v3350 = vsub.f32 %v1852, %v2368
        %v3351 = vsub.f32 %v1859, %v2369
        %v3352 = vsub.f32 %v1866, %v2370
        %v3353 = vsub.f32 %v1873, %v2371
        %v3354 = vsub.f32 %v1824, %v1663
        %v3355 = vsub.f32 %v1831, %v2372
        %v3356 = vsub.f32 %v1838, %v2373
        %v3357 = vsub.f32 %v1845, %v2374
        %v3358 = vsub.f32 %v1852, %v2375
        %v3359 = vsub.f32 %v1859, %v2376
        %v3360 = vsub.f32 %v1866, %v2377
        %v3361 = vsub.f32 %v1873, %v2378
        %v3362 = vsub.f32 %v1824, %v1664
        %v3363 = vsub.f32 %v1831, %v2379
        %v3364 = vsub.f32 %v1838, %v2380
        %v3365 = vsub.f32 %v1845, %v2381
        %v3366 = vsub.f32 %v1852, %v2382
        %v3367 = vsub.f32 %v1859, %v2383
        %v3368 = vsub.f32 %v1866, %v2384
        %v3369 = vsub.f32 %v1873, %v2385
        %v3370 = vsub.f32 %v1880, %v1665
        %v3371 = vsub.f32 %v1887, %v2386
        %v3372 = vsub.f32 %v1894, %v2387
        %v3373 = vsub.f32 %v1901, %v2388
        %v3374 = vsub.f32 %v1908, %v2389
        %v3375 = vsub.f32 %v1915, %v2390
        %v3376 = vsub.f32 %v1922, %v2391
        %v3377 = vsub.f32 %v1929, %v2392
        %v3378 = vsub.f32 %v1880, %v1666
        %v3379 = vsub.f32 %v1887, %v2393
        %v3380 = vsub.f32 %v1894, %v2394
        %v3381 = vsub.f32 %v1901, %v2395
        %v3382 = vsub.f32 %v1908, %v2396
        %v3383 = vsub.f32 %v1915, %v2397
        %v3384 = vsub.f32 %v1922, %v2398
        %v3385 = vsub.f32 %v1929, %v2399
        %v3386 = vsub.f32 %v1880, %v1667
        %v3387 = vsub.f32 %v1887, %v2400
        %v3388 = vsub.f32 %v1894, %v2401
        %v3389 = vsub.f32 %v1901, %v2402
        %v3390 = vsub.f32 %v1908, %v2403
        %v3391 = vsub.f32 %v1915, %v2404
        %v3392 = vsub.f32 %v1922, %v2405
        %v3393 = vsub.f32 %v1929, %v2406
        %v3394 = vsub.f32 %v1880, %v1668
        %v3395 = vsub.f32 %v1887, %v2407
        %v3396 = vsub.f32 %v1894, %v2408
        %v3397 = vsub.f32 %v1901, %v2409
        %v3398 = vsub.f32 %v1908, %v2410
        %v3399 = vsub.f32 %v1915, %v2411
        %v3400 = vsub.f32 %v1922, %v2412
        %v3401 = vsub.f32 %v1929, %v2413
        %v3402 = vsub.f32 %v1880, %v1669
        %v3403 = vsub.f32 %v1887, %v2414
        %v3404 = vsub.f32 %v1894, %v2415
        %v3405 = vsub.f32 %v1901, %v2416
        %v3406 = vsub.f32 %v1908, %v2417
        %v3407 = vsub.f32 %v1915, %v2418
        %v3408 = vsub.f32 %v1922, %v2419
        %v3409 = vsub.f32 %v1929, %v2420
        %v3410 = vsub.f32 %v1880, %v1670
        %v3411 = vsub.f32 %v1887, %v2421
        %v3412 = vsub.f32 %v1894, %v2422
        %v3413 = vsub.f32 %v1901, %v2423
        %v3414 = vsub.f32 %v1908, %v2424
        %v3415 = vsub.f32 %v1915, %v2425
        %v3416 = vsub.f32 %v1922, %v2426
        %v3417 = vsub.f32 %v1929, %v2427
        %v3418 = vsub.f32 %v1880, %v1671
        %v3419 = vsub.f32 %v1887, %v2428
        %v3420 = vsub.f32 %v1894, %v2429
        %v3421 = vsub.f32 %v1901, %v2430
        %v3422 = vsub.f32 %v1908, %v2431
        %v3423 = vsub.f32 %v1915, %v2432
        %v3424 = vsub.f32 %v1922, %v2433
        %v3425 = vsub.f32 %v1929, %v2434
        %v3426 = vsub.f32 %v1880, %v1672
        %v3427 = vsub.f32 %v1887, %v2435
        %v3428 = vsub.f32 %v1894, %v2436
        %v3429 = vsub.f32 %v1901, %v2437
        %v3430 = vsub.f32 %v1908, %v2438
        %v3431 = vsub.f32 %v1915, %v2439
        %v3432 = vsub.f32 %v1922, %v2440
        %v3433 = vsub.f32 %v1929, %v2441
        %v3434 = vsub.f32 %v1936, %v1673
        %v3435 = vsub.f32 %v1943, %v2442
        %v3436 = vsub.f32 %v1950, %v2443
        %v3437 = vsub.f32 %v1957, %v2444
        %v3438 = vsub.f32 %v1964, %v2445
        %v3439 = vsub.f32 %v1971, %v2446
        %v3440 = vsub.f32 %v1978, %v2447
        %v3441 = vsub.f32 %v1985, %v2448
        %v3442 = vsub.f32 %v1936, %v1674
        %v3443 = vsub.f32 %v1943, %v2449
        %v3444 = vsub.f32 %v1950, %v2450
        %v3445 = vsub.f32 %v1957, %v2451
        %v3446 = vsub.f32 %v1964, %v2452
        %v3447 = vsub.f32 %v1971, %v2453
        %v3448 = vsub.f32 %v1978, %v2454
        %v3449 = vsub.f32 %v1985, %v2455
        %v3450 = vsub.f32 %v1936, %v1675
        %v3451 = vsub.f32 %v1943, %v2456
        %v3452 = vsub.f32 %v1950, %v2457
        %v3453 = vsub.f32 %v1957, %v2458
        %v3454 = vsub.f32 %v1964, %v2459
        %v3455 = vsub.f32 %v1971, %v2460
        %v3456 = vsub.f32 %v1978, %v2461
        %v3457 = vsub.f32 %v1985, %v2462
        %v3458 = vsub.f32 %v1936, %v1676
        %v3459 = vsub.f32 %v1943, %v2463
        %v3460 = vsub.f32 %v1950, %v2464
        %v3461 = vsub.f32 %v1957, %v2465
        %v3462 = vsub.f32 %v1964, %v2466
        %v3463 = vsub.f32 %v1971, %v2467
        %v3464 = vsub.f32 %v1978, %v2468
        %v3465 = vsub.f32 %v1985, %v2469
        %v3466 = vsub.f32 %v1936, %v1677
        %v3467 = vsub.f32 %v1943, %v2470
        %v3468 = vsub.f32 %v1950, %v2471
        %v3469 = vsub.f32 %v1957, %v2472
        %v3470 = vsub.f32 %v1964, %v2473
        %v3471 = vsub.f32 %v1971, %v2474
        %v3472 = vsub.f32 %v1978, %v2475
        %v3473 = vsub.f32 %v1985, %v2476
        %v3474 = vsub.f32 %v1936, %v1678
        %v3475 = vsub.f32 %v1943, %v2477
        %v3476 = vsub.f32 %v1950, %v2478
        %v3477 = vsub.f32 %v1957, %v2479
        %v3478 = vsub.f32 %v1964, %v2480
        %v3479 = vsub.f32 %v1971, %v2481
        %v3480 = vsub.f32 %v1978, %v2482
        %v3481 = vsub.f32 %v1985, %v2483
        %v3482 = vsub.f32 %v1936, %v1679
        %v3483 = vsub.f32 %v1943, %v2484
        %v3484 = vsub.f32 %v1950, %v2485
        %v3485 = vsub.f32 %v1957, %v2486
        %v3486 = vsub.f32 %v1964, %v2487
        %v3487 = vsub.f32 %v1971, %v2488
        %v3488 = vsub.f32 %v1978, %v2489
        %v3489 = vsub.f32 %v1985, %v2490
        %v3490 = vsub.f32 %v1936, %v1680
        %v3491 = vsub.f32 %v1943, %v2491
        %v3492 = vsub.f32 %v1950, %v2492
        %v3493 = vsub.f32 %v1957, %v2493
        %v3494 = vsub.f32 %v1964, %v2494
        %v3495 = vsub.f32 %v1971, %v2495
        %v3496 = vsub.f32 %v1978, %v2496
        %v3497 = vsub.f32 %v1985, %v2497
        %v3498 = vsub.f32 %v1992, %v1681
        %v3499 = vsub.f32 %v1999, %v2498
        %v3500 = vsub.f32 %v2006, %v2499
        %v3501 = vsub.f32 %v2013, %v2500
        %v3502 = vsub.f32 %v2020, %v2501
        %v3503 = vsub.f32 %v2027, %v2502
        %v3504 = vsub.f32 %v2034, %v2503
        %v3505 = vsub.f32 %v2041, %v2504
        %v3506 = vsub.f32 %v1992, %v1682
        %v3507 = vsub.f32 %v1999, %v2505
        %v3508 = vsub.f32 %v2006, %v2506
        %v3509 = vsub.f32 %v2013, %v2507
        %v3510 = vsub.f32 %v2020, %v2508
        %v3511 = vsub.f32 %v2027, %v2509
        %v3512 = vsub.f32 %v2034, %v2510
        %v3513 = vsub.f32 %v2041, %v2511
        %v3514 = vsub.f32 %v1992, %v1683
        %v3515 = vsub.f32 %v1999, %v2512
        %v3516 = vsub.f32 %v2006, %v2513
        %v3517 = vsub.f32 %v2013, %v2514
        %v3518 = vsub.f32 %v2020, %v2515
        %v3519 = vsub.f32 %v2027, %v2516
        %v3520 = vsub.f32 %v2034, %v2517
        %v3521 = vsub.f32 %v2041, %v2518
        %v3522 = vsub.f32 %v1992, %v1684
        %v3523 = vsub.f32 %v1999, %v2519
        %v3524 = vsub.f32 %v2006, %v2520
        %v3525 = vsub.f32 %v2013, %v2521
        %v3526 = vsub.f32 %v2020, %v2522
        %v3527 = vsub.f32 %v2027, %v2523
        %v3528 = vsub.f32 %v2034, %v2524
        %v3529 = vsub.f32 %v2041, %v2525
        %v3530 = vsub.f32 %v1992, %v1685
        %v3531 = vsub.f32 %v1999, %v2526
        %v3532 = vsub.f32 %v2006, %v2527
        %v3533 = vsub.f32 %v2013, %v2528
        %v3534 = vsub.f32 %v2020, %v2529
        %v3535 = vsub.f32 %v2027, %v2530
        %v3536 = vsub.f32 %v2034, %v2531
        %v3537 = vsub.f32 %v2041, %v2532
        %v3538 = vsub.f32 %v1992, %v1686
        %v3539 = vsub.f32 %v1999, %v2533
        %v3540 = vsub.f32 %v2006, %v2534
        %v3541 = vsub.f32 %v2013, %v2535
        %v3542 = vsub.f32 %v2020, %v2536
        %v3543 = vsub.f32 %v2027, %v2537
        %v3544 = vsub.f32 %v2034, %v2538
        %v3545 = vsub.f32 %v2041, %v2539
        %v3546 = vsub.f32 %v1992, %v1687
        %v3547 = vsub.f32 %v1999, %v2540
        %v3548 = vsub.f32 %v2006, %v2541
        %v3549 = vsub.f32 %v2013, %v2542
        %v3550 = vsub.f32 %v2020, %v2543
        %v3551 = vsub.f32 %v2027, %v2544
        %v3552 = vsub.f32 %v2034, %v2545
        %v3553 = vsub.f32 %v2041, %v2546
        %v3554 = vsub.f32 %v1992, %v1688
        %v3555 = vsub.f32 %v1999, %v2547
        %v3556 = vsub.f32 %v2006, %v2548
        %v3557 = vsub.f32 %v2013, %v2549
        %v3558 = vsub.f32 %v2020, %v2550
        %v3559 = vsub.f32 %v2027, %v2551
        %v3560 = vsub.f32 %v2034, %v2552
        %v3561 = vsub.f32 %v2041, %v2553
        %v3562 = vsub.f32 %v2048, %v1689
        %v3563 = vsub.f32 %v2055, %v2554
        %v3564 = vsub.f32 %v2062, %v2555
        %v3565 = vsub.f32 %v2069, %v2556
        %v3566 = vsub.f32 %v2076, %v2557
        %v3567 = vsub.f32 %v2083, %v2558
        %v3568 = vsub.f32 %v2090, %v2559
        %v3569 = vsub.f32 %v2097, %v2560
        %v3570 = vsub.f32 %v2048, %v1690
        %v3571 = vsub.f32 %v2055, %v2561
        %v3572 = vsub.f32 %v2062, %v2562
        %v3573 = vsub.f32 %v2069, %v2563
        %v3574 = vsub.f32 %v2076, %v2564
        %v3575 = vsub.f32 %v2083, %v2565
        %v3576 = vsub.f32 %v2090, %v2566
        %v3577 = vsub.f32 %v2097, %v2567
        %v3578 = vsub.f32 %v2048, %v1691
        %v3579 = vsub.f32 %v2055, %v2568
        %v3580 = vsub.f32 %v2062, %v2569
        %v3581 = vsub.f32 %v2069, %v2570
        %v3582 = vsub.f32 %v2076, %v2571
        %v3583 = vsub.f32 %v2083, %v2572
        %v3584 = vsub.f32 %v2090, %v2573
        %v3585 = vsub.f32 %v2097, %v2574
        %v3586 = vsub.f32 %v2048, %v1692
        %v3587 = vsub.f32 %v2055, %v2575
        %v3588 = vsub.f32 %v2062, %v2576
        %v3589 = vsub.f32 %v2069, %v2577
        %v3590 = vsub.f32 %v2076, %v2578
        %v3591 = vsub.f32 %v2083, %v2579
        %v3592 = vsub.f32 %v2090, %v2580
        %v3593 = vsub.f32 %v2097, %v2581
        %v3594 = vsub.f32 %v2048, %v1693
        %v3595 = vsub.f32 %v2055, %v2582
        %v3596 = vsub.f32 %v2062, %v2583
        %v3597 = vsub.f32 %v2069, %v2584
        %v3598 = vsub.f32 %v2076, %v2585
        %v3599 = vsub.f32 %v2083, %v2586
        %v3600 = vsub.f32 %v2090, %v2587
        %v3601 = vsub.f32 %v2097, %v2588
        %v3602 = vsub.f32 %v2048, %v1694
        %v3603 = vsub.f32 %v2055, %v2589
        %v3604 = vsub.f32 %v2062, %v2590
        %v3605 = vsub.f32 %v2069, %v2591
        %v3606 = vsub.f32 %v2076, %v2592
        %v3607 = vsub.f32 %v2083, %v2593
        %v3608 = vsub.f32 %v2090, %v2594
        %v3609 = vsub.f32 %v2097, %v2595
        %v3610 = vsub.f32 %v2048, %v1695
        %v3611 = vsub.f32 %v2055, %v2596
        %v3612 = vsub.f32 %v2062, %v2597
        %v3613 = vsub.f32 %v2069, %v2598
        %v3614 = vsub.f32 %v2076, %v2599
        %v3615 = vsub.f32 %v2083, %v2600
        %v3616 = vsub.f32 %v2090, %v2601
        %v3617 = vsub.f32 %v2097, %v2602
        %v3618 = vsub.f32 %v2048, %v1696
        %v3619 = vsub.f32 %v2055, %v2603
        %v3620 = vsub.f32 %v2062, %v2604
        %v3621 = vsub.f32 %v2069, %v2605
        %v3622 = vsub.f32 %v2076, %v2606
        %v3623 = vsub.f32 %v2083, %v2607
        %v3624 = vsub.f32 %v2090, %v2608
        %v3625 = vsub.f32 %v2097, %v2609
        %v3626 = vsub.f32 %v2104, %v1697
        %v3627 = vsub.f32 %v2111, %v2610
        %v3628 = vsub.f32 %v2118, %v2611
        %v3629 = vsub.f32 %v2125, %v2612
        %v3630 = vsub.f32 %v2132, %v2613
        %v3631 = vsub.f32 %v2139, %v2614
        %v3632 = vsub.f32 %v2146, %v2615
        %v3633 = vsub.f32 %v2153, %v2616
        %v3634 = vsub.f32 %v2104, %v1698
        %v3635 = vsub.f32 %v2111, %v2617
        %v3636 = vsub.f32 %v2118, %v2618
        %v3637 = vsub.f32 %v2125, %v2619
        %v3638 = vsub.f32 %v2132, %v2620
        %v3639 = vsub.f32 %v2139, %v2621
        %v3640 = vsub.f32 %v2146, %v2622
        %v3641 = vsub.f32 %v2153, %v2623
        %v3642 = vsub.f32 %v2104, %v1699
        %v3643 = vsub.f32 %v2111, %v2624
        %v3644 = vsub.f32 %v2118, %v2625
        %v3645 = vsub.f32 %v2125, %v2626
        %v3646 = vsub.f32 %v2132, %v2627
        %v3647 = vsub.f32 %v2139, %v2628
        %v3648 = vsub.f32 %v2146, %v2629
        %v3649 = vsub.f32 %v2153, %v2630
        %v3650 = vsub.f32 %v2104, %v1700
        %v3651 = vsub.f32 %v2111, %v2631
        %v3652 = vsub.f32 %v2118, %v2632
        %v3653 = vsub.f32 %v2125, %v2633
        %v3654 = vsub.f32 %v2132, %v2634
        %v3655 = vsub.f32 %v2139, %v2635
        %v3656 = vsub.f32 %v2146, %v2636
        %v3657 = vsub.f32 %v2153, %v2637
        %v3658 = vsub.f32 %v2104, %v1701
        %v3659 = vsub.f32 %v2111, %v2638
        %v3660 = vsub.f32 %v2118, %v2639
        %v3661 = vsub.f32 %v2125, %v2640
        %v3662 = vsub.f32 %v2132, %v2641
        %v3663 = vsub.f32 %v2139, %v2642
        %v3664 = vsub.f32 %v2146, %v2643
        %v3665 = vsub.f32 %v2153, %v2644
        %v3666 = vsub.f32 %v2104, %v1702
        %v3667 = vsub.f32 %v2111, %v2645
        %v3668 = vsub.f32 %v2118, %v2646
        %v3669 = vsub.f32 %v2125, %v2647
        %v3670 = vsub.f32 %v2132, %v2648
        %v3671 = vsub.f32 %v2139, %v2649
        %v3672 = vsub.f32 %v2146, %v2650
        %v3673 = vsub.f32 %v2153, %v2651
        %v3674 = vsub.f32 %v2104, %v1703
        %v3675 = vsub.f32 %v2111, %v2652
        %v3676 = vsub.f32 %v2118, %v2653
        %v3677 = vsub.f32 %v2125, %v2654
        %v3678 = vsub.f32 %v2132, %v2655
        %v3679 = vsub.f32 %v2139, %v2656
        %v3680 = vsub.f32 %v2146, %v2657
        %v3681 = vsub.f32 %v2153, %v2658
        %v3682 = vsub.f32 %v2104, %v1704
        %v3683 = vsub.f32 %v2111, %v2659
        %v3684 = vsub.f32 %v2118, %v2660
        %v3685 = vsub.f32 %v2125, %v2661
        %v3686 = vsub.f32 %v2132, %v2662
        %v3687 = vsub.f32 %v2139, %v2663
        %v3688 = vsub.f32 %v2146, %v2664
        %v3689 = vsub.f32 %v2153, %v2665
        %v3690 = vpack.c.bf16 %v3178, %v3178
        %v3691 = vpack.c.bf16 %v3179, %v3179
        %v3692 = vpack.c.bf16 %v3180, %v3180
        %v3693 = vpack.c.bf16 %v3181, %v3181
        %v3694 = vpack.c.bf16 %v3182, %v3182
        %v3695 = vpack.c.bf16 %v3183, %v3183
        %v3696 = vpack.c.bf16 %v3184, %v3184
        %v3697 = vpack.c.bf16 %v3185, %v3185
        %v3698 = vpack.c.bf16 %v3186, %v3186
        %v3699 = vpack.c.bf16 %v3187, %v3187
        %v3700 = vpack.c.bf16 %v3188, %v3188
        %v3701 = vpack.c.bf16 %v3189, %v3189
        %v3702 = vpack.c.bf16 %v3190, %v3190
        %v3703 = vpack.c.bf16 %v3191, %v3191
        %v3704 = vpack.c.bf16 %v3192, %v3192
        %v3705 = vpack.c.bf16 %v3193, %v3193
        %v3706 = vpack.c.bf16 %v3194, %v3194
        %v3707 = vpack.c.bf16 %v3195, %v3195
        %v3708 = vpack.c.bf16 %v3196, %v3196
        %v3709 = vpack.c.bf16 %v3197, %v3197
        %v3710 = vpack.c.bf16 %v3198, %v3198
        %v3711 = vpack.c.bf16 %v3199, %v3199
        %v3712 = vpack.c.bf16 %v3200, %v3200
        %v3713 = vpack.c.bf16 %v3201, %v3201
        %v3714 = vpack.c.bf16 %v3202, %v3202
        %v3715 = vpack.c.bf16 %v3203, %v3203
        %v3716 = vpack.c.bf16 %v3204, %v3204
        %v3717 = vpack.c.bf16 %v3205, %v3205
        %v3718 = vpack.c.bf16 %v3206, %v3206
        %v3719 = vpack.c.bf16 %v3207, %v3207
        %v3720 = vpack.c.bf16 %v3208, %v3208
        %v3721 = vpack.c.bf16 %v3209, %v3209
        %v3722 = vpack.c.bf16 %v3210, %v3210
        %v3723 = vpack.c.bf16 %v3211, %v3211
        %v3724 = vpack.c.bf16 %v3212, %v3212
        %v3725 = vpack.c.bf16 %v3213, %v3213
        %v3726 = vpack.c.bf16 %v3214, %v3214
        %v3727 = vpack.c.bf16 %v3215, %v3215
        %v3728 = vpack.c.bf16 %v3216, %v3216
        %v3729 = vpack.c.bf16 %v3217, %v3217
        %v3730 = vpack.c.bf16 %v3218, %v3218
        %v3731 = vpack.c.bf16 %v3219, %v3219
        %v3732 = vpack.c.bf16 %v3220, %v3220
        %v3733 = vpack.c.bf16 %v3221, %v3221
        %v3734 = vpack.c.bf16 %v3222, %v3222
        %v3735 = vpack.c.bf16 %v3223, %v3223
        %v3736 = vpack.c.bf16 %v3224, %v3224
        %v3737 = vpack.c.bf16 %v3225, %v3225
        %v3738 = vpack.c.bf16 %v3226, %v3226
        %v3739 = vpack.c.bf16 %v3227, %v3227
        %v3740 = vpack.c.bf16 %v3228, %v3228
        %v3741 = vpack.c.bf16 %v3229, %v3229
        %v3742 = vpack.c.bf16 %v3230, %v3230
        %v3743 = vpack.c.bf16 %v3231, %v3231
        %v3744 = vpack.c.bf16 %v3232, %v3232
        %v3745 = vpack.c.bf16 %v3233, %v3233
        %v3746 = vpack.c.bf16 %v3234, %v3234
        %v3747 = vpack.c.bf16 %v3235, %v3235
        %v3748 = vpack.c.bf16 %v3236, %v3236
        %v3749 = vpack.c.bf16 %v3237, %v3237
        %v3750 = vpack.c.bf16 %v3238, %v3238
        %v3751 = vpack.c.bf16 %v3239, %v3239
        %v3752 = vpack.c.bf16 %v3240, %v3240
        %v3753 = vpack.c.bf16 %v3241, %v3241
        %v3754 = vpack.c.bf16 %v3242, %v3242
        %v3755 = vpack.c.bf16 %v3243, %v3243
        %v3756 = vpack.c.bf16 %v3244, %v3244
        %v3757 = vpack.c.bf16 %v3245, %v3245
        %v3758 = vpack.c.bf16 %v3246, %v3246
        %v3759 = vpack.c.bf16 %v3247, %v3247
        %v3760 = vpack.c.bf16 %v3248, %v3248
        %v3761 = vpack.c.bf16 %v3249, %v3249
        %v3762 = vpack.c.bf16 %v3250, %v3250
        %v3763 = vpack.c.bf16 %v3251, %v3251
        %v3764 = vpack.c.bf16 %v3252, %v3252
        %v3765 = vpack.c.bf16 %v3253, %v3253
        %v3766 = vpack.c.bf16 %v3254, %v3254
        %v3767 = vpack.c.bf16 %v3255, %v3255
        %v3768 = vpack.c.bf16 %v3256, %v3256
        %v3769 = vpack.c.bf16 %v3257, %v3257
        %v3770 = vpack.c.bf16 %v3258, %v3258
        %v3771 = vpack.c.bf16 %v3259, %v3259
        %v3772 = vpack.c.bf16 %v3260, %v3260
        %v3773 = vpack.c.bf16 %v3261, %v3261
        %v3774 = vpack.c.bf16 %v3262, %v3262
        %v3775 = vpack.c.bf16 %v3263, %v3263
        %v3776 = vpack.c.bf16 %v3264, %v3264
        %v3777 = vpack.c.bf16 %v3265, %v3265
        %v3778 = vpack.c.bf16 %v3266, %v3266
        %v3779 = vpack.c.bf16 %v3267, %v3267
        %v3780 = vpack.c.bf16 %v3268, %v3268
        %v3781 = vpack.c.bf16 %v3269, %v3269
        %v3782 = vpack.c.bf16 %v3270, %v3270
        %v3783 = vpack.c.bf16 %v3271, %v3271
        %v3784 = vpack.c.bf16 %v3272, %v3272
        %v3785 = vpack.c.bf16 %v3273, %v3273
        %v3786 = vpack.c.bf16 %v3274, %v3274
        %v3787 = vpack.c.bf16 %v3275, %v3275
        %v3788 = vpack.c.bf16 %v3276, %v3276
        %v3789 = vpack.c.bf16 %v3277, %v3277
        %v3790 = vpack.c.bf16 %v3278, %v3278
        %v3791 = vpack.c.bf16 %v3279, %v3279
        %v3792 = vpack.c.bf16 %v3280, %v3280
        %v3793 = vpack.c.bf16 %v3281, %v3281
        %v3794 = vpack.c.bf16 %v3282, %v3282
        %v3795 = vpack.c.bf16 %v3283, %v3283
        %v3796 = vpack.c.bf16 %v3284, %v3284
        %v3797 = vpack.c.bf16 %v3285, %v3285
        %v3798 = vpack.c.bf16 %v3286, %v3286
        %v3799 = vpack.c.bf16 %v3287, %v3287
        %v3800 = vpack.c.bf16 %v3288, %v3288
        %v3801 = vpack.c.bf16 %v3289, %v3289
        %v3802 = vpack.c.bf16 %v3290, %v3290
        %v3803 = vpack.c.bf16 %v3291, %v3291
        %v3804 = vpack.c.bf16 %v3292, %v3292
        %v3805 = vpack.c.bf16 %v3293, %v3293
        %v3806 = vpack.c.bf16 %v3294, %v3294
        %v3807 = vpack.c.bf16 %v3295, %v3295
        %v3808 = vpack.c.bf16 %v3296, %v3296
        %v3809 = vpack.c.bf16 %v3297, %v3297
        %v3810 = vpack.c.bf16 %v3298, %v3298
        %v3811 = vpack.c.bf16 %v3299, %v3299
        %v3812 = vpack.c.bf16 %v3300, %v3300
        %v3813 = vpack.c.bf16 %v3301, %v3301
        %v3814 = vpack.c.bf16 %v3302, %v3302
        %v3815 = vpack.c.bf16 %v3303, %v3303
        %v3816 = vpack.c.bf16 %v3304, %v3304
        %v3817 = vpack.c.bf16 %v3305, %v3305
        %v3818 = vpack.c.bf16 %v3306, %v3306
        %v3819 = vpack.c.bf16 %v3307, %v3307
        %v3820 = vpack.c.bf16 %v3308, %v3308
        %v3821 = vpack.c.bf16 %v3309, %v3309
        %v3822 = vpack.c.bf16 %v3310, %v3310
        %v3823 = vpack.c.bf16 %v3311, %v3311
        %v3824 = vpack.c.bf16 %v3312, %v3312
        %v3825 = vpack.c.bf16 %v3313, %v3313
        %v3826 = vpack.c.bf16 %v3314, %v3314
        %v3827 = vpack.c.bf16 %v3315, %v3315
        %v3828 = vpack.c.bf16 %v3316, %v3316
        %v3829 = vpack.c.bf16 %v3317, %v3317
        %v3830 = vpack.c.bf16 %v3318, %v3318
        %v3831 = vpack.c.bf16 %v3319, %v3319
        %v3832 = vpack.c.bf16 %v3320, %v3320
        %v3833 = vpack.c.bf16 %v3321, %v3321
        %v3834 = vpack.c.bf16 %v3322, %v3322
        %v3835 = vpack.c.bf16 %v3323, %v3323
        %v3836 = vpack.c.bf16 %v3324, %v3324
        %v3837 = vpack.c.bf16 %v3325, %v3325
        %v3838 = vpack.c.bf16 %v3326, %v3326
        %v3839 = vpack.c.bf16 %v3327, %v3327
        %v3840 = vpack.c.bf16 %v3328, %v3328
        %v3841 = vpack.c.bf16 %v3329, %v3329
        %v3842 = vpack.c.bf16 %v3330, %v3330
        %v3843 = vpack.c.bf16 %v3331, %v3331
        %v3844 = vpack.c.bf16 %v3332, %v3332
        %v3845 = vpack.c.bf16 %v3333, %v3333
        %v3846 = vpack.c.bf16 %v3334, %v3334
        %v3847 = vpack.c.bf16 %v3335, %v3335
        %v3848 = vpack.c.bf16 %v3336, %v3336
        %v3849 = vpack.c.bf16 %v3337, %v3337
        %v3850 = vpack.c.bf16 %v3338, %v3338
        %v3851 = vpack.c.bf16 %v3339, %v3339
        %v3852 = vpack.c.bf16 %v3340, %v3340
        %v3853 = vpack.c.bf16 %v3341, %v3341
        %v3854 = vpack.c.bf16 %v3342, %v3342
        %v3855 = vpack.c.bf16 %v3343, %v3343
        %v3856 = vpack.c.bf16 %v3344, %v3344
        %v3857 = vpack.c.bf16 %v3345, %v3345
        %v3858 = vpack.c.bf16 %v3346, %v3346
        %v3859 = vpack.c.bf16 %v3347, %v3347
        %v3860 = vpack.c.bf16 %v3348, %v3348
        %v3861 = vpack.c.bf16 %v3349, %v3349
        %v3862 = vpack.c.bf16 %v3350, %v3350
        %v3863 = vpack.c.bf16 %v3351, %v3351
        %v3864 = vpack.c.bf16 %v3352, %v3352
        %v3865 = vpack.c.bf16 %v3353, %v3353
        %v3866 = vpack.c.bf16 %v3354, %v3354
        %v3867 = vpack.c.bf16 %v3355, %v3355
        %v3868 = vpack.c.bf16 %v3356, %v3356
        %v3869 = vpack.c.bf16 %v3357, %v3357
        %v3870 = vpack.c.bf16 %v3358, %v3358
        %v3871 = vpack.c.bf16 %v3359, %v3359
        %v3872 = vpack.c.bf16 %v3360, %v3360
        %v3873 = vpack.c.bf16 %v3361, %v3361
        %v3874 = vpack.c.bf16 %v3362, %v3362
        %v3875 = vpack.c.bf16 %v3363, %v3363
        %v3876 = vpack.c.bf16 %v3364, %v3364
        %v3877 = vpack.c.bf16 %v3365, %v3365
        %v3878 = vpack.c.bf16 %v3366, %v3366
        %v3879 = vpack.c.bf16 %v3367, %v3367
        %v3880 = vpack.c.bf16 %v3368, %v3368
        %v3881 = vpack.c.bf16 %v3369, %v3369
        %v3882 = vpack.c.bf16 %v3370, %v3370
        %v3883 = vpack.c.bf16 %v3371, %v3371
        %v3884 = vpack.c.bf16 %v3372, %v3372
        %v3885 = vpack.c.bf16 %v3373, %v3373
        %v3886 = vpack.c.bf16 %v3374, %v3374
        %v3887 = vpack.c.bf16 %v3375, %v3375
        %v3888 = vpack.c.bf16 %v3376, %v3376
        %v3889 = vpack.c.bf16 %v3377, %v3377
        %v3890 = vpack.c.bf16 %v3378, %v3378
        %v3891 = vpack.c.bf16 %v3379, %v3379
        %v3892 = vpack.c.bf16 %v3380, %v3380
        %v3893 = vpack.c.bf16 %v3381, %v3381
        %v3894 = vpack.c.bf16 %v3382, %v3382
        %v3895 = vpack.c.bf16 %v3383, %v3383
        %v3896 = vpack.c.bf16 %v3384, %v3384
        %v3897 = vpack.c.bf16 %v3385, %v3385
        %v3898 = vpack.c.bf16 %v3386, %v3386
        %v3899 = vpack.c.bf16 %v3387, %v3387
        %v3900 = vpack.c.bf16 %v3388, %v3388
        %v3901 = vpack.c.bf16 %v3389, %v3389
        %v3902 = vpack.c.bf16 %v3390, %v3390
        %v3903 = vpack.c.bf16 %v3391, %v3391
        %v3904 = vpack.c.bf16 %v3392, %v3392
        %v3905 = vpack.c.bf16 %v3393, %v3393
        %v3906 = vpack.c.bf16 %v3394, %v3394
        %v3907 = vpack.c.bf16 %v3395, %v3395
        %v3908 = vpack.c.bf16 %v3396, %v3396
        %v3909 = vpack.c.bf16 %v3397, %v3397
        %v3910 = vpack.c.bf16 %v3398, %v3398
        %v3911 = vpack.c.bf16 %v3399, %v3399
        %v3912 = vpack.c.bf16 %v3400, %v3400
        %v3913 = vpack.c.bf16 %v3401, %v3401
        %v3914 = vpack.c.bf16 %v3402, %v3402
        %v3915 = vpack.c.bf16 %v3403, %v3403
        %v3916 = vpack.c.bf16 %v3404, %v3404
        %v3917 = vpack.c.bf16 %v3405, %v3405
        %v3918 = vpack.c.bf16 %v3406, %v3406
        %v3919 = vpack.c.bf16 %v3407, %v3407
        %v3920 = vpack.c.bf16 %v3408, %v3408
        %v3921 = vpack.c.bf16 %v3409, %v3409
        %v3922 = vpack.c.bf16 %v3410, %v3410
        %v3923 = vpack.c.bf16 %v3411, %v3411
        %v3924 = vpack.c.bf16 %v3412, %v3412
        %v3925 = vpack.c.bf16 %v3413, %v3413
        %v3926 = vpack.c.bf16 %v3414, %v3414
        %v3927 = vpack.c.bf16 %v3415, %v3415
        %v3928 = vpack.c.bf16 %v3416, %v3416
        %v3929 = vpack.c.bf16 %v3417, %v3417
        %v3930 = vpack.c.bf16 %v3418, %v3418
        %v3931 = vpack.c.bf16 %v3419, %v3419
        %v3932 = vpack.c.bf16 %v3420, %v3420
        %v3933 = vpack.c.bf16 %v3421, %v3421
        %v3934 = vpack.c.bf16 %v3422, %v3422
        %v3935 = vpack.c.bf16 %v3423, %v3423
        %v3936 = vpack.c.bf16 %v3424, %v3424
        %v3937 = vpack.c.bf16 %v3425, %v3425
        %v3938 = vpack.c.bf16 %v3426, %v3426
        %v3939 = vpack.c.bf16 %v3427, %v3427
        %v3940 = vpack.c.bf16 %v3428, %v3428
        %v3941 = vpack.c.bf16 %v3429, %v3429
        %v3942 = vpack.c.bf16 %v3430, %v3430
        %v3943 = vpack.c.bf16 %v3431, %v3431
        %v3944 = vpack.c.bf16 %v3432, %v3432
        %v3945 = vpack.c.bf16 %v3433, %v3433
        %v3946 = vpack.c.bf16 %v3434, %v3434
        %v3947 = vpack.c.bf16 %v3435, %v3435
        %v3948 = vpack.c.bf16 %v3436, %v3436
        %v3949 = vpack.c.bf16 %v3437, %v3437
        %v3950 = vpack.c.bf16 %v3438, %v3438
        %v3951 = vpack.c.bf16 %v3439, %v3439
        %v3952 = vpack.c.bf16 %v3440, %v3440
        %v3953 = vpack.c.bf16 %v3441, %v3441
        %v3954 = vpack.c.bf16 %v3442, %v3442
        %v3955 = vpack.c.bf16 %v3443, %v3443
        %v3956 = vpack.c.bf16 %v3444, %v3444
        %v3957 = vpack.c.bf16 %v3445, %v3445
        %v3958 = vpack.c.bf16 %v3446, %v3446
        %v3959 = vpack.c.bf16 %v3447, %v3447
        %v3960 = vpack.c.bf16 %v3448, %v3448
        %v3961 = vpack.c.bf16 %v3449, %v3449
        %v3962 = vpack.c.bf16 %v3450, %v3450
        %v3963 = vpack.c.bf16 %v3451, %v3451
        %v3964 = vpack.c.bf16 %v3452, %v3452
        %v3965 = vpack.c.bf16 %v3453, %v3453
        %v3966 = vpack.c.bf16 %v3454, %v3454
        %v3967 = vpack.c.bf16 %v3455, %v3455
        %v3968 = vpack.c.bf16 %v3456, %v3456
        %v3969 = vpack.c.bf16 %v3457, %v3457
        %v3970 = vpack.c.bf16 %v3458, %v3458
        %v3971 = vpack.c.bf16 %v3459, %v3459
        %v3972 = vpack.c.bf16 %v3460, %v3460
        %v3973 = vpack.c.bf16 %v3461, %v3461
        %v3974 = vpack.c.bf16 %v3462, %v3462
        %v3975 = vpack.c.bf16 %v3463, %v3463
        %v3976 = vpack.c.bf16 %v3464, %v3464
        %v3977 = vpack.c.bf16 %v3465, %v3465
        %v3978 = vpack.c.bf16 %v3466, %v3466
        %v3979 = vpack.c.bf16 %v3467, %v3467
        %v3980 = vpack.c.bf16 %v3468, %v3468
        %v3981 = vpack.c.bf16 %v3469, %v3469
        %v3982 = vpack.c.bf16 %v3470, %v3470
        %v3983 = vpack.c.bf16 %v3471, %v3471
        %v3984 = vpack.c.bf16 %v3472, %v3472
        %v3985 = vpack.c.bf16 %v3473, %v3473
        %v3986 = vpack.c.bf16 %v3474, %v3474
        %v3987 = vpack.c.bf16 %v3475, %v3475
        %v3988 = vpack.c.bf16 %v3476, %v3476
        %v3989 = vpack.c.bf16 %v3477, %v3477
        %v3990 = vpack.c.bf16 %v3478, %v3478
        %v3991 = vpack.c.bf16 %v3479, %v3479
        %v3992 = vpack.c.bf16 %v3480, %v3480
        %v3993 = vpack.c.bf16 %v3481, %v3481
        %v3994 = vpack.c.bf16 %v3482, %v3482
        %v3995 = vpack.c.bf16 %v3483, %v3483
        %v3996 = vpack.c.bf16 %v3484, %v3484
        %v3997 = vpack.c.bf16 %v3485, %v3485
        %v3998 = vpack.c.bf16 %v3486, %v3486
        %v3999 = vpack.c.bf16 %v3487, %v3487
        %v4000 = vpack.c.bf16 %v3488, %v3488
        %v4001 = vpack.c.bf16 %v3489, %v3489
        %v4002 = vpack.c.bf16 %v3490, %v3490
        %v4003 = vpack.c.bf16 %v3491, %v3491
        %v4004 = vpack.c.bf16 %v3492, %v3492
        %v4005 = vpack.c.bf16 %v3493, %v3493
        %v4006 = vpack.c.bf16 %v3494, %v3494
        %v4007 = vpack.c.bf16 %v3495, %v3495
        %v4008 = vpack.c.bf16 %v3496, %v3496
        %v4009 = vpack.c.bf16 %v3497, %v3497
        %v4010 = vpack.c.bf16 %v3498, %v3498
        %v4011 = vpack.c.bf16 %v3499, %v3499
        %v4012 = vpack.c.bf16 %v3500, %v3500
        %v4013 = vpack.c.bf16 %v3501, %v3501
        %v4014 = vpack.c.bf16 %v3502, %v3502
        %v4015 = vpack.c.bf16 %v3503, %v3503
        %v4016 = vpack.c.bf16 %v3504, %v3504
        %v4017 = vpack.c.bf16 %v3505, %v3505
        %v4018 = vpack.c.bf16 %v3506, %v3506
        %v4019 = vpack.c.bf16 %v3507, %v3507
        %v4020 = vpack.c.bf16 %v3508, %v3508
        %v4021 = vpack.c.bf16 %v3509, %v3509
        %v4022 = vpack.c.bf16 %v3510, %v3510
        %v4023 = vpack.c.bf16 %v3511, %v3511
        %v4024 = vpack.c.bf16 %v3512, %v3512
        %v4025 = vpack.c.bf16 %v3513, %v3513
        %v4026 = vpack.c.bf16 %v3514, %v3514
        %v4027 = vpack.c.bf16 %v3515, %v3515
        %v4028 = vpack.c.bf16 %v3516, %v3516
        %v4029 = vpack.c.bf16 %v3517, %v3517
        %v4030 = vpack.c.bf16 %v3518, %v3518
        %v4031 = vpack.c.bf16 %v3519, %v3519
        %v4032 = vpack.c.bf16 %v3520, %v3520
        %v4033 = vpack.c.bf16 %v3521, %v3521
        %v4034 = vpack.c.bf16 %v3522, %v3522
        %v4035 = vpack.c.bf16 %v3523, %v3523
        %v4036 = vpack.c.bf16 %v3524, %v3524
        %v4037 = vpack.c.bf16 %v3525, %v3525
        %v4038 = vpack.c.bf16 %v3526, %v3526
        %v4039 = vpack.c.bf16 %v3527, %v3527
        %v4040 = vpack.c.bf16 %v3528, %v3528
        %v4041 = vpack.c.bf16 %v3529, %v3529
        %v4042 = vpack.c.bf16 %v3530, %v3530
        %v4043 = vpack.c.bf16 %v3531, %v3531
        %v4044 = vpack.c.bf16 %v3532, %v3532
        %v4045 = vpack.c.bf16 %v3533, %v3533
        %v4046 = vpack.c.bf16 %v3534, %v3534
        %v4047 = vpack.c.bf16 %v3535, %v3535
        %v4048 = vpack.c.bf16 %v3536, %v3536
        %v4049 = vpack.c.bf16 %v3537, %v3537
        %v4050 = vpack.c.bf16 %v3538, %v3538
        %v4051 = vpack.c.bf16 %v3539, %v3539
        %v4052 = vpack.c.bf16 %v3540, %v3540
        %v4053 = vpack.c.bf16 %v3541, %v3541
        %v4054 = vpack.c.bf16 %v3542, %v3542
        %v4055 = vpack.c.bf16 %v3543, %v3543
        %v4056 = vpack.c.bf16 %v3544, %v3544
        %v4057 = vpack.c.bf16 %v3545, %v3545
        %v4058 = vpack.c.bf16 %v3546, %v3546
        %v4059 = vpack.c.bf16 %v3547, %v3547
        %v4060 = vpack.c.bf16 %v3548, %v3548
        %v4061 = vpack.c.bf16 %v3549, %v3549
        %v4062 = vpack.c.bf16 %v3550, %v3550
        %v4063 = vpack.c.bf16 %v3551, %v3551
        %v4064 = vpack.c.bf16 %v3552, %v3552
        %v4065 = vpack.c.bf16 %v3553, %v3553
        %v4066 = vpack.c.bf16 %v3554, %v3554
        %v4067 = vpack.c.bf16 %v3555, %v3555
        %v4068 = vpack.c.bf16 %v3556, %v3556
        %v4069 = vpack.c.bf16 %v3557, %v3557
        %v4070 = vpack.c.bf16 %v3558, %v3558
        %v4071 = vpack.c.bf16 %v3559, %v3559
        %v4072 = vpack.c.bf16 %v3560, %v3560
        %v4073 = vpack.c.bf16 %v3561, %v3561
        %v4074 = vpack.c.bf16 %v3562, %v3562
        %v4075 = vpack.c.bf16 %v3563, %v3563
        %v4076 = vpack.c.bf16 %v3564, %v3564
        %v4077 = vpack.c.bf16 %v3565, %v3565
        %v4078 = vpack.c.bf16 %v3566, %v3566
        %v4079 = vpack.c.bf16 %v3567, %v3567
        %v4080 = vpack.c.bf16 %v3568, %v3568
        %v4081 = vpack.c.bf16 %v3569, %v3569
        %v4082 = vpack.c.bf16 %v3570, %v3570
        %v4083 = vpack.c.bf16 %v3571, %v3571
        %v4084 = vpack.c.bf16 %v3572, %v3572
        %v4085 = vpack.c.bf16 %v3573, %v3573
        %v4086 = vpack.c.bf16 %v3574, %v3574
        %v4087 = vpack.c.bf16 %v3575, %v3575
        %v4088 = vpack.c.bf16 %v3576, %v3576
        %v4089 = vpack.c.bf16 %v3577, %v3577
        %v4090 = vpack.c.bf16 %v3578, %v3578
        %v4091 = vpack.c.bf16 %v3579, %v3579
        %v4092 = vpack.c.bf16 %v3580, %v3580
        %v4093 = vpack.c.bf16 %v3581, %v3581
        %v4094 = vpack.c.bf16 %v3582, %v3582
        %v4095 = vpack.c.bf16 %v3583, %v3583
        %v4096 = vpack.c.bf16 %v3584, %v3584
        %v4097 = vpack.c.bf16 %v3585, %v3585
        %v4098 = vpack.c.bf16 %v3586, %v3586
        %v4099 = vpack.c.bf16 %v3587, %v3587
        %v4100 = vpack.c.bf16 %v3588, %v3588
        %v4101 = vpack.c.bf16 %v3589, %v3589
        %v4102 = vpack.c.bf16 %v3590, %v3590
        %v4103 = vpack.c.bf16 %v3591, %v3591
        %v4104 = vpack.c.bf16 %v3592, %v3592
        %v4105 = vpack.c.bf16 %v3593, %v3593
        %v4106 = vpack.c.bf16 %v3594, %v3594
        %v4107 = vpack.c.bf16 %v3595, %v3595
        %v4108 = vpack.c.bf16 %v3596, %v3596
        %v4109 = vpack.c.bf16 %v3597, %v3597
        %v4110 = vpack.c.bf16 %v3598, %v3598
        %v4111 = vpack.c.bf16 %v3599, %v3599
        %v4112 = vpack.c.bf16 %v3600, %v3600
        %v4113 = vpack.c.bf16 %v3601, %v3601
        %v4114 = vpack.c.bf16 %v3602, %v3602
        %v4115 = vpack.c.bf16 %v3603, %v3603
        %v4116 = vpack.c.bf16 %v3604, %v3604
        %v4117 = vpack.c.bf16 %v3605, %v3605
        %v4118 = vpack.c.bf16 %v3606, %v3606
        %v4119 = vpack.c.bf16 %v3607, %v3607
        %v4120 = vpack.c.bf16 %v3608, %v3608
        %v4121 = vpack.c.bf16 %v3609, %v3609
        %v4122 = vpack.c.bf16 %v3610, %v3610
        %v4123 = vpack.c.bf16 %v3611, %v3611
        %v4124 = vpack.c.bf16 %v3612, %v3612
        %v4125 = vpack.c.bf16 %v3613, %v3613
        %v4126 = vpack.c.bf16 %v3614, %v3614
        %v4127 = vpack.c.bf16 %v3615, %v3615
        %v4128 = vpack.c.bf16 %v3616, %v3616
        %v4129 = vpack.c.bf16 %v3617, %v3617
        %v4130 = vpack.c.bf16 %v3618, %v3618
        %v4131 = vpack.c.bf16 %v3619, %v3619
        %v4132 = vpack.c.bf16 %v3620, %v3620
        %v4133 = vpack.c.bf16 %v3621, %v3621
        %v4134 = vpack.c.bf16 %v3622, %v3622
        %v4135 = vpack.c.bf16 %v3623, %v3623
        %v4136 = vpack.c.bf16 %v3624, %v3624
        %v4137 = vpack.c.bf16 %v3625, %v3625
        %v4138 = vpack.c.bf16 %v3626, %v3626
        %v4139 = vpack.c.bf16 %v3627, %v3627
        %v4140 = vpack.c.bf16 %v3628, %v3628
        %v4141 = vpack.c.bf16 %v3629, %v3629
        %v4142 = vpack.c.bf16 %v3630, %v3630
        %v4143 = vpack.c.bf16 %v3631, %v3631
        %v4144 = vpack.c.bf16 %v3632, %v3632
        %v4145 = vpack.c.bf16 %v3633, %v3633
        %v4146 = vpack.c.bf16 %v3634, %v3634
        %v4147 = vpack.c.bf16 %v3635, %v3635
        %v4148 = vpack.c.bf16 %v3636, %v3636
        %v4149 = vpack.c.bf16 %v3637, %v3637
        %v4150 = vpack.c.bf16 %v3638, %v3638
        %v4151 = vpack.c.bf16 %v3639, %v3639
        %v4152 = vpack.c.bf16 %v3640, %v3640
        %v4153 = vpack.c.bf16 %v3641, %v3641
        %v4154 = vpack.c.bf16 %v3642, %v3642
        %v4155 = vpack.c.bf16 %v3643, %v3643
        %v4156 = vpack.c.bf16 %v3644, %v3644
        %v4157 = vpack.c.bf16 %v3645, %v3645
        %v4158 = vpack.c.bf16 %v3646, %v3646
        %v4159 = vpack.c.bf16 %v3647, %v3647
        %v4160 = vpack.c.bf16 %v3648, %v3648
        %v4161 = vpack.c.bf16 %v3649, %v3649
        %v4162 = vpack.c.bf16 %v3650, %v3650
        %v4163 = vpack.c.bf16 %v3651, %v3651
        %v4164 = vpack.c.bf16 %v3652, %v3652
        %v4165 = vpack.c.bf16 %v3653, %v3653
        %v4166 = vpack.c.bf16 %v3654, %v3654
        %v4167 = vpack.c.bf16 %v3655, %v3655
        %v4168 = vpack.c.bf16 %v3656, %v3656
        %v4169 = vpack.c.bf16 %v3657, %v3657
        %v4170 = vpack.c.bf16 %v3658, %v3658
        %v4171 = vpack.c.bf16 %v3659, %v3659
        %v4172 = vpack.c.bf16 %v3660, %v3660
        %v4173 = vpack.c.bf16 %v3661, %v3661
        %v4174 = vpack.c.bf16 %v3662, %v3662
        %v4175 = vpack.c.bf16 %v3663, %v3663
        %v4176 = vpack.c.bf16 %v3664, %v3664
        %v4177 = vpack.c.bf16 %v3665, %v3665
        %v4178 = vpack.c.bf16 %v3666, %v3666
        %v4179 = vpack.c.bf16 %v3667, %v3667
        %v4180 = vpack.c.bf16 %v3668, %v3668
        %v4181 = vpack.c.bf16 %v3669, %v3669
        %v4182 = vpack.c.bf16 %v3670, %v3670
        %v4183 = vpack.c.bf16 %v3671, %v3671
        %v4184 = vpack.c.bf16 %v3672, %v3672
        %v4185 = vpack.c.bf16 %v3673, %v3673
        %v4186 = vpack.c.bf16 %v3674, %v3674
        %v4187 = vpack.c.bf16 %v3675, %v3675
        %v4188 = vpack.c.bf16 %v3676, %v3676
        %v4189 = vpack.c.bf16 %v3677, %v3677
        %v4190 = vpack.c.bf16 %v3678, %v3678
        %v4191 = vpack.c.bf16 %v3679, %v3679
        %v4192 = vpack.c.bf16 %v3680, %v3680
        %v4193 = vpack.c.bf16 %v3681, %v3681
        %v4194 = vpack.c.bf16 %v3682, %v3682
        %v4195 = vpack.c.bf16 %v3683, %v3683
        %v4196 = vpack.c.bf16 %v3684, %v3684
        %v4197 = vpack.c.bf16 %v3685, %v3685
        %v4198 = vpack.c.bf16 %v3686, %v3686
        %v4199 = vpack.c.bf16 %v3687, %v3687
        %v4200 = vpack.c.bf16 %v3688, %v3688
        %v4201 = vpack.c.bf16 %v3689, %v3689
        %v4714 = vunpack.c.l.b16 %v3690
        %v4715 = vunpack.c.l.b16 %v3691
        %v4716 = vunpack.c.l.b16 %v3692
        %v4717 = vunpack.c.l.b16 %v3693
        %v4718 = vunpack.c.l.b16 %v3694
        %v4719 = vunpack.c.l.b16 %v3695
        %v4720 = vunpack.c.l.b16 %v3696
        %v4721 = vunpack.c.l.b16 %v3697
        %v4722 = vunpack.c.l.b16 %v3698
        %v4723 = vunpack.c.l.b16 %v3699
        %v4724 = vunpack.c.l.b16 %v3700
        %v4725 = vunpack.c.l.b16 %v3701
        %v4726 = vunpack.c.l.b16 %v3702
        %v4727 = vunpack.c.l.b16 %v3703
        %v4728 = vunpack.c.l.b16 %v3704
        %v4729 = vunpack.c.l.b16 %v3705
        %v4730 = vunpack.c.l.b16 %v3706
        %v4731 = vunpack.c.l.b16 %v3707
        %v4732 = vunpack.c.l.b16 %v3708
        %v4733 = vunpack.c.l.b16 %v3709
        %v4734 = vunpack.c.l.b16 %v3710
        %v4735 = vunpack.c.l.b16 %v3711
        %v4736 = vunpack.c.l.b16 %v3712
        %v4737 = vunpack.c.l.b16 %v3713
        %v4738 = vunpack.c.l.b16 %v3714
        %v4739 = vunpack.c.l.b16 %v3715
        %v4740 = vunpack.c.l.b16 %v3716
        %v4741 = vunpack.c.l.b16 %v3717
        %v4742 = vunpack.c.l.b16 %v3718
        %v4743 = vunpack.c.l.b16 %v3719
        %v4744 = vunpack.c.l.b16 %v3720
        %v4745 = vunpack.c.l.b16 %v3721
        %v4746 = vunpack.c.l.b16 %v3722
        %v4747 = vunpack.c.l.b16 %v3723
        %v4748 = vunpack.c.l.b16 %v3724
        %v4749 = vunpack.c.l.b16 %v3725
        %v4750 = vunpack.c.l.b16 %v3726
        %v4751 = vunpack.c.l.b16 %v3727
        %v4752 = vunpack.c.l.b16 %v3728
        %v4753 = vunpack.c.l.b16 %v3729
        %v4754 = vunpack.c.l.b16 %v3730
        %v4755 = vunpack.c.l.b16 %v3731
        %v4756 = vunpack.c.l.b16 %v3732
        %v4757 = vunpack.c.l.b16 %v3733
        %v4758 = vunpack.c.l.b16 %v3734
        %v4759 = vunpack.c.l.b16 %v3735
        %v4760 = vunpack.c.l.b16 %v3736
        %v4761 = vunpack.c.l.b16 %v3737
        %v4762 = vunpack.c.l.b16 %v3738
        %v4763 = vunpack.c.l.b16 %v3739
        %v4764 = vunpack.c.l.b16 %v3740
        %v4765 = vunpack.c.l.b16 %v3741
        %v4766 = vunpack.c.l.b16 %v3742
        %v4767 = vunpack.c.l.b16 %v3743
        %v4768 = vunpack.c.l.b16 %v3744
        %v4769 = vunpack.c.l.b16 %v3745
        %v4770 = vunpack.c.l.b16 %v3746
        %v4771 = vunpack.c.l.b16 %v3747
        %v4772 = vunpack.c.l.b16 %v3748
        %v4773 = vunpack.c.l.b16 %v3749
        %v4774 = vunpack.c.l.b16 %v3750
        %v4775 = vunpack.c.l.b16 %v3751
        %v4776 = vunpack.c.l.b16 %v3752
        %v4777 = vunpack.c.l.b16 %v3753
        %v4778 = vunpack.c.l.b16 %v3754
        %v4779 = vunpack.c.l.b16 %v3755
        %v4780 = vunpack.c.l.b16 %v3756
        %v4781 = vunpack.c.l.b16 %v3757
        %v4782 = vunpack.c.l.b16 %v3758
        %v4783 = vunpack.c.l.b16 %v3759
        %v4784 = vunpack.c.l.b16 %v3760
        %v4785 = vunpack.c.l.b16 %v3761
        %v4786 = vunpack.c.l.b16 %v3762
        %v4787 = vunpack.c.l.b16 %v3763
        %v4788 = vunpack.c.l.b16 %v3764
        %v4789 = vunpack.c.l.b16 %v3765
        %v4790 = vunpack.c.l.b16 %v3766
        %v4791 = vunpack.c.l.b16 %v3767
        %v4792 = vunpack.c.l.b16 %v3768
        %v4793 = vunpack.c.l.b16 %v3769
        %v4794 = vunpack.c.l.b16 %v3770
        %v4795 = vunpack.c.l.b16 %v3771
        %v4796 = vunpack.c.l.b16 %v3772
        %v4797 = vunpack.c.l.b16 %v3773
        %v4798 = vunpack.c.l.b16 %v3774
        %v4799 = vunpack.c.l.b16 %v3775
        %v4800 = vunpack.c.l.b16 %v3776
        %v4801 = vunpack.c.l.b16 %v3777
        %v4802 = vunpack.c.l.b16 %v3778
        %v4803 = vunpack.c.l.b16 %v3779
        %v4804 = vunpack.c.l.b16 %v3780
        %v4805 = vunpack.c.l.b16 %v3781
        %v4806 = vunpack.c.l.b16 %v3782
        %v4807 = vunpack.c.l.b16 %v3783
        %v4808 = vunpack.c.l.b16 %v3784
        %v4809 = vunpack.c.l.b16 %v3785
        %v4810 = vunpack.c.l.b16 %v3786
        %v4811 = vunpack.c.l.b16 %v3787
        %v4812 = vunpack.c.l.b16 %v3788
        %v4813 = vunpack.c.l.b16 %v3789
        %v4814 = vunpack.c.l.b16 %v3790
        %v4815 = vunpack.c.l.b16 %v3791
        %v4816 = vunpack.c.l.b16 %v3792
        %v4817 = vunpack.c.l.b16 %v3793
        %v4818 = vunpack.c.l.b16 %v3794
        %v4819 = vunpack.c.l.b16 %v3795
        %v4820 = vunpack.c.l.b16 %v3796
        %v4821 = vunpack.c.l.b16 %v3797
        %v4822 = vunpack.c.l.b16 %v3798
        %v4823 = vunpack.c.l.b16 %v3799
        %v4824 = vunpack.c.l.b16 %v3800
        %v4825 = vunpack.c.l.b16 %v3801
        %v4826 = vunpack.c.l.b16 %v3802
        %v4827 = vunpack.c.l.b16 %v3803
        %v4828 = vunpack.c.l.b16 %v3804
        %v4829 = vunpack.c.l.b16 %v3805
        %v4830 = vunpack.c.l.b16 %v3806
        %v4831 = vunpack.c.l.b16 %v3807
        %v4832 = vunpack.c.l.b16 %v3808
        %v4833 = vunpack.c.l.b16 %v3809
        %v4834 = vunpack.c.l.b16 %v3810
        %v4835 = vunpack.c.l.b16 %v3811
        %v4836 = vunpack.c.l.b16 %v3812
        %v4837 = vunpack.c.l.b16 %v3813
        %v4838 = vunpack.c.l.b16 %v3814
        %v4839 = vunpack.c.l.b16 %v3815
        %v4840 = vunpack.c.l.b16 %v3816
        %v4841 = vunpack.c.l.b16 %v3817
        %v4842 = vunpack.c.l.b16 %v3818
        %v4843 = vunpack.c.l.b16 %v3819
        %v4844 = vunpack.c.l.b16 %v3820
        %v4845 = vunpack.c.l.b16 %v3821
        %v4846 = vunpack.c.l.b16 %v3822
        %v4847 = vunpack.c.l.b16 %v3823
        %v4848 = vunpack.c.l.b16 %v3824
        %v4849 = vunpack.c.l.b16 %v3825
        %v4850 = vunpack.c.l.b16 %v3826
        %v4851 = vunpack.c.l.b16 %v3827
        %v4852 = vunpack.c.l.b16 %v3828
        %v4853 = vunpack.c.l.b16 %v3829
        %v4854 = vunpack.c.l.b16 %v3830
        %v4855 = vunpack.c.l.b16 %v3831
        %v4856 = vunpack.c.l.b16 %v3832
        %v4857 = vunpack.c.l.b16 %v3833
        %v4858 = vunpack.c.l.b16 %v3834
        %v4859 = vunpack.c.l.b16 %v3835
        %v4860 = vunpack.c.l.b16 %v3836
        %v4861 = vunpack.c.l.b16 %v3837
        %v4862 = vunpack.c.l.b16 %v3838
        %v4863 = vunpack.c.l.b16 %v3839
        %v4864 = vunpack.c.l.b16 %v3840
        %v4865 = vunpack.c.l.b16 %v3841
        %v4866 = vunpack.c.l.b16 %v3842
        %v4867 = vunpack.c.l.b16 %v3843
        %v4868 = vunpack.c.l.b16 %v3844
        %v4869 = vunpack.c.l.b16 %v3845
        %v4870 = vunpack.c.l.b16 %v3846
        %v4871 = vunpack.c.l.b16 %v3847
        %v4872 = vunpack.c.l.b16 %v3848
        %v4873 = vunpack.c.l.b16 %v3849
        %v4874 = vunpack.c.l.b16 %v3850
        %v4875 = vunpack.c.l.b16 %v3851
        %v4876 = vunpack.c.l.b16 %v3852
        %v4877 = vunpack.c.l.b16 %v3853
        %v4878 = vunpack.c.l.b16 %v3854
        %v4879 = vunpack.c.l.b16 %v3855
        %v4880 = vunpack.c.l.b16 %v3856
        %v4881 = vunpack.c.l.b16 %v3857
        %v4882 = vunpack.c.l.b16 %v3858
        %v4883 = vunpack.c.l.b16 %v3859
        %v4884 = vunpack.c.l.b16 %v3860
        %v4885 = vunpack.c.l.b16 %v3861
        %v4886 = vunpack.c.l.b16 %v3862
        %v4887 = vunpack.c.l.b16 %v3863
        %v4888 = vunpack.c.l.b16 %v3864
        %v4889 = vunpack.c.l.b16 %v3865
        %v4890 = vunpack.c.l.b16 %v3866
        %v4891 = vunpack.c.l.b16 %v3867
        %v4892 = vunpack.c.l.b16 %v3868
        %v4893 = vunpack.c.l.b16 %v3869
        %v4894 = vunpack.c.l.b16 %v3870
        %v4895 = vunpack.c.l.b16 %v3871
        %v4896 = vunpack.c.l.b16 %v3872
        %v4897 = vunpack.c.l.b16 %v3873
        %v4898 = vunpack.c.l.b16 %v3874
        %v4899 = vunpack.c.l.b16 %v3875
        %v4900 = vunpack.c.l.b16 %v3876
        %v4901 = vunpack.c.l.b16 %v3877
        %v4902 = vunpack.c.l.b16 %v3878
        %v4903 = vunpack.c.l.b16 %v3879
        %v4904 = vunpack.c.l.b16 %v3880
        %v4905 = vunpack.c.l.b16 %v3881
        %v4906 = vunpack.c.l.b16 %v3882
        %v4907 = vunpack.c.l.b16 %v3883
        %v4908 = vunpack.c.l.b16 %v3884
        %v4909 = vunpack.c.l.b16 %v3885
        %v4910 = vunpack.c.l.b16 %v3886
        %v4911 = vunpack.c.l.b16 %v3887
        %v4912 = vunpack.c.l.b16 %v3888
        %v4913 = vunpack.c.l.b16 %v3889
        %v4914 = vunpack.c.l.b16 %v3890
        %v4915 = vunpack.c.l.b16 %v3891
        %v4916 = vunpack.c.l.b16 %v3892
        %v4917 = vunpack.c.l.b16 %v3893
        %v4918 = vunpack.c.l.b16 %v3894
        %v4919 = vunpack.c.l.b16 %v3895
        %v4920 = vunpack.c.l.b16 %v3896
        %v4921 = vunpack.c.l.b16 %v3897
        %v4922 = vunpack.c.l.b16 %v3898
        %v4923 = vunpack.c.l.b16 %v3899
        %v4924 = vunpack.c.l.b16 %v3900
        %v4925 = vunpack.c.l.b16 %v3901
        %v4926 = vunpack.c.l.b16 %v3902
        %v4927 = vunpack.c.l.b16 %v3903
        %v4928 = vunpack.c.l.b16 %v3904
        %v4929 = vunpack.c.l.b16 %v3905
        %v4930 = vunpack.c.l.b16 %v3906
        %v4931 = vunpack.c.l.b16 %v3907
        %v4932 = vunpack.c.l.b16 %v3908
        %v4933 = vunpack.c.l.b16 %v3909
        %v4934 = vunpack.c.l.b16 %v3910
        %v4935 = vunpack.c.l.b16 %v3911
        %v4936 = vunpack.c.l.b16 %v3912
        %v4937 = vunpack.c.l.b16 %v3913
        %v4938 = vunpack.c.l.b16 %v3914
        %v4939 = vunpack.c.l.b16 %v3915
        %v4940 = vunpack.c.l.b16 %v3916
        %v4941 = vunpack.c.l.b16 %v3917
        %v4942 = vunpack.c.l.b16 %v3918
        %v4943 = vunpack.c.l.b16 %v3919
        %v4944 = vunpack.c.l.b16 %v3920
        %v4945 = vunpack.c.l.b16 %v3921
        %v4946 = vunpack.c.l.b16 %v3922
        %v4947 = vunpack.c.l.b16 %v3923
        %v4948 = vunpack.c.l.b16 %v3924
        %v4949 = vunpack.c.l.b16 %v3925
        %v4950 = vunpack.c.l.b16 %v3926
        %v4951 = vunpack.c.l.b16 %v3927
        %v4952 = vunpack.c.l.b16 %v3928
        %v4953 = vunpack.c.l.b16 %v3929
        %v4954 = vunpack.c.l.b16 %v3930
        %v4955 = vunpack.c.l.b16 %v3931
        %v4956 = vunpack.c.l.b16 %v3932
        %v4957 = vunpack.c.l.b16 %v3933
        %v4958 = vunpack.c.l.b16 %v3934
        %v4959 = vunpack.c.l.b16 %v3935
        %v4960 = vunpack.c.l.b16 %v3936
        %v4961 = vunpack.c.l.b16 %v3937
        %v4962 = vunpack.c.l.b16 %v3938
        %v4963 = vunpack.c.l.b16 %v3939
        %v4964 = vunpack.c.l.b16 %v3940
        %v4965 = vunpack.c.l.b16 %v3941
        %v4966 = vunpack.c.l.b16 %v3942
        %v4967 = vunpack.c.l.b16 %v3943
        %v4968 = vunpack.c.l.b16 %v3944
        %v4969 = vunpack.c.l.b16 %v3945
        %v4970 = vunpack.c.l.b16 %v3946
        %v4971 = vunpack.c.l.b16 %v3947
        %v4972 = vunpack.c.l.b16 %v3948
        %v4973 = vunpack.c.l.b16 %v3949
        %v4974 = vunpack.c.l.b16 %v3950
        %v4975 = vunpack.c.l.b16 %v3951
        %v4976 = vunpack.c.l.b16 %v3952
        %v4977 = vunpack.c.l.b16 %v3953
        %v4978 = vunpack.c.l.b16 %v3954
        %v4979 = vunpack.c.l.b16 %v3955
        %v4980 = vunpack.c.l.b16 %v3956
        %v4981 = vunpack.c.l.b16 %v3957
        %v4982 = vunpack.c.l.b16 %v3958
        %v4983 = vunpack.c.l.b16 %v3959
        %v4984 = vunpack.c.l.b16 %v3960
        %v4985 = vunpack.c.l.b16 %v3961
        %v4986 = vunpack.c.l.b16 %v3962
        %v4987 = vunpack.c.l.b16 %v3963
        %v4988 = vunpack.c.l.b16 %v3964
        %v4989 = vunpack.c.l.b16 %v3965
        %v4990 = vunpack.c.l.b16 %v3966
        %v4991 = vunpack.c.l.b16 %v3967
        %v4992 = vunpack.c.l.b16 %v3968
        %v4993 = vunpack.c.l.b16 %v3969
        %v4994 = vunpack.c.l.b16 %v3970
        %v4995 = vunpack.c.l.b16 %v3971
        %v4996 = vunpack.c.l.b16 %v3972
        %v4997 = vunpack.c.l.b16 %v3973
        %v4998 = vunpack.c.l.b16 %v3974
        %v4999 = vunpack.c.l.b16 %v3975
        %v5000 = vunpack.c.l.b16 %v3976
        %v5001 = vunpack.c.l.b16 %v3977
        %v5002 = vunpack.c.l.b16 %v3978
        %v5003 = vunpack.c.l.b16 %v3979
        %v5004 = vunpack.c.l.b16 %v3980
        %v5005 = vunpack.c.l.b16 %v3981
        %v5006 = vunpack.c.l.b16 %v3982
        %v5007 = vunpack.c.l.b16 %v3983
        %v5008 = vunpack.c.l.b16 %v3984
        %v5009 = vunpack.c.l.b16 %v3985
        %v5010 = vunpack.c.l.b16 %v3986
        %v5011 = vunpack.c.l.b16 %v3987
        %v5012 = vunpack.c.l.b16 %v3988
        %v5013 = vunpack.c.l.b16 %v3989
        %v5014 = vunpack.c.l.b16 %v3990
        %v5015 = vunpack.c.l.b16 %v3991
        %v5016 = vunpack.c.l.b16 %v3992
        %v5017 = vunpack.c.l.b16 %v3993
        %v5018 = vunpack.c.l.b16 %v3994
        %v5019 = vunpack.c.l.b16 %v3995
        %v5020 = vunpack.c.l.b16 %v3996
        %v5021 = vunpack.c.l.b16 %v3997
        %v5022 = vunpack.c.l.b16 %v3998
        %v5023 = vunpack.c.l.b16 %v3999
        %v5024 = vunpack.c.l.b16 %v4000
        %v5025 = vunpack.c.l.b16 %v4001
        %v5026 = vunpack.c.l.b16 %v4002
        %v5027 = vunpack.c.l.b16 %v4003
        %v5028 = vunpack.c.l.b16 %v4004
        %v5029 = vunpack.c.l.b16 %v4005
        %v5030 = vunpack.c.l.b16 %v4006
        %v5031 = vunpack.c.l.b16 %v4007
        %v5032 = vunpack.c.l.b16 %v4008
        %v5033 = vunpack.c.l.b16 %v4009
        %v5034 = vunpack.c.l.b16 %v4010
        %v5035 = vunpack.c.l.b16 %v4011
        %v5036 = vunpack.c.l.b16 %v4012
        %v5037 = vunpack.c.l.b16 %v4013
        %v5038 = vunpack.c.l.b16 %v4014
        %v5039 = vunpack.c.l.b16 %v4015
        %v5040 = vunpack.c.l.b16 %v4016
        %v5041 = vunpack.c.l.b16 %v4017
        %v5042 = vunpack.c.l.b16 %v4018
        %v5043 = vunpack.c.l.b16 %v4019
        %v5044 = vunpack.c.l.b16 %v4020
        %v5045 = vunpack.c.l.b16 %v4021
        %v5046 = vunpack.c.l.b16 %v4022
        %v5047 = vunpack.c.l.b16 %v4023
        %v5048 = vunpack.c.l.b16 %v4024
        %v5049 = vunpack.c.l.b16 %v4025
        %v5050 = vunpack.c.l.b16 %v4026
        %v5051 = vunpack.c.l.b16 %v4027
        %v5052 = vunpack.c.l.b16 %v4028
        %v5053 = vunpack.c.l.b16 %v4029
        %v5054 = vunpack.c.l.b16 %v4030
        %v5055 = vunpack.c.l.b16 %v4031
        %v5056 = vunpack.c.l.b16 %v4032
        %v5057 = vunpack.c.l.b16 %v4033
        %v5058 = vunpack.c.l.b16 %v4034
        %v5059 = vunpack.c.l.b16 %v4035
        %v5060 = vunpack.c.l.b16 %v4036
        %v5061 = vunpack.c.l.b16 %v4037
        %v5062 = vunpack.c.l.b16 %v4038
        %v5063 = vunpack.c.l.b16 %v4039
        %v5064 = vunpack.c.l.b16 %v4040
        %v5065 = vunpack.c.l.b16 %v4041
        %v5066 = vunpack.c.l.b16 %v4042
        %v5067 = vunpack.c.l.b16 %v4043
        %v5068 = vunpack.c.l.b16 %v4044
        %v5069 = vunpack.c.l.b16 %v4045
        %v5070 = vunpack.c.l.b16 %v4046
        %v5071 = vunpack.c.l.b16 %v4047
        %v5072 = vunpack.c.l.b16 %v4048
        %v5073 = vunpack.c.l.b16 %v4049
        %v5074 = vunpack.c.l.b16 %v4050
        %v5075 = vunpack.c.l.b16 %v4051
        %v5076 = vunpack.c.l.b16 %v4052
        %v5077 = vunpack.c.l.b16 %v4053
        %v5078 = vunpack.c.l.b16 %v4054
        %v5079 = vunpack.c.l.b16 %v4055
        %v5080 = vunpack.c.l.b16 %v4056
        %v5081 = vunpack.c.l.b16 %v4057
        %v5082 = vunpack.c.l.b16 %v4058
        %v5083 = vunpack.c.l.b16 %v4059
        %v5084 = vunpack.c.l.b16 %v4060
        %v5085 = vunpack.c.l.b16 %v4061
        %v5086 = vunpack.c.l.b16 %v4062
        %v5087 = vunpack.c.l.b16 %v4063
        %v5088 = vunpack.c.l.b16 %v4064
        %v5089 = vunpack.c.l.b16 %v4065
        %v5090 = vunpack.c.l.b16 %v4066
        %v5091 = vunpack.c.l.b16 %v4067
        %v5092 = vunpack.c.l.b16 %v4068
        %v5093 = vunpack.c.l.b16 %v4069
        %v5094 = vunpack.c.l.b16 %v4070
        %v5095 = vunpack.c.l.b16 %v4071
        %v5096 = vunpack.c.l.b16 %v4072
        %v5097 = vunpack.c.l.b16 %v4073
        %v5098 = vunpack.c.l.b16 %v4074
        %v5099 = vunpack.c.l.b16 %v4075
        %v5100 = vunpack.c.l.b16 %v4076
        %v5101 = vunpack.c.l.b16 %v4077
        %v5102 = vunpack.c.l.b16 %v4078
        %v5103 = vunpack.c.l.b16 %v4079
        %v5104 = vunpack.c.l.b16 %v4080
        %v5105 = vunpack.c.l.b16 %v4081
        %v5106 = vunpack.c.l.b16 %v4082
        %v5107 = vunpack.c.l.b16 %v4083
        %v5108 = vunpack.c.l.b16 %v4084
        %v5109 = vunpack.c.l.b16 %v4085
        %v5110 = vunpack.c.l.b16 %v4086
        %v5111 = vunpack.c.l.b16 %v4087
        %v5112 = vunpack.c.l.b16 %v4088
        %v5113 = vunpack.c.l.b16 %v4089
        %v5114 = vunpack.c.l.b16 %v4090
        %v5115 = vunpack.c.l.b16 %v4091
        %v5116 = vunpack.c.l.b16 %v4092
        %v5117 = vunpack.c.l.b16 %v4093
        %v5118 = vunpack.c.l.b16 %v4094
        %v5119 = vunpack.c.l.b16 %v4095
        %v5120 = vunpack.c.l.b16 %v4096
        %v5121 = vunpack.c.l.b16 %v4097
        %v5122 = vunpack.c.l.b16 %v4098
        %v5123 = vunpack.c.l.b16 %v4099
        %v5124 = vunpack.c.l.b16 %v4100
        %v5125 = vunpack.c.l.b16 %v4101
        %v5126 = vunpack.c.l.b16 %v4102
        %v5127 = vunpack.c.l.b16 %v4103
        %v5128 = vunpack.c.l.b16 %v4104
        %v5129 = vunpack.c.l.b16 %v4105
        %v5130 = vunpack.c.l.b16 %v4106
        %v5131 = vunpack.c.l.b16 %v4107
        %v5132 = vunpack.c.l.b16 %v4108
        %v5133 = vunpack.c.l.b16 %v4109
        %v5134 = vunpack.c.l.b16 %v4110
        %v5135 = vunpack.c.l.b16 %v4111
        %v5136 = vunpack.c.l.b16 %v4112
        %v5137 = vunpack.c.l.b16 %v4113
        %v5138 = vunpack.c.l.b16 %v4114
        %v5139 = vunpack.c.l.b16 %v4115
        %v5140 = vunpack.c.l.b16 %v4116
        %v5141 = vunpack.c.l.b16 %v4117
        %v5142 = vunpack.c.l.b16 %v4118
        %v5143 = vunpack.c.l.b16 %v4119
        %v5144 = vunpack.c.l.b16 %v4120
        %v5145 = vunpack.c.l.b16 %v4121
        %v5146 = vunpack.c.l.b16 %v4122
        %v5147 = vunpack.c.l.b16 %v4123
        %v5148 = vunpack.c.l.b16 %v4124
        %v5149 = vunpack.c.l.b16 %v4125
        %v5150 = vunpack.c.l.b16 %v4126
        %v5151 = vunpack.c.l.b16 %v4127
        %v5152 = vunpack.c.l.b16 %v4128
        %v5153 = vunpack.c.l.b16 %v4129
        %v5154 = vunpack.c.l.b16 %v4130
        %v5155 = vunpack.c.l.b16 %v4131
        %v5156 = vunpack.c.l.b16 %v4132
        %v5157 = vunpack.c.l.b16 %v4133
        %v5158 = vunpack.c.l.b16 %v4134
        %v5159 = vunpack.c.l.b16 %v4135
        %v5160 = vunpack.c.l.b16 %v4136
        %v5161 = vunpack.c.l.b16 %v4137
        %v5162 = vunpack.c.l.b16 %v4138
        %v5163 = vunpack.c.l.b16 %v4139
        %v5164 = vunpack.c.l.b16 %v4140
        %v5165 = vunpack.c.l.b16 %v4141
        %v5166 = vunpack.c.l.b16 %v4142
        %v5167 = vunpack.c.l.b16 %v4143
        %v5168 = vunpack.c.l.b16 %v4144
        %v5169 = vunpack.c.l.b16 %v4145
        %v5170 = vunpack.c.l.b16 %v4146
        %v5171 = vunpack.c.l.b16 %v4147
        %v5172 = vunpack.c.l.b16 %v4148
        %v5173 = vunpack.c.l.b16 %v4149
        %v5174 = vunpack.c.l.b16 %v4150
        %v5175 = vunpack.c.l.b16 %v4151
        %v5176 = vunpack.c.l.b16 %v4152
        %v5177 = vunpack.c.l.b16 %v4153
        %v5178 = vunpack.c.l.b16 %v4154
        %v5179 = vunpack.c.l.b16 %v4155
        %v5180 = vunpack.c.l.b16 %v4156
        %v5181 = vunpack.c.l.b16 %v4157
        %v5182 = vunpack.c.l.b16 %v4158
        %v5183 = vunpack.c.l.b16 %v4159
        %v5184 = vunpack.c.l.b16 %v4160
        %v5185 = vunpack.c.l.b16 %v4161
        %v5186 = vunpack.c.l.b16 %v4162
        %v5187 = vunpack.c.l.b16 %v4163
        %v5188 = vunpack.c.l.b16 %v4164
        %v5189 = vunpack.c.l.b16 %v4165
        %v5190 = vunpack.c.l.b16 %v4166
        %v5191 = vunpack.c.l.b16 %v4167
        %v5192 = vunpack.c.l.b16 %v4168
        %v5193 = vunpack.c.l.b16 %v4169
        %v5194 = vunpack.c.l.b16 %v4170
        %v5195 = vunpack.c.l.b16 %v4171
        %v5196 = vunpack.c.l.b16 %v4172
        %v5197 = vunpack.c.l.b16 %v4173
        %v5198 = vunpack.c.l.b16 %v4174
        %v5199 = vunpack.c.l.b16 %v4175
        %v5200 = vunpack.c.l.b16 %v4176
        %v5201 = vunpack.c.l.b16 %v4177
        %v5202 = vunpack.c.l.b16 %v4178
        %v5203 = vunpack.c.l.b16 %v4179
        %v5204 = vunpack.c.l.b16 %v4180
        %v5205 = vunpack.c.l.b16 %v4181
        %v5206 = vunpack.c.l.b16 %v4182
        %v5207 = vunpack.c.l.b16 %v4183
        %v5208 = vunpack.c.l.b16 %v4184
        %v5209 = vunpack.c.l.b16 %v4185
        %v5210 = vunpack.c.l.b16 %v4186
        %v5211 = vunpack.c.l.b16 %v4187
        %v5212 = vunpack.c.l.b16 %v4188
        %v5213 = vunpack.c.l.b16 %v4189
        %v5214 = vunpack.c.l.b16 %v4190
        %v5215 = vunpack.c.l.b16 %v4191
        %v5216 = vunpack.c.l.b16 %v4192
        %v5217 = vunpack.c.l.b16 %v4193
        %v5218 = vunpack.c.l.b16 %v4194
        %v5219 = vunpack.c.l.b16 %v4195
        %v5220 = vunpack.c.l.b16 %v4196
        %v5221 = vunpack.c.l.b16 %v4197
        %v5222 = vunpack.c.l.b16 %v4198
        %v5223 = vunpack.c.l.b16 %v4199
        %v5224 = vunpack.c.l.b16 %v4200
        %v5225 = vunpack.c.l.b16 %v4201
        %v5226 = vrot.slane %v4715, 7
        %vm5227 = vcmask 1041409
        %v5228 = vsel %vm5227, %v5226, %v4714
        %v5229 = vrot.slane %v4716, 6
        %vm5230 = vcmask 1042434
        %v5231 = vsel %vm5230, %v5229, %v5228
        %v5232 = vrot.slane %v4717, 5
        %vm5233 = vcmask 1043459
        %v5234 = vsel %vm5233, %v5232, %v5231
        %v5235 = vrot.slane %v4718, 4
        %vm5236 = vcmask 1044484
        %v5237 = vsel %vm5236, %v5235, %v5234
        %v5238 = vrot.slane %v4719, 3
        %vm5239 = vcmask 1045509
        %v5240 = vsel %vm5239, %v5238, %v5237
        %v5241 = vrot.slane %v4720, 2
        %vm5242 = vcmask 1046534
        %v5243 = vsel %vm5242, %v5241, %v5240
        %v5244 = vrot.slane %v4721, 1
        %vm5245 = vcmask 1047559
        %v5246 = vsel %vm5245, %v5244, %v5243
        %v5247 = vrot.slane %v4723, 7
        %v5248 = vsel %vm5227, %v5247, %v4722
        %v5249 = vrot.slane %v4724, 6
        %v5250 = vsel %vm5230, %v5249, %v5248
        %v5251 = vrot.slane %v4725, 5
        %v5252 = vsel %vm5233, %v5251, %v5250
        %v5253 = vrot.slane %v4726, 4
        %v5254 = vsel %vm5236, %v5253, %v5252
        %v5255 = vrot.slane %v4727, 3
        %v5256 = vsel %vm5239, %v5255, %v5254
        %v5257 = vrot.slane %v4728, 2
        %v5258 = vsel %vm5242, %v5257, %v5256
        %v5259 = vrot.slane %v4729, 1
        %v5260 = vsel %vm5245, %v5259, %v5258
        %v5261 = vrot.slane %v4731, 7
        %v5262 = vsel %vm5227, %v5261, %v4730
        %v5263 = vrot.slane %v4732, 6
        %v5264 = vsel %vm5230, %v5263, %v5262
        %v5265 = vrot.slane %v4733, 5
        %v5266 = vsel %vm5233, %v5265, %v5264
        %v5267 = vrot.slane %v4734, 4
        %v5268 = vsel %vm5236, %v5267, %v5266
        %v5269 = vrot.slane %v4735, 3
        %v5270 = vsel %vm5239, %v5269, %v5268
        %v5271 = vrot.slane %v4736, 2
        %v5272 = vsel %vm5242, %v5271, %v5270
        %v5273 = vrot.slane %v4737, 1
        %v5274 = vsel %vm5245, %v5273, %v5272
        %v5275 = vrot.slane %v4739, 7
        %v5276 = vsel %vm5227, %v5275, %v4738
        %v5277 = vrot.slane %v4740, 6
        %v5278 = vsel %vm5230, %v5277, %v5276
        %v5279 = vrot.slane %v4741, 5
        %v5280 = vsel %vm5233, %v5279, %v5278
        %v5281 = vrot.slane %v4742, 4
        %v5282 = vsel %vm5236, %v5281, %v5280
        %v5283 = vrot.slane %v4743, 3
        %v5284 = vsel %vm5239, %v5283, %v5282
        %v5285 = vrot.slane %v4744, 2
        %v5286 = vsel %vm5242, %v5285, %v5284
        %v5287 = vrot.slane %v4745, 1
        %v5288 = vsel %vm5245, %v5287, %v5286
        %v5289 = vrot.slane %v4747, 7
        %v5290 = vsel %vm5227, %v5289, %v4746
        %v5291 = vrot.slane %v4748, 6
        %v5292 = vsel %vm5230, %v5291, %v5290
        %v5293 = vrot.slane %v4749, 5
        %v5294 = vsel %vm5233, %v5293, %v5292
        %v5295 = vrot.slane %v4750, 4
        %v5296 = vsel %vm5236, %v5295, %v5294
        %v5297 = vrot.slane %v4751, 3
        %v5298 = vsel %vm5239, %v5297, %v5296
        %v5299 = vrot.slane %v4752, 2
        %v5300 = vsel %vm5242, %v5299, %v5298
        %v5301 = vrot.slane %v4753, 1
        %v5302 = vsel %vm5245, %v5301, %v5300
        %v5303 = vrot.slane %v4755, 7
        %v5304 = vsel %vm5227, %v5303, %v4754
        %v5305 = vrot.slane %v4756, 6
        %v5306 = vsel %vm5230, %v5305, %v5304
        %v5307 = vrot.slane %v4757, 5
        %v5308 = vsel %vm5233, %v5307, %v5306
        %v5309 = vrot.slane %v4758, 4
        %v5310 = vsel %vm5236, %v5309, %v5308
        %v5311 = vrot.slane %v4759, 3
        %v5312 = vsel %vm5239, %v5311, %v5310
        %v5313 = vrot.slane %v4760, 2
        %v5314 = vsel %vm5242, %v5313, %v5312
        %v5315 = vrot.slane %v4761, 1
        %v5316 = vsel %vm5245, %v5315, %v5314
        %v5317 = vrot.slane %v4763, 7
        %v5318 = vsel %vm5227, %v5317, %v4762
        %v5319 = vrot.slane %v4764, 6
        %v5320 = vsel %vm5230, %v5319, %v5318
        %v5321 = vrot.slane %v4765, 5
        %v5322 = vsel %vm5233, %v5321, %v5320
        %v5323 = vrot.slane %v4766, 4
        %v5324 = vsel %vm5236, %v5323, %v5322
        %v5325 = vrot.slane %v4767, 3
        %v5326 = vsel %vm5239, %v5325, %v5324
        %v5327 = vrot.slane %v4768, 2
        %v5328 = vsel %vm5242, %v5327, %v5326
        %v5329 = vrot.slane %v4769, 1
        %v5330 = vsel %vm5245, %v5329, %v5328
        %v5331 = vrot.slane %v4771, 7
        %v5332 = vsel %vm5227, %v5331, %v4770
        %v5333 = vrot.slane %v4772, 6
        %v5334 = vsel %vm5230, %v5333, %v5332
        %v5335 = vrot.slane %v4773, 5
        %v5336 = vsel %vm5233, %v5335, %v5334
        %v5337 = vrot.slane %v4774, 4
        %v5338 = vsel %vm5236, %v5337, %v5336
        %v5339 = vrot.slane %v4775, 3
        %v5340 = vsel %vm5239, %v5339, %v5338
        %v5341 = vrot.slane %v4776, 2
        %v5342 = vsel %vm5242, %v5341, %v5340
        %v5343 = vrot.slane %v4777, 1
        %v5344 = vsel %vm5245, %v5343, %v5342
        %v5345 = vrot.slane %v4779, 7
        %v5346 = vsel %vm5227, %v5345, %v4778
        %v5347 = vrot.slane %v4780, 6
        %v5348 = vsel %vm5230, %v5347, %v5346
        %v5349 = vrot.slane %v4781, 5
        %v5350 = vsel %vm5233, %v5349, %v5348
        %v5351 = vrot.slane %v4782, 4
        %v5352 = vsel %vm5236, %v5351, %v5350
        %v5353 = vrot.slane %v4783, 3
        %v5354 = vsel %vm5239, %v5353, %v5352
        %v5355 = vrot.slane %v4784, 2
        %v5356 = vsel %vm5242, %v5355, %v5354
        %v5357 = vrot.slane %v4785, 1
        %v5358 = vsel %vm5245, %v5357, %v5356
        %v5359 = vrot.slane %v4787, 7
        %v5360 = vsel %vm5227, %v5359, %v4786
        %v5361 = vrot.slane %v4788, 6
        %v5362 = vsel %vm5230, %v5361, %v5360
        %v5363 = vrot.slane %v4789, 5
        %v5364 = vsel %vm5233, %v5363, %v5362
        %v5365 = vrot.slane %v4790, 4
        %v5366 = vsel %vm5236, %v5365, %v5364
        %v5367 = vrot.slane %v4791, 3
        %v5368 = vsel %vm5239, %v5367, %v5366
        %v5369 = vrot.slane %v4792, 2
        %v5370 = vsel %vm5242, %v5369, %v5368
        %v5371 = vrot.slane %v4793, 1
        %v5372 = vsel %vm5245, %v5371, %v5370
        %v5373 = vrot.slane %v4795, 7
        %v5374 = vsel %vm5227, %v5373, %v4794
        %v5375 = vrot.slane %v4796, 6
        %v5376 = vsel %vm5230, %v5375, %v5374
        %v5377 = vrot.slane %v4797, 5
        %v5378 = vsel %vm5233, %v5377, %v5376
        %v5379 = vrot.slane %v4798, 4
        %v5380 = vsel %vm5236, %v5379, %v5378
        %v5381 = vrot.slane %v4799, 3
        %v5382 = vsel %vm5239, %v5381, %v5380
        %v5383 = vrot.slane %v4800, 2
        %v5384 = vsel %vm5242, %v5383, %v5382
        %v5385 = vrot.slane %v4801, 1
        %v5386 = vsel %vm5245, %v5385, %v5384
        %v5387 = vrot.slane %v4803, 7
        %v5388 = vsel %vm5227, %v5387, %v4802
        %v5389 = vrot.slane %v4804, 6
        %v5390 = vsel %vm5230, %v5389, %v5388
        %v5391 = vrot.slane %v4805, 5
        %v5392 = vsel %vm5233, %v5391, %v5390
        %v5393 = vrot.slane %v4806, 4
        %v5394 = vsel %vm5236, %v5393, %v5392
        %v5395 = vrot.slane %v4807, 3
        %v5396 = vsel %vm5239, %v5395, %v5394
        %v5397 = vrot.slane %v4808, 2
        %v5398 = vsel %vm5242, %v5397, %v5396
        %v5399 = vrot.slane %v4809, 1
        %v5400 = vsel %vm5245, %v5399, %v5398
        %v5401 = vrot.slane %v4811, 7
        %v5402 = vsel %vm5227, %v5401, %v4810
        %v5403 = vrot.slane %v4812, 6
        %v5404 = vsel %vm5230, %v5403, %v5402
        %v5405 = vrot.slane %v4813, 5
        %v5406 = vsel %vm5233, %v5405, %v5404
        %v5407 = vrot.slane %v4814, 4
        %v5408 = vsel %vm5236, %v5407, %v5406
        %v5409 = vrot.slane %v4815, 3
        %v5410 = vsel %vm5239, %v5409, %v5408
        %v5411 = vrot.slane %v4816, 2
        %v5412 = vsel %vm5242, %v5411, %v5410
        %v5413 = vrot.slane %v4817, 1
        %v5414 = vsel %vm5245, %v5413, %v5412
        %v5415 = vrot.slane %v4819, 7
        %v5416 = vsel %vm5227, %v5415, %v4818
        %v5417 = vrot.slane %v4820, 6
        %v5418 = vsel %vm5230, %v5417, %v5416
        %v5419 = vrot.slane %v4821, 5
        %v5420 = vsel %vm5233, %v5419, %v5418
        %v5421 = vrot.slane %v4822, 4
        %v5422 = vsel %vm5236, %v5421, %v5420
        %v5423 = vrot.slane %v4823, 3
        %v5424 = vsel %vm5239, %v5423, %v5422
        %v5425 = vrot.slane %v4824, 2
        %v5426 = vsel %vm5242, %v5425, %v5424
        %v5427 = vrot.slane %v4825, 1
        %v5428 = vsel %vm5245, %v5427, %v5426
        %v5429 = vrot.slane %v4827, 7
        %v5430 = vsel %vm5227, %v5429, %v4826
        %v5431 = vrot.slane %v4828, 6
        %v5432 = vsel %vm5230, %v5431, %v5430
        %v5433 = vrot.slane %v4829, 5
        %v5434 = vsel %vm5233, %v5433, %v5432
        %v5435 = vrot.slane %v4830, 4
        %v5436 = vsel %vm5236, %v5435, %v5434
        %v5437 = vrot.slane %v4831, 3
        %v5438 = vsel %vm5239, %v5437, %v5436
        %v5439 = vrot.slane %v4832, 2
        %v5440 = vsel %vm5242, %v5439, %v5438
        %v5441 = vrot.slane %v4833, 1
        %v5442 = vsel %vm5245, %v5441, %v5440
        %v5443 = vrot.slane %v4835, 7
        %v5444 = vsel %vm5227, %v5443, %v4834
        %v5445 = vrot.slane %v4836, 6
        %v5446 = vsel %vm5230, %v5445, %v5444
        %v5447 = vrot.slane %v4837, 5
        %v5448 = vsel %vm5233, %v5447, %v5446
        %v5449 = vrot.slane %v4838, 4
        %v5450 = vsel %vm5236, %v5449, %v5448
        %v5451 = vrot.slane %v4839, 3
        %v5452 = vsel %vm5239, %v5451, %v5450
        %v5453 = vrot.slane %v4840, 2
        %v5454 = vsel %vm5242, %v5453, %v5452
        %v5455 = vrot.slane %v4841, 1
        %v5456 = vsel %vm5245, %v5455, %v5454
        %v5457 = vrot.slane %v4843, 7
        %v5458 = vsel %vm5227, %v5457, %v4842
        %v5459 = vrot.slane %v4844, 6
        %v5460 = vsel %vm5230, %v5459, %v5458
        %v5461 = vrot.slane %v4845, 5
        %v5462 = vsel %vm5233, %v5461, %v5460
        %v5463 = vrot.slane %v4846, 4
        %v5464 = vsel %vm5236, %v5463, %v5462
        %v5465 = vrot.slane %v4847, 3
        %v5466 = vsel %vm5239, %v5465, %v5464
        %v5467 = vrot.slane %v4848, 2
        %v5468 = vsel %vm5242, %v5467, %v5466
        %v5469 = vrot.slane %v4849, 1
        %v5470 = vsel %vm5245, %v5469, %v5468
        %v5471 = vrot.slane %v4851, 7
        %v5472 = vsel %vm5227, %v5471, %v4850
        %v5473 = vrot.slane %v4852, 6
        %v5474 = vsel %vm5230, %v5473, %v5472
        %v5475 = vrot.slane %v4853, 5
        %v5476 = vsel %vm5233, %v5475, %v5474
        %v5477 = vrot.slane %v4854, 4
        %v5478 = vsel %vm5236, %v5477, %v5476
        %v5479 = vrot.slane %v4855, 3
        %v5480 = vsel %vm5239, %v5479, %v5478
        %v5481 = vrot.slane %v4856, 2
        %v5482 = vsel %vm5242, %v5481, %v5480
        %v5483 = vrot.slane %v4857, 1
        %v5484 = vsel %vm5245, %v5483, %v5482
        %v5485 = vrot.slane %v4859, 7
        %v5486 = vsel %vm5227, %v5485, %v4858
        %v5487 = vrot.slane %v4860, 6
        %v5488 = vsel %vm5230, %v5487, %v5486
        %v5489 = vrot.slane %v4861, 5
        %v5490 = vsel %vm5233, %v5489, %v5488
        %v5491 = vrot.slane %v4862, 4
        %v5492 = vsel %vm5236, %v5491, %v5490
        %v5493 = vrot.slane %v4863, 3
        %v5494 = vsel %vm5239, %v5493, %v5492
        %v5495 = vrot.slane %v4864, 2
        %v5496 = vsel %vm5242, %v5495, %v5494
        %v5497 = vrot.slane %v4865, 1
        %v5498 = vsel %vm5245, %v5497, %v5496
        %v5499 = vrot.slane %v4867, 7
        %v5500 = vsel %vm5227, %v5499, %v4866
        %v5501 = vrot.slane %v4868, 6
        %v5502 = vsel %vm5230, %v5501, %v5500
        %v5503 = vrot.slane %v4869, 5
        %v5504 = vsel %vm5233, %v5503, %v5502
        %v5505 = vrot.slane %v4870, 4
        %v5506 = vsel %vm5236, %v5505, %v5504
        %v5507 = vrot.slane %v4871, 3
        %v5508 = vsel %vm5239, %v5507, %v5506
        %v5509 = vrot.slane %v4872, 2
        %v5510 = vsel %vm5242, %v5509, %v5508
        %v5511 = vrot.slane %v4873, 1
        %v5512 = vsel %vm5245, %v5511, %v5510
        %v5513 = vrot.slane %v4875, 7
        %v5514 = vsel %vm5227, %v5513, %v4874
        %v5515 = vrot.slane %v4876, 6
        %v5516 = vsel %vm5230, %v5515, %v5514
        %v5517 = vrot.slane %v4877, 5
        %v5518 = vsel %vm5233, %v5517, %v5516
        %v5519 = vrot.slane %v4878, 4
        %v5520 = vsel %vm5236, %v5519, %v5518
        %v5521 = vrot.slane %v4879, 3
        %v5522 = vsel %vm5239, %v5521, %v5520
        %v5523 = vrot.slane %v4880, 2
        %v5524 = vsel %vm5242, %v5523, %v5522
        %v5525 = vrot.slane %v4881, 1
        %v5526 = vsel %vm5245, %v5525, %v5524
        %v5527 = vrot.slane %v4883, 7
        %v5528 = vsel %vm5227, %v5527, %v4882
        %v5529 = vrot.slane %v4884, 6
        %v5530 = vsel %vm5230, %v5529, %v5528
        %v5531 = vrot.slane %v4885, 5
        %v5532 = vsel %vm5233, %v5531, %v5530
        %v5533 = vrot.slane %v4886, 4
        %v5534 = vsel %vm5236, %v5533, %v5532
        %v5535 = vrot.slane %v4887, 3
        %v5536 = vsel %vm5239, %v5535, %v5534
        %v5537 = vrot.slane %v4888, 2
        %v5538 = vsel %vm5242, %v5537, %v5536
        %v5539 = vrot.slane %v4889, 1
        %v5540 = vsel %vm5245, %v5539, %v5538
        %v5541 = vrot.slane %v4891, 7
        %v5542 = vsel %vm5227, %v5541, %v4890
        %v5543 = vrot.slane %v4892, 6
        %v5544 = vsel %vm5230, %v5543, %v5542
        %v5545 = vrot.slane %v4893, 5
        %v5546 = vsel %vm5233, %v5545, %v5544
        %v5547 = vrot.slane %v4894, 4
        %v5548 = vsel %vm5236, %v5547, %v5546
        %v5549 = vrot.slane %v4895, 3
        %v5550 = vsel %vm5239, %v5549, %v5548
        %v5551 = vrot.slane %v4896, 2
        %v5552 = vsel %vm5242, %v5551, %v5550
        %v5553 = vrot.slane %v4897, 1
        %v5554 = vsel %vm5245, %v5553, %v5552
        %v5555 = vrot.slane %v4899, 7
        %v5556 = vsel %vm5227, %v5555, %v4898
        %v5557 = vrot.slane %v4900, 6
        %v5558 = vsel %vm5230, %v5557, %v5556
        %v5559 = vrot.slane %v4901, 5
        %v5560 = vsel %vm5233, %v5559, %v5558
        %v5561 = vrot.slane %v4902, 4
        %v5562 = vsel %vm5236, %v5561, %v5560
        %v5563 = vrot.slane %v4903, 3
        %v5564 = vsel %vm5239, %v5563, %v5562
        %v5565 = vrot.slane %v4904, 2
        %v5566 = vsel %vm5242, %v5565, %v5564
        %v5567 = vrot.slane %v4905, 1
        %v5568 = vsel %vm5245, %v5567, %v5566
        %v5569 = vrot.slane %v4907, 7
        %v5570 = vsel %vm5227, %v5569, %v4906
        %v5571 = vrot.slane %v4908, 6
        %v5572 = vsel %vm5230, %v5571, %v5570
        %v5573 = vrot.slane %v4909, 5
        %v5574 = vsel %vm5233, %v5573, %v5572
        %v5575 = vrot.slane %v4910, 4
        %v5576 = vsel %vm5236, %v5575, %v5574
        %v5577 = vrot.slane %v4911, 3
        %v5578 = vsel %vm5239, %v5577, %v5576
        %v5579 = vrot.slane %v4912, 2
        %v5580 = vsel %vm5242, %v5579, %v5578
        %v5581 = vrot.slane %v4913, 1
        %v5582 = vsel %vm5245, %v5581, %v5580
        %v5583 = vrot.slane %v4915, 7
        %v5584 = vsel %vm5227, %v5583, %v4914
        %v5585 = vrot.slane %v4916, 6
        %v5586 = vsel %vm5230, %v5585, %v5584
        %v5587 = vrot.slane %v4917, 5
        %v5588 = vsel %vm5233, %v5587, %v5586
        %v5589 = vrot.slane %v4918, 4
        %v5590 = vsel %vm5236, %v5589, %v5588
        %v5591 = vrot.slane %v4919, 3
        %v5592 = vsel %vm5239, %v5591, %v5590
        %v5593 = vrot.slane %v4920, 2
        %v5594 = vsel %vm5242, %v5593, %v5592
        %v5595 = vrot.slane %v4921, 1
        %v5596 = vsel %vm5245, %v5595, %v5594
        %v5597 = vrot.slane %v4923, 7
        %v5598 = vsel %vm5227, %v5597, %v4922
        %v5599 = vrot.slane %v4924, 6
        %v5600 = vsel %vm5230, %v5599, %v5598
        %v5601 = vrot.slane %v4925, 5
        %v5602 = vsel %vm5233, %v5601, %v5600
        %v5603 = vrot.slane %v4926, 4
        %v5604 = vsel %vm5236, %v5603, %v5602
        %v5605 = vrot.slane %v4927, 3
        %v5606 = vsel %vm5239, %v5605, %v5604
        %v5607 = vrot.slane %v4928, 2
        %v5608 = vsel %vm5242, %v5607, %v5606
        %v5609 = vrot.slane %v4929, 1
        %v5610 = vsel %vm5245, %v5609, %v5608
        %v5611 = vrot.slane %v4931, 7
        %v5612 = vsel %vm5227, %v5611, %v4930
        %v5613 = vrot.slane %v4932, 6
        %v5614 = vsel %vm5230, %v5613, %v5612
        %v5615 = vrot.slane %v4933, 5
        %v5616 = vsel %vm5233, %v5615, %v5614
        %v5617 = vrot.slane %v4934, 4
        %v5618 = vsel %vm5236, %v5617, %v5616
        %v5619 = vrot.slane %v4935, 3
        %v5620 = vsel %vm5239, %v5619, %v5618
        %v5621 = vrot.slane %v4936, 2
        %v5622 = vsel %vm5242, %v5621, %v5620
        %v5623 = vrot.slane %v4937, 1
        %v5624 = vsel %vm5245, %v5623, %v5622
        %v5625 = vrot.slane %v4939, 7
        %v5626 = vsel %vm5227, %v5625, %v4938
        %v5627 = vrot.slane %v4940, 6
        %v5628 = vsel %vm5230, %v5627, %v5626
        %v5629 = vrot.slane %v4941, 5
        %v5630 = vsel %vm5233, %v5629, %v5628
        %v5631 = vrot.slane %v4942, 4
        %v5632 = vsel %vm5236, %v5631, %v5630
        %v5633 = vrot.slane %v4943, 3
        %v5634 = vsel %vm5239, %v5633, %v5632
        %v5635 = vrot.slane %v4944, 2
        %v5636 = vsel %vm5242, %v5635, %v5634
        %v5637 = vrot.slane %v4945, 1
        %v5638 = vsel %vm5245, %v5637, %v5636
        %v5639 = vrot.slane %v4947, 7
        %v5640 = vsel %vm5227, %v5639, %v4946
        %v5641 = vrot.slane %v4948, 6
        %v5642 = vsel %vm5230, %v5641, %v5640
        %v5643 = vrot.slane %v4949, 5
        %v5644 = vsel %vm5233, %v5643, %v5642
        %v5645 = vrot.slane %v4950, 4
        %v5646 = vsel %vm5236, %v5645, %v5644
        %v5647 = vrot.slane %v4951, 3
        %v5648 = vsel %vm5239, %v5647, %v5646
        %v5649 = vrot.slane %v4952, 2
        %v5650 = vsel %vm5242, %v5649, %v5648
        %v5651 = vrot.slane %v4953, 1
        %v5652 = vsel %vm5245, %v5651, %v5650
        %v5653 = vrot.slane %v4955, 7
        %v5654 = vsel %vm5227, %v5653, %v4954
        %v5655 = vrot.slane %v4956, 6
        %v5656 = vsel %vm5230, %v5655, %v5654
        %v5657 = vrot.slane %v4957, 5
        %v5658 = vsel %vm5233, %v5657, %v5656
        %v5659 = vrot.slane %v4958, 4
        %v5660 = vsel %vm5236, %v5659, %v5658
        %v5661 = vrot.slane %v4959, 3
        %v5662 = vsel %vm5239, %v5661, %v5660
        %v5663 = vrot.slane %v4960, 2
        %v5664 = vsel %vm5242, %v5663, %v5662
        %v5665 = vrot.slane %v4961, 1
        %v5666 = vsel %vm5245, %v5665, %v5664
        %v5667 = vrot.slane %v4963, 7
        %v5668 = vsel %vm5227, %v5667, %v4962
        %v5669 = vrot.slane %v4964, 6
        %v5670 = vsel %vm5230, %v5669, %v5668
        %v5671 = vrot.slane %v4965, 5
        %v5672 = vsel %vm5233, %v5671, %v5670
        %v5673 = vrot.slane %v4966, 4
        %v5674 = vsel %vm5236, %v5673, %v5672
        %v5675 = vrot.slane %v4967, 3
        %v5676 = vsel %vm5239, %v5675, %v5674
        %v5677 = vrot.slane %v4968, 2
        %v5678 = vsel %vm5242, %v5677, %v5676
        %v5679 = vrot.slane %v4969, 1
        %v5680 = vsel %vm5245, %v5679, %v5678
        %v5681 = vrot.slane %v4971, 7
        %v5682 = vsel %vm5227, %v5681, %v4970
        %v5683 = vrot.slane %v4972, 6
        %v5684 = vsel %vm5230, %v5683, %v5682
        %v5685 = vrot.slane %v4973, 5
        %v5686 = vsel %vm5233, %v5685, %v5684
        %v5687 = vrot.slane %v4974, 4
        %v5688 = vsel %vm5236, %v5687, %v5686
        %v5689 = vrot.slane %v4975, 3
        %v5690 = vsel %vm5239, %v5689, %v5688
        %v5691 = vrot.slane %v4976, 2
        %v5692 = vsel %vm5242, %v5691, %v5690
        %v5693 = vrot.slane %v4977, 1
        %v5694 = vsel %vm5245, %v5693, %v5692
        %v5695 = vrot.slane %v4979, 7
        %v5696 = vsel %vm5227, %v5695, %v4978
        %v5697 = vrot.slane %v4980, 6
        %v5698 = vsel %vm5230, %v5697, %v5696
        %v5699 = vrot.slane %v4981, 5
        %v5700 = vsel %vm5233, %v5699, %v5698
        %v5701 = vrot.slane %v4982, 4
        %v5702 = vsel %vm5236, %v5701, %v5700
        %v5703 = vrot.slane %v4983, 3
        %v5704 = vsel %vm5239, %v5703, %v5702
        %v5705 = vrot.slane %v4984, 2
        %v5706 = vsel %vm5242, %v5705, %v5704
        %v5707 = vrot.slane %v4985, 1
        %v5708 = vsel %vm5245, %v5707, %v5706
        %v5709 = vrot.slane %v4987, 7
        %v5710 = vsel %vm5227, %v5709, %v4986
        %v5711 = vrot.slane %v4988, 6
        %v5712 = vsel %vm5230, %v5711, %v5710
        %v5713 = vrot.slane %v4989, 5
        %v5714 = vsel %vm5233, %v5713, %v5712
        %v5715 = vrot.slane %v4990, 4
        %v5716 = vsel %vm5236, %v5715, %v5714
        %v5717 = vrot.slane %v4991, 3
        %v5718 = vsel %vm5239, %v5717, %v5716
        %v5719 = vrot.slane %v4992, 2
        %v5720 = vsel %vm5242, %v5719, %v5718
        %v5721 = vrot.slane %v4993, 1
        %v5722 = vsel %vm5245, %v5721, %v5720
        %v5723 = vrot.slane %v4995, 7
        %v5724 = vsel %vm5227, %v5723, %v4994
        %v5725 = vrot.slane %v4996, 6
        %v5726 = vsel %vm5230, %v5725, %v5724
        %v5727 = vrot.slane %v4997, 5
        %v5728 = vsel %vm5233, %v5727, %v5726
        %v5729 = vrot.slane %v4998, 4
        %v5730 = vsel %vm5236, %v5729, %v5728
        %v5731 = vrot.slane %v4999, 3
        %v5732 = vsel %vm5239, %v5731, %v5730
        %v5733 = vrot.slane %v5000, 2
        %v5734 = vsel %vm5242, %v5733, %v5732
        %v5735 = vrot.slane %v5001, 1
        %v5736 = vsel %vm5245, %v5735, %v5734
        %v5737 = vrot.slane %v5003, 7
        %v5738 = vsel %vm5227, %v5737, %v5002
        %v5739 = vrot.slane %v5004, 6
        %v5740 = vsel %vm5230, %v5739, %v5738
        %v5741 = vrot.slane %v5005, 5
        %v5742 = vsel %vm5233, %v5741, %v5740
        %v5743 = vrot.slane %v5006, 4
        %v5744 = vsel %vm5236, %v5743, %v5742
        %v5745 = vrot.slane %v5007, 3
        %v5746 = vsel %vm5239, %v5745, %v5744
        %v5747 = vrot.slane %v5008, 2
        %v5748 = vsel %vm5242, %v5747, %v5746
        %v5749 = vrot.slane %v5009, 1
        %v5750 = vsel %vm5245, %v5749, %v5748
        %v5751 = vrot.slane %v5011, 7
        %v5752 = vsel %vm5227, %v5751, %v5010
        %v5753 = vrot.slane %v5012, 6
        %v5754 = vsel %vm5230, %v5753, %v5752
        %v5755 = vrot.slane %v5013, 5
        %v5756 = vsel %vm5233, %v5755, %v5754
        %v5757 = vrot.slane %v5014, 4
        %v5758 = vsel %vm5236, %v5757, %v5756
        %v5759 = vrot.slane %v5015, 3
        %v5760 = vsel %vm5239, %v5759, %v5758
        %v5761 = vrot.slane %v5016, 2
        %v5762 = vsel %vm5242, %v5761, %v5760
        %v5763 = vrot.slane %v5017, 1
        %v5764 = vsel %vm5245, %v5763, %v5762
        %v5765 = vrot.slane %v5019, 7
        %v5766 = vsel %vm5227, %v5765, %v5018
        %v5767 = vrot.slane %v5020, 6
        %v5768 = vsel %vm5230, %v5767, %v5766
        %v5769 = vrot.slane %v5021, 5
        %v5770 = vsel %vm5233, %v5769, %v5768
        %v5771 = vrot.slane %v5022, 4
        %v5772 = vsel %vm5236, %v5771, %v5770
        %v5773 = vrot.slane %v5023, 3
        %v5774 = vsel %vm5239, %v5773, %v5772
        %v5775 = vrot.slane %v5024, 2
        %v5776 = vsel %vm5242, %v5775, %v5774
        %v5777 = vrot.slane %v5025, 1
        %v5778 = vsel %vm5245, %v5777, %v5776
        %v5779 = vrot.slane %v5027, 7
        %v5780 = vsel %vm5227, %v5779, %v5026
        %v5781 = vrot.slane %v5028, 6
        %v5782 = vsel %vm5230, %v5781, %v5780
        %v5783 = vrot.slane %v5029, 5
        %v5784 = vsel %vm5233, %v5783, %v5782
        %v5785 = vrot.slane %v5030, 4
        %v5786 = vsel %vm5236, %v5785, %v5784
        %v5787 = vrot.slane %v5031, 3
        %v5788 = vsel %vm5239, %v5787, %v5786
        %v5789 = vrot.slane %v5032, 2
        %v5790 = vsel %vm5242, %v5789, %v5788
        %v5791 = vrot.slane %v5033, 1
        %v5792 = vsel %vm5245, %v5791, %v5790
        %v5793 = vrot.slane %v5035, 7
        %v5794 = vsel %vm5227, %v5793, %v5034
        %v5795 = vrot.slane %v5036, 6
        %v5796 = vsel %vm5230, %v5795, %v5794
        %v5797 = vrot.slane %v5037, 5
        %v5798 = vsel %vm5233, %v5797, %v5796
        %v5799 = vrot.slane %v5038, 4
        %v5800 = vsel %vm5236, %v5799, %v5798
        %v5801 = vrot.slane %v5039, 3
        %v5802 = vsel %vm5239, %v5801, %v5800
        %v5803 = vrot.slane %v5040, 2
        %v5804 = vsel %vm5242, %v5803, %v5802
        %v5805 = vrot.slane %v5041, 1
        %v5806 = vsel %vm5245, %v5805, %v5804
        %v5807 = vrot.slane %v5043, 7
        %v5808 = vsel %vm5227, %v5807, %v5042
        %v5809 = vrot.slane %v5044, 6
        %v5810 = vsel %vm5230, %v5809, %v5808
        %v5811 = vrot.slane %v5045, 5
        %v5812 = vsel %vm5233, %v5811, %v5810
        %v5813 = vrot.slane %v5046, 4
        %v5814 = vsel %vm5236, %v5813, %v5812
        %v5815 = vrot.slane %v5047, 3
        %v5816 = vsel %vm5239, %v5815, %v5814
        %v5817 = vrot.slane %v5048, 2
        %v5818 = vsel %vm5242, %v5817, %v5816
        %v5819 = vrot.slane %v5049, 1
        %v5820 = vsel %vm5245, %v5819, %v5818
        %v5821 = vrot.slane %v5051, 7
        %v5822 = vsel %vm5227, %v5821, %v5050
        %v5823 = vrot.slane %v5052, 6
        %v5824 = vsel %vm5230, %v5823, %v5822
        %v5825 = vrot.slane %v5053, 5
        %v5826 = vsel %vm5233, %v5825, %v5824
        %v5827 = vrot.slane %v5054, 4
        %v5828 = vsel %vm5236, %v5827, %v5826
        %v5829 = vrot.slane %v5055, 3
        %v5830 = vsel %vm5239, %v5829, %v5828
        %v5831 = vrot.slane %v5056, 2
        %v5832 = vsel %vm5242, %v5831, %v5830
        %v5833 = vrot.slane %v5057, 1
        %v5834 = vsel %vm5245, %v5833, %v5832
        %v5835 = vrot.slane %v5059, 7
        %v5836 = vsel %vm5227, %v5835, %v5058
        %v5837 = vrot.slane %v5060, 6
        %v5838 = vsel %vm5230, %v5837, %v5836
        %v5839 = vrot.slane %v5061, 5
        %v5840 = vsel %vm5233, %v5839, %v5838
        %v5841 = vrot.slane %v5062, 4
        %v5842 = vsel %vm5236, %v5841, %v5840
        %v5843 = vrot.slane %v5063, 3
        %v5844 = vsel %vm5239, %v5843, %v5842
        %v5845 = vrot.slane %v5064, 2
        %v5846 = vsel %vm5242, %v5845, %v5844
        %v5847 = vrot.slane %v5065, 1
        %v5848 = vsel %vm5245, %v5847, %v5846
        %v5849 = vrot.slane %v5067, 7
        %v5850 = vsel %vm5227, %v5849, %v5066
        %v5851 = vrot.slane %v5068, 6
        %v5852 = vsel %vm5230, %v5851, %v5850
        %v5853 = vrot.slane %v5069, 5
        %v5854 = vsel %vm5233, %v5853, %v5852
        %v5855 = vrot.slane %v5070, 4
        %v5856 = vsel %vm5236, %v5855, %v5854
        %v5857 = vrot.slane %v5071, 3
        %v5858 = vsel %vm5239, %v5857, %v5856
        %v5859 = vrot.slane %v5072, 2
        %v5860 = vsel %vm5242, %v5859, %v5858
        %v5861 = vrot.slane %v5073, 1
        %v5862 = vsel %vm5245, %v5861, %v5860
        %v5863 = vrot.slane %v5075, 7
        %v5864 = vsel %vm5227, %v5863, %v5074
        %v5865 = vrot.slane %v5076, 6
        %v5866 = vsel %vm5230, %v5865, %v5864
        %v5867 = vrot.slane %v5077, 5
        %v5868 = vsel %vm5233, %v5867, %v5866
        %v5869 = vrot.slane %v5078, 4
        %v5870 = vsel %vm5236, %v5869, %v5868
        %v5871 = vrot.slane %v5079, 3
        %v5872 = vsel %vm5239, %v5871, %v5870
        %v5873 = vrot.slane %v5080, 2
        %v5874 = vsel %vm5242, %v5873, %v5872
        %v5875 = vrot.slane %v5081, 1
        %v5876 = vsel %vm5245, %v5875, %v5874
        %v5877 = vrot.slane %v5083, 7
        %v5878 = vsel %vm5227, %v5877, %v5082
        %v5879 = vrot.slane %v5084, 6
        %v5880 = vsel %vm5230, %v5879, %v5878
        %v5881 = vrot.slane %v5085, 5
        %v5882 = vsel %vm5233, %v5881, %v5880
        %v5883 = vrot.slane %v5086, 4
        %v5884 = vsel %vm5236, %v5883, %v5882
        %v5885 = vrot.slane %v5087, 3
        %v5886 = vsel %vm5239, %v5885, %v5884
        %v5887 = vrot.slane %v5088, 2
        %v5888 = vsel %vm5242, %v5887, %v5886
        %v5889 = vrot.slane %v5089, 1
        %v5890 = vsel %vm5245, %v5889, %v5888
        %v5891 = vrot.slane %v5091, 7
        %v5892 = vsel %vm5227, %v5891, %v5090
        %v5893 = vrot.slane %v5092, 6
        %v5894 = vsel %vm5230, %v5893, %v5892
        %v5895 = vrot.slane %v5093, 5
        %v5896 = vsel %vm5233, %v5895, %v5894
        %v5897 = vrot.slane %v5094, 4
        %v5898 = vsel %vm5236, %v5897, %v5896
        %v5899 = vrot.slane %v5095, 3
        %v5900 = vsel %vm5239, %v5899, %v5898
        %v5901 = vrot.slane %v5096, 2
        %v5902 = vsel %vm5242, %v5901, %v5900
        %v5903 = vrot.slane %v5097, 1
        %v5904 = vsel %vm5245, %v5903, %v5902
        %v5905 = vrot.slane %v5099, 7
        %v5906 = vsel %vm5227, %v5905, %v5098
        %v5907 = vrot.slane %v5100, 6
        %v5908 = vsel %vm5230, %v5907, %v5906
        %v5909 = vrot.slane %v5101, 5
        %v5910 = vsel %vm5233, %v5909, %v5908
        %v5911 = vrot.slane %v5102, 4
        %v5912 = vsel %vm5236, %v5911, %v5910
        %v5913 = vrot.slane %v5103, 3
        %v5914 = vsel %vm5239, %v5913, %v5912
        %v5915 = vrot.slane %v5104, 2
        %v5916 = vsel %vm5242, %v5915, %v5914
        %v5917 = vrot.slane %v5105, 1
        %v5918 = vsel %vm5245, %v5917, %v5916
        %v5919 = vrot.slane %v5107, 7
        %v5920 = vsel %vm5227, %v5919, %v5106
        %v5921 = vrot.slane %v5108, 6
        %v5922 = vsel %vm5230, %v5921, %v5920
        %v5923 = vrot.slane %v5109, 5
        %v5924 = vsel %vm5233, %v5923, %v5922
        %v5925 = vrot.slane %v5110, 4
        %v5926 = vsel %vm5236, %v5925, %v5924
        %v5927 = vrot.slane %v5111, 3
        %v5928 = vsel %vm5239, %v5927, %v5926
        %v5929 = vrot.slane %v5112, 2
        %v5930 = vsel %vm5242, %v5929, %v5928
        %v5931 = vrot.slane %v5113, 1
        %v5932 = vsel %vm5245, %v5931, %v5930
        %v5933 = vrot.slane %v5115, 7
        %v5934 = vsel %vm5227, %v5933, %v5114
        %v5935 = vrot.slane %v5116, 6
        %v5936 = vsel %vm5230, %v5935, %v5934
        %v5937 = vrot.slane %v5117, 5
        %v5938 = vsel %vm5233, %v5937, %v5936
        %v5939 = vrot.slane %v5118, 4
        %v5940 = vsel %vm5236, %v5939, %v5938
        %v5941 = vrot.slane %v5119, 3
        %v5942 = vsel %vm5239, %v5941, %v5940
        %v5943 = vrot.slane %v5120, 2
        %v5944 = vsel %vm5242, %v5943, %v5942
        %v5945 = vrot.slane %v5121, 1
        %v5946 = vsel %vm5245, %v5945, %v5944
        %v5947 = vrot.slane %v5123, 7
        %v5948 = vsel %vm5227, %v5947, %v5122
        %v5949 = vrot.slane %v5124, 6
        %v5950 = vsel %vm5230, %v5949, %v5948
        %v5951 = vrot.slane %v5125, 5
        %v5952 = vsel %vm5233, %v5951, %v5950
        %v5953 = vrot.slane %v5126, 4
        %v5954 = vsel %vm5236, %v5953, %v5952
        %v5955 = vrot.slane %v5127, 3
        %v5956 = vsel %vm5239, %v5955, %v5954
        %v5957 = vrot.slane %v5128, 2
        %v5958 = vsel %vm5242, %v5957, %v5956
        %v5959 = vrot.slane %v5129, 1
        %v5960 = vsel %vm5245, %v5959, %v5958
        %v5961 = vrot.slane %v5131, 7
        %v5962 = vsel %vm5227, %v5961, %v5130
        %v5963 = vrot.slane %v5132, 6
        %v5964 = vsel %vm5230, %v5963, %v5962
        %v5965 = vrot.slane %v5133, 5
        %v5966 = vsel %vm5233, %v5965, %v5964
        %v5967 = vrot.slane %v5134, 4
        %v5968 = vsel %vm5236, %v5967, %v5966
        %v5969 = vrot.slane %v5135, 3
        %v5970 = vsel %vm5239, %v5969, %v5968
        %v5971 = vrot.slane %v5136, 2
        %v5972 = vsel %vm5242, %v5971, %v5970
        %v5973 = vrot.slane %v5137, 1
        %v5974 = vsel %vm5245, %v5973, %v5972
        %v5975 = vrot.slane %v5139, 7
        %v5976 = vsel %vm5227, %v5975, %v5138
        %v5977 = vrot.slane %v5140, 6
        %v5978 = vsel %vm5230, %v5977, %v5976
        %v5979 = vrot.slane %v5141, 5
        %v5980 = vsel %vm5233, %v5979, %v5978
        %v5981 = vrot.slane %v5142, 4
        %v5982 = vsel %vm5236, %v5981, %v5980
        %v5983 = vrot.slane %v5143, 3
        %v5984 = vsel %vm5239, %v5983, %v5982
        %v5985 = vrot.slane %v5144, 2
        %v5986 = vsel %vm5242, %v5985, %v5984
        %v5987 = vrot.slane %v5145, 1
        %v5988 = vsel %vm5245, %v5987, %v5986
        %v5989 = vrot.slane %v5147, 7
        %v5990 = vsel %vm5227, %v5989, %v5146
        %v5991 = vrot.slane %v5148, 6
        %v5992 = vsel %vm5230, %v5991, %v5990
        %v5993 = vrot.slane %v5149, 5
        %v5994 = vsel %vm5233, %v5993, %v5992
        %v5995 = vrot.slane %v5150, 4
        %v5996 = vsel %vm5236, %v5995, %v5994
        %v5997 = vrot.slane %v5151, 3
        %v5998 = vsel %vm5239, %v5997, %v5996
        %v5999 = vrot.slane %v5152, 2
        %v6000 = vsel %vm5242, %v5999, %v5998
        %v6001 = vrot.slane %v5153, 1
        %v6002 = vsel %vm5245, %v6001, %v6000
        %v6003 = vrot.slane %v5155, 7
        %v6004 = vsel %vm5227, %v6003, %v5154
        %v6005 = vrot.slane %v5156, 6
        %v6006 = vsel %vm5230, %v6005, %v6004
        %v6007 = vrot.slane %v5157, 5
        %v6008 = vsel %vm5233, %v6007, %v6006
        %v6009 = vrot.slane %v5158, 4
        %v6010 = vsel %vm5236, %v6009, %v6008
        %v6011 = vrot.slane %v5159, 3
        %v6012 = vsel %vm5239, %v6011, %v6010
        %v6013 = vrot.slane %v5160, 2
        %v6014 = vsel %vm5242, %v6013, %v6012
        %v6015 = vrot.slane %v5161, 1
        %v6016 = vsel %vm5245, %v6015, %v6014
        %v6017 = vrot.slane %v5163, 7
        %v6018 = vsel %vm5227, %v6017, %v5162
        %v6019 = vrot.slane %v5164, 6
        %v6020 = vsel %vm5230, %v6019, %v6018
        %v6021 = vrot.slane %v5165, 5
        %v6022 = vsel %vm5233, %v6021, %v6020
        %v6023 = vrot.slane %v5166, 4
        %v6024 = vsel %vm5236, %v6023, %v6022
        %v6025 = vrot.slane %v5167, 3
        %v6026 = vsel %vm5239, %v6025, %v6024
        %v6027 = vrot.slane %v5168, 2
        %v6028 = vsel %vm5242, %v6027, %v6026
        %v6029 = vrot.slane %v5169, 1
        %v6030 = vsel %vm5245, %v6029, %v6028
        %v6031 = vrot.slane %v5171, 7
        %v6032 = vsel %vm5227, %v6031, %v5170
        %v6033 = vrot.slane %v5172, 6
        %v6034 = vsel %vm5230, %v6033, %v6032
        %v6035 = vrot.slane %v5173, 5
        %v6036 = vsel %vm5233, %v6035, %v6034
        %v6037 = vrot.slane %v5174, 4
        %v6038 = vsel %vm5236, %v6037, %v6036
        %v6039 = vrot.slane %v5175, 3
        %v6040 = vsel %vm5239, %v6039, %v6038
        %v6041 = vrot.slane %v5176, 2
        %v6042 = vsel %vm5242, %v6041, %v6040
        %v6043 = vrot.slane %v5177, 1
        %v6044 = vsel %vm5245, %v6043, %v6042
        %v6045 = vrot.slane %v5179, 7
        %v6046 = vsel %vm5227, %v6045, %v5178
        %v6047 = vrot.slane %v5180, 6
        %v6048 = vsel %vm5230, %v6047, %v6046
        %v6049 = vrot.slane %v5181, 5
        %v6050 = vsel %vm5233, %v6049, %v6048
        %v6051 = vrot.slane %v5182, 4
        %v6052 = vsel %vm5236, %v6051, %v6050
        %v6053 = vrot.slane %v5183, 3
        %v6054 = vsel %vm5239, %v6053, %v6052
        %v6055 = vrot.slane %v5184, 2
        %v6056 = vsel %vm5242, %v6055, %v6054
        %v6057 = vrot.slane %v5185, 1
        %v6058 = vsel %vm5245, %v6057, %v6056
        %v6059 = vrot.slane %v5187, 7
        %v6060 = vsel %vm5227, %v6059, %v5186
        %v6061 = vrot.slane %v5188, 6
        %v6062 = vsel %vm5230, %v6061, %v6060
        %v6063 = vrot.slane %v5189, 5
        %v6064 = vsel %vm5233, %v6063, %v6062
        %v6065 = vrot.slane %v5190, 4
        %v6066 = vsel %vm5236, %v6065, %v6064
        %v6067 = vrot.slane %v5191, 3
        %v6068 = vsel %vm5239, %v6067, %v6066
        %v6069 = vrot.slane %v5192, 2
        %v6070 = vsel %vm5242, %v6069, %v6068
        %v6071 = vrot.slane %v5193, 1
        %v6072 = vsel %vm5245, %v6071, %v6070
        %v6073 = vrot.slane %v5195, 7
        %v6074 = vsel %vm5227, %v6073, %v5194
        %v6075 = vrot.slane %v5196, 6
        %v6076 = vsel %vm5230, %v6075, %v6074
        %v6077 = vrot.slane %v5197, 5
        %v6078 = vsel %vm5233, %v6077, %v6076
        %v6079 = vrot.slane %v5198, 4
        %v6080 = vsel %vm5236, %v6079, %v6078
        %v6081 = vrot.slane %v5199, 3
        %v6082 = vsel %vm5239, %v6081, %v6080
        %v6083 = vrot.slane %v5200, 2
        %v6084 = vsel %vm5242, %v6083, %v6082
        %v6085 = vrot.slane %v5201, 1
        %v6086 = vsel %vm5245, %v6085, %v6084
        %v6087 = vrot.slane %v5203, 7
        %v6088 = vsel %vm5227, %v6087, %v5202
        %v6089 = vrot.slane %v5204, 6
        %v6090 = vsel %vm5230, %v6089, %v6088
        %v6091 = vrot.slane %v5205, 5
        %v6092 = vsel %vm5233, %v6091, %v6090
        %v6093 = vrot.slane %v5206, 4
        %v6094 = vsel %vm5236, %v6093, %v6092
        %v6095 = vrot.slane %v5207, 3
        %v6096 = vsel %vm5239, %v6095, %v6094
        %v6097 = vrot.slane %v5208, 2
        %v6098 = vsel %vm5242, %v6097, %v6096
        %v6099 = vrot.slane %v5209, 1
        %v6100 = vsel %vm5245, %v6099, %v6098
        %v6101 = vrot.slane %v5211, 7
        %v6102 = vsel %vm5227, %v6101, %v5210
        %v6103 = vrot.slane %v5212, 6
        %v6104 = vsel %vm5230, %v6103, %v6102
        %v6105 = vrot.slane %v5213, 5
        %v6106 = vsel %vm5233, %v6105, %v6104
        %v6107 = vrot.slane %v5214, 4
        %v6108 = vsel %vm5236, %v6107, %v6106
        %v6109 = vrot.slane %v5215, 3
        %v6110 = vsel %vm5239, %v6109, %v6108
        %v6111 = vrot.slane %v5216, 2
        %v6112 = vsel %vm5242, %v6111, %v6110
        %v6113 = vrot.slane %v5217, 1
        %v6114 = vsel %vm5245, %v6113, %v6112
        %v6115 = vrot.slane %v5219, 7
        %v6116 = vsel %vm5227, %v6115, %v5218
        %v6117 = vrot.slane %v5220, 6
        %v6118 = vsel %vm5230, %v6117, %v6116
        %v6119 = vrot.slane %v5221, 5
        %v6120 = vsel %vm5233, %v6119, %v6118
        %v6121 = vrot.slane %v5222, 4
        %v6122 = vsel %vm5236, %v6121, %v6120
        %v6123 = vrot.slane %v5223, 3
        %v6124 = vsel %vm5239, %v6123, %v6122
        %v6125 = vrot.slane %v5224, 2
        %v6126 = vsel %vm5242, %v6125, %v6124
        %v6127 = vrot.slane %v5225, 1
        %v6128 = vsel %vm5245, %v6127, %v6126
        %v6129 = vpack.c.b16 %v5260, %v5246
        %v6130 = vpack.c.b16 %v5288, %v5274
        %v6131 = vpack.c.b16 %v5316, %v5302
        %v6132 = vpack.c.b16 %v5344, %v5330
        %v6133 = vpack.c.b16 %v5372, %v5358
        %v6134 = vpack.c.b16 %v5400, %v5386
        %v6135 = vpack.c.b16 %v5428, %v5414
        %v6136 = vpack.c.b16 %v5456, %v5442
        %v6137 = vpack.c.b16 %v5484, %v5470
        %v6138 = vpack.c.b16 %v5512, %v5498
        %v6139 = vpack.c.b16 %v5540, %v5526
        %v6140 = vpack.c.b16 %v5568, %v5554
        %v6141 = vpack.c.b16 %v5596, %v5582
        %v6142 = vpack.c.b16 %v5624, %v5610
        %v6143 = vpack.c.b16 %v5652, %v5638
        %v6144 = vpack.c.b16 %v5680, %v5666
        %v6145 = vpack.c.b16 %v5708, %v5694
        %v6146 = vpack.c.b16 %v5736, %v5722
        %v6147 = vpack.c.b16 %v5764, %v5750
        %v6148 = vpack.c.b16 %v5792, %v5778
        %v6149 = vpack.c.b16 %v5820, %v5806
        %v6150 = vpack.c.b16 %v5848, %v5834
        %v6151 = vpack.c.b16 %v5876, %v5862
        %v6152 = vpack.c.b16 %v5904, %v5890
        %v6153 = vpack.c.b16 %v5932, %v5918
        %v6154 = vpack.c.b16 %v5960, %v5946
        %v6155 = vpack.c.b16 %v5988, %v5974
        %v6156 = vpack.c.b16 %v6016, %v6002
        %v6157 = vpack.c.b16 %v6044, %v6030
        %v6158 = vpack.c.b16 %v6072, %v6058
        %v6159 = vpack.c.b16 %v6100, %v6086
        %v6160 = vpack.c.b16 %v6128, %v6114
        %v6165 = vunpack.c.l.b16 %v1034
        %v6166 = vunpack.c.l.b16 %v1035
        %v6167 = vunpack.c.l.b16 %v1036
        %v6168 = vunpack.c.l.b16 %v1037
        %v6169 = vpack.c.b16 %v6166, %v6165
        %v6170 = vpack.c.b16 %v6168, %v6167
        %v6174 = vsel %vm1705, %v6129, 0
        %v6177 = vsel %vm1705, %v6130, 0
        %v6180 = vsel %vm1705, %v6131, 0
        %v6183 = vsel %vm1705, %v6132, 0
        %v6186 = vsel %vm1705, %v6133, 0
        %v6189 = vsel %vm1705, %v6134, 0
        %v6192 = vsel %vm1705, %v6135, 0
        %v6195 = vsel %vm1705, %v6136, 0
        %v6198 = vsel %vm1705, %v6137, 0
        %v6201 = vsel %vm1705, %v6138, 0
        %v6204 = vsel %vm1705, %v6139, 0
        %v6207 = vsel %vm1705, %v6140, 0
        %v6210 = vsel %vm1705, %v6141, 0
        %v6213 = vsel %vm1705, %v6142, 0
        %v6216 = vsel %vm1705, %v6143, 0
        %v6219 = vsel %vm1705, %v6144, 0
        %v6222 = vsel %vm1705, %v6145, 0
        %v6225 = vsel %vm1705, %v6146, 0
        %v6228 = vsel %vm1705, %v6147, 0
        %v6231 = vsel %vm1705, %v6148, 0
        %v6234 = vsel %vm1705, %v6149, 0
        %v6237 = vsel %vm1705, %v6150, 0
        %v6240 = vsel %vm1705, %v6151, 0
        %v6243 = vsel %vm1705, %v6152, 0
        %v6246 = vsel %vm1705, %v6153, 0
        %v6249 = vsel %vm1705, %v6154, 0
        %v6252 = vsel %vm1705, %v6155, 0
        %v6255 = vsel %vm1705, %v6156, 0
        %v6258 = vsel %vm1705, %v6157, 0
        %v6261 = vsel %vm1705, %v6158, 0
        %v6264 = vsel %vm1705, %v6159, 0
        %v6267 = vsel %vm1705, %v6160, 0
        %6269 = vmatprep.subr.bf16.mxu0 0
        %6270 = vmatpush1.bf16.msra.mxu0 %v6169
        %6271 = vmatprep.subr.bf16.mxu0 0
        %6272 = vmatpush1.bf16.msra.mxu0 %v6170
        %6273 = vmatprep.subr.bf16.mxu0 0
        %6274 = vmatpush1.bf16.msra.mxu0 0
        %6275 = vmatprep.subr.bf16.mxu0 0
        %6276 = vmatpush1.bf16.msra.mxu0 0
        %6277 = vmatprep.subr.bf16.mxu0 0
        %6278 = vmatpush1.bf16.msra.mxu0 0
        %6279 = vmatprep.subr.bf16.mxu0 0
        %6280 = vmatpush1.bf16.msra.mxu0 0
        %6281 = vmatprep.subr.bf16.mxu0 0
        %6282 = vmatpush1.bf16.msra.mxu0 0
        %6283 = vmatprep.subr.bf16.mxu0 0
        %6284 = vmatpush1.bf16.msra.mxu0 0
        %6285 = vmatprep.subr.bf16.mxu0 0
        %6286 = vmatpush1.bf16.msra.mxu0 0
        %6287 = vmatprep.subr.bf16.mxu0 0
        %6288 = vmatpush1.bf16.msra.mxu0 0
        %6289 = vmatprep.subr.bf16.mxu0 0
        %6290 = vmatpush1.bf16.msra.mxu0 0
        %6291 = vmatprep.subr.bf16.mxu0 0
        %6292 = vmatpush1.bf16.msra.mxu0 0
        %6293 = vmatprep.subr.bf16.mxu0 0
        %6294 = vmatpush1.bf16.msra.mxu0 0
        %6295 = vmatprep.subr.bf16.mxu0 0
        %6296 = vmatpush1.bf16.msra.mxu0 0
        %6297 = vmatprep.subr.bf16.mxu0 0
        %6298 = vmatpush1.bf16.msra.mxu0 0
        %6299 = vmatprep.subr.bf16.mxu0 0
        %6300 = vmatpush1.bf16.msra.mxu0 0
        %6301 = vmatprep.mubr.bf16.mxu0 0
        %6302 = vmatmul.mubr.bf16.gmra.mrb[0].mxu0 %v6174
        %v6303 = vpop.f32.mrb[0].mxu0
        %v6304 = vadd.f32 0.0, %v6303
        %v6305 = vpop.f32.mrb[0].mxu0
        %v6306 = vpop.f32.mrb[0].mxu0
        %v6307 = vadd.f32 0.0, %v6306
        %v6308 = vpop.f32.mrb[0].mxu0
        %6309 = vmatprep.mubr.bf16.mxu0 0
        %6310 = vmatmul.mubr.bf16.gmra.mrb[0].mxu0 %v6177
        %v6311 = vpop.f32.mrb[0].mxu0
        %v6312 = vadd.f32 0.0, %v6311
        %v6313 = vpop.f32.mrb[0].mxu0
        %v6314 = vpop.f32.mrb[0].mxu0
        %v6315 = vadd.f32 0.0, %v6314
        %v6316 = vpop.f32.mrb[0].mxu0
        %6317 = vmatprep.mubr.bf16.mxu0 0
        %6318 = vmatmul.mubr.bf16.gmra.mrb[0].mxu0 %v6180
        %v6319 = vpop.f32.mrb[0].mxu0
        %v6320 = vadd.f32 0.0, %v6319
        %v6321 = vpop.f32.mrb[0].mxu0
        %v6322 = vpop.f32.mrb[0].mxu0
        %v6323 = vadd.f32 0.0, %v6322
        %v6324 = vpop.f32.mrb[0].mxu0
        %6325 = vmatprep.mubr.bf16.mxu0 0
        %6326 = vmatmul.mubr.bf16.gmra.mrb[0].mxu0 %v6183
        %v6327 = vpop.f32.mrb[0].mxu0
        %v6328 = vadd.f32 0.0, %v6327
        %v6329 = vpop.f32.mrb[0].mxu0
        %v6330 = vpop.f32.mrb[0].mxu0
        %v6331 = vadd.f32 0.0, %v6330
        %v6332 = vpop.f32.mrb[0].mxu0
        %6333 = vmatprep.mubr.bf16.mxu0 0
        %6334 = vmatmul.mubr.bf16.gmra.mrb[0].mxu0 %v6186
        %v6335 = vpop.f32.mrb[0].mxu0
        %v6336 = vadd.f32 0.0, %v6335
        %v6337 = vpop.f32.mrb[0].mxu0
        %v6338 = vpop.f32.mrb[0].mxu0
        %v6339 = vadd.f32 0.0, %v6338
        %v6340 = vpop.f32.mrb[0].mxu0
        %6341 = vmatprep.mubr.bf16.mxu0 0
        %6342 = vmatmul.mubr.bf16.gmra.mrb[0].mxu0 %v6189
        %v6343 = vpop.f32.mrb[0].mxu0
        %v6344 = vadd.f32 0.0, %v6343
        %v6345 = vpop.f32.mrb[0].mxu0
        %v6346 = vpop.f32.mrb[0].mxu0
        %v6347 = vadd.f32 0.0, %v6346
        %v6348 = vpop.f32.mrb[0].mxu0
        %6349 = vmatprep.mubr.bf16.mxu0 0
        %6350 = vmatmul.mubr.bf16.gmra.mrb[0].mxu0 %v6192
        %v6351 = vpop.f32.mrb[0].mxu0
        %v6352 = vadd.f32 0.0, %v6351
        %v6353 = vpop.f32.mrb[0].mxu0
        %v6354 = vpop.f32.mrb[0].mxu0
        %v6355 = vadd.f32 0.0, %v6354
        %v6356 = vpop.f32.mrb[0].mxu0
        %6357 = vmatprep.mubr.bf16.mxu0 0
        %6358 = vmatmul.mubr.bf16.gmra.mrb[0].mxu0 %v6195
        %v6359 = vpop.f32.mrb[0].mxu0
        %v6360 = vadd.f32 0.0, %v6359
        %v6361 = vpop.f32.mrb[0].mxu0
        %v6362 = vpop.f32.mrb[0].mxu0
        %v6363 = vadd.f32 0.0, %v6362
        %v6364 = vpop.f32.mrb[0].mxu0
        %6365 = vmatprep.mubr.bf16.mxu0 0
        %6366 = vmatmul.mubr.bf16.gmra.mrb[0].mxu0 %v6198
        %v6367 = vpop.f32.mrb[0].mxu0
        %v6368 = vadd.f32 0.0, %v6367
        %v6369 = vpop.f32.mrb[0].mxu0
        %v6370 = vpop.f32.mrb[0].mxu0
        %v6371 = vadd.f32 0.0, %v6370
        %v6372 = vpop.f32.mrb[0].mxu0
        %6373 = vmatprep.mubr.bf16.mxu0 0
        %6374 = vmatmul.mubr.bf16.gmra.mrb[0].mxu0 %v6201
        %v6375 = vpop.f32.mrb[0].mxu0
        %v6376 = vadd.f32 0.0, %v6375
        %v6377 = vpop.f32.mrb[0].mxu0
        %v6378 = vpop.f32.mrb[0].mxu0
        %v6379 = vadd.f32 0.0, %v6378
        %v6380 = vpop.f32.mrb[0].mxu0
        %6381 = vmatprep.mubr.bf16.mxu0 0
        %6382 = vmatmul.mubr.bf16.gmra.mrb[0].mxu0 %v6204
        %v6383 = vpop.f32.mrb[0].mxu0
        %v6384 = vadd.f32 0.0, %v6383
        %v6385 = vpop.f32.mrb[0].mxu0
        %v6386 = vpop.f32.mrb[0].mxu0
        %v6387 = vadd.f32 0.0, %v6386
        %v6388 = vpop.f32.mrb[0].mxu0
        %6389 = vmatprep.mubr.bf16.mxu0 0
        %6390 = vmatmul.mubr.bf16.gmra.mrb[0].mxu0 %v6207
        %v6391 = vpop.f32.mrb[0].mxu0
        %v6392 = vadd.f32 0.0, %v6391
        %v6393 = vpop.f32.mrb[0].mxu0
        %v6394 = vpop.f32.mrb[0].mxu0
        %v6395 = vadd.f32 0.0, %v6394
        %v6396 = vpop.f32.mrb[0].mxu0
        %6397 = vmatprep.mubr.bf16.mxu0 0
        %6398 = vmatmul.mubr.bf16.gmra.mrb[0].mxu0 %v6210
        %v6399 = vpop.f32.mrb[0].mxu0
        %v6400 = vadd.f32 0.0, %v6399
        %v6401 = vpop.f32.mrb[0].mxu0
        %v6402 = vpop.f32.mrb[0].mxu0
        %v6403 = vadd.f32 0.0, %v6402
        %v6404 = vpop.f32.mrb[0].mxu0
        %6405 = vmatprep.mubr.bf16.mxu0 0
        %6406 = vmatmul.mubr.bf16.gmra.mrb[0].mxu0 %v6213
        %v6407 = vpop.f32.mrb[0].mxu0
        %v6408 = vadd.f32 0.0, %v6407
        %v6409 = vpop.f32.mrb[0].mxu0
        %v6410 = vpop.f32.mrb[0].mxu0
        %v6411 = vadd.f32 0.0, %v6410
        %v6412 = vpop.f32.mrb[0].mxu0
        %6413 = vmatprep.mubr.bf16.mxu0 0
        %6414 = vmatmul.mubr.bf16.gmra.mrb[0].mxu0 %v6216
        %v6415 = vpop.f32.mrb[0].mxu0
        %v6416 = vadd.f32 0.0, %v6415
        %v6417 = vpop.f32.mrb[0].mxu0
        %v6418 = vpop.f32.mrb[0].mxu0
        %v6419 = vadd.f32 0.0, %v6418
        %v6420 = vpop.f32.mrb[0].mxu0
        %6421 = vmatprep.mubr.bf16.mxu0 0
        %6422 = vmatmul.mubr.bf16.gmra.mrb[0].mxu0 %v6219
        %v6423 = vpop.f32.mrb[0].mxu0
        %v6424 = vadd.f32 0.0, %v6423
        %v6425 = vpop.f32.mrb[0].mxu0
        %v6426 = vpop.f32.mrb[0].mxu0
        %v6427 = vadd.f32 0.0, %v6426
        %v6428 = vpop.f32.mrb[0].mxu0
        %6429 = vmatprep.mubr.bf16.mxu0 0
        %6430 = vmatmul.mubr.bf16.gmra.mrb[0].mxu0 %v6222
        %v6431 = vpop.f32.mrb[0].mxu0
        %v6432 = vadd.f32 0.0, %v6431
        %v6433 = vpop.f32.mrb[0].mxu0
        %v6434 = vpop.f32.mrb[0].mxu0
        %v6435 = vadd.f32 0.0, %v6434
        %v6436 = vpop.f32.mrb[0].mxu0
        %6437 = vmatprep.mubr.bf16.mxu0 0
        %6438 = vmatmul.mubr.bf16.gmra.mrb[0].mxu0 %v6225
        %v6439 = vpop.f32.mrb[0].mxu0
        %v6440 = vadd.f32 0.0, %v6439
        %v6441 = vpop.f32.mrb[0].mxu0
        %v6442 = vpop.f32.mrb[0].mxu0
        %v6443 = vadd.f32 0.0, %v6442
        %v6444 = vpop.f32.mrb[0].mxu0
        %6445 = vmatprep.mubr.bf16.mxu0 0
        %6446 = vmatmul.mubr.bf16.gmra.mrb[0].mxu0 %v6228
        %v6447 = vpop.f32.mrb[0].mxu0
        %v6448 = vadd.f32 0.0, %v6447
        %v6449 = vpop.f32.mrb[0].mxu0
        %v6450 = vpop.f32.mrb[0].mxu0
        %v6451 = vadd.f32 0.0, %v6450
        %v6452 = vpop.f32.mrb[0].mxu0
        %6453 = vmatprep.mubr.bf16.mxu0 0
        %6454 = vmatmul.mubr.bf16.gmra.mrb[0].mxu0 %v6231
        %v6455 = vpop.f32.mrb[0].mxu0
        %v6456 = vadd.f32 0.0, %v6455
        %v6457 = vpop.f32.mrb[0].mxu0
        %v6458 = vpop.f32.mrb[0].mxu0
        %v6459 = vadd.f32 0.0, %v6458
        %v6460 = vpop.f32.mrb[0].mxu0
        %6461 = vmatprep.mubr.bf16.mxu0 0
        %6462 = vmatmul.mubr.bf16.gmra.mrb[0].mxu0 %v6234
        %v6463 = vpop.f32.mrb[0].mxu0
        %v6464 = vadd.f32 0.0, %v6463
        %v6465 = vpop.f32.mrb[0].mxu0
        %v6466 = vpop.f32.mrb[0].mxu0
        %v6467 = vadd.f32 0.0, %v6466
        %v6468 = vpop.f32.mrb[0].mxu0
        %6469 = vmatprep.mubr.bf16.mxu0 0
        %6470 = vmatmul.mubr.bf16.gmra.mrb[0].mxu0 %v6237
        %v6471 = vpop.f32.mrb[0].mxu0
        %v6472 = vadd.f32 0.0, %v6471
        %v6473 = vpop.f32.mrb[0].mxu0
        %v6474 = vpop.f32.mrb[0].mxu0
        %v6475 = vadd.f32 0.0, %v6474
        %v6476 = vpop.f32.mrb[0].mxu0
        %6477 = vmatprep.mubr.bf16.mxu0 0
        %6478 = vmatmul.mubr.bf16.gmra.mrb[0].mxu0 %v6240
        %v6479 = vpop.f32.mrb[0].mxu0
        %v6480 = vadd.f32 0.0, %v6479
        %v6481 = vpop.f32.mrb[0].mxu0
        %v6482 = vpop.f32.mrb[0].mxu0
        %v6483 = vadd.f32 0.0, %v6482
        %v6484 = vpop.f32.mrb[0].mxu0
        %6485 = vmatprep.mubr.bf16.mxu0 0
        %6486 = vmatmul.mubr.bf16.gmra.mrb[0].mxu0 %v6243
        %v6487 = vpop.f32.mrb[0].mxu0
        %v6488 = vadd.f32 0.0, %v6487
        %v6489 = vpop.f32.mrb[0].mxu0
        %v6490 = vpop.f32.mrb[0].mxu0
        %v6491 = vadd.f32 0.0, %v6490
        %v6492 = vpop.f32.mrb[0].mxu0
        %6493 = vmatprep.mubr.bf16.mxu0 0
        %6494 = vmatmul.mubr.bf16.gmra.mrb[0].mxu0 %v6246
        %v6495 = vpop.f32.mrb[0].mxu0
        %v6496 = vadd.f32 0.0, %v6495
        %v6497 = vpop.f32.mrb[0].mxu0
        %v6498 = vpop.f32.mrb[0].mxu0
        %v6499 = vadd.f32 0.0, %v6498
        %v6500 = vpop.f32.mrb[0].mxu0
        %6501 = vmatprep.mubr.bf16.mxu0 0
        %6502 = vmatmul.mubr.bf16.gmra.mrb[0].mxu0 %v6249
        %v6503 = vpop.f32.mrb[0].mxu0
        %v6504 = vadd.f32 0.0, %v6503
        %v6505 = vpop.f32.mrb[0].mxu0
        %v6506 = vpop.f32.mrb[0].mxu0
        %v6507 = vadd.f32 0.0, %v6506
        %v6508 = vpop.f32.mrb[0].mxu0
        %6509 = vmatprep.mubr.bf16.mxu0 0
        %6510 = vmatmul.mubr.bf16.gmra.mrb[0].mxu0 %v6252
        %v6511 = vpop.f32.mrb[0].mxu0
        %v6512 = vadd.f32 0.0, %v6511
        %v6513 = vpop.f32.mrb[0].mxu0
        %v6514 = vpop.f32.mrb[0].mxu0
        %v6515 = vadd.f32 0.0, %v6514
        %v6516 = vpop.f32.mrb[0].mxu0
        %6517 = vmatprep.mubr.bf16.mxu0 0
        %6518 = vmatmul.mubr.bf16.gmra.mrb[0].mxu0 %v6255
        %v6519 = vpop.f32.mrb[0].mxu0
        %v6520 = vadd.f32 0.0, %v6519
        %v6521 = vpop.f32.mrb[0].mxu0
        %v6522 = vpop.f32.mrb[0].mxu0
        %v6523 = vadd.f32 0.0, %v6522
        %v6524 = vpop.f32.mrb[0].mxu0
        %6525 = vmatprep.mubr.bf16.mxu0 0
        %6526 = vmatmul.mubr.bf16.gmra.mrb[0].mxu0 %v6258
        %v6527 = vpop.f32.mrb[0].mxu0
        %v6528 = vadd.f32 0.0, %v6527
        %v6529 = vpop.f32.mrb[0].mxu0
        %v6530 = vpop.f32.mrb[0].mxu0
        %v6531 = vadd.f32 0.0, %v6530
        %v6532 = vpop.f32.mrb[0].mxu0
        %6533 = vmatprep.mubr.bf16.mxu0 0
        %6534 = vmatmul.mubr.bf16.gmra.mrb[0].mxu0 %v6261
        %v6535 = vpop.f32.mrb[0].mxu0
        %v6536 = vadd.f32 0.0, %v6535
        %v6537 = vpop.f32.mrb[0].mxu0
        %v6538 = vpop.f32.mrb[0].mxu0
        %v6539 = vadd.f32 0.0, %v6538
        %v6540 = vpop.f32.mrb[0].mxu0
        %6541 = vmatprep.mubr.bf16.mxu0 0
        %6542 = vmatmul.mubr.bf16.gmra.mrb[0].mxu0 %v6264
        %v6543 = vpop.f32.mrb[0].mxu0
        %v6544 = vadd.f32 0.0, %v6543
        %v6545 = vpop.f32.mrb[0].mxu0
        %v6546 = vpop.f32.mrb[0].mxu0
        %v6547 = vadd.f32 0.0, %v6546
        %v6548 = vpop.f32.mrb[0].mxu0
        %6549 = vmatprep.mubr.bf16.mxu0 0
        %6550 = vmatmul.mubr.bf16.gmra.mrb[0].mxu0 %v6267
        %v6551 = vpop.f32.mrb[0].mxu0
        %v6552 = vadd.f32 0.0, %v6551
        %v6553 = vpop.f32.mrb[0].mxu0
        %v6554 = vpop.f32.mrb[0].mxu0
        %v6555 = vadd.f32 0.0, %v6554
        %v6556 = vpop.f32.mrb[0].mxu0
        %6557 = vdwg.mxu0
        %v6558 = vadd.f32 %v1513, %v6304
        %v6559 = vadd.f32 %v1514, %v6307
        %v6560 = vadd.f32 %v1515, %v6312
        %v6561 = vadd.f32 %v1516, %v6315
        %v6562 = vadd.f32 %v1517, %v6320
        %v6563 = vadd.f32 %v1518, %v6323
        %v6564 = vadd.f32 %v1519, %v6328
        %v6565 = vadd.f32 %v1520, %v6331
        %v6566 = vadd.f32 %v1521, %v6336
        %v6567 = vadd.f32 %v1522, %v6339
        %v6568 = vadd.f32 %v1523, %v6344
        %v6569 = vadd.f32 %v1524, %v6347
        %v6570 = vadd.f32 %v1525, %v6352
        %v6571 = vadd.f32 %v1526, %v6355
        %v6572 = vadd.f32 %v1527, %v6360
        %v6573 = vadd.f32 %v1528, %v6363
        %v6574 = vadd.f32 %v1529, %v6368
        %v6575 = vadd.f32 %v1530, %v6371
        %v6576 = vadd.f32 %v1531, %v6376
        %v6577 = vadd.f32 %v1532, %v6379
        %v6578 = vadd.f32 %v1533, %v6384
        %v6579 = vadd.f32 %v1534, %v6387
        %v6580 = vadd.f32 %v1535, %v6392
        %v6581 = vadd.f32 %v1536, %v6395
        %v6582 = vadd.f32 %v1537, %v6400
        %v6583 = vadd.f32 %v1538, %v6403
        %v6584 = vadd.f32 %v1539, %v6408
        %v6585 = vadd.f32 %v1540, %v6411
        %v6586 = vadd.f32 %v1541, %v6416
        %v6587 = vadd.f32 %v1542, %v6419
        %v6588 = vadd.f32 %v1543, %v6424
        %v6589 = vadd.f32 %v1544, %v6427
        %v6590 = vadd.f32 %v1545, %v6432
        %v6591 = vadd.f32 %v1546, %v6435
        %v6592 = vadd.f32 %v1547, %v6440
        %v6593 = vadd.f32 %v1548, %v6443
        %v6594 = vadd.f32 %v1549, %v6448
        %v6595 = vadd.f32 %v1550, %v6451
        %v6596 = vadd.f32 %v1551, %v6456
        %v6597 = vadd.f32 %v1552, %v6459
        %v6598 = vadd.f32 %v1553, %v6464
        %v6599 = vadd.f32 %v1554, %v6467
        %v6600 = vadd.f32 %v1555, %v6472
        %v6601 = vadd.f32 %v1556, %v6475
        %v6602 = vadd.f32 %v1557, %v6480
        %v6603 = vadd.f32 %v1558, %v6483
        %v6604 = vadd.f32 %v1559, %v6488
        %v6605 = vadd.f32 %v1560, %v6491
        %v6606 = vadd.f32 %v1561, %v6496
        %v6607 = vadd.f32 %v1562, %v6499
        %v6608 = vadd.f32 %v1563, %v6504
        %v6609 = vadd.f32 %v1564, %v6507
        %v6610 = vadd.f32 %v1565, %v6512
        %v6611 = vadd.f32 %v1566, %v6515
        %v6612 = vadd.f32 %v1567, %v6520
        %v6613 = vadd.f32 %v1568, %v6523
        %v6614 = vadd.f32 %v1569, %v6528
        %v6615 = vadd.f32 %v1570, %v6531
        %v6616 = vadd.f32 %v1571, %v6536
        %v6617 = vadd.f32 %v1572, %v6539
        %v6618 = vadd.f32 %v1573, %v6544
        %v6619 = vadd.f32 %v1574, %v6547
        %v6620 = vadd.f32 %v1575, %v6552
        %v6621 = vadd.f32 %v1576, %v6555
        %v6622 = vmax.f32 %v6558, 0.0
        %v6623 = vmax.f32 %v6559, 0.0
        %v6624 = vmax.f32 %v6560, 0.0
        %v6625 = vmax.f32 %v6561, 0.0
        %v6626 = vmax.f32 %v6562, 0.0
        %v6627 = vmax.f32 %v6563, 0.0
        %v6628 = vmax.f32 %v6564, 0.0
        %v6629 = vmax.f32 %v6565, 0.0
        %v6630 = vmax.f32 %v6566, 0.0
        %v6631 = vmax.f32 %v6567, 0.0
        %v6632 = vmax.f32 %v6568, 0.0
        %v6633 = vmax.f32 %v6569, 0.0
        %v6634 = vmax.f32 %v6570, 0.0
        %v6635 = vmax.f32 %v6571, 0.0
        %v6636 = vmax.f32 %v6572, 0.0
        %v6637 = vmax.f32 %v6573, 0.0
        %v6638 = vmax.f32 %v6574, 0.0
        %v6639 = vmax.f32 %v6575, 0.0
        %v6640 = vmax.f32 %v6576, 0.0
        %v6641 = vmax.f32 %v6577, 0.0
        %v6642 = vmax.f32 %v6578, 0.0
        %v6643 = vmax.f32 %v6579, 0.0
        %v6644 = vmax.f32 %v6580, 0.0
        %v6645 = vmax.f32 %v6581, 0.0
        %v6646 = vmax.f32 %v6582, 0.0
        %v6647 = vmax.f32 %v6583, 0.0
        %v6648 = vmax.f32 %v6584, 0.0
        %v6649 = vmax.f32 %v6585, 0.0
        %v6650 = vmax.f32 %v6586, 0.0
        %v6651 = vmax.f32 %v6587, 0.0
        %v6652 = vmax.f32 %v6588, 0.0
        %v6653 = vmax.f32 %v6589, 0.0
        %v6654 = vmax.f32 %v6590, 0.0
        %v6655 = vmax.f32 %v6591, 0.0
        %v6656 = vmax.f32 %v6592, 0.0
        %v6657 = vmax.f32 %v6593, 0.0
        %v6658 = vmax.f32 %v6594, 0.0
        %v6659 = vmax.f32 %v6595, 0.0
        %v6660 = vmax.f32 %v6596, 0.0
        %v6661 = vmax.f32 %v6597, 0.0
        %v6662 = vmax.f32 %v6598, 0.0
        %v6663 = vmax.f32 %v6599, 0.0
        %v6664 = vmax.f32 %v6600, 0.0
        %v6665 = vmax.f32 %v6601, 0.0
        %v6666 = vmax.f32 %v6602, 0.0
        %v6667 = vmax.f32 %v6603, 0.0
        %v6668 = vmax.f32 %v6604, 0.0
        %v6669 = vmax.f32 %v6605, 0.0
        %v6670 = vmax.f32 %v6606, 0.0
        %v6671 = vmax.f32 %v6607, 0.0
        %v6672 = vmax.f32 %v6608, 0.0
        %v6673 = vmax.f32 %v6609, 0.0
        %v6674 = vmax.f32 %v6610, 0.0
        %v6675 = vmax.f32 %v6611, 0.0
        %v6676 = vmax.f32 %v6612, 0.0
        %v6677 = vmax.f32 %v6613, 0.0
        %v6678 = vmax.f32 %v6614, 0.0
        %v6679 = vmax.f32 %v6615, 0.0
        %v6680 = vmax.f32 %v6616, 0.0
        %v6681 = vmax.f32 %v6617, 0.0
        %v6682 = vmax.f32 %v6618, 0.0
        %v6683 = vmax.f32 %v6619, 0.0
        %v6684 = vmax.f32 %v6620, 0.0
        %v6685 = vmax.f32 %v6621, 0.0
        %v6686 = vmul.f32 %v6622, %v588
        %v6687 = vmul.f32 %v6623, %v595
        %v6688 = vmul.f32 %v6624, %v602
        %v6689 = vmul.f32 %v6625, %v609
        %v6690 = vmul.f32 %v6626, %v616
        %v6691 = vmul.f32 %v6627, %v623
        %v6692 = vmul.f32 %v6628, %v630
        %v6693 = vmul.f32 %v6629, %v637
        %v6694 = vmul.f32 %v6630, %v644
        %v6695 = vmul.f32 %v6631, %v651
        %v6696 = vmul.f32 %v6632, %v658
        %v6697 = vmul.f32 %v6633, %v665
        %v6698 = vmul.f32 %v6634, %v672
        %v6699 = vmul.f32 %v6635, %v679
        %v6700 = vmul.f32 %v6636, %v686
        %v6701 = vmul.f32 %v6637, %v693
        %v6702 = vmul.f32 %v6638, %v700
        %v6703 = vmul.f32 %v6639, %v707
        %v6704 = vmul.f32 %v6640, %v714
        %v6705 = vmul.f32 %v6641, %v721
        %v6706 = vmul.f32 %v6642, %v728
        %v6707 = vmul.f32 %v6643, %v735
        %v6708 = vmul.f32 %v6644, %v742
        %v6709 = vmul.f32 %v6645, %v749
        %v6710 = vmul.f32 %v6646, %v756
        %v6711 = vmul.f32 %v6647, %v763
        %v6712 = vmul.f32 %v6648, %v770
        %v6713 = vmul.f32 %v6649, %v777
        %v6714 = vmul.f32 %v6650, %v784
        %v6715 = vmul.f32 %v6651, %v791
        %v6716 = vmul.f32 %v6652, %v798
        %v6717 = vmul.f32 %v6653, %v805
        %v6718 = vmul.f32 %v6654, %v812
        %v6719 = vmul.f32 %v6655, %v819
        %v6720 = vmul.f32 %v6656, %v826
        %v6721 = vmul.f32 %v6657, %v833
        %v6722 = vmul.f32 %v6658, %v840
        %v6723 = vmul.f32 %v6659, %v847
        %v6724 = vmul.f32 %v6660, %v854
        %v6725 = vmul.f32 %v6661, %v861
        %v6726 = vmul.f32 %v6662, %v868
        %v6727 = vmul.f32 %v6663, %v875
        %v6728 = vmul.f32 %v6664, %v882
        %v6729 = vmul.f32 %v6665, %v889
        %v6730 = vmul.f32 %v6666, %v896
        %v6731 = vmul.f32 %v6667, %v903
        %v6732 = vmul.f32 %v6668, %v910
        %v6733 = vmul.f32 %v6669, %v917
        %v6734 = vmul.f32 %v6670, %v924
        %v6735 = vmul.f32 %v6671, %v931
        %v6736 = vmul.f32 %v6672, %v938
        %v6737 = vmul.f32 %v6673, %v945
        %v6738 = vmul.f32 %v6674, %v952
        %v6739 = vmul.f32 %v6675, %v959
        %v6740 = vmul.f32 %v6676, %v966
        %v6741 = vmul.f32 %v6677, %v973
        %v6742 = vmul.f32 %v6678, %v980
        %v6743 = vmul.f32 %v6679, %v987
        %v6744 = vmul.f32 %v6680, %v994
        %v6745 = vmul.f32 %v6681, %v1001
        %v6746 = vmul.f32 %v6682, %v1008
        %v6747 = vmul.f32 %v6683, %v1015
        %v6748 = vmul.f32 %v6684, %v1022
        %v6749 = vmul.f32 %v6685, %v1029
        %v6750 = vsub.f32 0.0, %v6686
        %v6751 = vsub.f32 0.0, %v6687
        %v6752 = vsub.f32 0.0, %v6688
        %v6753 = vsub.f32 0.0, %v6689
        %v6754 = vsub.f32 0.0, %v6690
        %v6755 = vsub.f32 0.0, %v6691
        %v6756 = vsub.f32 0.0, %v6692
        %v6757 = vsub.f32 0.0, %v6693
        %v6758 = vsub.f32 0.0, %v6694
        %v6759 = vsub.f32 0.0, %v6695
        %v6760 = vsub.f32 0.0, %v6696
        %v6761 = vsub.f32 0.0, %v6697
        %v6762 = vsub.f32 0.0, %v6698
        %v6763 = vsub.f32 0.0, %v6699
        %v6764 = vsub.f32 0.0, %v6700
        %v6765 = vsub.f32 0.0, %v6701
        %v6766 = vsub.f32 0.0, %v6702
        %v6767 = vsub.f32 0.0, %v6703
        %v6768 = vsub.f32 0.0, %v6704
        %v6769 = vsub.f32 0.0, %v6705
        %v6770 = vsub.f32 0.0, %v6706
        %v6771 = vsub.f32 0.0, %v6707
        %v6772 = vsub.f32 0.0, %v6708
        %v6773 = vsub.f32 0.0, %v6709
        %v6774 = vsub.f32 0.0, %v6710
        %v6775 = vsub.f32 0.0, %v6711
        %v6776 = vsub.f32 0.0, %v6712
        %v6777 = vsub.f32 0.0, %v6713
        %v6778 = vsub.f32 0.0, %v6714
        %v6779 = vsub.f32 0.0, %v6715
        %v6780 = vsub.f32 0.0, %v6716
        %v6781 = vsub.f32 0.0, %v6717
        %v6782 = vsub.f32 0.0, %v6718
        %v6783 = vsub.f32 0.0, %v6719
        %v6784 = vsub.f32 0.0, %v6720
        %v6785 = vsub.f32 0.0, %v6721
        %v6786 = vsub.f32 0.0, %v6722
        %v6787 = vsub.f32 0.0, %v6723
        %v6788 = vsub.f32 0.0, %v6724
        %v6789 = vsub.f32 0.0, %v6725
        %v6790 = vsub.f32 0.0, %v6726
        %v6791 = vsub.f32 0.0, %v6727
        %v6792 = vsub.f32 0.0, %v6728
        %v6793 = vsub.f32 0.0, %v6729
        %v6794 = vsub.f32 0.0, %v6730
        %v6795 = vsub.f32 0.0, %v6731
        %v6796 = vsub.f32 0.0, %v6732
        %v6797 = vsub.f32 0.0, %v6733
        %v6798 = vsub.f32 0.0, %v6734
        %v6799 = vsub.f32 0.0, %v6735
        %v6800 = vsub.f32 0.0, %v6736
        %v6801 = vsub.f32 0.0, %v6737
        %v6802 = vsub.f32 0.0, %v6738
        %v6803 = vsub.f32 0.0, %v6739
        %v6804 = vsub.f32 0.0, %v6740
        %v6805 = vsub.f32 0.0, %v6741
        %v6806 = vsub.f32 0.0, %v6742
        %v6807 = vsub.f32 0.0, %v6743
        %v6808 = vsub.f32 0.0, %v6744
        %v6809 = vsub.f32 0.0, %v6745
        %v6810 = vsub.f32 0.0, %v6746
        %v6811 = vsub.f32 0.0, %v6747
        %v6812 = vsub.f32 0.0, %v6748
        %v6813 = vsub.f32 0.0, %v6749
        %v6814 = vmul.f32 %v6750, 1.442695
        %v6815 = vpow.pop %v6814
        %v6816 = vmul.f32 %v6751, 1.442695
        %v6817 = vpow.pop %v6816
        %v6818 = vmul.f32 %v6752, 1.442695
        %v6819 = vpow.pop %v6818
        %v6820 = vmul.f32 %v6753, 1.442695
        %v6821 = vpow.pop %v6820
        %v6822 = vmul.f32 %v6754, 1.442695
        %v6823 = vpow.pop %v6822
        %v6824 = vmul.f32 %v6755, 1.442695
        %v6825 = vpow.pop %v6824
        %v6826 = vmul.f32 %v6756, 1.442695
        %v6827 = vpow.pop %v6826
        %v6828 = vmul.f32 %v6757, 1.442695
        %v6829 = vpow.pop %v6828
        %v6830 = vmul.f32 %v6758, 1.442695
        %v6831 = vpow.pop %v6830
        %v6832 = vmul.f32 %v6759, 1.442695
        %v6833 = vpow.pop %v6832
        %v6834 = vmul.f32 %v6760, 1.442695
        %v6835 = vpow.pop %v6834
        %v6836 = vmul.f32 %v6761, 1.442695
        %v6837 = vpow.pop %v6836
        %v6838 = vmul.f32 %v6762, 1.442695
        %v6839 = vpow.pop %v6838
        %v6840 = vmul.f32 %v6763, 1.442695
        %v6841 = vpow.pop %v6840
        %v6842 = vmul.f32 %v6764, 1.442695
        %v6843 = vpow.pop %v6842
        %v6844 = vmul.f32 %v6765, 1.442695
        %v6845 = vpow.pop %v6844
        %v6846 = vmul.f32 %v6766, 1.442695
        %v6847 = vpow.pop %v6846
        %v6848 = vmul.f32 %v6767, 1.442695
        %v6849 = vpow.pop %v6848
        %v6850 = vmul.f32 %v6768, 1.442695
        %v6851 = vpow.pop %v6850
        %v6852 = vmul.f32 %v6769, 1.442695
        %v6853 = vpow.pop %v6852
        %v6854 = vmul.f32 %v6770, 1.442695
        %v6855 = vpow.pop %v6854
        %v6856 = vmul.f32 %v6771, 1.442695
        %v6857 = vpow.pop %v6856
        %v6858 = vmul.f32 %v6772, 1.442695
        %v6859 = vpow.pop %v6858
        %v6860 = vmul.f32 %v6773, 1.442695
        %v6861 = vpow.pop %v6860
        %v6862 = vmul.f32 %v6774, 1.442695
        %v6863 = vpow.pop %v6862
        %v6864 = vmul.f32 %v6775, 1.442695
        %v6865 = vpow.pop %v6864
        %v6866 = vmul.f32 %v6776, 1.442695
        %v6867 = vpow.pop %v6866
        %v6868 = vmul.f32 %v6777, 1.442695
        %v6869 = vpow.pop %v6868
        %v6870 = vmul.f32 %v6778, 1.442695
        %v6871 = vpow.pop %v6870
        %v6872 = vmul.f32 %v6779, 1.442695
        %v6873 = vpow.pop %v6872
        %v6874 = vmul.f32 %v6780, 1.442695
        %v6875 = vpow.pop %v6874
        %v6876 = vmul.f32 %v6781, 1.442695
        %v6877 = vpow.pop %v6876
        %v6878 = vmul.f32 %v6782, 1.442695
        %v6879 = vpow.pop %v6878
        %v6880 = vmul.f32 %v6783, 1.442695
        %v6881 = vpow.pop %v6880
        %v6882 = vmul.f32 %v6784, 1.442695
        %v6883 = vpow.pop %v6882
        %v6884 = vmul.f32 %v6785, 1.442695
        %v6885 = vpow.pop %v6884
        %v6886 = vmul.f32 %v6786, 1.442695
        %v6887 = vpow.pop %v6886
        %v6888 = vmul.f32 %v6787, 1.442695
        %v6889 = vpow.pop %v6888
        %v6890 = vmul.f32 %v6788, 1.442695
        %v6891 = vpow.pop %v6890
        %v6892 = vmul.f32 %v6789, 1.442695
        %v6893 = vpow.pop %v6892
        %v6894 = vmul.f32 %v6790, 1.442695
        %v6895 = vpow.pop %v6894
        %v6896 = vmul.f32 %v6791, 1.442695
        %v6897 = vpow.pop %v6896
        %v6898 = vmul.f32 %v6792, 1.442695
        %v6899 = vpow.pop %v6898
        %v6900 = vmul.f32 %v6793, 1.442695
        %v6901 = vpow.pop %v6900
        %v6902 = vmul.f32 %v6794, 1.442695
        %v6903 = vpow.pop %v6902
        %v6904 = vmul.f32 %v6795, 1.442695
        %v6905 = vpow.pop %v6904
        %v6906 = vmul.f32 %v6796, 1.442695
        %v6907 = vpow.pop %v6906
        %v6908 = vmul.f32 %v6797, 1.442695
        %v6909 = vpow.pop %v6908
        %v6910 = vmul.f32 %v6798, 1.442695
        %v6911 = vpow.pop %v6910
        %v6912 = vmul.f32 %v6799, 1.442695
        %v6913 = vpow.pop %v6912
        %v6914 = vmul.f32 %v6800, 1.442695
        %v6915 = vpow.pop %v6914
        %v6916 = vmul.f32 %v6801, 1.442695
        %v6917 = vpow.pop %v6916
        %v6918 = vmul.f32 %v6802, 1.442695
        %v6919 = vpow.pop %v6918
        %v6920 = vmul.f32 %v6803, 1.442695
        %v6921 = vpow.pop %v6920
        %v6922 = vmul.f32 %v6804, 1.442695
        %v6923 = vpow.pop %v6922
        %v6924 = vmul.f32 %v6805, 1.442695
        %v6925 = vpow.pop %v6924
        %v6926 = vmul.f32 %v6806, 1.442695
        %v6927 = vpow.pop %v6926
        %v6928 = vmul.f32 %v6807, 1.442695
        %v6929 = vpow.pop %v6928
        %v6930 = vmul.f32 %v6808, 1.442695
        %v6931 = vpow.pop %v6930
        %v6932 = vmul.f32 %v6809, 1.442695
        %v6933 = vpow.pop %v6932
        %v6934 = vmul.f32 %v6810, 1.442695
        %v6935 = vpow.pop %v6934
        %v6936 = vmul.f32 %v6811, 1.442695
        %v6937 = vpow.pop %v6936
        %v6938 = vmul.f32 %v6812, 1.442695
        %v6939 = vpow.pop %v6938
        %v6940 = vmul.f32 %v6813, 1.442695
        %v6941 = vpow.pop %v6940
        %v6942 = vadd.f32 %v6815, 1.0
        %v6943 = vadd.f32 %v6817, 1.0
        %v6944 = vadd.f32 %v6819, 1.0
        %v6945 = vadd.f32 %v6821, 1.0
        %v6946 = vadd.f32 %v6823, 1.0
        %v6947 = vadd.f32 %v6825, 1.0
        %v6948 = vadd.f32 %v6827, 1.0
        %v6949 = vadd.f32 %v6829, 1.0
        %v6950 = vadd.f32 %v6831, 1.0
        %v6951 = vadd.f32 %v6833, 1.0
        %v6952 = vadd.f32 %v6835, 1.0
        %v6953 = vadd.f32 %v6837, 1.0
        %v6954 = vadd.f32 %v6839, 1.0
        %v6955 = vadd.f32 %v6841, 1.0
        %v6956 = vadd.f32 %v6843, 1.0
        %v6957 = vadd.f32 %v6845, 1.0
        %v6958 = vadd.f32 %v6847, 1.0
        %v6959 = vadd.f32 %v6849, 1.0
        %v6960 = vadd.f32 %v6851, 1.0
        %v6961 = vadd.f32 %v6853, 1.0
        %v6962 = vadd.f32 %v6855, 1.0
        %v6963 = vadd.f32 %v6857, 1.0
        %v6964 = vadd.f32 %v6859, 1.0
        %v6965 = vadd.f32 %v6861, 1.0
        %v6966 = vadd.f32 %v6863, 1.0
        %v6967 = vadd.f32 %v6865, 1.0
        %v6968 = vadd.f32 %v6867, 1.0
        %v6969 = vadd.f32 %v6869, 1.0
        %v6970 = vadd.f32 %v6871, 1.0
        %v6971 = vadd.f32 %v6873, 1.0
        %v6972 = vadd.f32 %v6875, 1.0
        %v6973 = vadd.f32 %v6877, 1.0
        %v6974 = vadd.f32 %v6879, 1.0
        %v6975 = vadd.f32 %v6881, 1.0
        %v6976 = vadd.f32 %v6883, 1.0
        %v6977 = vadd.f32 %v6885, 1.0
        %v6978 = vadd.f32 %v6887, 1.0
        %v6979 = vadd.f32 %v6889, 1.0
        %v6980 = vadd.f32 %v6891, 1.0
        %v6981 = vadd.f32 %v6893, 1.0
        %v6982 = vadd.f32 %v6895, 1.0
        %v6983 = vadd.f32 %v6897, 1.0
        %v6984 = vadd.f32 %v6899, 1.0
        %v6985 = vadd.f32 %v6901, 1.0
        %v6986 = vadd.f32 %v6903, 1.0
        %v6987 = vadd.f32 %v6905, 1.0
        %v6988 = vadd.f32 %v6907, 1.0
        %v6989 = vadd.f32 %v6909, 1.0
        %v6990 = vadd.f32 %v6911, 1.0
        %v6991 = vadd.f32 %v6913, 1.0
        %v6992 = vadd.f32 %v6915, 1.0
        %v6993 = vadd.f32 %v6917, 1.0
        %v6994 = vadd.f32 %v6919, 1.0
        %v6995 = vadd.f32 %v6921, 1.0
        %v6996 = vadd.f32 %v6923, 1.0
        %v6997 = vadd.f32 %v6925, 1.0
        %v6998 = vadd.f32 %v6927, 1.0
        %v6999 = vadd.f32 %v6929, 1.0
        %v7000 = vadd.f32 %v6931, 1.0
        %v7001 = vadd.f32 %v6933, 1.0
        %v7002 = vadd.f32 %v6935, 1.0
        %v7003 = vadd.f32 %v6937, 1.0
        %v7004 = vadd.f32 %v6939, 1.0
        %v7005 = vadd.f32 %v6941, 1.0
        %v7006 = vrcp.pop %v6942
        %v7007 = vrcp.pop %v6943
        %v7008 = vrcp.pop %v6944
        %v7009 = vrcp.pop %v6945
        %v7010 = vrcp.pop %v6946
        %v7011 = vrcp.pop %v6947
        %v7012 = vrcp.pop %v6948
        %v7013 = vrcp.pop %v6949
        %v7014 = vrcp.pop %v6950
        %v7015 = vrcp.pop %v6951
        %v7016 = vrcp.pop %v6952
        %v7017 = vrcp.pop %v6953
        %v7018 = vrcp.pop %v6954
        %v7019 = vrcp.pop %v6955
        %v7020 = vrcp.pop %v6956
        %v7021 = vrcp.pop %v6957
        %v7022 = vrcp.pop %v6958
        %v7023 = vrcp.pop %v6959
        %v7024 = vrcp.pop %v6960
        %v7025 = vrcp.pop %v6961
        %v7026 = vrcp.pop %v6962
        %v7027 = vrcp.pop %v6963
        %v7028 = vrcp.pop %v6964
        %v7029 = vrcp.pop %v6965
        %v7030 = vrcp.pop %v6966
        %v7031 = vrcp.pop %v6967
        %v7032 = vrcp.pop %v6968
        %v7033 = vrcp.pop %v6969
        %v7034 = vrcp.pop %v6970
        %v7035 = vrcp.pop %v6971
        %v7036 = vrcp.pop %v6972
        %v7037 = vrcp.pop %v6973
        %v7038 = vrcp.pop %v6974
        %v7039 = vrcp.pop %v6975
        %v7040 = vrcp.pop %v6976
        %v7041 = vrcp.pop %v6977
        %v7042 = vrcp.pop %v6978
        %v7043 = vrcp.pop %v6979
        %v7044 = vrcp.pop %v6980
        %v7045 = vrcp.pop %v6981
        %v7046 = vrcp.pop %v6982
        %v7047 = vrcp.pop %v6983
        %v7048 = vrcp.pop %v6984
        %v7049 = vrcp.pop %v6985
        %v7050 = vrcp.pop %v6986
        %v7051 = vrcp.pop %v6987
        %v7052 = vrcp.pop %v6988
        %v7053 = vrcp.pop %v6989
        %v7054 = vrcp.pop %v6990
        %v7055 = vrcp.pop %v6991
        %v7056 = vrcp.pop %v6992
        %v7057 = vrcp.pop %v6993
        %v7058 = vrcp.pop %v6994
        %v7059 = vrcp.pop %v6995
        %v7060 = vrcp.pop %v6996
        %v7061 = vrcp.pop %v6997
        %v7062 = vrcp.pop %v6998
        %v7063 = vrcp.pop %v6999
        %v7064 = vrcp.pop %v7000
        %v7065 = vrcp.pop %v7001
        %v7066 = vrcp.pop %v7002
        %v7067 = vrcp.pop %v7003
        %v7068 = vrcp.pop %v7004
        %v7069 = vrcp.pop %v7005
        %v7070 = vsel %vm1705, %v7006, 0.0
        %v7071 = vrot.slane %v7070, 4
        %v7072 = vadd.f32 %v7070, %v7071
        %v7073 = vrot.slane %v7072, 2
        %v7074 = vadd.f32 %v7072, %v7073
        %v7075 = vrot.slane %v7074, 1
        %v7076 = vadd.f32 %v7074, %v7075
        %v7077 = vsel %vm1705, %v7007, 0.0
        %v7078 = vrot.slane %v7077, 4
        %v7079 = vadd.f32 %v7077, %v7078
        %v7080 = vrot.slane %v7079, 2
        %v7081 = vadd.f32 %v7079, %v7080
        %v7082 = vrot.slane %v7081, 1
        %v7083 = vadd.f32 %v7081, %v7082
        %v7084 = vsel %vm1705, %v7008, 0.0
        %v7085 = vrot.slane %v7084, 4
        %v7086 = vadd.f32 %v7084, %v7085
        %v7087 = vrot.slane %v7086, 2
        %v7088 = vadd.f32 %v7086, %v7087
        %v7089 = vrot.slane %v7088, 1
        %v7090 = vadd.f32 %v7088, %v7089
        %v7091 = vsel %vm1705, %v7009, 0.0
        %v7092 = vrot.slane %v7091, 4
        %v7093 = vadd.f32 %v7091, %v7092
        %v7094 = vrot.slane %v7093, 2
        %v7095 = vadd.f32 %v7093, %v7094
        %v7096 = vrot.slane %v7095, 1
        %v7097 = vadd.f32 %v7095, %v7096
        %v7098 = vsel %vm1705, %v7010, 0.0
        %v7099 = vrot.slane %v7098, 4
        %v7100 = vadd.f32 %v7098, %v7099
        %v7101 = vrot.slane %v7100, 2
        %v7102 = vadd.f32 %v7100, %v7101
        %v7103 = vrot.slane %v7102, 1
        %v7104 = vadd.f32 %v7102, %v7103
        %v7105 = vsel %vm1705, %v7011, 0.0
        %v7106 = vrot.slane %v7105, 4
        %v7107 = vadd.f32 %v7105, %v7106
        %v7108 = vrot.slane %v7107, 2
        %v7109 = vadd.f32 %v7107, %v7108
        %v7110 = vrot.slane %v7109, 1
        %v7111 = vadd.f32 %v7109, %v7110
        %v7112 = vsel %vm1705, %v7012, 0.0
        %v7113 = vrot.slane %v7112, 4
        %v7114 = vadd.f32 %v7112, %v7113
        %v7115 = vrot.slane %v7114, 2
        %v7116 = vadd.f32 %v7114, %v7115
        %v7117 = vrot.slane %v7116, 1
        %v7118 = vadd.f32 %v7116, %v7117
        %v7119 = vsel %vm1705, %v7013, 0.0
        %v7120 = vrot.slane %v7119, 4
        %v7121 = vadd.f32 %v7119, %v7120
        %v7122 = vrot.slane %v7121, 2
        %v7123 = vadd.f32 %v7121, %v7122
        %v7124 = vrot.slane %v7123, 1
        %v7125 = vadd.f32 %v7123, %v7124
        %v7126 = vsel %vm1705, %v7014, 0.0
        %v7127 = vrot.slane %v7126, 4
        %v7128 = vadd.f32 %v7126, %v7127
        %v7129 = vrot.slane %v7128, 2
        %v7130 = vadd.f32 %v7128, %v7129
        %v7131 = vrot.slane %v7130, 1
        %v7132 = vadd.f32 %v7130, %v7131
        %v7133 = vsel %vm1705, %v7015, 0.0
        %v7134 = vrot.slane %v7133, 4
        %v7135 = vadd.f32 %v7133, %v7134
        %v7136 = vrot.slane %v7135, 2
        %v7137 = vadd.f32 %v7135, %v7136
        %v7138 = vrot.slane %v7137, 1
        %v7139 = vadd.f32 %v7137, %v7138
        %v7140 = vsel %vm1705, %v7016, 0.0
        %v7141 = vrot.slane %v7140, 4
        %v7142 = vadd.f32 %v7140, %v7141
        %v7143 = vrot.slane %v7142, 2
        %v7144 = vadd.f32 %v7142, %v7143
        %v7145 = vrot.slane %v7144, 1
        %v7146 = vadd.f32 %v7144, %v7145
        %v7147 = vsel %vm1705, %v7017, 0.0
        %v7148 = vrot.slane %v7147, 4
        %v7149 = vadd.f32 %v7147, %v7148
        %v7150 = vrot.slane %v7149, 2
        %v7151 = vadd.f32 %v7149, %v7150
        %v7152 = vrot.slane %v7151, 1
        %v7153 = vadd.f32 %v7151, %v7152
        %v7154 = vsel %vm1705, %v7018, 0.0
        %v7155 = vrot.slane %v7154, 4
        %v7156 = vadd.f32 %v7154, %v7155
        %v7157 = vrot.slane %v7156, 2
        %v7158 = vadd.f32 %v7156, %v7157
        %v7159 = vrot.slane %v7158, 1
        %v7160 = vadd.f32 %v7158, %v7159
        %v7161 = vsel %vm1705, %v7019, 0.0
        %v7162 = vrot.slane %v7161, 4
        %v7163 = vadd.f32 %v7161, %v7162
        %v7164 = vrot.slane %v7163, 2
        %v7165 = vadd.f32 %v7163, %v7164
        %v7166 = vrot.slane %v7165, 1
        %v7167 = vadd.f32 %v7165, %v7166
        %v7168 = vsel %vm1705, %v7020, 0.0
        %v7169 = vrot.slane %v7168, 4
        %v7170 = vadd.f32 %v7168, %v7169
        %v7171 = vrot.slane %v7170, 2
        %v7172 = vadd.f32 %v7170, %v7171
        %v7173 = vrot.slane %v7172, 1
        %v7174 = vadd.f32 %v7172, %v7173
        %v7175 = vsel %vm1705, %v7021, 0.0
        %v7176 = vrot.slane %v7175, 4
        %v7177 = vadd.f32 %v7175, %v7176
        %v7178 = vrot.slane %v7177, 2
        %v7179 = vadd.f32 %v7177, %v7178
        %v7180 = vrot.slane %v7179, 1
        %v7181 = vadd.f32 %v7179, %v7180
        %v7182 = vsel %vm1705, %v7022, 0.0
        %v7183 = vrot.slane %v7182, 4
        %v7184 = vadd.f32 %v7182, %v7183
        %v7185 = vrot.slane %v7184, 2
        %v7186 = vadd.f32 %v7184, %v7185
        %v7187 = vrot.slane %v7186, 1
        %v7188 = vadd.f32 %v7186, %v7187
        %v7189 = vsel %vm1705, %v7023, 0.0
        %v7190 = vrot.slane %v7189, 4
        %v7191 = vadd.f32 %v7189, %v7190
        %v7192 = vrot.slane %v7191, 2
        %v7193 = vadd.f32 %v7191, %v7192
        %v7194 = vrot.slane %v7193, 1
        %v7195 = vadd.f32 %v7193, %v7194
        %v7196 = vsel %vm1705, %v7024, 0.0
        %v7197 = vrot.slane %v7196, 4
        %v7198 = vadd.f32 %v7196, %v7197
        %v7199 = vrot.slane %v7198, 2
        %v7200 = vadd.f32 %v7198, %v7199
        %v7201 = vrot.slane %v7200, 1
        %v7202 = vadd.f32 %v7200, %v7201
        %v7203 = vsel %vm1705, %v7025, 0.0
        %v7204 = vrot.slane %v7203, 4
        %v7205 = vadd.f32 %v7203, %v7204
        %v7206 = vrot.slane %v7205, 2
        %v7207 = vadd.f32 %v7205, %v7206
        %v7208 = vrot.slane %v7207, 1
        %v7209 = vadd.f32 %v7207, %v7208
        %v7210 = vsel %vm1705, %v7026, 0.0
        %v7211 = vrot.slane %v7210, 4
        %v7212 = vadd.f32 %v7210, %v7211
        %v7213 = vrot.slane %v7212, 2
        %v7214 = vadd.f32 %v7212, %v7213
        %v7215 = vrot.slane %v7214, 1
        %v7216 = vadd.f32 %v7214, %v7215
        %v7217 = vsel %vm1705, %v7027, 0.0
        %v7218 = vrot.slane %v7217, 4
        %v7219 = vadd.f32 %v7217, %v7218
        %v7220 = vrot.slane %v7219, 2
        %v7221 = vadd.f32 %v7219, %v7220
        %v7222 = vrot.slane %v7221, 1
        %v7223 = vadd.f32 %v7221, %v7222
        %v7224 = vsel %vm1705, %v7028, 0.0
        %v7225 = vrot.slane %v7224, 4
        %v7226 = vadd.f32 %v7224, %v7225
        %v7227 = vrot.slane %v7226, 2
        %v7228 = vadd.f32 %v7226, %v7227
        %v7229 = vrot.slane %v7228, 1
        %v7230 = vadd.f32 %v7228, %v7229
        %v7231 = vsel %vm1705, %v7029, 0.0
        %v7232 = vrot.slane %v7231, 4
        %v7233 = vadd.f32 %v7231, %v7232
        %v7234 = vrot.slane %v7233, 2
        %v7235 = vadd.f32 %v7233, %v7234
        %v7236 = vrot.slane %v7235, 1
        %v7237 = vadd.f32 %v7235, %v7236
        %v7238 = vsel %vm1705, %v7030, 0.0
        %v7239 = vrot.slane %v7238, 4
        %v7240 = vadd.f32 %v7238, %v7239
        %v7241 = vrot.slane %v7240, 2
        %v7242 = vadd.f32 %v7240, %v7241
        %v7243 = vrot.slane %v7242, 1
        %v7244 = vadd.f32 %v7242, %v7243
        %v7245 = vsel %vm1705, %v7031, 0.0
        %v7246 = vrot.slane %v7245, 4
        %v7247 = vadd.f32 %v7245, %v7246
        %v7248 = vrot.slane %v7247, 2
        %v7249 = vadd.f32 %v7247, %v7248
        %v7250 = vrot.slane %v7249, 1
        %v7251 = vadd.f32 %v7249, %v7250
        %v7252 = vsel %vm1705, %v7032, 0.0
        %v7253 = vrot.slane %v7252, 4
        %v7254 = vadd.f32 %v7252, %v7253
        %v7255 = vrot.slane %v7254, 2
        %v7256 = vadd.f32 %v7254, %v7255
        %v7257 = vrot.slane %v7256, 1
        %v7258 = vadd.f32 %v7256, %v7257
        %v7259 = vsel %vm1705, %v7033, 0.0
        %v7260 = vrot.slane %v7259, 4
        %v7261 = vadd.f32 %v7259, %v7260
        %v7262 = vrot.slane %v7261, 2
        %v7263 = vadd.f32 %v7261, %v7262
        %v7264 = vrot.slane %v7263, 1
        %v7265 = vadd.f32 %v7263, %v7264
        %v7266 = vsel %vm1705, %v7034, 0.0
        %v7267 = vrot.slane %v7266, 4
        %v7268 = vadd.f32 %v7266, %v7267
        %v7269 = vrot.slane %v7268, 2
        %v7270 = vadd.f32 %v7268, %v7269
        %v7271 = vrot.slane %v7270, 1
        %v7272 = vadd.f32 %v7270, %v7271
        %v7273 = vsel %vm1705, %v7035, 0.0
        %v7274 = vrot.slane %v7273, 4
        %v7275 = vadd.f32 %v7273, %v7274
        %v7276 = vrot.slane %v7275, 2
        %v7277 = vadd.f32 %v7275, %v7276
        %v7278 = vrot.slane %v7277, 1
        %v7279 = vadd.f32 %v7277, %v7278
        %v7280 = vsel %vm1705, %v7036, 0.0
        %v7281 = vrot.slane %v7280, 4
        %v7282 = vadd.f32 %v7280, %v7281
        %v7283 = vrot.slane %v7282, 2
        %v7284 = vadd.f32 %v7282, %v7283
        %v7285 = vrot.slane %v7284, 1
        %v7286 = vadd.f32 %v7284, %v7285
        %v7287 = vsel %vm1705, %v7037, 0.0
        %v7288 = vrot.slane %v7287, 4
        %v7289 = vadd.f32 %v7287, %v7288
        %v7290 = vrot.slane %v7289, 2
        %v7291 = vadd.f32 %v7289, %v7290
        %v7292 = vrot.slane %v7291, 1
        %v7293 = vadd.f32 %v7291, %v7292
        %v7294 = vsel %vm1705, %v7038, 0.0
        %v7295 = vrot.slane %v7294, 4
        %v7296 = vadd.f32 %v7294, %v7295
        %v7297 = vrot.slane %v7296, 2
        %v7298 = vadd.f32 %v7296, %v7297
        %v7299 = vrot.slane %v7298, 1
        %v7300 = vadd.f32 %v7298, %v7299
        %v7301 = vsel %vm1705, %v7039, 0.0
        %v7302 = vrot.slane %v7301, 4
        %v7303 = vadd.f32 %v7301, %v7302
        %v7304 = vrot.slane %v7303, 2
        %v7305 = vadd.f32 %v7303, %v7304
        %v7306 = vrot.slane %v7305, 1
        %v7307 = vadd.f32 %v7305, %v7306
        %v7308 = vsel %vm1705, %v7040, 0.0
        %v7309 = vrot.slane %v7308, 4
        %v7310 = vadd.f32 %v7308, %v7309
        %v7311 = vrot.slane %v7310, 2
        %v7312 = vadd.f32 %v7310, %v7311
        %v7313 = vrot.slane %v7312, 1
        %v7314 = vadd.f32 %v7312, %v7313
        %v7315 = vsel %vm1705, %v7041, 0.0
        %v7316 = vrot.slane %v7315, 4
        %v7317 = vadd.f32 %v7315, %v7316
        %v7318 = vrot.slane %v7317, 2
        %v7319 = vadd.f32 %v7317, %v7318
        %v7320 = vrot.slane %v7319, 1
        %v7321 = vadd.f32 %v7319, %v7320
        %v7322 = vsel %vm1705, %v7042, 0.0
        %v7323 = vrot.slane %v7322, 4
        %v7324 = vadd.f32 %v7322, %v7323
        %v7325 = vrot.slane %v7324, 2
        %v7326 = vadd.f32 %v7324, %v7325
        %v7327 = vrot.slane %v7326, 1
        %v7328 = vadd.f32 %v7326, %v7327
        %v7329 = vsel %vm1705, %v7043, 0.0
        %v7330 = vrot.slane %v7329, 4
        %v7331 = vadd.f32 %v7329, %v7330
        %v7332 = vrot.slane %v7331, 2
        %v7333 = vadd.f32 %v7331, %v7332
        %v7334 = vrot.slane %v7333, 1
        %v7335 = vadd.f32 %v7333, %v7334
        %v7336 = vsel %vm1705, %v7044, 0.0
        %v7337 = vrot.slane %v7336, 4
        %v7338 = vadd.f32 %v7336, %v7337
        %v7339 = vrot.slane %v7338, 2
        %v7340 = vadd.f32 %v7338, %v7339
        %v7341 = vrot.slane %v7340, 1
        %v7342 = vadd.f32 %v7340, %v7341
        %v7343 = vsel %vm1705, %v7045, 0.0
        %v7344 = vrot.slane %v7343, 4
        %v7345 = vadd.f32 %v7343, %v7344
        %v7346 = vrot.slane %v7345, 2
        %v7347 = vadd.f32 %v7345, %v7346
        %v7348 = vrot.slane %v7347, 1
        %v7349 = vadd.f32 %v7347, %v7348
        %v7350 = vsel %vm1705, %v7046, 0.0
        %v7351 = vrot.slane %v7350, 4
        %v7352 = vadd.f32 %v7350, %v7351
        %v7353 = vrot.slane %v7352, 2
        %v7354 = vadd.f32 %v7352, %v7353
        %v7355 = vrot.slane %v7354, 1
        %v7356 = vadd.f32 %v7354, %v7355
        %v7357 = vsel %vm1705, %v7047, 0.0
        %v7358 = vrot.slane %v7357, 4
        %v7359 = vadd.f32 %v7357, %v7358
        %v7360 = vrot.slane %v7359, 2
        %v7361 = vadd.f32 %v7359, %v7360
        %v7362 = vrot.slane %v7361, 1
        %v7363 = vadd.f32 %v7361, %v7362
        %v7364 = vsel %vm1705, %v7048, 0.0
        %v7365 = vrot.slane %v7364, 4
        %v7366 = vadd.f32 %v7364, %v7365
        %v7367 = vrot.slane %v7366, 2
        %v7368 = vadd.f32 %v7366, %v7367
        %v7369 = vrot.slane %v7368, 1
        %v7370 = vadd.f32 %v7368, %v7369
        %v7371 = vsel %vm1705, %v7049, 0.0
        %v7372 = vrot.slane %v7371, 4
        %v7373 = vadd.f32 %v7371, %v7372
        %v7374 = vrot.slane %v7373, 2
        %v7375 = vadd.f32 %v7373, %v7374
        %v7376 = vrot.slane %v7375, 1
        %v7377 = vadd.f32 %v7375, %v7376
        %v7378 = vsel %vm1705, %v7050, 0.0
        %v7379 = vrot.slane %v7378, 4
        %v7380 = vadd.f32 %v7378, %v7379
        %v7381 = vrot.slane %v7380, 2
        %v7382 = vadd.f32 %v7380, %v7381
        %v7383 = vrot.slane %v7382, 1
        %v7384 = vadd.f32 %v7382, %v7383
        %v7385 = vsel %vm1705, %v7051, 0.0
        %v7386 = vrot.slane %v7385, 4
        %v7387 = vadd.f32 %v7385, %v7386
        %v7388 = vrot.slane %v7387, 2
        %v7389 = vadd.f32 %v7387, %v7388
        %v7390 = vrot.slane %v7389, 1
        %v7391 = vadd.f32 %v7389, %v7390
        %v7392 = vsel %vm1705, %v7052, 0.0
        %v7393 = vrot.slane %v7392, 4
        %v7394 = vadd.f32 %v7392, %v7393
        %v7395 = vrot.slane %v7394, 2
        %v7396 = vadd.f32 %v7394, %v7395
        %v7397 = vrot.slane %v7396, 1
        %v7398 = vadd.f32 %v7396, %v7397
        %v7399 = vsel %vm1705, %v7053, 0.0
        %v7400 = vrot.slane %v7399, 4
        %v7401 = vadd.f32 %v7399, %v7400
        %v7402 = vrot.slane %v7401, 2
        %v7403 = vadd.f32 %v7401, %v7402
        %v7404 = vrot.slane %v7403, 1
        %v7405 = vadd.f32 %v7403, %v7404
        %v7406 = vsel %vm1705, %v7054, 0.0
        %v7407 = vrot.slane %v7406, 4
        %v7408 = vadd.f32 %v7406, %v7407
        %v7409 = vrot.slane %v7408, 2
        %v7410 = vadd.f32 %v7408, %v7409
        %v7411 = vrot.slane %v7410, 1
        %v7412 = vadd.f32 %v7410, %v7411
        %v7413 = vsel %vm1705, %v7055, 0.0
        %v7414 = vrot.slane %v7413, 4
        %v7415 = vadd.f32 %v7413, %v7414
        %v7416 = vrot.slane %v7415, 2
        %v7417 = vadd.f32 %v7415, %v7416
        %v7418 = vrot.slane %v7417, 1
        %v7419 = vadd.f32 %v7417, %v7418
        %v7420 = vsel %vm1705, %v7056, 0.0
        %v7421 = vrot.slane %v7420, 4
        %v7422 = vadd.f32 %v7420, %v7421
        %v7423 = vrot.slane %v7422, 2
        %v7424 = vadd.f32 %v7422, %v7423
        %v7425 = vrot.slane %v7424, 1
        %v7426 = vadd.f32 %v7424, %v7425
        %v7427 = vsel %vm1705, %v7057, 0.0
        %v7428 = vrot.slane %v7427, 4
        %v7429 = vadd.f32 %v7427, %v7428
        %v7430 = vrot.slane %v7429, 2
        %v7431 = vadd.f32 %v7429, %v7430
        %v7432 = vrot.slane %v7431, 1
        %v7433 = vadd.f32 %v7431, %v7432
        %v7434 = vsel %vm1705, %v7058, 0.0
        %v7435 = vrot.slane %v7434, 4
        %v7436 = vadd.f32 %v7434, %v7435
        %v7437 = vrot.slane %v7436, 2
        %v7438 = vadd.f32 %v7436, %v7437
        %v7439 = vrot.slane %v7438, 1
        %v7440 = vadd.f32 %v7438, %v7439
        %v7441 = vsel %vm1705, %v7059, 0.0
        %v7442 = vrot.slane %v7441, 4
        %v7443 = vadd.f32 %v7441, %v7442
        %v7444 = vrot.slane %v7443, 2
        %v7445 = vadd.f32 %v7443, %v7444
        %v7446 = vrot.slane %v7445, 1
        %v7447 = vadd.f32 %v7445, %v7446
        %v7448 = vsel %vm1705, %v7060, 0.0
        %v7449 = vrot.slane %v7448, 4
        %v7450 = vadd.f32 %v7448, %v7449
        %v7451 = vrot.slane %v7450, 2
        %v7452 = vadd.f32 %v7450, %v7451
        %v7453 = vrot.slane %v7452, 1
        %v7454 = vadd.f32 %v7452, %v7453
        %v7455 = vsel %vm1705, %v7061, 0.0
        %v7456 = vrot.slane %v7455, 4
        %v7457 = vadd.f32 %v7455, %v7456
        %v7458 = vrot.slane %v7457, 2
        %v7459 = vadd.f32 %v7457, %v7458
        %v7460 = vrot.slane %v7459, 1
        %v7461 = vadd.f32 %v7459, %v7460
        %v7462 = vsel %vm1705, %v7062, 0.0
        %v7463 = vrot.slane %v7462, 4
        %v7464 = vadd.f32 %v7462, %v7463
        %v7465 = vrot.slane %v7464, 2
        %v7466 = vadd.f32 %v7464, %v7465
        %v7467 = vrot.slane %v7466, 1
        %v7468 = vadd.f32 %v7466, %v7467
        %v7469 = vsel %vm1705, %v7063, 0.0
        %v7470 = vrot.slane %v7469, 4
        %v7471 = vadd.f32 %v7469, %v7470
        %v7472 = vrot.slane %v7471, 2
        %v7473 = vadd.f32 %v7471, %v7472
        %v7474 = vrot.slane %v7473, 1
        %v7475 = vadd.f32 %v7473, %v7474
        %v7476 = vsel %vm1705, %v7064, 0.0
        %v7477 = vrot.slane %v7476, 4
        %v7478 = vadd.f32 %v7476, %v7477
        %v7479 = vrot.slane %v7478, 2
        %v7480 = vadd.f32 %v7478, %v7479
        %v7481 = vrot.slane %v7480, 1
        %v7482 = vadd.f32 %v7480, %v7481
        %v7483 = vsel %vm1705, %v7065, 0.0
        %v7484 = vrot.slane %v7483, 4
        %v7485 = vadd.f32 %v7483, %v7484
        %v7486 = vrot.slane %v7485, 2
        %v7487 = vadd.f32 %v7485, %v7486
        %v7488 = vrot.slane %v7487, 1
        %v7489 = vadd.f32 %v7487, %v7488
        %v7490 = vsel %vm1705, %v7066, 0.0
        %v7491 = vrot.slane %v7490, 4
        %v7492 = vadd.f32 %v7490, %v7491
        %v7493 = vrot.slane %v7492, 2
        %v7494 = vadd.f32 %v7492, %v7493
        %v7495 = vrot.slane %v7494, 1
        %v7496 = vadd.f32 %v7494, %v7495
        %v7497 = vsel %vm1705, %v7067, 0.0
        %v7498 = vrot.slane %v7497, 4
        %v7499 = vadd.f32 %v7497, %v7498
        %v7500 = vrot.slane %v7499, 2
        %v7501 = vadd.f32 %v7499, %v7500
        %v7502 = vrot.slane %v7501, 1
        %v7503 = vadd.f32 %v7501, %v7502
        %v7504 = vsel %vm1705, %v7068, 0.0
        %v7505 = vrot.slane %v7504, 4
        %v7506 = vadd.f32 %v7504, %v7505
        %v7507 = vrot.slane %v7506, 2
        %v7508 = vadd.f32 %v7506, %v7507
        %v7509 = vrot.slane %v7508, 1
        %v7510 = vadd.f32 %v7508, %v7509
        %v7511 = vsel %vm1705, %v7069, 0.0
        %v7512 = vrot.slane %v7511, 4
        %v7513 = vadd.f32 %v7511, %v7512
        %v7514 = vrot.slane %v7513, 2
        %v7515 = vadd.f32 %v7513, %v7514
        %v7516 = vrot.slane %v7515, 1
        %v7517 = vadd.f32 %v7515, %v7516
        %v7582 = vrot.slane %v7006, 1
        %v7583 = vrot.slane %v7006, 2
        %v7584 = vrot.slane %v7006, 3
        %v7585 = vrot.slane %v7006, 4
        %v7586 = vrot.slane %v7006, 5
        %v7587 = vrot.slane %v7006, 6
        %v7588 = vrot.slane %v7006, 7
        %v7589 = vrot.slane %v7007, 1
        %v7590 = vrot.slane %v7007, 2
        %v7591 = vrot.slane %v7007, 3
        %v7592 = vrot.slane %v7007, 4
        %v7593 = vrot.slane %v7007, 5
        %v7594 = vrot.slane %v7007, 6
        %v7595 = vrot.slane %v7007, 7
        %v7596 = vrot.slane %v7008, 1
        %v7597 = vrot.slane %v7008, 2
        %v7598 = vrot.slane %v7008, 3
        %v7599 = vrot.slane %v7008, 4
        %v7600 = vrot.slane %v7008, 5
        %v7601 = vrot.slane %v7008, 6
        %v7602 = vrot.slane %v7008, 7
        %v7603 = vrot.slane %v7009, 1
        %v7604 = vrot.slane %v7009, 2
        %v7605 = vrot.slane %v7009, 3
        %v7606 = vrot.slane %v7009, 4
        %v7607 = vrot.slane %v7009, 5
        %v7608 = vrot.slane %v7009, 6
        %v7609 = vrot.slane %v7009, 7
        %v7610 = vrot.slane %v7010, 1
        %v7611 = vrot.slane %v7010, 2
        %v7612 = vrot.slane %v7010, 3
        %v7613 = vrot.slane %v7010, 4
        %v7614 = vrot.slane %v7010, 5
        %v7615 = vrot.slane %v7010, 6
        %v7616 = vrot.slane %v7010, 7
        %v7617 = vrot.slane %v7011, 1
        %v7618 = vrot.slane %v7011, 2
        %v7619 = vrot.slane %v7011, 3
        %v7620 = vrot.slane %v7011, 4
        %v7621 = vrot.slane %v7011, 5
        %v7622 = vrot.slane %v7011, 6
        %v7623 = vrot.slane %v7011, 7
        %v7624 = vrot.slane %v7012, 1
        %v7625 = vrot.slane %v7012, 2
        %v7626 = vrot.slane %v7012, 3
        %v7627 = vrot.slane %v7012, 4
        %v7628 = vrot.slane %v7012, 5
        %v7629 = vrot.slane %v7012, 6
        %v7630 = vrot.slane %v7012, 7
        %v7631 = vrot.slane %v7013, 1
        %v7632 = vrot.slane %v7013, 2
        %v7633 = vrot.slane %v7013, 3
        %v7634 = vrot.slane %v7013, 4
        %v7635 = vrot.slane %v7013, 5
        %v7636 = vrot.slane %v7013, 6
        %v7637 = vrot.slane %v7013, 7
        %v7638 = vrot.slane %v7014, 1
        %v7639 = vrot.slane %v7014, 2
        %v7640 = vrot.slane %v7014, 3
        %v7641 = vrot.slane %v7014, 4
        %v7642 = vrot.slane %v7014, 5
        %v7643 = vrot.slane %v7014, 6
        %v7644 = vrot.slane %v7014, 7
        %v7645 = vrot.slane %v7015, 1
        %v7646 = vrot.slane %v7015, 2
        %v7647 = vrot.slane %v7015, 3
        %v7648 = vrot.slane %v7015, 4
        %v7649 = vrot.slane %v7015, 5
        %v7650 = vrot.slane %v7015, 6
        %v7651 = vrot.slane %v7015, 7
        %v7652 = vrot.slane %v7016, 1
        %v7653 = vrot.slane %v7016, 2
        %v7654 = vrot.slane %v7016, 3
        %v7655 = vrot.slane %v7016, 4
        %v7656 = vrot.slane %v7016, 5
        %v7657 = vrot.slane %v7016, 6
        %v7658 = vrot.slane %v7016, 7
        %v7659 = vrot.slane %v7017, 1
        %v7660 = vrot.slane %v7017, 2
        %v7661 = vrot.slane %v7017, 3
        %v7662 = vrot.slane %v7017, 4
        %v7663 = vrot.slane %v7017, 5
        %v7664 = vrot.slane %v7017, 6
        %v7665 = vrot.slane %v7017, 7
        %v7666 = vrot.slane %v7018, 1
        %v7667 = vrot.slane %v7018, 2
        %v7668 = vrot.slane %v7018, 3
        %v7669 = vrot.slane %v7018, 4
        %v7670 = vrot.slane %v7018, 5
        %v7671 = vrot.slane %v7018, 6
        %v7672 = vrot.slane %v7018, 7
        %v7673 = vrot.slane %v7019, 1
        %v7674 = vrot.slane %v7019, 2
        %v7675 = vrot.slane %v7019, 3
        %v7676 = vrot.slane %v7019, 4
        %v7677 = vrot.slane %v7019, 5
        %v7678 = vrot.slane %v7019, 6
        %v7679 = vrot.slane %v7019, 7
        %v7680 = vrot.slane %v7020, 1
        %v7681 = vrot.slane %v7020, 2
        %v7682 = vrot.slane %v7020, 3
        %v7683 = vrot.slane %v7020, 4
        %v7684 = vrot.slane %v7020, 5
        %v7685 = vrot.slane %v7020, 6
        %v7686 = vrot.slane %v7020, 7
        %v7687 = vrot.slane %v7021, 1
        %v7688 = vrot.slane %v7021, 2
        %v7689 = vrot.slane %v7021, 3
        %v7690 = vrot.slane %v7021, 4
        %v7691 = vrot.slane %v7021, 5
        %v7692 = vrot.slane %v7021, 6
        %v7693 = vrot.slane %v7021, 7
        %v7694 = vrot.slane %v7022, 1
        %v7695 = vrot.slane %v7022, 2
        %v7696 = vrot.slane %v7022, 3
        %v7697 = vrot.slane %v7022, 4
        %v7698 = vrot.slane %v7022, 5
        %v7699 = vrot.slane %v7022, 6
        %v7700 = vrot.slane %v7022, 7
        %v7701 = vrot.slane %v7023, 1
        %v7702 = vrot.slane %v7023, 2
        %v7703 = vrot.slane %v7023, 3
        %v7704 = vrot.slane %v7023, 4
        %v7705 = vrot.slane %v7023, 5
        %v7706 = vrot.slane %v7023, 6
        %v7707 = vrot.slane %v7023, 7
        %v7708 = vrot.slane %v7024, 1
        %v7709 = vrot.slane %v7024, 2
        %v7710 = vrot.slane %v7024, 3
        %v7711 = vrot.slane %v7024, 4
        %v7712 = vrot.slane %v7024, 5
        %v7713 = vrot.slane %v7024, 6
        %v7714 = vrot.slane %v7024, 7
        %v7715 = vrot.slane %v7025, 1
        %v7716 = vrot.slane %v7025, 2
        %v7717 = vrot.slane %v7025, 3
        %v7718 = vrot.slane %v7025, 4
        %v7719 = vrot.slane %v7025, 5
        %v7720 = vrot.slane %v7025, 6
        %v7721 = vrot.slane %v7025, 7
        %v7722 = vrot.slane %v7026, 1
        %v7723 = vrot.slane %v7026, 2
        %v7724 = vrot.slane %v7026, 3
        %v7725 = vrot.slane %v7026, 4
        %v7726 = vrot.slane %v7026, 5
        %v7727 = vrot.slane %v7026, 6
        %v7728 = vrot.slane %v7026, 7
        %v7729 = vrot.slane %v7027, 1
        %v7730 = vrot.slane %v7027, 2
        %v7731 = vrot.slane %v7027, 3
        %v7732 = vrot.slane %v7027, 4
        %v7733 = vrot.slane %v7027, 5
        %v7734 = vrot.slane %v7027, 6
        %v7735 = vrot.slane %v7027, 7
        %v7736 = vrot.slane %v7028, 1
        %v7737 = vrot.slane %v7028, 2
        %v7738 = vrot.slane %v7028, 3
        %v7739 = vrot.slane %v7028, 4
        %v7740 = vrot.slane %v7028, 5
        %v7741 = vrot.slane %v7028, 6
        %v7742 = vrot.slane %v7028, 7
        %v7743 = vrot.slane %v7029, 1
        %v7744 = vrot.slane %v7029, 2
        %v7745 = vrot.slane %v7029, 3
        %v7746 = vrot.slane %v7029, 4
        %v7747 = vrot.slane %v7029, 5
        %v7748 = vrot.slane %v7029, 6
        %v7749 = vrot.slane %v7029, 7
        %v7750 = vrot.slane %v7030, 1
        %v7751 = vrot.slane %v7030, 2
        %v7752 = vrot.slane %v7030, 3
        %v7753 = vrot.slane %v7030, 4
        %v7754 = vrot.slane %v7030, 5
        %v7755 = vrot.slane %v7030, 6
        %v7756 = vrot.slane %v7030, 7
        %v7757 = vrot.slane %v7031, 1
        %v7758 = vrot.slane %v7031, 2
        %v7759 = vrot.slane %v7031, 3
        %v7760 = vrot.slane %v7031, 4
        %v7761 = vrot.slane %v7031, 5
        %v7762 = vrot.slane %v7031, 6
        %v7763 = vrot.slane %v7031, 7
        %v7764 = vrot.slane %v7032, 1
        %v7765 = vrot.slane %v7032, 2
        %v7766 = vrot.slane %v7032, 3
        %v7767 = vrot.slane %v7032, 4
        %v7768 = vrot.slane %v7032, 5
        %v7769 = vrot.slane %v7032, 6
        %v7770 = vrot.slane %v7032, 7
        %v7771 = vrot.slane %v7033, 1
        %v7772 = vrot.slane %v7033, 2
        %v7773 = vrot.slane %v7033, 3
        %v7774 = vrot.slane %v7033, 4
        %v7775 = vrot.slane %v7033, 5
        %v7776 = vrot.slane %v7033, 6
        %v7777 = vrot.slane %v7033, 7
        %v7778 = vrot.slane %v7034, 1
        %v7779 = vrot.slane %v7034, 2
        %v7780 = vrot.slane %v7034, 3
        %v7781 = vrot.slane %v7034, 4
        %v7782 = vrot.slane %v7034, 5
        %v7783 = vrot.slane %v7034, 6
        %v7784 = vrot.slane %v7034, 7
        %v7785 = vrot.slane %v7035, 1
        %v7786 = vrot.slane %v7035, 2
        %v7787 = vrot.slane %v7035, 3
        %v7788 = vrot.slane %v7035, 4
        %v7789 = vrot.slane %v7035, 5
        %v7790 = vrot.slane %v7035, 6
        %v7791 = vrot.slane %v7035, 7
        %v7792 = vrot.slane %v7036, 1
        %v7793 = vrot.slane %v7036, 2
        %v7794 = vrot.slane %v7036, 3
        %v7795 = vrot.slane %v7036, 4
        %v7796 = vrot.slane %v7036, 5
        %v7797 = vrot.slane %v7036, 6
        %v7798 = vrot.slane %v7036, 7
        %v7799 = vrot.slane %v7037, 1
        %v7800 = vrot.slane %v7037, 2
        %v7801 = vrot.slane %v7037, 3
        %v7802 = vrot.slane %v7037, 4
        %v7803 = vrot.slane %v7037, 5
        %v7804 = vrot.slane %v7037, 6
        %v7805 = vrot.slane %v7037, 7
        %v7806 = vrot.slane %v7038, 1
        %v7807 = vrot.slane %v7038, 2
        %v7808 = vrot.slane %v7038, 3
        %v7809 = vrot.slane %v7038, 4
        %v7810 = vrot.slane %v7038, 5
        %v7811 = vrot.slane %v7038, 6
        %v7812 = vrot.slane %v7038, 7
        %v7813 = vrot.slane %v7039, 1
        %v7814 = vrot.slane %v7039, 2
        %v7815 = vrot.slane %v7039, 3
        %v7816 = vrot.slane %v7039, 4
        %v7817 = vrot.slane %v7039, 5
        %v7818 = vrot.slane %v7039, 6
        %v7819 = vrot.slane %v7039, 7
        %v7820 = vrot.slane %v7040, 1
        %v7821 = vrot.slane %v7040, 2
        %v7822 = vrot.slane %v7040, 3
        %v7823 = vrot.slane %v7040, 4
        %v7824 = vrot.slane %v7040, 5
        %v7825 = vrot.slane %v7040, 6
        %v7826 = vrot.slane %v7040, 7
        %v7827 = vrot.slane %v7041, 1
        %v7828 = vrot.slane %v7041, 2
        %v7829 = vrot.slane %v7041, 3
        %v7830 = vrot.slane %v7041, 4
        %v7831 = vrot.slane %v7041, 5
        %v7832 = vrot.slane %v7041, 6
        %v7833 = vrot.slane %v7041, 7
        %v7834 = vrot.slane %v7042, 1
        %v7835 = vrot.slane %v7042, 2
        %v7836 = vrot.slane %v7042, 3
        %v7837 = vrot.slane %v7042, 4
        %v7838 = vrot.slane %v7042, 5
        %v7839 = vrot.slane %v7042, 6
        %v7840 = vrot.slane %v7042, 7
        %v7841 = vrot.slane %v7043, 1
        %v7842 = vrot.slane %v7043, 2
        %v7843 = vrot.slane %v7043, 3
        %v7844 = vrot.slane %v7043, 4
        %v7845 = vrot.slane %v7043, 5
        %v7846 = vrot.slane %v7043, 6
        %v7847 = vrot.slane %v7043, 7
        %v7848 = vrot.slane %v7044, 1
        %v7849 = vrot.slane %v7044, 2
        %v7850 = vrot.slane %v7044, 3
        %v7851 = vrot.slane %v7044, 4
        %v7852 = vrot.slane %v7044, 5
        %v7853 = vrot.slane %v7044, 6
        %v7854 = vrot.slane %v7044, 7
        %v7855 = vrot.slane %v7045, 1
        %v7856 = vrot.slane %v7045, 2
        %v7857 = vrot.slane %v7045, 3
        %v7858 = vrot.slane %v7045, 4
        %v7859 = vrot.slane %v7045, 5
        %v7860 = vrot.slane %v7045, 6
        %v7861 = vrot.slane %v7045, 7
        %v7862 = vrot.slane %v7046, 1
        %v7863 = vrot.slane %v7046, 2
        %v7864 = vrot.slane %v7046, 3
        %v7865 = vrot.slane %v7046, 4
        %v7866 = vrot.slane %v7046, 5
        %v7867 = vrot.slane %v7046, 6
        %v7868 = vrot.slane %v7046, 7
        %v7869 = vrot.slane %v7047, 1
        %v7870 = vrot.slane %v7047, 2
        %v7871 = vrot.slane %v7047, 3
        %v7872 = vrot.slane %v7047, 4
        %v7873 = vrot.slane %v7047, 5
        %v7874 = vrot.slane %v7047, 6
        %v7875 = vrot.slane %v7047, 7
        %v7876 = vrot.slane %v7048, 1
        %v7877 = vrot.slane %v7048, 2
        %v7878 = vrot.slane %v7048, 3
        %v7879 = vrot.slane %v7048, 4
        %v7880 = vrot.slane %v7048, 5
        %v7881 = vrot.slane %v7048, 6
        %v7882 = vrot.slane %v7048, 7
        %v7883 = vrot.slane %v7049, 1
        %v7884 = vrot.slane %v7049, 2
        %v7885 = vrot.slane %v7049, 3
        %v7886 = vrot.slane %v7049, 4
        %v7887 = vrot.slane %v7049, 5
        %v7888 = vrot.slane %v7049, 6
        %v7889 = vrot.slane %v7049, 7
        %v7890 = vrot.slane %v7050, 1
        %v7891 = vrot.slane %v7050, 2
        %v7892 = vrot.slane %v7050, 3
        %v7893 = vrot.slane %v7050, 4
        %v7894 = vrot.slane %v7050, 5
        %v7895 = vrot.slane %v7050, 6
        %v7896 = vrot.slane %v7050, 7
        %v7897 = vrot.slane %v7051, 1
        %v7898 = vrot.slane %v7051, 2
        %v7899 = vrot.slane %v7051, 3
        %v7900 = vrot.slane %v7051, 4
        %v7901 = vrot.slane %v7051, 5
        %v7902 = vrot.slane %v7051, 6
        %v7903 = vrot.slane %v7051, 7
        %v7904 = vrot.slane %v7052, 1
        %v7905 = vrot.slane %v7052, 2
        %v7906 = vrot.slane %v7052, 3
        %v7907 = vrot.slane %v7052, 4
        %v7908 = vrot.slane %v7052, 5
        %v7909 = vrot.slane %v7052, 6
        %v7910 = vrot.slane %v7052, 7
        %v7911 = vrot.slane %v7053, 1
        %v7912 = vrot.slane %v7053, 2
        %v7913 = vrot.slane %v7053, 3
        %v7914 = vrot.slane %v7053, 4
        %v7915 = vrot.slane %v7053, 5
        %v7916 = vrot.slane %v7053, 6
        %v7917 = vrot.slane %v7053, 7
        %v7918 = vrot.slane %v7054, 1
        %v7919 = vrot.slane %v7054, 2
        %v7920 = vrot.slane %v7054, 3
        %v7921 = vrot.slane %v7054, 4
        %v7922 = vrot.slane %v7054, 5
        %v7923 = vrot.slane %v7054, 6
        %v7924 = vrot.slane %v7054, 7
        %v7925 = vrot.slane %v7055, 1
        %v7926 = vrot.slane %v7055, 2
        %v7927 = vrot.slane %v7055, 3
        %v7928 = vrot.slane %v7055, 4
        %v7929 = vrot.slane %v7055, 5
        %v7930 = vrot.slane %v7055, 6
        %v7931 = vrot.slane %v7055, 7
        %v7932 = vrot.slane %v7056, 1
        %v7933 = vrot.slane %v7056, 2
        %v7934 = vrot.slane %v7056, 3
        %v7935 = vrot.slane %v7056, 4
        %v7936 = vrot.slane %v7056, 5
        %v7937 = vrot.slane %v7056, 6
        %v7938 = vrot.slane %v7056, 7
        %v7939 = vrot.slane %v7057, 1
        %v7940 = vrot.slane %v7057, 2
        %v7941 = vrot.slane %v7057, 3
        %v7942 = vrot.slane %v7057, 4
        %v7943 = vrot.slane %v7057, 5
        %v7944 = vrot.slane %v7057, 6
        %v7945 = vrot.slane %v7057, 7
        %v7946 = vrot.slane %v7058, 1
        %v7947 = vrot.slane %v7058, 2
        %v7948 = vrot.slane %v7058, 3
        %v7949 = vrot.slane %v7058, 4
        %v7950 = vrot.slane %v7058, 5
        %v7951 = vrot.slane %v7058, 6
        %v7952 = vrot.slane %v7058, 7
        %v7953 = vrot.slane %v7059, 1
        %v7954 = vrot.slane %v7059, 2
        %v7955 = vrot.slane %v7059, 3
        %v7956 = vrot.slane %v7059, 4
        %v7957 = vrot.slane %v7059, 5
        %v7958 = vrot.slane %v7059, 6
        %v7959 = vrot.slane %v7059, 7
        %v7960 = vrot.slane %v7060, 1
        %v7961 = vrot.slane %v7060, 2
        %v7962 = vrot.slane %v7060, 3
        %v7963 = vrot.slane %v7060, 4
        %v7964 = vrot.slane %v7060, 5
        %v7965 = vrot.slane %v7060, 6
        %v7966 = vrot.slane %v7060, 7
        %v7967 = vrot.slane %v7061, 1
        %v7968 = vrot.slane %v7061, 2
        %v7969 = vrot.slane %v7061, 3
        %v7970 = vrot.slane %v7061, 4
        %v7971 = vrot.slane %v7061, 5
        %v7972 = vrot.slane %v7061, 6
        %v7973 = vrot.slane %v7061, 7
        %v7974 = vrot.slane %v7062, 1
        %v7975 = vrot.slane %v7062, 2
        %v7976 = vrot.slane %v7062, 3
        %v7977 = vrot.slane %v7062, 4
        %v7978 = vrot.slane %v7062, 5
        %v7979 = vrot.slane %v7062, 6
        %v7980 = vrot.slane %v7062, 7
        %v7981 = vrot.slane %v7063, 1
        %v7982 = vrot.slane %v7063, 2
        %v7983 = vrot.slane %v7063, 3
        %v7984 = vrot.slane %v7063, 4
        %v7985 = vrot.slane %v7063, 5
        %v7986 = vrot.slane %v7063, 6
        %v7987 = vrot.slane %v7063, 7
        %v7988 = vrot.slane %v7064, 1
        %v7989 = vrot.slane %v7064, 2
        %v7990 = vrot.slane %v7064, 3
        %v7991 = vrot.slane %v7064, 4
        %v7992 = vrot.slane %v7064, 5
        %v7993 = vrot.slane %v7064, 6
        %v7994 = vrot.slane %v7064, 7
        %v7995 = vrot.slane %v7065, 1
        %v7996 = vrot.slane %v7065, 2
        %v7997 = vrot.slane %v7065, 3
        %v7998 = vrot.slane %v7065, 4
        %v7999 = vrot.slane %v7065, 5
        %v8000 = vrot.slane %v7065, 6
        %v8001 = vrot.slane %v7065, 7
        %v8002 = vrot.slane %v7066, 1
        %v8003 = vrot.slane %v7066, 2
        %v8004 = vrot.slane %v7066, 3
        %v8005 = vrot.slane %v7066, 4
        %v8006 = vrot.slane %v7066, 5
        %v8007 = vrot.slane %v7066, 6
        %v8008 = vrot.slane %v7066, 7
        %v8009 = vrot.slane %v7067, 1
        %v8010 = vrot.slane %v7067, 2
        %v8011 = vrot.slane %v7067, 3
        %v8012 = vrot.slane %v7067, 4
        %v8013 = vrot.slane %v7067, 5
        %v8014 = vrot.slane %v7067, 6
        %v8015 = vrot.slane %v7067, 7
        %v8016 = vrot.slane %v7068, 1
        %v8017 = vrot.slane %v7068, 2
        %v8018 = vrot.slane %v7068, 3
        %v8019 = vrot.slane %v7068, 4
        %v8020 = vrot.slane %v7068, 5
        %v8021 = vrot.slane %v7068, 6
        %v8022 = vrot.slane %v7068, 7
        %v8023 = vrot.slane %v7069, 1
        %v8024 = vrot.slane %v7069, 2
        %v8025 = vrot.slane %v7069, 3
        %v8026 = vrot.slane %v7069, 4
        %v8027 = vrot.slane %v7069, 5
        %v8028 = vrot.slane %v7069, 6
        %v8029 = vrot.slane %v7069, 7
        %v8542 = vsub.f32 %v7076, %v7006
        %v8543 = vsub.f32 %v7083, %v7582
        %v8544 = vsub.f32 %v7090, %v7583
        %v8545 = vsub.f32 %v7097, %v7584
        %v8546 = vsub.f32 %v7104, %v7585
        %v8547 = vsub.f32 %v7111, %v7586
        %v8548 = vsub.f32 %v7118, %v7587
        %v8549 = vsub.f32 %v7125, %v7588
        %v8550 = vsub.f32 %v7076, %v7007
        %v8551 = vsub.f32 %v7083, %v7589
        %v8552 = vsub.f32 %v7090, %v7590
        %v8553 = vsub.f32 %v7097, %v7591
        %v8554 = vsub.f32 %v7104, %v7592
        %v8555 = vsub.f32 %v7111, %v7593
        %v8556 = vsub.f32 %v7118, %v7594
        %v8557 = vsub.f32 %v7125, %v7595
        %v8558 = vsub.f32 %v7076, %v7008
        %v8559 = vsub.f32 %v7083, %v7596
        %v8560 = vsub.f32 %v7090, %v7597
        %v8561 = vsub.f32 %v7097, %v7598
        %v8562 = vsub.f32 %v7104, %v7599
        %v8563 = vsub.f32 %v7111, %v7600
        %v8564 = vsub.f32 %v7118, %v7601
        %v8565 = vsub.f32 %v7125, %v7602
        %v8566 = vsub.f32 %v7076, %v7009
        %v8567 = vsub.f32 %v7083, %v7603
        %v8568 = vsub.f32 %v7090, %v7604
        %v8569 = vsub.f32 %v7097, %v7605
        %v8570 = vsub.f32 %v7104, %v7606
        %v8571 = vsub.f32 %v7111, %v7607
        %v8572 = vsub.f32 %v7118, %v7608
        %v8573 = vsub.f32 %v7125, %v7609
        %v8574 = vsub.f32 %v7076, %v7010
        %v8575 = vsub.f32 %v7083, %v7610
        %v8576 = vsub.f32 %v7090, %v7611
        %v8577 = vsub.f32 %v7097, %v7612
        %v8578 = vsub.f32 %v7104, %v7613
        %v8579 = vsub.f32 %v7111, %v7614
        %v8580 = vsub.f32 %v7118, %v7615
        %v8581 = vsub.f32 %v7125, %v7616
        %v8582 = vsub.f32 %v7076, %v7011
        %v8583 = vsub.f32 %v7083, %v7617
        %v8584 = vsub.f32 %v7090, %v7618
        %v8585 = vsub.f32 %v7097, %v7619
        %v8586 = vsub.f32 %v7104, %v7620
        %v8587 = vsub.f32 %v7111, %v7621
        %v8588 = vsub.f32 %v7118, %v7622
        %v8589 = vsub.f32 %v7125, %v7623
        %v8590 = vsub.f32 %v7076, %v7012
        %v8591 = vsub.f32 %v7083, %v7624
        %v8592 = vsub.f32 %v7090, %v7625
        %v8593 = vsub.f32 %v7097, %v7626
        %v8594 = vsub.f32 %v7104, %v7627
        %v8595 = vsub.f32 %v7111, %v7628
        %v8596 = vsub.f32 %v7118, %v7629
        %v8597 = vsub.f32 %v7125, %v7630
        %v8598 = vsub.f32 %v7076, %v7013
        %v8599 = vsub.f32 %v7083, %v7631
        %v8600 = vsub.f32 %v7090, %v7632
        %v8601 = vsub.f32 %v7097, %v7633
        %v8602 = vsub.f32 %v7104, %v7634
        %v8603 = vsub.f32 %v7111, %v7635
        %v8604 = vsub.f32 %v7118, %v7636
        %v8605 = vsub.f32 %v7125, %v7637
        %v8606 = vsub.f32 %v7132, %v7014
        %v8607 = vsub.f32 %v7139, %v7638
        %v8608 = vsub.f32 %v7146, %v7639
        %v8609 = vsub.f32 %v7153, %v7640
        %v8610 = vsub.f32 %v7160, %v7641
        %v8611 = vsub.f32 %v7167, %v7642
        %v8612 = vsub.f32 %v7174, %v7643
        %v8613 = vsub.f32 %v7181, %v7644
        %v8614 = vsub.f32 %v7132, %v7015
        %v8615 = vsub.f32 %v7139, %v7645
        %v8616 = vsub.f32 %v7146, %v7646
        %v8617 = vsub.f32 %v7153, %v7647
        %v8618 = vsub.f32 %v7160, %v7648
        %v8619 = vsub.f32 %v7167, %v7649
        %v8620 = vsub.f32 %v7174, %v7650
        %v8621 = vsub.f32 %v7181, %v7651
        %v8622 = vsub.f32 %v7132, %v7016
        %v8623 = vsub.f32 %v7139, %v7652
        %v8624 = vsub.f32 %v7146, %v7653
        %v8625 = vsub.f32 %v7153, %v7654
        %v8626 = vsub.f32 %v7160, %v7655
        %v8627 = vsub.f32 %v7167, %v7656
        %v8628 = vsub.f32 %v7174, %v7657
        %v8629 = vsub.f32 %v7181, %v7658
        %v8630 = vsub.f32 %v7132, %v7017
        %v8631 = vsub.f32 %v7139, %v7659
        %v8632 = vsub.f32 %v7146, %v7660
        %v8633 = vsub.f32 %v7153, %v7661
        %v8634 = vsub.f32 %v7160, %v7662
        %v8635 = vsub.f32 %v7167, %v7663
        %v8636 = vsub.f32 %v7174, %v7664
        %v8637 = vsub.f32 %v7181, %v7665
        %v8638 = vsub.f32 %v7132, %v7018
        %v8639 = vsub.f32 %v7139, %v7666
        %v8640 = vsub.f32 %v7146, %v7667
        %v8641 = vsub.f32 %v7153, %v7668
        %v8642 = vsub.f32 %v7160, %v7669
        %v8643 = vsub.f32 %v7167, %v7670
        %v8644 = vsub.f32 %v7174, %v7671
        %v8645 = vsub.f32 %v7181, %v7672
        %v8646 = vsub.f32 %v7132, %v7019
        %v8647 = vsub.f32 %v7139, %v7673
        %v8648 = vsub.f32 %v7146, %v7674
        %v8649 = vsub.f32 %v7153, %v7675
        %v8650 = vsub.f32 %v7160, %v7676
        %v8651 = vsub.f32 %v7167, %v7677
        %v8652 = vsub.f32 %v7174, %v7678
        %v8653 = vsub.f32 %v7181, %v7679
        %v8654 = vsub.f32 %v7132, %v7020
        %v8655 = vsub.f32 %v7139, %v7680
        %v8656 = vsub.f32 %v7146, %v7681
        %v8657 = vsub.f32 %v7153, %v7682
        %v8658 = vsub.f32 %v7160, %v7683
        %v8659 = vsub.f32 %v7167, %v7684
        %v8660 = vsub.f32 %v7174, %v7685
        %v8661 = vsub.f32 %v7181, %v7686
        %v8662 = vsub.f32 %v7132, %v7021
        %v8663 = vsub.f32 %v7139, %v7687
        %v8664 = vsub.f32 %v7146, %v7688
        %v8665 = vsub.f32 %v7153, %v7689
        %v8666 = vsub.f32 %v7160, %v7690
        %v8667 = vsub.f32 %v7167, %v7691
        %v8668 = vsub.f32 %v7174, %v7692
        %v8669 = vsub.f32 %v7181, %v7693
        %v8670 = vsub.f32 %v7188, %v7022
        %v8671 = vsub.f32 %v7195, %v7694
        %v8672 = vsub.f32 %v7202, %v7695
        %v8673 = vsub.f32 %v7209, %v7696
        %v8674 = vsub.f32 %v7216, %v7697
        %v8675 = vsub.f32 %v7223, %v7698
        %v8676 = vsub.f32 %v7230, %v7699
        %v8677 = vsub.f32 %v7237, %v7700
        %v8678 = vsub.f32 %v7188, %v7023
        %v8679 = vsub.f32 %v7195, %v7701
        %v8680 = vsub.f32 %v7202, %v7702
        %v8681 = vsub.f32 %v7209, %v7703
        %v8682 = vsub.f32 %v7216, %v7704
        %v8683 = vsub.f32 %v7223, %v7705
        %v8684 = vsub.f32 %v7230, %v7706
        %v8685 = vsub.f32 %v7237, %v7707
        %v8686 = vsub.f32 %v7188, %v7024
        %v8687 = vsub.f32 %v7195, %v7708
        %v8688 = vsub.f32 %v7202, %v7709
        %v8689 = vsub.f32 %v7209, %v7710
        %v8690 = vsub.f32 %v7216, %v7711
        %v8691 = vsub.f32 %v7223, %v7712
        %v8692 = vsub.f32 %v7230, %v7713
        %v8693 = vsub.f32 %v7237, %v7714
        %v8694 = vsub.f32 %v7188, %v7025
        %v8695 = vsub.f32 %v7195, %v7715
        %v8696 = vsub.f32 %v7202, %v7716
        %v8697 = vsub.f32 %v7209, %v7717
        %v8698 = vsub.f32 %v7216, %v7718
        %v8699 = vsub.f32 %v7223, %v7719
        %v8700 = vsub.f32 %v7230, %v7720
        %v8701 = vsub.f32 %v7237, %v7721
        %v8702 = vsub.f32 %v7188, %v7026
        %v8703 = vsub.f32 %v7195, %v7722
        %v8704 = vsub.f32 %v7202, %v7723
        %v8705 = vsub.f32 %v7209, %v7724
        %v8706 = vsub.f32 %v7216, %v7725
        %v8707 = vsub.f32 %v7223, %v7726
        %v8708 = vsub.f32 %v7230, %v7727
        %v8709 = vsub.f32 %v7237, %v7728
        %v8710 = vsub.f32 %v7188, %v7027
        %v8711 = vsub.f32 %v7195, %v7729
        %v8712 = vsub.f32 %v7202, %v7730
        %v8713 = vsub.f32 %v7209, %v7731
        %v8714 = vsub.f32 %v7216, %v7732
        %v8715 = vsub.f32 %v7223, %v7733
        %v8716 = vsub.f32 %v7230, %v7734
        %v8717 = vsub.f32 %v7237, %v7735
        %v8718 = vsub.f32 %v7188, %v7028
        %v8719 = vsub.f32 %v7195, %v7736
        %v8720 = vsub.f32 %v7202, %v7737
        %v8721 = vsub.f32 %v7209, %v7738
        %v8722 = vsub.f32 %v7216, %v7739
        %v8723 = vsub.f32 %v7223, %v7740
        %v8724 = vsub.f32 %v7230, %v7741
        %v8725 = vsub.f32 %v7237, %v7742
        %v8726 = vsub.f32 %v7188, %v7029
        %v8727 = vsub.f32 %v7195, %v7743
        %v8728 = vsub.f32 %v7202, %v7744
        %v8729 = vsub.f32 %v7209, %v7745
        %v8730 = vsub.f32 %v7216, %v7746
        %v8731 = vsub.f32 %v7223, %v7747
        %v8732 = vsub.f32 %v7230, %v7748
        %v8733 = vsub.f32 %v7237, %v7749
        %v8734 = vsub.f32 %v7244, %v7030
        %v8735 = vsub.f32 %v7251, %v7750
        %v8736 = vsub.f32 %v7258, %v7751
        %v8737 = vsub.f32 %v7265, %v7752
        %v8738 = vsub.f32 %v7272, %v7753
        %v8739 = vsub.f32 %v7279, %v7754
        %v8740 = vsub.f32 %v7286, %v7755
        %v8741 = vsub.f32 %v7293, %v7756
        %v8742 = vsub.f32 %v7244, %v7031
        %v8743 = vsub.f32 %v7251, %v7757
        %v8744 = vsub.f32 %v7258, %v7758
        %v8745 = vsub.f32 %v7265, %v7759
        %v8746 = vsub.f32 %v7272, %v7760
        %v8747 = vsub.f32 %v7279, %v7761
        %v8748 = vsub.f32 %v7286, %v7762
        %v8749 = vsub.f32 %v7293, %v7763
        %v8750 = vsub.f32 %v7244, %v7032
        %v8751 = vsub.f32 %v7251, %v7764
        %v8752 = vsub.f32 %v7258, %v7765
        %v8753 = vsub.f32 %v7265, %v7766
        %v8754 = vsub.f32 %v7272, %v7767
        %v8755 = vsub.f32 %v7279, %v7768
        %v8756 = vsub.f32 %v7286, %v7769
        %v8757 = vsub.f32 %v7293, %v7770
        %v8758 = vsub.f32 %v7244, %v7033
        %v8759 = vsub.f32 %v7251, %v7771
        %v8760 = vsub.f32 %v7258, %v7772
        %v8761 = vsub.f32 %v7265, %v7773
        %v8762 = vsub.f32 %v7272, %v7774
        %v8763 = vsub.f32 %v7279, %v7775
        %v8764 = vsub.f32 %v7286, %v7776
        %v8765 = vsub.f32 %v7293, %v7777
        %v8766 = vsub.f32 %v7244, %v7034
        %v8767 = vsub.f32 %v7251, %v7778
        %v8768 = vsub.f32 %v7258, %v7779
        %v8769 = vsub.f32 %v7265, %v7780
        %v8770 = vsub.f32 %v7272, %v7781
        %v8771 = vsub.f32 %v7279, %v7782
        %v8772 = vsub.f32 %v7286, %v7783
        %v8773 = vsub.f32 %v7293, %v7784
        %v8774 = vsub.f32 %v7244, %v7035
        %v8775 = vsub.f32 %v7251, %v7785
        %v8776 = vsub.f32 %v7258, %v7786
        %v8777 = vsub.f32 %v7265, %v7787
        %v8778 = vsub.f32 %v7272, %v7788
        %v8779 = vsub.f32 %v7279, %v7789
        %v8780 = vsub.f32 %v7286, %v7790
        %v8781 = vsub.f32 %v7293, %v7791
        %v8782 = vsub.f32 %v7244, %v7036
        %v8783 = vsub.f32 %v7251, %v7792
        %v8784 = vsub.f32 %v7258, %v7793
        %v8785 = vsub.f32 %v7265, %v7794
        %v8786 = vsub.f32 %v7272, %v7795
        %v8787 = vsub.f32 %v7279, %v7796
        %v8788 = vsub.f32 %v7286, %v7797
        %v8789 = vsub.f32 %v7293, %v7798
        %v8790 = vsub.f32 %v7244, %v7037
        %v8791 = vsub.f32 %v7251, %v7799
        %v8792 = vsub.f32 %v7258, %v7800
        %v8793 = vsub.f32 %v7265, %v7801
        %v8794 = vsub.f32 %v7272, %v7802
        %v8795 = vsub.f32 %v7279, %v7803
        %v8796 = vsub.f32 %v7286, %v7804
        %v8797 = vsub.f32 %v7293, %v7805
        %v8798 = vsub.f32 %v7300, %v7038
        %v8799 = vsub.f32 %v7307, %v7806
        %v8800 = vsub.f32 %v7314, %v7807
        %v8801 = vsub.f32 %v7321, %v7808
        %v8802 = vsub.f32 %v7328, %v7809
        %v8803 = vsub.f32 %v7335, %v7810
        %v8804 = vsub.f32 %v7342, %v7811
        %v8805 = vsub.f32 %v7349, %v7812
        %v8806 = vsub.f32 %v7300, %v7039
        %v8807 = vsub.f32 %v7307, %v7813
        %v8808 = vsub.f32 %v7314, %v7814
        %v8809 = vsub.f32 %v7321, %v7815
        %v8810 = vsub.f32 %v7328, %v7816
        %v8811 = vsub.f32 %v7335, %v7817
        %v8812 = vsub.f32 %v7342, %v7818
        %v8813 = vsub.f32 %v7349, %v7819
        %v8814 = vsub.f32 %v7300, %v7040
        %v8815 = vsub.f32 %v7307, %v7820
        %v8816 = vsub.f32 %v7314, %v7821
        %v8817 = vsub.f32 %v7321, %v7822
        %v8818 = vsub.f32 %v7328, %v7823
        %v8819 = vsub.f32 %v7335, %v7824
        %v8820 = vsub.f32 %v7342, %v7825
        %v8821 = vsub.f32 %v7349, %v7826
        %v8822 = vsub.f32 %v7300, %v7041
        %v8823 = vsub.f32 %v7307, %v7827
        %v8824 = vsub.f32 %v7314, %v7828
        %v8825 = vsub.f32 %v7321, %v7829
        %v8826 = vsub.f32 %v7328, %v7830
        %v8827 = vsub.f32 %v7335, %v7831
        %v8828 = vsub.f32 %v7342, %v7832
        %v8829 = vsub.f32 %v7349, %v7833
        %v8830 = vsub.f32 %v7300, %v7042
        %v8831 = vsub.f32 %v7307, %v7834
        %v8832 = vsub.f32 %v7314, %v7835
        %v8833 = vsub.f32 %v7321, %v7836
        %v8834 = vsub.f32 %v7328, %v7837
        %v8835 = vsub.f32 %v7335, %v7838
        %v8836 = vsub.f32 %v7342, %v7839
        %v8837 = vsub.f32 %v7349, %v7840
        %v8838 = vsub.f32 %v7300, %v7043
        %v8839 = vsub.f32 %v7307, %v7841
        %v8840 = vsub.f32 %v7314, %v7842
        %v8841 = vsub.f32 %v7321, %v7843
        %v8842 = vsub.f32 %v7328, %v7844
        %v8843 = vsub.f32 %v7335, %v7845
        %v8844 = vsub.f32 %v7342, %v7846
        %v8845 = vsub.f32 %v7349, %v7847
        %v8846 = vsub.f32 %v7300, %v7044
        %v8847 = vsub.f32 %v7307, %v7848
        %v8848 = vsub.f32 %v7314, %v7849
        %v8849 = vsub.f32 %v7321, %v7850
        %v8850 = vsub.f32 %v7328, %v7851
        %v8851 = vsub.f32 %v7335, %v7852
        %v8852 = vsub.f32 %v7342, %v7853
        %v8853 = vsub.f32 %v7349, %v7854
        %v8854 = vsub.f32 %v7300, %v7045
        %v8855 = vsub.f32 %v7307, %v7855
        %v8856 = vsub.f32 %v7314, %v7856
        %v8857 = vsub.f32 %v7321, %v7857
        %v8858 = vsub.f32 %v7328, %v7858
        %v8859 = vsub.f32 %v7335, %v7859
        %v8860 = vsub.f32 %v7342, %v7860
        %v8861 = vsub.f32 %v7349, %v7861
        %v8862 = vsub.f32 %v7356, %v7046
        %v8863 = vsub.f32 %v7363, %v7862
        %v8864 = vsub.f32 %v7370, %v7863
        %v8865 = vsub.f32 %v7377, %v7864
        %v8866 = vsub.f32 %v7384, %v7865
        %v8867 = vsub.f32 %v7391, %v7866
        %v8868 = vsub.f32 %v7398, %v7867
        %v8869 = vsub.f32 %v7405, %v7868
        %v8870 = vsub.f32 %v7356, %v7047
        %v8871 = vsub.f32 %v7363, %v7869
        %v8872 = vsub.f32 %v7370, %v7870
        %v8873 = vsub.f32 %v7377, %v7871
        %v8874 = vsub.f32 %v7384, %v7872
        %v8875 = vsub.f32 %v7391, %v7873
        %v8876 = vsub.f32 %v7398, %v7874
        %v8877 = vsub.f32 %v7405, %v7875
        %v8878 = vsub.f32 %v7356, %v7048
        %v8879 = vsub.f32 %v7363, %v7876
        %v8880 = vsub.f32 %v7370, %v7877
        %v8881 = vsub.f32 %v7377, %v7878
        %v8882 = vsub.f32 %v7384, %v7879
        %v8883 = vsub.f32 %v7391, %v7880
        %v8884 = vsub.f32 %v7398, %v7881
        %v8885 = vsub.f32 %v7405, %v7882
        %v8886 = vsub.f32 %v7356, %v7049
        %v8887 = vsub.f32 %v7363, %v7883
        %v8888 = vsub.f32 %v7370, %v7884
        %v8889 = vsub.f32 %v7377, %v7885
        %v8890 = vsub.f32 %v7384, %v7886
        %v8891 = vsub.f32 %v7391, %v7887
        %v8892 = vsub.f32 %v7398, %v7888
        %v8893 = vsub.f32 %v7405, %v7889
        %v8894 = vsub.f32 %v7356, %v7050
        %v8895 = vsub.f32 %v7363, %v7890
        %v8896 = vsub.f32 %v7370, %v7891
        %v8897 = vsub.f32 %v7377, %v7892
        %v8898 = vsub.f32 %v7384, %v7893
        %v8899 = vsub.f32 %v7391, %v7894
        %v8900 = vsub.f32 %v7398, %v7895
        %v8901 = vsub.f32 %v7405, %v7896
        %v8902 = vsub.f32 %v7356, %v7051
        %v8903 = vsub.f32 %v7363, %v7897
        %v8904 = vsub.f32 %v7370, %v7898
        %v8905 = vsub.f32 %v7377, %v7899
        %v8906 = vsub.f32 %v7384, %v7900
        %v8907 = vsub.f32 %v7391, %v7901
        %v8908 = vsub.f32 %v7398, %v7902
        %v8909 = vsub.f32 %v7405, %v7903
        %v8910 = vsub.f32 %v7356, %v7052
        %v8911 = vsub.f32 %v7363, %v7904
        %v8912 = vsub.f32 %v7370, %v7905
        %v8913 = vsub.f32 %v7377, %v7906
        %v8914 = vsub.f32 %v7384, %v7907
        %v8915 = vsub.f32 %v7391, %v7908
        %v8916 = vsub.f32 %v7398, %v7909
        %v8917 = vsub.f32 %v7405, %v7910
        %v8918 = vsub.f32 %v7356, %v7053
        %v8919 = vsub.f32 %v7363, %v7911
        %v8920 = vsub.f32 %v7370, %v7912
        %v8921 = vsub.f32 %v7377, %v7913
        %v8922 = vsub.f32 %v7384, %v7914
        %v8923 = vsub.f32 %v7391, %v7915
        %v8924 = vsub.f32 %v7398, %v7916
        %v8925 = vsub.f32 %v7405, %v7917
        %v8926 = vsub.f32 %v7412, %v7054
        %v8927 = vsub.f32 %v7419, %v7918
        %v8928 = vsub.f32 %v7426, %v7919
        %v8929 = vsub.f32 %v7433, %v7920
        %v8930 = vsub.f32 %v7440, %v7921
        %v8931 = vsub.f32 %v7447, %v7922
        %v8932 = vsub.f32 %v7454, %v7923
        %v8933 = vsub.f32 %v7461, %v7924
        %v8934 = vsub.f32 %v7412, %v7055
        %v8935 = vsub.f32 %v7419, %v7925
        %v8936 = vsub.f32 %v7426, %v7926
        %v8937 = vsub.f32 %v7433, %v7927
        %v8938 = vsub.f32 %v7440, %v7928
        %v8939 = vsub.f32 %v7447, %v7929
        %v8940 = vsub.f32 %v7454, %v7930
        %v8941 = vsub.f32 %v7461, %v7931
        %v8942 = vsub.f32 %v7412, %v7056
        %v8943 = vsub.f32 %v7419, %v7932
        %v8944 = vsub.f32 %v7426, %v7933
        %v8945 = vsub.f32 %v7433, %v7934
        %v8946 = vsub.f32 %v7440, %v7935
        %v8947 = vsub.f32 %v7447, %v7936
        %v8948 = vsub.f32 %v7454, %v7937
        %v8949 = vsub.f32 %v7461, %v7938
        %v8950 = vsub.f32 %v7412, %v7057
        %v8951 = vsub.f32 %v7419, %v7939
        %v8952 = vsub.f32 %v7426, %v7940
        %v8953 = vsub.f32 %v7433, %v7941
        %v8954 = vsub.f32 %v7440, %v7942
        %v8955 = vsub.f32 %v7447, %v7943
        %v8956 = vsub.f32 %v7454, %v7944
        %v8957 = vsub.f32 %v7461, %v7945
        %v8958 = vsub.f32 %v7412, %v7058
        %v8959 = vsub.f32 %v7419, %v7946
        %v8960 = vsub.f32 %v7426, %v7947
        %v8961 = vsub.f32 %v7433, %v7948
        %v8962 = vsub.f32 %v7440, %v7949
        %v8963 = vsub.f32 %v7447, %v7950
        %v8964 = vsub.f32 %v7454, %v7951
        %v8965 = vsub.f32 %v7461, %v7952
        %v8966 = vsub.f32 %v7412, %v7059
        %v8967 = vsub.f32 %v7419, %v7953
        %v8968 = vsub.f32 %v7426, %v7954
        %v8969 = vsub.f32 %v7433, %v7955
        %v8970 = vsub.f32 %v7440, %v7956
        %v8971 = vsub.f32 %v7447, %v7957
        %v8972 = vsub.f32 %v7454, %v7958
        %v8973 = vsub.f32 %v7461, %v7959
        %v8974 = vsub.f32 %v7412, %v7060
        %v8975 = vsub.f32 %v7419, %v7960
        %v8976 = vsub.f32 %v7426, %v7961
        %v8977 = vsub.f32 %v7433, %v7962
        %v8978 = vsub.f32 %v7440, %v7963
        %v8979 = vsub.f32 %v7447, %v7964
        %v8980 = vsub.f32 %v7454, %v7965
        %v8981 = vsub.f32 %v7461, %v7966
        %v8982 = vsub.f32 %v7412, %v7061
        %v8983 = vsub.f32 %v7419, %v7967
        %v8984 = vsub.f32 %v7426, %v7968
        %v8985 = vsub.f32 %v7433, %v7969
        %v8986 = vsub.f32 %v7440, %v7970
        %v8987 = vsub.f32 %v7447, %v7971
        %v8988 = vsub.f32 %v7454, %v7972
        %v8989 = vsub.f32 %v7461, %v7973
        %v8990 = vsub.f32 %v7468, %v7062
        %v8991 = vsub.f32 %v7475, %v7974
        %v8992 = vsub.f32 %v7482, %v7975
        %v8993 = vsub.f32 %v7489, %v7976
        %v8994 = vsub.f32 %v7496, %v7977
        %v8995 = vsub.f32 %v7503, %v7978
        %v8996 = vsub.f32 %v7510, %v7979
        %v8997 = vsub.f32 %v7517, %v7980
        %v8998 = vsub.f32 %v7468, %v7063
        %v8999 = vsub.f32 %v7475, %v7981
        %v9000 = vsub.f32 %v7482, %v7982
        %v9001 = vsub.f32 %v7489, %v7983
        %v9002 = vsub.f32 %v7496, %v7984
        %v9003 = vsub.f32 %v7503, %v7985
        %v9004 = vsub.f32 %v7510, %v7986
        %v9005 = vsub.f32 %v7517, %v7987
        %v9006 = vsub.f32 %v7468, %v7064
        %v9007 = vsub.f32 %v7475, %v7988
        %v9008 = vsub.f32 %v7482, %v7989
        %v9009 = vsub.f32 %v7489, %v7990
        %v9010 = vsub.f32 %v7496, %v7991
        %v9011 = vsub.f32 %v7503, %v7992
        %v9012 = vsub.f32 %v7510, %v7993
        %v9013 = vsub.f32 %v7517, %v7994
        %v9014 = vsub.f32 %v7468, %v7065
        %v9015 = vsub.f32 %v7475, %v7995
        %v9016 = vsub.f32 %v7482, %v7996
        %v9017 = vsub.f32 %v7489, %v7997
        %v9018 = vsub.f32 %v7496, %v7998
        %v9019 = vsub.f32 %v7503, %v7999
        %v9020 = vsub.f32 %v7510, %v8000
        %v9021 = vsub.f32 %v7517, %v8001
        %v9022 = vsub.f32 %v7468, %v7066
        %v9023 = vsub.f32 %v7475, %v8002
        %v9024 = vsub.f32 %v7482, %v8003
        %v9025 = vsub.f32 %v7489, %v8004
        %v9026 = vsub.f32 %v7496, %v8005
        %v9027 = vsub.f32 %v7503, %v8006
        %v9028 = vsub.f32 %v7510, %v8007
        %v9029 = vsub.f32 %v7517, %v8008
        %v9030 = vsub.f32 %v7468, %v7067
        %v9031 = vsub.f32 %v7475, %v8009
        %v9032 = vsub.f32 %v7482, %v8010
        %v9033 = vsub.f32 %v7489, %v8011
        %v9034 = vsub.f32 %v7496, %v8012
        %v9035 = vsub.f32 %v7503, %v8013
        %v9036 = vsub.f32 %v7510, %v8014
        %v9037 = vsub.f32 %v7517, %v8015
        %v9038 = vsub.f32 %v7468, %v7068
        %v9039 = vsub.f32 %v7475, %v8016
        %v9040 = vsub.f32 %v7482, %v8017
        %v9041 = vsub.f32 %v7489, %v8018
        %v9042 = vsub.f32 %v7496, %v8019
        %v9043 = vsub.f32 %v7503, %v8020
        %v9044 = vsub.f32 %v7510, %v8021
        %v9045 = vsub.f32 %v7517, %v8022
        %v9046 = vsub.f32 %v7468, %v7069
        %v9047 = vsub.f32 %v7475, %v8023
        %v9048 = vsub.f32 %v7482, %v8024
        %v9049 = vsub.f32 %v7489, %v8025
        %v9050 = vsub.f32 %v7496, %v8026
        %v9051 = vsub.f32 %v7503, %v8027
        %v9052 = vsub.f32 %v7510, %v8028
        %v9053 = vsub.f32 %v7517, %v8029
        %v9054 = vpack.c.bf16 %v8542, %v8542
        %v9055 = vpack.c.bf16 %v8543, %v8543
        %v9056 = vpack.c.bf16 %v8544, %v8544
        %v9057 = vpack.c.bf16 %v8545, %v8545
        %v9058 = vpack.c.bf16 %v8546, %v8546
        %v9059 = vpack.c.bf16 %v8547, %v8547
        %v9060 = vpack.c.bf16 %v8548, %v8548
        %v9061 = vpack.c.bf16 %v8549, %v8549
        %v9062 = vpack.c.bf16 %v8550, %v8550
        %v9063 = vpack.c.bf16 %v8551, %v8551
        %v9064 = vpack.c.bf16 %v8552, %v8552
        %v9065 = vpack.c.bf16 %v8553, %v8553
        %v9066 = vpack.c.bf16 %v8554, %v8554
        %v9067 = vpack.c.bf16 %v8555, %v8555
        %v9068 = vpack.c.bf16 %v8556, %v8556
        %v9069 = vpack.c.bf16 %v8557, %v8557
        %v9070 = vpack.c.bf16 %v8558, %v8558
        %v9071 = vpack.c.bf16 %v8559, %v8559
        %v9072 = vpack.c.bf16 %v8560, %v8560
        %v9073 = vpack.c.bf16 %v8561, %v8561
        %v9074 = vpack.c.bf16 %v8562, %v8562
        %v9075 = vpack.c.bf16 %v8563, %v8563
        %v9076 = vpack.c.bf16 %v8564, %v8564
        %v9077 = vpack.c.bf16 %v8565, %v8565
        %v9078 = vpack.c.bf16 %v8566, %v8566
        %v9079 = vpack.c.bf16 %v8567, %v8567
        %v9080 = vpack.c.bf16 %v8568, %v8568
        %v9081 = vpack.c.bf16 %v8569, %v8569
        %v9082 = vpack.c.bf16 %v8570, %v8570
        %v9083 = vpack.c.bf16 %v8571, %v8571
        %v9084 = vpack.c.bf16 %v8572, %v8572
        %v9085 = vpack.c.bf16 %v8573, %v8573
        %v9086 = vpack.c.bf16 %v8574, %v8574
        %v9087 = vpack.c.bf16 %v8575, %v8575
        %v9088 = vpack.c.bf16 %v8576, %v8576
        %v9089 = vpack.c.bf16 %v8577, %v8577
        %v9090 = vpack.c.bf16 %v8578, %v8578
        %v9091 = vpack.c.bf16 %v8579, %v8579
        %v9092 = vpack.c.bf16 %v8580, %v8580
        %v9093 = vpack.c.bf16 %v8581, %v8581
        %v9094 = vpack.c.bf16 %v8582, %v8582
        %v9095 = vpack.c.bf16 %v8583, %v8583
        %v9096 = vpack.c.bf16 %v8584, %v8584
        %v9097 = vpack.c.bf16 %v8585, %v8585
        %v9098 = vpack.c.bf16 %v8586, %v8586
        %v9099 = vpack.c.bf16 %v8587, %v8587
        %v9100 = vpack.c.bf16 %v8588, %v8588
        %v9101 = vpack.c.bf16 %v8589, %v8589
        %v9102 = vpack.c.bf16 %v8590, %v8590
        %v9103 = vpack.c.bf16 %v8591, %v8591
        %v9104 = vpack.c.bf16 %v8592, %v8592
        %v9105 = vpack.c.bf16 %v8593, %v8593
        %v9106 = vpack.c.bf16 %v8594, %v8594
        %v9107 = vpack.c.bf16 %v8595, %v8595
        %v9108 = vpack.c.bf16 %v8596, %v8596
        %v9109 = vpack.c.bf16 %v8597, %v8597
        %v9110 = vpack.c.bf16 %v8598, %v8598
        %v9111 = vpack.c.bf16 %v8599, %v8599
        %v9112 = vpack.c.bf16 %v8600, %v8600
        %v9113 = vpack.c.bf16 %v8601, %v8601
        %v9114 = vpack.c.bf16 %v8602, %v8602
        %v9115 = vpack.c.bf16 %v8603, %v8603
        %v9116 = vpack.c.bf16 %v8604, %v8604
        %v9117 = vpack.c.bf16 %v8605, %v8605
        %v9118 = vpack.c.bf16 %v8606, %v8606
        %v9119 = vpack.c.bf16 %v8607, %v8607
        %v9120 = vpack.c.bf16 %v8608, %v8608
        %v9121 = vpack.c.bf16 %v8609, %v8609
        %v9122 = vpack.c.bf16 %v8610, %v8610
        %v9123 = vpack.c.bf16 %v8611, %v8611
        %v9124 = vpack.c.bf16 %v8612, %v8612
        %v9125 = vpack.c.bf16 %v8613, %v8613
        %v9126 = vpack.c.bf16 %v8614, %v8614
        %v9127 = vpack.c.bf16 %v8615, %v8615
        %v9128 = vpack.c.bf16 %v8616, %v8616
        %v9129 = vpack.c.bf16 %v8617, %v8617
        %v9130 = vpack.c.bf16 %v8618, %v8618
        %v9131 = vpack.c.bf16 %v8619, %v8619
        %v9132 = vpack.c.bf16 %v8620, %v8620
        %v9133 = vpack.c.bf16 %v8621, %v8621
        %v9134 = vpack.c.bf16 %v8622, %v8622
        %v9135 = vpack.c.bf16 %v8623, %v8623
        %v9136 = vpack.c.bf16 %v8624, %v8624
        %v9137 = vpack.c.bf16 %v8625, %v8625
        %v9138 = vpack.c.bf16 %v8626, %v8626
        %v9139 = vpack.c.bf16 %v8627, %v8627
        %v9140 = vpack.c.bf16 %v8628, %v8628
        %v9141 = vpack.c.bf16 %v8629, %v8629
        %v9142 = vpack.c.bf16 %v8630, %v8630
        %v9143 = vpack.c.bf16 %v8631, %v8631
        %v9144 = vpack.c.bf16 %v8632, %v8632
        %v9145 = vpack.c.bf16 %v8633, %v8633
        %v9146 = vpack.c.bf16 %v8634, %v8634
        %v9147 = vpack.c.bf16 %v8635, %v8635
        %v9148 = vpack.c.bf16 %v8636, %v8636
        %v9149 = vpack.c.bf16 %v8637, %v8637
        %v9150 = vpack.c.bf16 %v8638, %v8638
        %v9151 = vpack.c.bf16 %v8639, %v8639
        %v9152 = vpack.c.bf16 %v8640, %v8640
        %v9153 = vpack.c.bf16 %v8641, %v8641
        %v9154 = vpack.c.bf16 %v8642, %v8642
        %v9155 = vpack.c.bf16 %v8643, %v8643
        %v9156 = vpack.c.bf16 %v8644, %v8644
        %v9157 = vpack.c.bf16 %v8645, %v8645
        %v9158 = vpack.c.bf16 %v8646, %v8646
        %v9159 = vpack.c.bf16 %v8647, %v8647
        %v9160 = vpack.c.bf16 %v8648, %v8648
        %v9161 = vpack.c.bf16 %v8649, %v8649
        %v9162 = vpack.c.bf16 %v8650, %v8650
        %v9163 = vpack.c.bf16 %v8651, %v8651
        %v9164 = vpack.c.bf16 %v8652, %v8652
        %v9165 = vpack.c.bf16 %v8653, %v8653
        %v9166 = vpack.c.bf16 %v8654, %v8654
        %v9167 = vpack.c.bf16 %v8655, %v8655
        %v9168 = vpack.c.bf16 %v8656, %v8656
        %v9169 = vpack.c.bf16 %v8657, %v8657
        %v9170 = vpack.c.bf16 %v8658, %v8658
        %v9171 = vpack.c.bf16 %v8659, %v8659
        %v9172 = vpack.c.bf16 %v8660, %v8660
        %v9173 = vpack.c.bf16 %v8661, %v8661
        %v9174 = vpack.c.bf16 %v8662, %v8662
        %v9175 = vpack.c.bf16 %v8663, %v8663
        %v9176 = vpack.c.bf16 %v8664, %v8664
        %v9177 = vpack.c.bf16 %v8665, %v8665
        %v9178 = vpack.c.bf16 %v8666, %v8666
        %v9179 = vpack.c.bf16 %v8667, %v8667
        %v9180 = vpack.c.bf16 %v8668, %v8668
        %v9181 = vpack.c.bf16 %v8669, %v8669
        %v9182 = vpack.c.bf16 %v8670, %v8670
        %v9183 = vpack.c.bf16 %v8671, %v8671
        %v9184 = vpack.c.bf16 %v8672, %v8672
        %v9185 = vpack.c.bf16 %v8673, %v8673
        %v9186 = vpack.c.bf16 %v8674, %v8674
        %v9187 = vpack.c.bf16 %v8675, %v8675
        %v9188 = vpack.c.bf16 %v8676, %v8676
        %v9189 = vpack.c.bf16 %v8677, %v8677
        %v9190 = vpack.c.bf16 %v8678, %v8678
        %v9191 = vpack.c.bf16 %v8679, %v8679
        %v9192 = vpack.c.bf16 %v8680, %v8680
        %v9193 = vpack.c.bf16 %v8681, %v8681
        %v9194 = vpack.c.bf16 %v8682, %v8682
        %v9195 = vpack.c.bf16 %v8683, %v8683
        %v9196 = vpack.c.bf16 %v8684, %v8684
        %v9197 = vpack.c.bf16 %v8685, %v8685
        %v9198 = vpack.c.bf16 %v8686, %v8686
        %v9199 = vpack.c.bf16 %v8687, %v8687
        %v9200 = vpack.c.bf16 %v8688, %v8688
        %v9201 = vpack.c.bf16 %v8689, %v8689
        %v9202 = vpack.c.bf16 %v8690, %v8690
        %v9203 = vpack.c.bf16 %v8691, %v8691
        %v9204 = vpack.c.bf16 %v8692, %v8692
        %v9205 = vpack.c.bf16 %v8693, %v8693
        %v9206 = vpack.c.bf16 %v8694, %v8694
        %v9207 = vpack.c.bf16 %v8695, %v8695
        %v9208 = vpack.c.bf16 %v8696, %v8696
        %v9209 = vpack.c.bf16 %v8697, %v8697
        %v9210 = vpack.c.bf16 %v8698, %v8698
        %v9211 = vpack.c.bf16 %v8699, %v8699
        %v9212 = vpack.c.bf16 %v8700, %v8700
        %v9213 = vpack.c.bf16 %v8701, %v8701
        %v9214 = vpack.c.bf16 %v8702, %v8702
        %v9215 = vpack.c.bf16 %v8703, %v8703
        %v9216 = vpack.c.bf16 %v8704, %v8704
        %v9217 = vpack.c.bf16 %v8705, %v8705
        %v9218 = vpack.c.bf16 %v8706, %v8706
        %v9219 = vpack.c.bf16 %v8707, %v8707
        %v9220 = vpack.c.bf16 %v8708, %v8708
        %v9221 = vpack.c.bf16 %v8709, %v8709
        %v9222 = vpack.c.bf16 %v8710, %v8710
        %v9223 = vpack.c.bf16 %v8711, %v8711
        %v9224 = vpack.c.bf16 %v8712, %v8712
        %v9225 = vpack.c.bf16 %v8713, %v8713
        %v9226 = vpack.c.bf16 %v8714, %v8714
        %v9227 = vpack.c.bf16 %v8715, %v8715
        %v9228 = vpack.c.bf16 %v8716, %v8716
        %v9229 = vpack.c.bf16 %v8717, %v8717
        %v9230 = vpack.c.bf16 %v8718, %v8718
        %v9231 = vpack.c.bf16 %v8719, %v8719
        %v9232 = vpack.c.bf16 %v8720, %v8720
        %v9233 = vpack.c.bf16 %v8721, %v8721
        %v9234 = vpack.c.bf16 %v8722, %v8722
        %v9235 = vpack.c.bf16 %v8723, %v8723
        %v9236 = vpack.c.bf16 %v8724, %v8724
        %v9237 = vpack.c.bf16 %v8725, %v8725
        %v9238 = vpack.c.bf16 %v8726, %v8726
        %v9239 = vpack.c.bf16 %v8727, %v8727
        %v9240 = vpack.c.bf16 %v8728, %v8728
        %v9241 = vpack.c.bf16 %v8729, %v8729
        %v9242 = vpack.c.bf16 %v8730, %v8730
        %v9243 = vpack.c.bf16 %v8731, %v8731
        %v9244 = vpack.c.bf16 %v8732, %v8732
        %v9245 = vpack.c.bf16 %v8733, %v8733
        %v9246 = vpack.c.bf16 %v8734, %v8734
        %v9247 = vpack.c.bf16 %v8735, %v8735
        %v9248 = vpack.c.bf16 %v8736, %v8736
        %v9249 = vpack.c.bf16 %v8737, %v8737
        %v9250 = vpack.c.bf16 %v8738, %v8738
        %v9251 = vpack.c.bf16 %v8739, %v8739
        %v9252 = vpack.c.bf16 %v8740, %v8740
        %v9253 = vpack.c.bf16 %v8741, %v8741
        %v9254 = vpack.c.bf16 %v8742, %v8742
        %v9255 = vpack.c.bf16 %v8743, %v8743
        %v9256 = vpack.c.bf16 %v8744, %v8744
        %v9257 = vpack.c.bf16 %v8745, %v8745
        %v9258 = vpack.c.bf16 %v8746, %v8746
        %v9259 = vpack.c.bf16 %v8747, %v8747
        %v9260 = vpack.c.bf16 %v8748, %v8748
        %v9261 = vpack.c.bf16 %v8749, %v8749
        %v9262 = vpack.c.bf16 %v8750, %v8750
        %v9263 = vpack.c.bf16 %v8751, %v8751
        %v9264 = vpack.c.bf16 %v8752, %v8752
        %v9265 = vpack.c.bf16 %v8753, %v8753
        %v9266 = vpack.c.bf16 %v8754, %v8754
        %v9267 = vpack.c.bf16 %v8755, %v8755
        %v9268 = vpack.c.bf16 %v8756, %v8756
        %v9269 = vpack.c.bf16 %v8757, %v8757
        %v9270 = vpack.c.bf16 %v8758, %v8758
        %v9271 = vpack.c.bf16 %v8759, %v8759
        %v9272 = vpack.c.bf16 %v8760, %v8760
        %v9273 = vpack.c.bf16 %v8761, %v8761
        %v9274 = vpack.c.bf16 %v8762, %v8762
        %v9275 = vpack.c.bf16 %v8763, %v8763
        %v9276 = vpack.c.bf16 %v8764, %v8764
        %v9277 = vpack.c.bf16 %v8765, %v8765
        %v9278 = vpack.c.bf16 %v8766, %v8766
        %v9279 = vpack.c.bf16 %v8767, %v8767
        %v9280 = vpack.c.bf16 %v8768, %v8768
        %v9281 = vpack.c.bf16 %v8769, %v8769
        %v9282 = vpack.c.bf16 %v8770, %v8770
        %v9283 = vpack.c.bf16 %v8771, %v8771
        %v9284 = vpack.c.bf16 %v8772, %v8772
        %v9285 = vpack.c.bf16 %v8773, %v8773
        %v9286 = vpack.c.bf16 %v8774, %v8774
        %v9287 = vpack.c.bf16 %v8775, %v8775
        %v9288 = vpack.c.bf16 %v8776, %v8776
        %v9289 = vpack.c.bf16 %v8777, %v8777
        %v9290 = vpack.c.bf16 %v8778, %v8778
        %v9291 = vpack.c.bf16 %v8779, %v8779
        %v9292 = vpack.c.bf16 %v8780, %v8780
        %v9293 = vpack.c.bf16 %v8781, %v8781
        %v9294 = vpack.c.bf16 %v8782, %v8782
        %v9295 = vpack.c.bf16 %v8783, %v8783
        %v9296 = vpack.c.bf16 %v8784, %v8784
        %v9297 = vpack.c.bf16 %v8785, %v8785
        %v9298 = vpack.c.bf16 %v8786, %v8786
        %v9299 = vpack.c.bf16 %v8787, %v8787
        %v9300 = vpack.c.bf16 %v8788, %v8788
        %v9301 = vpack.c.bf16 %v8789, %v8789
        %v9302 = vpack.c.bf16 %v8790, %v8790
        %v9303 = vpack.c.bf16 %v8791, %v8791
        %v9304 = vpack.c.bf16 %v8792, %v8792
        %v9305 = vpack.c.bf16 %v8793, %v8793
        %v9306 = vpack.c.bf16 %v8794, %v8794
        %v9307 = vpack.c.bf16 %v8795, %v8795
        %v9308 = vpack.c.bf16 %v8796, %v8796
        %v9309 = vpack.c.bf16 %v8797, %v8797
        %v9310 = vpack.c.bf16 %v8798, %v8798
        %v9311 = vpack.c.bf16 %v8799, %v8799
        %v9312 = vpack.c.bf16 %v8800, %v8800
        %v9313 = vpack.c.bf16 %v8801, %v8801
        %v9314 = vpack.c.bf16 %v8802, %v8802
        %v9315 = vpack.c.bf16 %v8803, %v8803
        %v9316 = vpack.c.bf16 %v8804, %v8804
        %v9317 = vpack.c.bf16 %v8805, %v8805
        %v9318 = vpack.c.bf16 %v8806, %v8806
        %v9319 = vpack.c.bf16 %v8807, %v8807
        %v9320 = vpack.c.bf16 %v8808, %v8808
        %v9321 = vpack.c.bf16 %v8809, %v8809
        %v9322 = vpack.c.bf16 %v8810, %v8810
        %v9323 = vpack.c.bf16 %v8811, %v8811
        %v9324 = vpack.c.bf16 %v8812, %v8812
        %v9325 = vpack.c.bf16 %v8813, %v8813
        %v9326 = vpack.c.bf16 %v8814, %v8814
        %v9327 = vpack.c.bf16 %v8815, %v8815
        %v9328 = vpack.c.bf16 %v8816, %v8816
        %v9329 = vpack.c.bf16 %v8817, %v8817
        %v9330 = vpack.c.bf16 %v8818, %v8818
        %v9331 = vpack.c.bf16 %v8819, %v8819
        %v9332 = vpack.c.bf16 %v8820, %v8820
        %v9333 = vpack.c.bf16 %v8821, %v8821
        %v9334 = vpack.c.bf16 %v8822, %v8822
        %v9335 = vpack.c.bf16 %v8823, %v8823
        %v9336 = vpack.c.bf16 %v8824, %v8824
        %v9337 = vpack.c.bf16 %v8825, %v8825
        %v9338 = vpack.c.bf16 %v8826, %v8826
        %v9339 = vpack.c.bf16 %v8827, %v8827
        %v9340 = vpack.c.bf16 %v8828, %v8828
        %v9341 = vpack.c.bf16 %v8829, %v8829
        %v9342 = vpack.c.bf16 %v8830, %v8830
        %v9343 = vpack.c.bf16 %v8831, %v8831
        %v9344 = vpack.c.bf16 %v8832, %v8832
        %v9345 = vpack.c.bf16 %v8833, %v8833
        %v9346 = vpack.c.bf16 %v8834, %v8834
        %v9347 = vpack.c.bf16 %v8835, %v8835
        %v9348 = vpack.c.bf16 %v8836, %v8836
        %v9349 = vpack.c.bf16 %v8837, %v8837
        %v9350 = vpack.c.bf16 %v8838, %v8838
        %v9351 = vpack.c.bf16 %v8839, %v8839
        %v9352 = vpack.c.bf16 %v8840, %v8840
        %v9353 = vpack.c.bf16 %v8841, %v8841
        %v9354 = vpack.c.bf16 %v8842, %v8842
        %v9355 = vpack.c.bf16 %v8843, %v8843
        %v9356 = vpack.c.bf16 %v8844, %v8844
        %v9357 = vpack.c.bf16 %v8845, %v8845
        %v9358 = vpack.c.bf16 %v8846, %v8846
        %v9359 = vpack.c.bf16 %v8847, %v8847
        %v9360 = vpack.c.bf16 %v8848, %v8848
        %v9361 = vpack.c.bf16 %v8849, %v8849
        %v9362 = vpack.c.bf16 %v8850, %v8850
        %v9363 = vpack.c.bf16 %v8851, %v8851
        %v9364 = vpack.c.bf16 %v8852, %v8852
        %v9365 = vpack.c.bf16 %v8853, %v8853
        %v9366 = vpack.c.bf16 %v8854, %v8854
        %v9367 = vpack.c.bf16 %v8855, %v8855
        %v9368 = vpack.c.bf16 %v8856, %v8856
        %v9369 = vpack.c.bf16 %v8857, %v8857
        %v9370 = vpack.c.bf16 %v8858, %v8858
        %v9371 = vpack.c.bf16 %v8859, %v8859
        %v9372 = vpack.c.bf16 %v8860, %v8860
        %v9373 = vpack.c.bf16 %v8861, %v8861
        %v9374 = vpack.c.bf16 %v8862, %v8862
        %v9375 = vpack.c.bf16 %v8863, %v8863
        %v9376 = vpack.c.bf16 %v8864, %v8864
        %v9377 = vpack.c.bf16 %v8865, %v8865
        %v9378 = vpack.c.bf16 %v8866, %v8866
        %v9379 = vpack.c.bf16 %v8867, %v8867
        %v9380 = vpack.c.bf16 %v8868, %v8868
        %v9381 = vpack.c.bf16 %v8869, %v8869
        %v9382 = vpack.c.bf16 %v8870, %v8870
        %v9383 = vpack.c.bf16 %v8871, %v8871
        %v9384 = vpack.c.bf16 %v8872, %v8872
        %v9385 = vpack.c.bf16 %v8873, %v8873
        %v9386 = vpack.c.bf16 %v8874, %v8874
        %v9387 = vpack.c.bf16 %v8875, %v8875
        %v9388 = vpack.c.bf16 %v8876, %v8876
        %v9389 = vpack.c.bf16 %v8877, %v8877
        %v9390 = vpack.c.bf16 %v8878, %v8878
        %v9391 = vpack.c.bf16 %v8879, %v8879
        %v9392 = vpack.c.bf16 %v8880, %v8880
        %v9393 = vpack.c.bf16 %v8881, %v8881
        %v9394 = vpack.c.bf16 %v8882, %v8882
        %v9395 = vpack.c.bf16 %v8883, %v8883
        %v9396 = vpack.c.bf16 %v8884, %v8884
        %v9397 = vpack.c.bf16 %v8885, %v8885
        %v9398 = vpack.c.bf16 %v8886, %v8886
        %v9399 = vpack.c.bf16 %v8887, %v8887
        %v9400 = vpack.c.bf16 %v8888, %v8888
        %v9401 = vpack.c.bf16 %v8889, %v8889
        %v9402 = vpack.c.bf16 %v8890, %v8890
        %v9403 = vpack.c.bf16 %v8891, %v8891
        %v9404 = vpack.c.bf16 %v8892, %v8892
        %v9405 = vpack.c.bf16 %v8893, %v8893
        %v9406 = vpack.c.bf16 %v8894, %v8894
        %v9407 = vpack.c.bf16 %v8895, %v8895
        %v9408 = vpack.c.bf16 %v8896, %v8896
        %v9409 = vpack.c.bf16 %v8897, %v8897
        %v9410 = vpack.c.bf16 %v8898, %v8898
        %v9411 = vpack.c.bf16 %v8899, %v8899
        %v9412 = vpack.c.bf16 %v8900, %v8900
        %v9413 = vpack.c.bf16 %v8901, %v8901
        %v9414 = vpack.c.bf16 %v8902, %v8902
        %v9415 = vpack.c.bf16 %v8903, %v8903
        %v9416 = vpack.c.bf16 %v8904, %v8904
        %v9417 = vpack.c.bf16 %v8905, %v8905
        %v9418 = vpack.c.bf16 %v8906, %v8906
        %v9419 = vpack.c.bf16 %v8907, %v8907
        %v9420 = vpack.c.bf16 %v8908, %v8908
        %v9421 = vpack.c.bf16 %v8909, %v8909
        %v9422 = vpack.c.bf16 %v8910, %v8910
        %v9423 = vpack.c.bf16 %v8911, %v8911
        %v9424 = vpack.c.bf16 %v8912, %v8912
        %v9425 = vpack.c.bf16 %v8913, %v8913
        %v9426 = vpack.c.bf16 %v8914, %v8914
        %v9427 = vpack.c.bf16 %v8915, %v8915
        %v9428 = vpack.c.bf16 %v8916, %v8916
        %v9429 = vpack.c.bf16 %v8917, %v8917
        %v9430 = vpack.c.bf16 %v8918, %v8918
        %v9431 = vpack.c.bf16 %v8919, %v8919
        %v9432 = vpack.c.bf16 %v8920, %v8920
        %v9433 = vpack.c.bf16 %v8921, %v8921
        %v9434 = vpack.c.bf16 %v8922, %v8922
        %v9435 = vpack.c.bf16 %v8923, %v8923
        %v9436 = vpack.c.bf16 %v8924, %v8924
        %v9437 = vpack.c.bf16 %v8925, %v8925
        %v9438 = vpack.c.bf16 %v8926, %v8926
        %v9439 = vpack.c.bf16 %v8927, %v8927
        %v9440 = vpack.c.bf16 %v8928, %v8928
        %v9441 = vpack.c.bf16 %v8929, %v8929
        %v9442 = vpack.c.bf16 %v8930, %v8930
        %v9443 = vpack.c.bf16 %v8931, %v8931
        %v9444 = vpack.c.bf16 %v8932, %v8932
        %v9445 = vpack.c.bf16 %v8933, %v8933
        %v9446 = vpack.c.bf16 %v8934, %v8934
        %v9447 = vpack.c.bf16 %v8935, %v8935
        %v9448 = vpack.c.bf16 %v8936, %v8936
        %v9449 = vpack.c.bf16 %v8937, %v8937
        %v9450 = vpack.c.bf16 %v8938, %v8938
        %v9451 = vpack.c.bf16 %v8939, %v8939
        %v9452 = vpack.c.bf16 %v8940, %v8940
        %v9453 = vpack.c.bf16 %v8941, %v8941
        %v9454 = vpack.c.bf16 %v8942, %v8942
        %v9455 = vpack.c.bf16 %v8943, %v8943
        %v9456 = vpack.c.bf16 %v8944, %v8944
        %v9457 = vpack.c.bf16 %v8945, %v8945
        %v9458 = vpack.c.bf16 %v8946, %v8946
        %v9459 = vpack.c.bf16 %v8947, %v8947
        %v9460 = vpack.c.bf16 %v8948, %v8948
        %v9461 = vpack.c.bf16 %v8949, %v8949
        %v9462 = vpack.c.bf16 %v8950, %v8950
        %v9463 = vpack.c.bf16 %v8951, %v8951
        %v9464 = vpack.c.bf16 %v8952, %v8952
        %v9465 = vpack.c.bf16 %v8953, %v8953
        %v9466 = vpack.c.bf16 %v8954, %v8954
        %v9467 = vpack.c.bf16 %v8955, %v8955
        %v9468 = vpack.c.bf16 %v8956, %v8956
        %v9469 = vpack.c.bf16 %v8957, %v8957
        %v9470 = vpack.c.bf16 %v8958, %v8958
        %v9471 = vpack.c.bf16 %v8959, %v8959
        %v9472 = vpack.c.bf16 %v8960, %v8960
        %v9473 = vpack.c.bf16 %v8961, %v8961
        %v9474 = vpack.c.bf16 %v8962, %v8962
        %v9475 = vpack.c.bf16 %v8963, %v8963
        %v9476 = vpack.c.bf16 %v8964, %v8964
        %v9477 = vpack.c.bf16 %v8965, %v8965
        %v9478 = vpack.c.bf16 %v8966, %v8966
        %v9479 = vpack.c.bf16 %v8967, %v8967
        %v9480 = vpack.c.bf16 %v8968, %v8968
        %v9481 = vpack.c.bf16 %v8969, %v8969
        %v9482 = vpack.c.bf16 %v8970, %v8970
        %v9483 = vpack.c.bf16 %v8971, %v8971
        %v9484 = vpack.c.bf16 %v8972, %v8972
        %v9485 = vpack.c.bf16 %v8973, %v8973
        %v9486 = vpack.c.bf16 %v8974, %v8974
        %v9487 = vpack.c.bf16 %v8975, %v8975
        %v9488 = vpack.c.bf16 %v8976, %v8976
        %v9489 = vpack.c.bf16 %v8977, %v8977
        %v9490 = vpack.c.bf16 %v8978, %v8978
        %v9491 = vpack.c.bf16 %v8979, %v8979
        %v9492 = vpack.c.bf16 %v8980, %v8980
        %v9493 = vpack.c.bf16 %v8981, %v8981
        %v9494 = vpack.c.bf16 %v8982, %v8982
        %v9495 = vpack.c.bf16 %v8983, %v8983
        %v9496 = vpack.c.bf16 %v8984, %v8984
        %v9497 = vpack.c.bf16 %v8985, %v8985
        %v9498 = vpack.c.bf16 %v8986, %v8986
        %v9499 = vpack.c.bf16 %v8987, %v8987
        %v9500 = vpack.c.bf16 %v8988, %v8988
        %v9501 = vpack.c.bf16 %v8989, %v8989
        %v9502 = vpack.c.bf16 %v8990, %v8990
        %v9503 = vpack.c.bf16 %v8991, %v8991
        %v9504 = vpack.c.bf16 %v8992, %v8992
        %v9505 = vpack.c.bf16 %v8993, %v8993
        %v9506 = vpack.c.bf16 %v8994, %v8994
        %v9507 = vpack.c.bf16 %v8995, %v8995
        %v9508 = vpack.c.bf16 %v8996, %v8996
        %v9509 = vpack.c.bf16 %v8997, %v8997
        %v9510 = vpack.c.bf16 %v8998, %v8998
        %v9511 = vpack.c.bf16 %v8999, %v8999
        %v9512 = vpack.c.bf16 %v9000, %v9000
        %v9513 = vpack.c.bf16 %v9001, %v9001
        %v9514 = vpack.c.bf16 %v9002, %v9002
        %v9515 = vpack.c.bf16 %v9003, %v9003
        %v9516 = vpack.c.bf16 %v9004, %v9004
        %v9517 = vpack.c.bf16 %v9005, %v9005
        %v9518 = vpack.c.bf16 %v9006, %v9006
        %v9519 = vpack.c.bf16 %v9007, %v9007
        %v9520 = vpack.c.bf16 %v9008, %v9008
        %v9521 = vpack.c.bf16 %v9009, %v9009
        %v9522 = vpack.c.bf16 %v9010, %v9010
        %v9523 = vpack.c.bf16 %v9011, %v9011
        %v9524 = vpack.c.bf16 %v9012, %v9012
        %v9525 = vpack.c.bf16 %v9013, %v9013
        %v9526 = vpack.c.bf16 %v9014, %v9014
        %v9527 = vpack.c.bf16 %v9015, %v9015
        %v9528 = vpack.c.bf16 %v9016, %v9016
        %v9529 = vpack.c.bf16 %v9017, %v9017
        %v9530 = vpack.c.bf16 %v9018, %v9018
        %v9531 = vpack.c.bf16 %v9019, %v9019
        %v9532 = vpack.c.bf16 %v9020, %v9020
        %v9533 = vpack.c.bf16 %v9021, %v9021
        %v9534 = vpack.c.bf16 %v9022, %v9022
        %v9535 = vpack.c.bf16 %v9023, %v9023
        %v9536 = vpack.c.bf16 %v9024, %v9024
        %v9537 = vpack.c.bf16 %v9025, %v9025
        %v9538 = vpack.c.bf16 %v9026, %v9026
        %v9539 = vpack.c.bf16 %v9027, %v9027
        %v9540 = vpack.c.bf16 %v9028, %v9028
        %v9541 = vpack.c.bf16 %v9029, %v9029
        %v9542 = vpack.c.bf16 %v9030, %v9030
        %v9543 = vpack.c.bf16 %v9031, %v9031
        %v9544 = vpack.c.bf16 %v9032, %v9032
        %v9545 = vpack.c.bf16 %v9033, %v9033
        %v9546 = vpack.c.bf16 %v9034, %v9034
        %v9547 = vpack.c.bf16 %v9035, %v9035
        %v9548 = vpack.c.bf16 %v9036, %v9036
        %v9549 = vpack.c.bf16 %v9037, %v9037
        %v9550 = vpack.c.bf16 %v9038, %v9038
        %v9551 = vpack.c.bf16 %v9039, %v9039
        %v9552 = vpack.c.bf16 %v9040, %v9040
        %v9553 = vpack.c.bf16 %v9041, %v9041
        %v9554 = vpack.c.bf16 %v9042, %v9042
        %v9555 = vpack.c.bf16 %v9043, %v9043
        %v9556 = vpack.c.bf16 %v9044, %v9044
        %v9557 = vpack.c.bf16 %v9045, %v9045
        %v9558 = vpack.c.bf16 %v9046, %v9046
        %v9559 = vpack.c.bf16 %v9047, %v9047
        %v9560 = vpack.c.bf16 %v9048, %v9048
        %v9561 = vpack.c.bf16 %v9049, %v9049
        %v9562 = vpack.c.bf16 %v9050, %v9050
        %v9563 = vpack.c.bf16 %v9051, %v9051
        %v9564 = vpack.c.bf16 %v9052, %v9052
        %v9565 = vpack.c.bf16 %v9053, %v9053
        %v10078 = vunpack.c.l.b16 %v9054
        %v10079 = vunpack.c.l.b16 %v9055
        %v10080 = vunpack.c.l.b16 %v9056
        %v10081 = vunpack.c.l.b16 %v9057
        %v10082 = vunpack.c.l.b16 %v9058
        %v10083 = vunpack.c.l.b16 %v9059
        %v10084 = vunpack.c.l.b16 %v9060
        %v10085 = vunpack.c.l.b16 %v9061
        %v10086 = vunpack.c.l.b16 %v9062
        %v10087 = vunpack.c.l.b16 %v9063
        %v10088 = vunpack.c.l.b16 %v9064
        %v10089 = vunpack.c.l.b16 %v9065
        %v10090 = vunpack.c.l.b16 %v9066
        %v10091 = vunpack.c.l.b16 %v9067
        %v10092 = vunpack.c.l.b16 %v9068
        %v10093 = vunpack.c.l.b16 %v9069
        %v10094 = vunpack.c.l.b16 %v9070
        %v10095 = vunpack.c.l.b16 %v9071
        %v10096 = vunpack.c.l.b16 %v9072
        %v10097 = vunpack.c.l.b16 %v9073
        %v10098 = vunpack.c.l.b16 %v9074
        %v10099 = vunpack.c.l.b16 %v9075
        %v10100 = vunpack.c.l.b16 %v9076
        %v10101 = vunpack.c.l.b16 %v9077
        %v10102 = vunpack.c.l.b16 %v9078
        %v10103 = vunpack.c.l.b16 %v9079
        %v10104 = vunpack.c.l.b16 %v9080
        %v10105 = vunpack.c.l.b16 %v9081
        %v10106 = vunpack.c.l.b16 %v9082
        %v10107 = vunpack.c.l.b16 %v9083
        %v10108 = vunpack.c.l.b16 %v9084
        %v10109 = vunpack.c.l.b16 %v9085
        %v10110 = vunpack.c.l.b16 %v9086
        %v10111 = vunpack.c.l.b16 %v9087
        %v10112 = vunpack.c.l.b16 %v9088
        %v10113 = vunpack.c.l.b16 %v9089
        %v10114 = vunpack.c.l.b16 %v9090
        %v10115 = vunpack.c.l.b16 %v9091
        %v10116 = vunpack.c.l.b16 %v9092
        %v10117 = vunpack.c.l.b16 %v9093
        %v10118 = vunpack.c.l.b16 %v9094
        %v10119 = vunpack.c.l.b16 %v9095
        %v10120 = vunpack.c.l.b16 %v9096
        %v10121 = vunpack.c.l.b16 %v9097
        %v10122 = vunpack.c.l.b16 %v9098
        %v10123 = vunpack.c.l.b16 %v9099
        %v10124 = vunpack.c.l.b16 %v9100
        %v10125 = vunpack.c.l.b16 %v9101
        %v10126 = vunpack.c.l.b16 %v9102
        %v10127 = vunpack.c.l.b16 %v9103
        %v10128 = vunpack.c.l.b16 %v9104
        %v10129 = vunpack.c.l.b16 %v9105
        %v10130 = vunpack.c.l.b16 %v9106
        %v10131 = vunpack.c.l.b16 %v9107
        %v10132 = vunpack.c.l.b16 %v9108
        %v10133 = vunpack.c.l.b16 %v9109
        %v10134 = vunpack.c.l.b16 %v9110
        %v10135 = vunpack.c.l.b16 %v9111
        %v10136 = vunpack.c.l.b16 %v9112
        %v10137 = vunpack.c.l.b16 %v9113
        %v10138 = vunpack.c.l.b16 %v9114
        %v10139 = vunpack.c.l.b16 %v9115
        %v10140 = vunpack.c.l.b16 %v9116
        %v10141 = vunpack.c.l.b16 %v9117
        %v10142 = vunpack.c.l.b16 %v9118
        %v10143 = vunpack.c.l.b16 %v9119
        %v10144 = vunpack.c.l.b16 %v9120
        %v10145 = vunpack.c.l.b16 %v9121
        %v10146 = vunpack.c.l.b16 %v9122
        %v10147 = vunpack.c.l.b16 %v9123
        %v10148 = vunpack.c.l.b16 %v9124
        %v10149 = vunpack.c.l.b16 %v9125
        %v10150 = vunpack.c.l.b16 %v9126
        %v10151 = vunpack.c.l.b16 %v9127
        %v10152 = vunpack.c.l.b16 %v9128
        %v10153 = vunpack.c.l.b16 %v9129
        %v10154 = vunpack.c.l.b16 %v9130
        %v10155 = vunpack.c.l.b16 %v9131
        %v10156 = vunpack.c.l.b16 %v9132
        %v10157 = vunpack.c.l.b16 %v9133
        %v10158 = vunpack.c.l.b16 %v9134
        %v10159 = vunpack.c.l.b16 %v9135
        %v10160 = vunpack.c.l.b16 %v9136
        %v10161 = vunpack.c.l.b16 %v9137
        %v10162 = vunpack.c.l.b16 %v9138
        %v10163 = vunpack.c.l.b16 %v9139
        %v10164 = vunpack.c.l.b16 %v9140
        %v10165 = vunpack.c.l.b16 %v9141
        %v10166 = vunpack.c.l.b16 %v9142
        %v10167 = vunpack.c.l.b16 %v9143
        %v10168 = vunpack.c.l.b16 %v9144
        %v10169 = vunpack.c.l.b16 %v9145
        %v10170 = vunpack.c.l.b16 %v9146
        %v10171 = vunpack.c.l.b16 %v9147
        %v10172 = vunpack.c.l.b16 %v9148
        %v10173 = vunpack.c.l.b16 %v9149
        %v10174 = vunpack.c.l.b16 %v9150
        %v10175 = vunpack.c.l.b16 %v9151
        %v10176 = vunpack.c.l.b16 %v9152
        %v10177 = vunpack.c.l.b16 %v9153
        %v10178 = vunpack.c.l.b16 %v9154
        %v10179 = vunpack.c.l.b16 %v9155
        %v10180 = vunpack.c.l.b16 %v9156
        %v10181 = vunpack.c.l.b16 %v9157
        %v10182 = vunpack.c.l.b16 %v9158
        %v10183 = vunpack.c.l.b16 %v9159
        %v10184 = vunpack.c.l.b16 %v9160
        %v10185 = vunpack.c.l.b16 %v9161
        %v10186 = vunpack.c.l.b16 %v9162
        %v10187 = vunpack.c.l.b16 %v9163
        %v10188 = vunpack.c.l.b16 %v9164
        %v10189 = vunpack.c.l.b16 %v9165
        %v10190 = vunpack.c.l.b16 %v9166
        %v10191 = vunpack.c.l.b16 %v9167
        %v10192 = vunpack.c.l.b16 %v9168
        %v10193 = vunpack.c.l.b16 %v9169
        %v10194 = vunpack.c.l.b16 %v9170
        %v10195 = vunpack.c.l.b16 %v9171
        %v10196 = vunpack.c.l.b16 %v9172
        %v10197 = vunpack.c.l.b16 %v9173
        %v10198 = vunpack.c.l.b16 %v9174
        %v10199 = vunpack.c.l.b16 %v9175
        %v10200 = vunpack.c.l.b16 %v9176
        %v10201 = vunpack.c.l.b16 %v9177
        %v10202 = vunpack.c.l.b16 %v9178
        %v10203 = vunpack.c.l.b16 %v9179
        %v10204 = vunpack.c.l.b16 %v9180
        %v10205 = vunpack.c.l.b16 %v9181
        %v10206 = vunpack.c.l.b16 %v9182
        %v10207 = vunpack.c.l.b16 %v9183
        %v10208 = vunpack.c.l.b16 %v9184
        %v10209 = vunpack.c.l.b16 %v9185
        %v10210 = vunpack.c.l.b16 %v9186
        %v10211 = vunpack.c.l.b16 %v9187
        %v10212 = vunpack.c.l.b16 %v9188
        %v10213 = vunpack.c.l.b16 %v9189
        %v10214 = vunpack.c.l.b16 %v9190
        %v10215 = vunpack.c.l.b16 %v9191
        %v10216 = vunpack.c.l.b16 %v9192
        %v10217 = vunpack.c.l.b16 %v9193
        %v10218 = vunpack.c.l.b16 %v9194
        %v10219 = vunpack.c.l.b16 %v9195
        %v10220 = vunpack.c.l.b16 %v9196
        %v10221 = vunpack.c.l.b16 %v9197
        %v10222 = vunpack.c.l.b16 %v9198
        %v10223 = vunpack.c.l.b16 %v9199
        %v10224 = vunpack.c.l.b16 %v9200
        %v10225 = vunpack.c.l.b16 %v9201
        %v10226 = vunpack.c.l.b16 %v9202
        %v10227 = vunpack.c.l.b16 %v9203
        %v10228 = vunpack.c.l.b16 %v9204
        %v10229 = vunpack.c.l.b16 %v9205
        %v10230 = vunpack.c.l.b16 %v9206
        %v10231 = vunpack.c.l.b16 %v9207
        %v10232 = vunpack.c.l.b16 %v9208
        %v10233 = vunpack.c.l.b16 %v9209
        %v10234 = vunpack.c.l.b16 %v9210
        %v10235 = vunpack.c.l.b16 %v9211
        %v10236 = vunpack.c.l.b16 %v9212
        %v10237 = vunpack.c.l.b16 %v9213
        %v10238 = vunpack.c.l.b16 %v9214
        %v10239 = vunpack.c.l.b16 %v9215
        %v10240 = vunpack.c.l.b16 %v9216
        %v10241 = vunpack.c.l.b16 %v9217
        %v10242 = vunpack.c.l.b16 %v9218
        %v10243 = vunpack.c.l.b16 %v9219
        %v10244 = vunpack.c.l.b16 %v9220
        %v10245 = vunpack.c.l.b16 %v9221
        %v10246 = vunpack.c.l.b16 %v9222
        %v10247 = vunpack.c.l.b16 %v9223
        %v10248 = vunpack.c.l.b16 %v9224
        %v10249 = vunpack.c.l.b16 %v9225
        %v10250 = vunpack.c.l.b16 %v9226
        %v10251 = vunpack.c.l.b16 %v9227
        %v10252 = vunpack.c.l.b16 %v9228
        %v10253 = vunpack.c.l.b16 %v9229
        %v10254 = vunpack.c.l.b16 %v9230
        %v10255 = vunpack.c.l.b16 %v9231
        %v10256 = vunpack.c.l.b16 %v9232
        %v10257 = vunpack.c.l.b16 %v9233
        %v10258 = vunpack.c.l.b16 %v9234
        %v10259 = vunpack.c.l.b16 %v9235
        %v10260 = vunpack.c.l.b16 %v9236
        %v10261 = vunpack.c.l.b16 %v9237
        %v10262 = vunpack.c.l.b16 %v9238
        %v10263 = vunpack.c.l.b16 %v9239
        %v10264 = vunpack.c.l.b16 %v9240
        %v10265 = vunpack.c.l.b16 %v9241
        %v10266 = vunpack.c.l.b16 %v9242
        %v10267 = vunpack.c.l.b16 %v9243
        %v10268 = vunpack.c.l.b16 %v9244
        %v10269 = vunpack.c.l.b16 %v9245
        %v10270 = vunpack.c.l.b16 %v9246
        %v10271 = vunpack.c.l.b16 %v9247
        %v10272 = vunpack.c.l.b16 %v9248
        %v10273 = vunpack.c.l.b16 %v9249
        %v10274 = vunpack.c.l.b16 %v9250
        %v10275 = vunpack.c.l.b16 %v9251
        %v10276 = vunpack.c.l.b16 %v9252
        %v10277 = vunpack.c.l.b16 %v9253
        %v10278 = vunpack.c.l.b16 %v9254
        %v10279 = vunpack.c.l.b16 %v9255
        %v10280 = vunpack.c.l.b16 %v9256
        %v10281 = vunpack.c.l.b16 %v9257
        %v10282 = vunpack.c.l.b16 %v9258
        %v10283 = vunpack.c.l.b16 %v9259
        %v10284 = vunpack.c.l.b16 %v9260
        %v10285 = vunpack.c.l.b16 %v9261
        %v10286 = vunpack.c.l.b16 %v9262
        %v10287 = vunpack.c.l.b16 %v9263
        %v10288 = vunpack.c.l.b16 %v9264
        %v10289 = vunpack.c.l.b16 %v9265
        %v10290 = vunpack.c.l.b16 %v9266
        %v10291 = vunpack.c.l.b16 %v9267
        %v10292 = vunpack.c.l.b16 %v9268
        %v10293 = vunpack.c.l.b16 %v9269
        %v10294 = vunpack.c.l.b16 %v9270
        %v10295 = vunpack.c.l.b16 %v9271
        %v10296 = vunpack.c.l.b16 %v9272
        %v10297 = vunpack.c.l.b16 %v9273
        %v10298 = vunpack.c.l.b16 %v9274
        %v10299 = vunpack.c.l.b16 %v9275
        %v10300 = vunpack.c.l.b16 %v9276
        %v10301 = vunpack.c.l.b16 %v9277
        %v10302 = vunpack.c.l.b16 %v9278
        %v10303 = vunpack.c.l.b16 %v9279
        %v10304 = vunpack.c.l.b16 %v9280
        %v10305 = vunpack.c.l.b16 %v9281
        %v10306 = vunpack.c.l.b16 %v9282
        %v10307 = vunpack.c.l.b16 %v9283
        %v10308 = vunpack.c.l.b16 %v9284
        %v10309 = vunpack.c.l.b16 %v9285
        %v10310 = vunpack.c.l.b16 %v9286
        %v10311 = vunpack.c.l.b16 %v9287
        %v10312 = vunpack.c.l.b16 %v9288
        %v10313 = vunpack.c.l.b16 %v9289
        %v10314 = vunpack.c.l.b16 %v9290
        %v10315 = vunpack.c.l.b16 %v9291
        %v10316 = vunpack.c.l.b16 %v9292
        %v10317 = vunpack.c.l.b16 %v9293
        %v10318 = vunpack.c.l.b16 %v9294
        %v10319 = vunpack.c.l.b16 %v9295
        %v10320 = vunpack.c.l.b16 %v9296
        %v10321 = vunpack.c.l.b16 %v9297
        %v10322 = vunpack.c.l.b16 %v9298
        %v10323 = vunpack.c.l.b16 %v9299
        %v10324 = vunpack.c.l.b16 %v9300
        %v10325 = vunpack.c.l.b16 %v9301
        %v10326 = vunpack.c.l.b16 %v9302
        %v10327 = vunpack.c.l.b16 %v9303
        %v10328 = vunpack.c.l.b16 %v9304
        %v10329 = vunpack.c.l.b16 %v9305
        %v10330 = vunpack.c.l.b16 %v9306
        %v10331 = vunpack.c.l.b16 %v9307
        %v10332 = vunpack.c.l.b16 %v9308
        %v10333 = vunpack.c.l.b16 %v9309
        %v10334 = vunpack.c.l.b16 %v9310
        %v10335 = vunpack.c.l.b16 %v9311
        %v10336 = vunpack.c.l.b16 %v9312
        %v10337 = vunpack.c.l.b16 %v9313
        %v10338 = vunpack.c.l.b16 %v9314
        %v10339 = vunpack.c.l.b16 %v9315
        %v10340 = vunpack.c.l.b16 %v9316
        %v10341 = vunpack.c.l.b16 %v9317
        %v10342 = vunpack.c.l.b16 %v9318
        %v10343 = vunpack.c.l.b16 %v9319
        %v10344 = vunpack.c.l.b16 %v9320
        %v10345 = vunpack.c.l.b16 %v9321
        %v10346 = vunpack.c.l.b16 %v9322
        %v10347 = vunpack.c.l.b16 %v9323
        %v10348 = vunpack.c.l.b16 %v9324
        %v10349 = vunpack.c.l.b16 %v9325
        %v10350 = vunpack.c.l.b16 %v9326
        %v10351 = vunpack.c.l.b16 %v9327
        %v10352 = vunpack.c.l.b16 %v9328
        %v10353 = vunpack.c.l.b16 %v9329
        %v10354 = vunpack.c.l.b16 %v9330
        %v10355 = vunpack.c.l.b16 %v9331
        %v10356 = vunpack.c.l.b16 %v9332
        %v10357 = vunpack.c.l.b16 %v9333
        %v10358 = vunpack.c.l.b16 %v9334
        %v10359 = vunpack.c.l.b16 %v9335
        %v10360 = vunpack.c.l.b16 %v9336
        %v10361 = vunpack.c.l.b16 %v9337
        %v10362 = vunpack.c.l.b16 %v9338
        %v10363 = vunpack.c.l.b16 %v9339
        %v10364 = vunpack.c.l.b16 %v9340
        %v10365 = vunpack.c.l.b16 %v9341
        %v10366 = vunpack.c.l.b16 %v9342
        %v10367 = vunpack.c.l.b16 %v9343
        %v10368 = vunpack.c.l.b16 %v9344
        %v10369 = vunpack.c.l.b16 %v9345
        %v10370 = vunpack.c.l.b16 %v9346
        %v10371 = vunpack.c.l.b16 %v9347
        %v10372 = vunpack.c.l.b16 %v9348
        %v10373 = vunpack.c.l.b16 %v9349
        %v10374 = vunpack.c.l.b16 %v9350
        %v10375 = vunpack.c.l.b16 %v9351
        %v10376 = vunpack.c.l.b16 %v9352
        %v10377 = vunpack.c.l.b16 %v9353
        %v10378 = vunpack.c.l.b16 %v9354
        %v10379 = vunpack.c.l.b16 %v9355
        %v10380 = vunpack.c.l.b16 %v9356
        %v10381 = vunpack.c.l.b16 %v9357
        %v10382 = vunpack.c.l.b16 %v9358
        %v10383 = vunpack.c.l.b16 %v9359
        %v10384 = vunpack.c.l.b16 %v9360
        %v10385 = vunpack.c.l.b16 %v9361
        %v10386 = vunpack.c.l.b16 %v9362
        %v10387 = vunpack.c.l.b16 %v9363
        %v10388 = vunpack.c.l.b16 %v9364
        %v10389 = vunpack.c.l.b16 %v9365
        %v10390 = vunpack.c.l.b16 %v9366
        %v10391 = vunpack.c.l.b16 %v9367
        %v10392 = vunpack.c.l.b16 %v9368
        %v10393 = vunpack.c.l.b16 %v9369
        %v10394 = vunpack.c.l.b16 %v9370
        %v10395 = vunpack.c.l.b16 %v9371
        %v10396 = vunpack.c.l.b16 %v9372
        %v10397 = vunpack.c.l.b16 %v9373
        %v10398 = vunpack.c.l.b16 %v9374
        %v10399 = vunpack.c.l.b16 %v9375
        %v10400 = vunpack.c.l.b16 %v9376
        %v10401 = vunpack.c.l.b16 %v9377
        %v10402 = vunpack.c.l.b16 %v9378
        %v10403 = vunpack.c.l.b16 %v9379
        %v10404 = vunpack.c.l.b16 %v9380
        %v10405 = vunpack.c.l.b16 %v9381
        %v10406 = vunpack.c.l.b16 %v9382
        %v10407 = vunpack.c.l.b16 %v9383
        %v10408 = vunpack.c.l.b16 %v9384
        %v10409 = vunpack.c.l.b16 %v9385
        %v10410 = vunpack.c.l.b16 %v9386
        %v10411 = vunpack.c.l.b16 %v9387
        %v10412 = vunpack.c.l.b16 %v9388
        %v10413 = vunpack.c.l.b16 %v9389
        %v10414 = vunpack.c.l.b16 %v9390
        %v10415 = vunpack.c.l.b16 %v9391
        %v10416 = vunpack.c.l.b16 %v9392
        %v10417 = vunpack.c.l.b16 %v9393
        %v10418 = vunpack.c.l.b16 %v9394
        %v10419 = vunpack.c.l.b16 %v9395
        %v10420 = vunpack.c.l.b16 %v9396
        %v10421 = vunpack.c.l.b16 %v9397
        %v10422 = vunpack.c.l.b16 %v9398
        %v10423 = vunpack.c.l.b16 %v9399
        %v10424 = vunpack.c.l.b16 %v9400
        %v10425 = vunpack.c.l.b16 %v9401
        %v10426 = vunpack.c.l.b16 %v9402
        %v10427 = vunpack.c.l.b16 %v9403
        %v10428 = vunpack.c.l.b16 %v9404
        %v10429 = vunpack.c.l.b16 %v9405
        %v10430 = vunpack.c.l.b16 %v9406
        %v10431 = vunpack.c.l.b16 %v9407
        %v10432 = vunpack.c.l.b16 %v9408
        %v10433 = vunpack.c.l.b16 %v9409
        %v10434 = vunpack.c.l.b16 %v9410
        %v10435 = vunpack.c.l.b16 %v9411
        %v10436 = vunpack.c.l.b16 %v9412
        %v10437 = vunpack.c.l.b16 %v9413
        %v10438 = vunpack.c.l.b16 %v9414
        %v10439 = vunpack.c.l.b16 %v9415
        %v10440 = vunpack.c.l.b16 %v9416
        %v10441 = vunpack.c.l.b16 %v9417
        %v10442 = vunpack.c.l.b16 %v9418
        %v10443 = vunpack.c.l.b16 %v9419
        %v10444 = vunpack.c.l.b16 %v9420
        %v10445 = vunpack.c.l.b16 %v9421
        %v10446 = vunpack.c.l.b16 %v9422
        %v10447 = vunpack.c.l.b16 %v9423
        %v10448 = vunpack.c.l.b16 %v9424
        %v10449 = vunpack.c.l.b16 %v9425
        %v10450 = vunpack.c.l.b16 %v9426
        %v10451 = vunpack.c.l.b16 %v9427
        %v10452 = vunpack.c.l.b16 %v9428
        %v10453 = vunpack.c.l.b16 %v9429
        %v10454 = vunpack.c.l.b16 %v9430
        %v10455 = vunpack.c.l.b16 %v9431
        %v10456 = vunpack.c.l.b16 %v9432
        %v10457 = vunpack.c.l.b16 %v9433
        %v10458 = vunpack.c.l.b16 %v9434
        %v10459 = vunpack.c.l.b16 %v9435
        %v10460 = vunpack.c.l.b16 %v9436
        %v10461 = vunpack.c.l.b16 %v9437
        %v10462 = vunpack.c.l.b16 %v9438
        %v10463 = vunpack.c.l.b16 %v9439
        %v10464 = vunpack.c.l.b16 %v9440
        %v10465 = vunpack.c.l.b16 %v9441
        %v10466 = vunpack.c.l.b16 %v9442
        %v10467 = vunpack.c.l.b16 %v9443
        %v10468 = vunpack.c.l.b16 %v9444
        %v10469 = vunpack.c.l.b16 %v9445
        %v10470 = vunpack.c.l.b16 %v9446
        %v10471 = vunpack.c.l.b16 %v9447
        %v10472 = vunpack.c.l.b16 %v9448
        %v10473 = vunpack.c.l.b16 %v9449
        %v10474 = vunpack.c.l.b16 %v9450
        %v10475 = vunpack.c.l.b16 %v9451
        %v10476 = vunpack.c.l.b16 %v9452
        %v10477 = vunpack.c.l.b16 %v9453
        %v10478 = vunpack.c.l.b16 %v9454
        %v10479 = vunpack.c.l.b16 %v9455
        %v10480 = vunpack.c.l.b16 %v9456
        %v10481 = vunpack.c.l.b16 %v9457
        %v10482 = vunpack.c.l.b16 %v9458
        %v10483 = vunpack.c.l.b16 %v9459
        %v10484 = vunpack.c.l.b16 %v9460
        %v10485 = vunpack.c.l.b16 %v9461
        %v10486 = vunpack.c.l.b16 %v9462
        %v10487 = vunpack.c.l.b16 %v9463
        %v10488 = vunpack.c.l.b16 %v9464
        %v10489 = vunpack.c.l.b16 %v9465
        %v10490 = vunpack.c.l.b16 %v9466
        %v10491 = vunpack.c.l.b16 %v9467
        %v10492 = vunpack.c.l.b16 %v9468
        %v10493 = vunpack.c.l.b16 %v9469
        %v10494 = vunpack.c.l.b16 %v9470
        %v10495 = vunpack.c.l.b16 %v9471
        %v10496 = vunpack.c.l.b16 %v9472
        %v10497 = vunpack.c.l.b16 %v9473
        %v10498 = vunpack.c.l.b16 %v9474
        %v10499 = vunpack.c.l.b16 %v9475
        %v10500 = vunpack.c.l.b16 %v9476
        %v10501 = vunpack.c.l.b16 %v9477
        %v10502 = vunpack.c.l.b16 %v9478
        %v10503 = vunpack.c.l.b16 %v9479
        %v10504 = vunpack.c.l.b16 %v9480
        %v10505 = vunpack.c.l.b16 %v9481
        %v10506 = vunpack.c.l.b16 %v9482
        %v10507 = vunpack.c.l.b16 %v9483
        %v10508 = vunpack.c.l.b16 %v9484
        %v10509 = vunpack.c.l.b16 %v9485
        %v10510 = vunpack.c.l.b16 %v9486
        %v10511 = vunpack.c.l.b16 %v9487
        %v10512 = vunpack.c.l.b16 %v9488
        %v10513 = vunpack.c.l.b16 %v9489
        %v10514 = vunpack.c.l.b16 %v9490
        %v10515 = vunpack.c.l.b16 %v9491
        %v10516 = vunpack.c.l.b16 %v9492
        %v10517 = vunpack.c.l.b16 %v9493
        %v10518 = vunpack.c.l.b16 %v9494
        %v10519 = vunpack.c.l.b16 %v9495
        %v10520 = vunpack.c.l.b16 %v9496
        %v10521 = vunpack.c.l.b16 %v9497
        %v10522 = vunpack.c.l.b16 %v9498
        %v10523 = vunpack.c.l.b16 %v9499
        %v10524 = vunpack.c.l.b16 %v9500
        %v10525 = vunpack.c.l.b16 %v9501
        %v10526 = vunpack.c.l.b16 %v9502
        %v10527 = vunpack.c.l.b16 %v9503
        %v10528 = vunpack.c.l.b16 %v9504
        %v10529 = vunpack.c.l.b16 %v9505
        %v10530 = vunpack.c.l.b16 %v9506
        %v10531 = vunpack.c.l.b16 %v9507
        %v10532 = vunpack.c.l.b16 %v9508
        %v10533 = vunpack.c.l.b16 %v9509
        %v10534 = vunpack.c.l.b16 %v9510
        %v10535 = vunpack.c.l.b16 %v9511
        %v10536 = vunpack.c.l.b16 %v9512
        %v10537 = vunpack.c.l.b16 %v9513
        %v10538 = vunpack.c.l.b16 %v9514
        %v10539 = vunpack.c.l.b16 %v9515
        %v10540 = vunpack.c.l.b16 %v9516
        %v10541 = vunpack.c.l.b16 %v9517
        %v10542 = vunpack.c.l.b16 %v9518
        %v10543 = vunpack.c.l.b16 %v9519
        %v10544 = vunpack.c.l.b16 %v9520
        %v10545 = vunpack.c.l.b16 %v9521
        %v10546 = vunpack.c.l.b16 %v9522
        %v10547 = vunpack.c.l.b16 %v9523
        %v10548 = vunpack.c.l.b16 %v9524
        %v10549 = vunpack.c.l.b16 %v9525
        %v10550 = vunpack.c.l.b16 %v9526
        %v10551 = vunpack.c.l.b16 %v9527
        %v10552 = vunpack.c.l.b16 %v9528
        %v10553 = vunpack.c.l.b16 %v9529
        %v10554 = vunpack.c.l.b16 %v9530
        %v10555 = vunpack.c.l.b16 %v9531
        %v10556 = vunpack.c.l.b16 %v9532
        %v10557 = vunpack.c.l.b16 %v9533
        %v10558 = vunpack.c.l.b16 %v9534
        %v10559 = vunpack.c.l.b16 %v9535
        %v10560 = vunpack.c.l.b16 %v9536
        %v10561 = vunpack.c.l.b16 %v9537
        %v10562 = vunpack.c.l.b16 %v9538
        %v10563 = vunpack.c.l.b16 %v9539
        %v10564 = vunpack.c.l.b16 %v9540
        %v10565 = vunpack.c.l.b16 %v9541
        %v10566 = vunpack.c.l.b16 %v9542
        %v10567 = vunpack.c.l.b16 %v9543
        %v10568 = vunpack.c.l.b16 %v9544
        %v10569 = vunpack.c.l.b16 %v9545
        %v10570 = vunpack.c.l.b16 %v9546
        %v10571 = vunpack.c.l.b16 %v9547
        %v10572 = vunpack.c.l.b16 %v9548
        %v10573 = vunpack.c.l.b16 %v9549
        %v10574 = vunpack.c.l.b16 %v9550
        %v10575 = vunpack.c.l.b16 %v9551
        %v10576 = vunpack.c.l.b16 %v9552
        %v10577 = vunpack.c.l.b16 %v9553
        %v10578 = vunpack.c.l.b16 %v9554
        %v10579 = vunpack.c.l.b16 %v9555
        %v10580 = vunpack.c.l.b16 %v9556
        %v10581 = vunpack.c.l.b16 %v9557
        %v10582 = vunpack.c.l.b16 %v9558
        %v10583 = vunpack.c.l.b16 %v9559
        %v10584 = vunpack.c.l.b16 %v9560
        %v10585 = vunpack.c.l.b16 %v9561
        %v10586 = vunpack.c.l.b16 %v9562
        %v10587 = vunpack.c.l.b16 %v9563
        %v10588 = vunpack.c.l.b16 %v9564
        %v10589 = vunpack.c.l.b16 %v9565
        %v10590 = vrot.slane %v10079, 7
        %v10591 = vsel %vm5227, %v10590, %v10078
        %v10592 = vrot.slane %v10080, 6
        %v10593 = vsel %vm5230, %v10592, %v10591
        %v10594 = vrot.slane %v10081, 5
        %v10595 = vsel %vm5233, %v10594, %v10593
        %v10596 = vrot.slane %v10082, 4
        %v10597 = vsel %vm5236, %v10596, %v10595
        %v10598 = vrot.slane %v10083, 3
        %v10599 = vsel %vm5239, %v10598, %v10597
        %v10600 = vrot.slane %v10084, 2
        %v10601 = vsel %vm5242, %v10600, %v10599
        %v10602 = vrot.slane %v10085, 1
        %v10603 = vsel %vm5245, %v10602, %v10601
        %v10604 = vrot.slane %v10087, 7
        %v10605 = vsel %vm5227, %v10604, %v10086
        %v10606 = vrot.slane %v10088, 6
        %v10607 = vsel %vm5230, %v10606, %v10605
        %v10608 = vrot.slane %v10089, 5
        %v10609 = vsel %vm5233, %v10608, %v10607
        %v10610 = vrot.slane %v10090, 4
        %v10611 = vsel %vm5236, %v10610, %v10609
        %v10612 = vrot.slane %v10091, 3
        %v10613 = vsel %vm5239, %v10612, %v10611
        %v10614 = vrot.slane %v10092, 2
        %v10615 = vsel %vm5242, %v10614, %v10613
        %v10616 = vrot.slane %v10093, 1
        %v10617 = vsel %vm5245, %v10616, %v10615
        %v10618 = vrot.slane %v10095, 7
        %v10619 = vsel %vm5227, %v10618, %v10094
        %v10620 = vrot.slane %v10096, 6
        %v10621 = vsel %vm5230, %v10620, %v10619
        %v10622 = vrot.slane %v10097, 5
        %v10623 = vsel %vm5233, %v10622, %v10621
        %v10624 = vrot.slane %v10098, 4
        %v10625 = vsel %vm5236, %v10624, %v10623
        %v10626 = vrot.slane %v10099, 3
        %v10627 = vsel %vm5239, %v10626, %v10625
        %v10628 = vrot.slane %v10100, 2
        %v10629 = vsel %vm5242, %v10628, %v10627
        %v10630 = vrot.slane %v10101, 1
        %v10631 = vsel %vm5245, %v10630, %v10629
        %v10632 = vrot.slane %v10103, 7
        %v10633 = vsel %vm5227, %v10632, %v10102
        %v10634 = vrot.slane %v10104, 6
        %v10635 = vsel %vm5230, %v10634, %v10633
        %v10636 = vrot.slane %v10105, 5
        %v10637 = vsel %vm5233, %v10636, %v10635
        %v10638 = vrot.slane %v10106, 4
        %v10639 = vsel %vm5236, %v10638, %v10637
        %v10640 = vrot.slane %v10107, 3
        %v10641 = vsel %vm5239, %v10640, %v10639
        %v10642 = vrot.slane %v10108, 2
        %v10643 = vsel %vm5242, %v10642, %v10641
        %v10644 = vrot.slane %v10109, 1
        %v10645 = vsel %vm5245, %v10644, %v10643
        %v10646 = vrot.slane %v10111, 7
        %v10647 = vsel %vm5227, %v10646, %v10110
        %v10648 = vrot.slane %v10112, 6
        %v10649 = vsel %vm5230, %v10648, %v10647
        %v10650 = vrot.slane %v10113, 5
        %v10651 = vsel %vm5233, %v10650, %v10649
        %v10652 = vrot.slane %v10114, 4
        %v10653 = vsel %vm5236, %v10652, %v10651
        %v10654 = vrot.slane %v10115, 3
        %v10655 = vsel %vm5239, %v10654, %v10653
        %v10656 = vrot.slane %v10116, 2
        %v10657 = vsel %vm5242, %v10656, %v10655
        %v10658 = vrot.slane %v10117, 1
        %v10659 = vsel %vm5245, %v10658, %v10657
        %v10660 = vrot.slane %v10119, 7
        %v10661 = vsel %vm5227, %v10660, %v10118
        %v10662 = vrot.slane %v10120, 6
        %v10663 = vsel %vm5230, %v10662, %v10661
        %v10664 = vrot.slane %v10121, 5
        %v10665 = vsel %vm5233, %v10664, %v10663
        %v10666 = vrot.slane %v10122, 4
        %v10667 = vsel %vm5236, %v10666, %v10665
        %v10668 = vrot.slane %v10123, 3
        %v10669 = vsel %vm5239, %v10668, %v10667
        %v10670 = vrot.slane %v10124, 2
        %v10671 = vsel %vm5242, %v10670, %v10669
        %v10672 = vrot.slane %v10125, 1
        %v10673 = vsel %vm5245, %v10672, %v10671
        %v10674 = vrot.slane %v10127, 7
        %v10675 = vsel %vm5227, %v10674, %v10126
        %v10676 = vrot.slane %v10128, 6
        %v10677 = vsel %vm5230, %v10676, %v10675
        %v10678 = vrot.slane %v10129, 5
        %v10679 = vsel %vm5233, %v10678, %v10677
        %v10680 = vrot.slane %v10130, 4
        %v10681 = vsel %vm5236, %v10680, %v10679
        %v10682 = vrot.slane %v10131, 3
        %v10683 = vsel %vm5239, %v10682, %v10681
        %v10684 = vrot.slane %v10132, 2
        %v10685 = vsel %vm5242, %v10684, %v10683
        %v10686 = vrot.slane %v10133, 1
        %v10687 = vsel %vm5245, %v10686, %v10685
        %v10688 = vrot.slane %v10135, 7
        %v10689 = vsel %vm5227, %v10688, %v10134
        %v10690 = vrot.slane %v10136, 6
        %v10691 = vsel %vm5230, %v10690, %v10689
        %v10692 = vrot.slane %v10137, 5
        %v10693 = vsel %vm5233, %v10692, %v10691
        %v10694 = vrot.slane %v10138, 4
        %v10695 = vsel %vm5236, %v10694, %v10693
        %v10696 = vrot.slane %v10139, 3
        %v10697 = vsel %vm5239, %v10696, %v10695
        %v10698 = vrot.slane %v10140, 2
        %v10699 = vsel %vm5242, %v10698, %v10697
        %v10700 = vrot.slane %v10141, 1
        %v10701 = vsel %vm5245, %v10700, %v10699
        %v10702 = vrot.slane %v10143, 7
        %v10703 = vsel %vm5227, %v10702, %v10142
        %v10704 = vrot.slane %v10144, 6
        %v10705 = vsel %vm5230, %v10704, %v10703
        %v10706 = vrot.slane %v10145, 5
        %v10707 = vsel %vm5233, %v10706, %v10705
        %v10708 = vrot.slane %v10146, 4
        %v10709 = vsel %vm5236, %v10708, %v10707
        %v10710 = vrot.slane %v10147, 3
        %v10711 = vsel %vm5239, %v10710, %v10709
        %v10712 = vrot.slane %v10148, 2
        %v10713 = vsel %vm5242, %v10712, %v10711
        %v10714 = vrot.slane %v10149, 1
        %v10715 = vsel %vm5245, %v10714, %v10713
        %v10716 = vrot.slane %v10151, 7
        %v10717 = vsel %vm5227, %v10716, %v10150
        %v10718 = vrot.slane %v10152, 6
        %v10719 = vsel %vm5230, %v10718, %v10717
        %v10720 = vrot.slane %v10153, 5
        %v10721 = vsel %vm5233, %v10720, %v10719
        %v10722 = vrot.slane %v10154, 4
        %v10723 = vsel %vm5236, %v10722, %v10721
        %v10724 = vrot.slane %v10155, 3
        %v10725 = vsel %vm5239, %v10724, %v10723
        %v10726 = vrot.slane %v10156, 2
        %v10727 = vsel %vm5242, %v10726, %v10725
        %v10728 = vrot.slane %v10157, 1
        %v10729 = vsel %vm5245, %v10728, %v10727
        %v10730 = vrot.slane %v10159, 7
        %v10731 = vsel %vm5227, %v10730, %v10158
        %v10732 = vrot.slane %v10160, 6
        %v10733 = vsel %vm5230, %v10732, %v10731
        %v10734 = vrot.slane %v10161, 5
        %v10735 = vsel %vm5233, %v10734, %v10733
        %v10736 = vrot.slane %v10162, 4
        %v10737 = vsel %vm5236, %v10736, %v10735
        %v10738 = vrot.slane %v10163, 3
        %v10739 = vsel %vm5239, %v10738, %v10737
        %v10740 = vrot.slane %v10164, 2
        %v10741 = vsel %vm5242, %v10740, %v10739
        %v10742 = vrot.slane %v10165, 1
        %v10743 = vsel %vm5245, %v10742, %v10741
        %v10744 = vrot.slane %v10167, 7
        %v10745 = vsel %vm5227, %v10744, %v10166
        %v10746 = vrot.slane %v10168, 6
        %v10747 = vsel %vm5230, %v10746, %v10745
        %v10748 = vrot.slane %v10169, 5
        %v10749 = vsel %vm5233, %v10748, %v10747
        %v10750 = vrot.slane %v10170, 4
        %v10751 = vsel %vm5236, %v10750, %v10749
        %v10752 = vrot.slane %v10171, 3
        %v10753 = vsel %vm5239, %v10752, %v10751
        %v10754 = vrot.slane %v10172, 2
        %v10755 = vsel %vm5242, %v10754, %v10753
        %v10756 = vrot.slane %v10173, 1
        %v10757 = vsel %vm5245, %v10756, %v10755
        %v10758 = vrot.slane %v10175, 7
        %v10759 = vsel %vm5227, %v10758, %v10174
        %v10760 = vrot.slane %v10176, 6
        %v10761 = vsel %vm5230, %v10760, %v10759
        %v10762 = vrot.slane %v10177, 5
        %v10763 = vsel %vm5233, %v10762, %v10761
        %v10764 = vrot.slane %v10178, 4
        %v10765 = vsel %vm5236, %v10764, %v10763
        %v10766 = vrot.slane %v10179, 3
        %v10767 = vsel %vm5239, %v10766, %v10765
        %v10768 = vrot.slane %v10180, 2
        %v10769 = vsel %vm5242, %v10768, %v10767
        %v10770 = vrot.slane %v10181, 1
        %v10771 = vsel %vm5245, %v10770, %v10769
        %v10772 = vrot.slane %v10183, 7
        %v10773 = vsel %vm5227, %v10772, %v10182
        %v10774 = vrot.slane %v10184, 6
        %v10775 = vsel %vm5230, %v10774, %v10773
        %v10776 = vrot.slane %v10185, 5
        %v10777 = vsel %vm5233, %v10776, %v10775
        %v10778 = vrot.slane %v10186, 4
        %v10779 = vsel %vm5236, %v10778, %v10777
        %v10780 = vrot.slane %v10187, 3
        %v10781 = vsel %vm5239, %v10780, %v10779
        %v10782 = vrot.slane %v10188, 2
        %v10783 = vsel %vm5242, %v10782, %v10781
        %v10784 = vrot.slane %v10189, 1
        %v10785 = vsel %vm5245, %v10784, %v10783
        %v10786 = vrot.slane %v10191, 7
        %v10787 = vsel %vm5227, %v10786, %v10190
        %v10788 = vrot.slane %v10192, 6
        %v10789 = vsel %vm5230, %v10788, %v10787
        %v10790 = vrot.slane %v10193, 5
        %v10791 = vsel %vm5233, %v10790, %v10789
        %v10792 = vrot.slane %v10194, 4
        %v10793 = vsel %vm5236, %v10792, %v10791
        %v10794 = vrot.slane %v10195, 3
        %v10795 = vsel %vm5239, %v10794, %v10793
        %v10796 = vrot.slane %v10196, 2
        %v10797 = vsel %vm5242, %v10796, %v10795
        %v10798 = vrot.slane %v10197, 1
        %v10799 = vsel %vm5245, %v10798, %v10797
        %v10800 = vrot.slane %v10199, 7
        %v10801 = vsel %vm5227, %v10800, %v10198
        %v10802 = vrot.slane %v10200, 6
        %v10803 = vsel %vm5230, %v10802, %v10801
        %v10804 = vrot.slane %v10201, 5
        %v10805 = vsel %vm5233, %v10804, %v10803
        %v10806 = vrot.slane %v10202, 4
        %v10807 = vsel %vm5236, %v10806, %v10805
        %v10808 = vrot.slane %v10203, 3
        %v10809 = vsel %vm5239, %v10808, %v10807
        %v10810 = vrot.slane %v10204, 2
        %v10811 = vsel %vm5242, %v10810, %v10809
        %v10812 = vrot.slane %v10205, 1
        %v10813 = vsel %vm5245, %v10812, %v10811
        %v10814 = vrot.slane %v10207, 7
        %v10815 = vsel %vm5227, %v10814, %v10206
        %v10816 = vrot.slane %v10208, 6
        %v10817 = vsel %vm5230, %v10816, %v10815
        %v10818 = vrot.slane %v10209, 5
        %v10819 = vsel %vm5233, %v10818, %v10817
        %v10820 = vrot.slane %v10210, 4
        %v10821 = vsel %vm5236, %v10820, %v10819
        %v10822 = vrot.slane %v10211, 3
        %v10823 = vsel %vm5239, %v10822, %v10821
        %v10824 = vrot.slane %v10212, 2
        %v10825 = vsel %vm5242, %v10824, %v10823
        %v10826 = vrot.slane %v10213, 1
        %v10827 = vsel %vm5245, %v10826, %v10825
        %v10828 = vrot.slane %v10215, 7
        %v10829 = vsel %vm5227, %v10828, %v10214
        %v10830 = vrot.slane %v10216, 6
        %v10831 = vsel %vm5230, %v10830, %v10829
        %v10832 = vrot.slane %v10217, 5
        %v10833 = vsel %vm5233, %v10832, %v10831
        %v10834 = vrot.slane %v10218, 4
        %v10835 = vsel %vm5236, %v10834, %v10833
        %v10836 = vrot.slane %v10219, 3
        %v10837 = vsel %vm5239, %v10836, %v10835
        %v10838 = vrot.slane %v10220, 2
        %v10839 = vsel %vm5242, %v10838, %v10837
        %v10840 = vrot.slane %v10221, 1
        %v10841 = vsel %vm5245, %v10840, %v10839
        %v10842 = vrot.slane %v10223, 7
        %v10843 = vsel %vm5227, %v10842, %v10222
        %v10844 = vrot.slane %v10224, 6
        %v10845 = vsel %vm5230, %v10844, %v10843
        %v10846 = vrot.slane %v10225, 5
        %v10847 = vsel %vm5233, %v10846, %v10845
        %v10848 = vrot.slane %v10226, 4
        %v10849 = vsel %vm5236, %v10848, %v10847
        %v10850 = vrot.slane %v10227, 3
        %v10851 = vsel %vm5239, %v10850, %v10849
        %v10852 = vrot.slane %v10228, 2
        %v10853 = vsel %vm5242, %v10852, %v10851
        %v10854 = vrot.slane %v10229, 1
        %v10855 = vsel %vm5245, %v10854, %v10853
        %v10856 = vrot.slane %v10231, 7
        %v10857 = vsel %vm5227, %v10856, %v10230
        %v10858 = vrot.slane %v10232, 6
        %v10859 = vsel %vm5230, %v10858, %v10857
        %v10860 = vrot.slane %v10233, 5
        %v10861 = vsel %vm5233, %v10860, %v10859
        %v10862 = vrot.slane %v10234, 4
        %v10863 = vsel %vm5236, %v10862, %v10861
        %v10864 = vrot.slane %v10235, 3
        %v10865 = vsel %vm5239, %v10864, %v10863
        %v10866 = vrot.slane %v10236, 2
        %v10867 = vsel %vm5242, %v10866, %v10865
        %v10868 = vrot.slane %v10237, 1
        %v10869 = vsel %vm5245, %v10868, %v10867
        %v10870 = vrot.slane %v10239, 7
        %v10871 = vsel %vm5227, %v10870, %v10238
        %v10872 = vrot.slane %v10240, 6
        %v10873 = vsel %vm5230, %v10872, %v10871
        %v10874 = vrot.slane %v10241, 5
        %v10875 = vsel %vm5233, %v10874, %v10873
        %v10876 = vrot.slane %v10242, 4
        %v10877 = vsel %vm5236, %v10876, %v10875
        %v10878 = vrot.slane %v10243, 3
        %v10879 = vsel %vm5239, %v10878, %v10877
        %v10880 = vrot.slane %v10244, 2
        %v10881 = vsel %vm5242, %v10880, %v10879
        %v10882 = vrot.slane %v10245, 1
        %v10883 = vsel %vm5245, %v10882, %v10881
        %v10884 = vrot.slane %v10247, 7
        %v10885 = vsel %vm5227, %v10884, %v10246
        %v10886 = vrot.slane %v10248, 6
        %v10887 = vsel %vm5230, %v10886, %v10885
        %v10888 = vrot.slane %v10249, 5
        %v10889 = vsel %vm5233, %v10888, %v10887
        %v10890 = vrot.slane %v10250, 4
        %v10891 = vsel %vm5236, %v10890, %v10889
        %v10892 = vrot.slane %v10251, 3
        %v10893 = vsel %vm5239, %v10892, %v10891
        %v10894 = vrot.slane %v10252, 2
        %v10895 = vsel %vm5242, %v10894, %v10893
        %v10896 = vrot.slane %v10253, 1
        %v10897 = vsel %vm5245, %v10896, %v10895
        %v10898 = vrot.slane %v10255, 7
        %v10899 = vsel %vm5227, %v10898, %v10254
        %v10900 = vrot.slane %v10256, 6
        %v10901 = vsel %vm5230, %v10900, %v10899
        %v10902 = vrot.slane %v10257, 5
        %v10903 = vsel %vm5233, %v10902, %v10901
        %v10904 = vrot.slane %v10258, 4
        %v10905 = vsel %vm5236, %v10904, %v10903
        %v10906 = vrot.slane %v10259, 3
        %v10907 = vsel %vm5239, %v10906, %v10905
        %v10908 = vrot.slane %v10260, 2
        %v10909 = vsel %vm5242, %v10908, %v10907
        %v10910 = vrot.slane %v10261, 1
        %v10911 = vsel %vm5245, %v10910, %v10909
        %v10912 = vrot.slane %v10263, 7
        %v10913 = vsel %vm5227, %v10912, %v10262
        %v10914 = vrot.slane %v10264, 6
        %v10915 = vsel %vm5230, %v10914, %v10913
        %v10916 = vrot.slane %v10265, 5
        %v10917 = vsel %vm5233, %v10916, %v10915
        %v10918 = vrot.slane %v10266, 4
        %v10919 = vsel %vm5236, %v10918, %v10917
        %v10920 = vrot.slane %v10267, 3
        %v10921 = vsel %vm5239, %v10920, %v10919
        %v10922 = vrot.slane %v10268, 2
        %v10923 = vsel %vm5242, %v10922, %v10921
        %v10924 = vrot.slane %v10269, 1
        %v10925 = vsel %vm5245, %v10924, %v10923
        %v10926 = vrot.slane %v10271, 7
        %v10927 = vsel %vm5227, %v10926, %v10270
        %v10928 = vrot.slane %v10272, 6
        %v10929 = vsel %vm5230, %v10928, %v10927
        %v10930 = vrot.slane %v10273, 5
        %v10931 = vsel %vm5233, %v10930, %v10929
        %v10932 = vrot.slane %v10274, 4
        %v10933 = vsel %vm5236, %v10932, %v10931
        %v10934 = vrot.slane %v10275, 3
        %v10935 = vsel %vm5239, %v10934, %v10933
        %v10936 = vrot.slane %v10276, 2
        %v10937 = vsel %vm5242, %v10936, %v10935
        %v10938 = vrot.slane %v10277, 1
        %v10939 = vsel %vm5245, %v10938, %v10937
        %v10940 = vrot.slane %v10279, 7
        %v10941 = vsel %vm5227, %v10940, %v10278
        %v10942 = vrot.slane %v10280, 6
        %v10943 = vsel %vm5230, %v10942, %v10941
        %v10944 = vrot.slane %v10281, 5
        %v10945 = vsel %vm5233, %v10944, %v10943
        %v10946 = vrot.slane %v10282, 4
        %v10947 = vsel %vm5236, %v10946, %v10945
        %v10948 = vrot.slane %v10283, 3
        %v10949 = vsel %vm5239, %v10948, %v10947
        %v10950 = vrot.slane %v10284, 2
        %v10951 = vsel %vm5242, %v10950, %v10949
        %v10952 = vrot.slane %v10285, 1
        %v10953 = vsel %vm5245, %v10952, %v10951
        %v10954 = vrot.slane %v10287, 7
        %v10955 = vsel %vm5227, %v10954, %v10286
        %v10956 = vrot.slane %v10288, 6
        %v10957 = vsel %vm5230, %v10956, %v10955
        %v10958 = vrot.slane %v10289, 5
        %v10959 = vsel %vm5233, %v10958, %v10957
        %v10960 = vrot.slane %v10290, 4
        %v10961 = vsel %vm5236, %v10960, %v10959
        %v10962 = vrot.slane %v10291, 3
        %v10963 = vsel %vm5239, %v10962, %v10961
        %v10964 = vrot.slane %v10292, 2
        %v10965 = vsel %vm5242, %v10964, %v10963
        %v10966 = vrot.slane %v10293, 1
        %v10967 = vsel %vm5245, %v10966, %v10965
        %v10968 = vrot.slane %v10295, 7
        %v10969 = vsel %vm5227, %v10968, %v10294
        %v10970 = vrot.slane %v10296, 6
        %v10971 = vsel %vm5230, %v10970, %v10969
        %v10972 = vrot.slane %v10297, 5
        %v10973 = vsel %vm5233, %v10972, %v10971
        %v10974 = vrot.slane %v10298, 4
        %v10975 = vsel %vm5236, %v10974, %v10973
        %v10976 = vrot.slane %v10299, 3
        %v10977 = vsel %vm5239, %v10976, %v10975
        %v10978 = vrot.slane %v10300, 2
        %v10979 = vsel %vm5242, %v10978, %v10977
        %v10980 = vrot.slane %v10301, 1
        %v10981 = vsel %vm5245, %v10980, %v10979
        %v10982 = vrot.slane %v10303, 7
        %v10983 = vsel %vm5227, %v10982, %v10302
        %v10984 = vrot.slane %v10304, 6
        %v10985 = vsel %vm5230, %v10984, %v10983
        %v10986 = vrot.slane %v10305, 5
        %v10987 = vsel %vm5233, %v10986, %v10985
        %v10988 = vrot.slane %v10306, 4
        %v10989 = vsel %vm5236, %v10988, %v10987
        %v10990 = vrot.slane %v10307, 3
        %v10991 = vsel %vm5239, %v10990, %v10989
        %v10992 = vrot.slane %v10308, 2
        %v10993 = vsel %vm5242, %v10992, %v10991
        %v10994 = vrot.slane %v10309, 1
        %v10995 = vsel %vm5245, %v10994, %v10993
        %v10996 = vrot.slane %v10311, 7
        %v10997 = vsel %vm5227, %v10996, %v10310
        %v10998 = vrot.slane %v10312, 6
        %v10999 = vsel %vm5230, %v10998, %v10997
        %v11000 = vrot.slane %v10313, 5
        %v11001 = vsel %vm5233, %v11000, %v10999
        %v11002 = vrot.slane %v10314, 4
        %v11003 = vsel %vm5236, %v11002, %v11001
        %v11004 = vrot.slane %v10315, 3
        %v11005 = vsel %vm5239, %v11004, %v11003
        %v11006 = vrot.slane %v10316, 2
        %v11007 = vsel %vm5242, %v11006, %v11005
        %v11008 = vrot.slane %v10317, 1
        %v11009 = vsel %vm5245, %v11008, %v11007
        %v11010 = vrot.slane %v10319, 7
        %v11011 = vsel %vm5227, %v11010, %v10318
        %v11012 = vrot.slane %v10320, 6
        %v11013 = vsel %vm5230, %v11012, %v11011
        %v11014 = vrot.slane %v10321, 5
        %v11015 = vsel %vm5233, %v11014, %v11013
        %v11016 = vrot.slane %v10322, 4
        %v11017 = vsel %vm5236, %v11016, %v11015
        %v11018 = vrot.slane %v10323, 3
        %v11019 = vsel %vm5239, %v11018, %v11017
        %v11020 = vrot.slane %v10324, 2
        %v11021 = vsel %vm5242, %v11020, %v11019
        %v11022 = vrot.slane %v10325, 1
        %v11023 = vsel %vm5245, %v11022, %v11021
        %v11024 = vrot.slane %v10327, 7
        %v11025 = vsel %vm5227, %v11024, %v10326
        %v11026 = vrot.slane %v10328, 6
        %v11027 = vsel %vm5230, %v11026, %v11025
        %v11028 = vrot.slane %v10329, 5
        %v11029 = vsel %vm5233, %v11028, %v11027
        %v11030 = vrot.slane %v10330, 4
        %v11031 = vsel %vm5236, %v11030, %v11029
        %v11032 = vrot.slane %v10331, 3
        %v11033 = vsel %vm5239, %v11032, %v11031
        %v11034 = vrot.slane %v10332, 2
        %v11035 = vsel %vm5242, %v11034, %v11033
        %v11036 = vrot.slane %v10333, 1
        %v11037 = vsel %vm5245, %v11036, %v11035
        %v11038 = vrot.slane %v10335, 7
        %v11039 = vsel %vm5227, %v11038, %v10334
        %v11040 = vrot.slane %v10336, 6
        %v11041 = vsel %vm5230, %v11040, %v11039
        %v11042 = vrot.slane %v10337, 5
        %v11043 = vsel %vm5233, %v11042, %v11041
        %v11044 = vrot.slane %v10338, 4
        %v11045 = vsel %vm5236, %v11044, %v11043
        %v11046 = vrot.slane %v10339, 3
        %v11047 = vsel %vm5239, %v11046, %v11045
        %v11048 = vrot.slane %v10340, 2
        %v11049 = vsel %vm5242, %v11048, %v11047
        %v11050 = vrot.slane %v10341, 1
        %v11051 = vsel %vm5245, %v11050, %v11049
        %v11052 = vrot.slane %v10343, 7
        %v11053 = vsel %vm5227, %v11052, %v10342
        %v11054 = vrot.slane %v10344, 6
        %v11055 = vsel %vm5230, %v11054, %v11053
        %v11056 = vrot.slane %v10345, 5
        %v11057 = vsel %vm5233, %v11056, %v11055
        %v11058 = vrot.slane %v10346, 4
        %v11059 = vsel %vm5236, %v11058, %v11057
        %v11060 = vrot.slane %v10347, 3
        %v11061 = vsel %vm5239, %v11060, %v11059
        %v11062 = vrot.slane %v10348, 2
        %v11063 = vsel %vm5242, %v11062, %v11061
        %v11064 = vrot.slane %v10349, 1
        %v11065 = vsel %vm5245, %v11064, %v11063
        %v11066 = vrot.slane %v10351, 7
        %v11067 = vsel %vm5227, %v11066, %v10350
        %v11068 = vrot.slane %v10352, 6
        %v11069 = vsel %vm5230, %v11068, %v11067
        %v11070 = vrot.slane %v10353, 5
        %v11071 = vsel %vm5233, %v11070, %v11069
        %v11072 = vrot.slane %v10354, 4
        %v11073 = vsel %vm5236, %v11072, %v11071
        %v11074 = vrot.slane %v10355, 3
        %v11075 = vsel %vm5239, %v11074, %v11073
        %v11076 = vrot.slane %v10356, 2
        %v11077 = vsel %vm5242, %v11076, %v11075
        %v11078 = vrot.slane %v10357, 1
        %v11079 = vsel %vm5245, %v11078, %v11077
        %v11080 = vrot.slane %v10359, 7
        %v11081 = vsel %vm5227, %v11080, %v10358
        %v11082 = vrot.slane %v10360, 6
        %v11083 = vsel %vm5230, %v11082, %v11081
        %v11084 = vrot.slane %v10361, 5
        %v11085 = vsel %vm5233, %v11084, %v11083
        %v11086 = vrot.slane %v10362, 4
        %v11087 = vsel %vm5236, %v11086, %v11085
        %v11088 = vrot.slane %v10363, 3
        %v11089 = vsel %vm5239, %v11088, %v11087
        %v11090 = vrot.slane %v10364, 2
        %v11091 = vsel %vm5242, %v11090, %v11089
        %v11092 = vrot.slane %v10365, 1
        %v11093 = vsel %vm5245, %v11092, %v11091
        %v11094 = vrot.slane %v10367, 7
        %v11095 = vsel %vm5227, %v11094, %v10366
        %v11096 = vrot.slane %v10368, 6
        %v11097 = vsel %vm5230, %v11096, %v11095
        %v11098 = vrot.slane %v10369, 5
        %v11099 = vsel %vm5233, %v11098, %v11097
        %v11100 = vrot.slane %v10370, 4
        %v11101 = vsel %vm5236, %v11100, %v11099
        %v11102 = vrot.slane %v10371, 3
        %v11103 = vsel %vm5239, %v11102, %v11101
        %v11104 = vrot.slane %v10372, 2
        %v11105 = vsel %vm5242, %v11104, %v11103
        %v11106 = vrot.slane %v10373, 1
        %v11107 = vsel %vm5245, %v11106, %v11105
        %v11108 = vrot.slane %v10375, 7
        %v11109 = vsel %vm5227, %v11108, %v10374
        %v11110 = vrot.slane %v10376, 6
        %v11111 = vsel %vm5230, %v11110, %v11109
        %v11112 = vrot.slane %v10377, 5
        %v11113 = vsel %vm5233, %v11112, %v11111
        %v11114 = vrot.slane %v10378, 4
        %v11115 = vsel %vm5236, %v11114, %v11113
        %v11116 = vrot.slane %v10379, 3
        %v11117 = vsel %vm5239, %v11116, %v11115
        %v11118 = vrot.slane %v10380, 2
        %v11119 = vsel %vm5242, %v11118, %v11117
        %v11120 = vrot.slane %v10381, 1
        %v11121 = vsel %vm5245, %v11120, %v11119
        %v11122 = vrot.slane %v10383, 7
        %v11123 = vsel %vm5227, %v11122, %v10382
        %v11124 = vrot.slane %v10384, 6
        %v11125 = vsel %vm5230, %v11124, %v11123
        %v11126 = vrot.slane %v10385, 5
        %v11127 = vsel %vm5233, %v11126, %v11125
        %v11128 = vrot.slane %v10386, 4
        %v11129 = vsel %vm5236, %v11128, %v11127
        %v11130 = vrot.slane %v10387, 3
        %v11131 = vsel %vm5239, %v11130, %v11129
        %v11132 = vrot.slane %v10388, 2
        %v11133 = vsel %vm5242, %v11132, %v11131
        %v11134 = vrot.slane %v10389, 1
        %v11135 = vsel %vm5245, %v11134, %v11133
        %v11136 = vrot.slane %v10391, 7
        %v11137 = vsel %vm5227, %v11136, %v10390
        %v11138 = vrot.slane %v10392, 6
        %v11139 = vsel %vm5230, %v11138, %v11137
        %v11140 = vrot.slane %v10393, 5
        %v11141 = vsel %vm5233, %v11140, %v11139
        %v11142 = vrot.slane %v10394, 4
        %v11143 = vsel %vm5236, %v11142, %v11141
        %v11144 = vrot.slane %v10395, 3
        %v11145 = vsel %vm5239, %v11144, %v11143
        %v11146 = vrot.slane %v10396, 2
        %v11147 = vsel %vm5242, %v11146, %v11145
        %v11148 = vrot.slane %v10397, 1
        %v11149 = vsel %vm5245, %v11148, %v11147
        %v11150 = vrot.slane %v10399, 7
        %v11151 = vsel %vm5227, %v11150, %v10398
        %v11152 = vrot.slane %v10400, 6
        %v11153 = vsel %vm5230, %v11152, %v11151
        %v11154 = vrot.slane %v10401, 5
        %v11155 = vsel %vm5233, %v11154, %v11153
        %v11156 = vrot.slane %v10402, 4
        %v11157 = vsel %vm5236, %v11156, %v11155
        %v11158 = vrot.slane %v10403, 3
        %v11159 = vsel %vm5239, %v11158, %v11157
        %v11160 = vrot.slane %v10404, 2
        %v11161 = vsel %vm5242, %v11160, %v11159
        %v11162 = vrot.slane %v10405, 1
        %v11163 = vsel %vm5245, %v11162, %v11161
        %v11164 = vrot.slane %v10407, 7
        %v11165 = vsel %vm5227, %v11164, %v10406
        %v11166 = vrot.slane %v10408, 6
        %v11167 = vsel %vm5230, %v11166, %v11165
        %v11168 = vrot.slane %v10409, 5
        %v11169 = vsel %vm5233, %v11168, %v11167
        %v11170 = vrot.slane %v10410, 4
        %v11171 = vsel %vm5236, %v11170, %v11169
        %v11172 = vrot.slane %v10411, 3
        %v11173 = vsel %vm5239, %v11172, %v11171
        %v11174 = vrot.slane %v10412, 2
        %v11175 = vsel %vm5242, %v11174, %v11173
        %v11176 = vrot.slane %v10413, 1
        %v11177 = vsel %vm5245, %v11176, %v11175
        %v11178 = vrot.slane %v10415, 7
        %v11179 = vsel %vm5227, %v11178, %v10414
        %v11180 = vrot.slane %v10416, 6
        %v11181 = vsel %vm5230, %v11180, %v11179
        %v11182 = vrot.slane %v10417, 5
        %v11183 = vsel %vm5233, %v11182, %v11181
        %v11184 = vrot.slane %v10418, 4
        %v11185 = vsel %vm5236, %v11184, %v11183
        %v11186 = vrot.slane %v10419, 3
        %v11187 = vsel %vm5239, %v11186, %v11185
        %v11188 = vrot.slane %v10420, 2
        %v11189 = vsel %vm5242, %v11188, %v11187
        %v11190 = vrot.slane %v10421, 1
        %v11191 = vsel %vm5245, %v11190, %v11189
        %v11192 = vrot.slane %v10423, 7
        %v11193 = vsel %vm5227, %v11192, %v10422
        %v11194 = vrot.slane %v10424, 6
        %v11195 = vsel %vm5230, %v11194, %v11193
        %v11196 = vrot.slane %v10425, 5
        %v11197 = vsel %vm5233, %v11196, %v11195
        %v11198 = vrot.slane %v10426, 4
        %v11199 = vsel %vm5236, %v11198, %v11197
        %v11200 = vrot.slane %v10427, 3
        %v11201 = vsel %vm5239, %v11200, %v11199
        %v11202 = vrot.slane %v10428, 2
        %v11203 = vsel %vm5242, %v11202, %v11201
        %v11204 = vrot.slane %v10429, 1
        %v11205 = vsel %vm5245, %v11204, %v11203
        %v11206 = vrot.slane %v10431, 7
        %v11207 = vsel %vm5227, %v11206, %v10430
        %v11208 = vrot.slane %v10432, 6
        %v11209 = vsel %vm5230, %v11208, %v11207
        %v11210 = vrot.slane %v10433, 5
        %v11211 = vsel %vm5233, %v11210, %v11209
        %v11212 = vrot.slane %v10434, 4
        %v11213 = vsel %vm5236, %v11212, %v11211
        %v11214 = vrot.slane %v10435, 3
        %v11215 = vsel %vm5239, %v11214, %v11213
        %v11216 = vrot.slane %v10436, 2
        %v11217 = vsel %vm5242, %v11216, %v11215
        %v11218 = vrot.slane %v10437, 1
        %v11219 = vsel %vm5245, %v11218, %v11217
        %v11220 = vrot.slane %v10439, 7
        %v11221 = vsel %vm5227, %v11220, %v10438
        %v11222 = vrot.slane %v10440, 6
        %v11223 = vsel %vm5230, %v11222, %v11221
        %v11224 = vrot.slane %v10441, 5
        %v11225 = vsel %vm5233, %v11224, %v11223
        %v11226 = vrot.slane %v10442, 4
        %v11227 = vsel %vm5236, %v11226, %v11225
        %v11228 = vrot.slane %v10443, 3
        %v11229 = vsel %vm5239, %v11228, %v11227
        %v11230 = vrot.slane %v10444, 2
        %v11231 = vsel %vm5242, %v11230, %v11229
        %v11232 = vrot.slane %v10445, 1
        %v11233 = vsel %vm5245, %v11232, %v11231
        %v11234 = vrot.slane %v10447, 7
        %v11235 = vsel %vm5227, %v11234, %v10446
        %v11236 = vrot.slane %v10448, 6
        %v11237 = vsel %vm5230, %v11236, %v11235
        %v11238 = vrot.slane %v10449, 5
        %v11239 = vsel %vm5233, %v11238, %v11237
        %v11240 = vrot.slane %v10450, 4
        %v11241 = vsel %vm5236, %v11240, %v11239
        %v11242 = vrot.slane %v10451, 3
        %v11243 = vsel %vm5239, %v11242, %v11241
        %v11244 = vrot.slane %v10452, 2
        %v11245 = vsel %vm5242, %v11244, %v11243
        %v11246 = vrot.slane %v10453, 1
        %v11247 = vsel %vm5245, %v11246, %v11245
        %v11248 = vrot.slane %v10455, 7
        %v11249 = vsel %vm5227, %v11248, %v10454
        %v11250 = vrot.slane %v10456, 6
        %v11251 = vsel %vm5230, %v11250, %v11249
        %v11252 = vrot.slane %v10457, 5
        %v11253 = vsel %vm5233, %v11252, %v11251
        %v11254 = vrot.slane %v10458, 4
        %v11255 = vsel %vm5236, %v11254, %v11253
        %v11256 = vrot.slane %v10459, 3
        %v11257 = vsel %vm5239, %v11256, %v11255
        %v11258 = vrot.slane %v10460, 2
        %v11259 = vsel %vm5242, %v11258, %v11257
        %v11260 = vrot.slane %v10461, 1
        %v11261 = vsel %vm5245, %v11260, %v11259
        %v11262 = vrot.slane %v10463, 7
        %v11263 = vsel %vm5227, %v11262, %v10462
        %v11264 = vrot.slane %v10464, 6
        %v11265 = vsel %vm5230, %v11264, %v11263
        %v11266 = vrot.slane %v10465, 5
        %v11267 = vsel %vm5233, %v11266, %v11265
        %v11268 = vrot.slane %v10466, 4
        %v11269 = vsel %vm5236, %v11268, %v11267
        %v11270 = vrot.slane %v10467, 3
        %v11271 = vsel %vm5239, %v11270, %v11269
        %v11272 = vrot.slane %v10468, 2
        %v11273 = vsel %vm5242, %v11272, %v11271
        %v11274 = vrot.slane %v10469, 1
        %v11275 = vsel %vm5245, %v11274, %v11273
        %v11276 = vrot.slane %v10471, 7
        %v11277 = vsel %vm5227, %v11276, %v10470
        %v11278 = vrot.slane %v10472, 6
        %v11279 = vsel %vm5230, %v11278, %v11277
        %v11280 = vrot.slane %v10473, 5
        %v11281 = vsel %vm5233, %v11280, %v11279
        %v11282 = vrot.slane %v10474, 4
        %v11283 = vsel %vm5236, %v11282, %v11281
        %v11284 = vrot.slane %v10475, 3
        %v11285 = vsel %vm5239, %v11284, %v11283
        %v11286 = vrot.slane %v10476, 2
        %v11287 = vsel %vm5242, %v11286, %v11285
        %v11288 = vrot.slane %v10477, 1
        %v11289 = vsel %vm5245, %v11288, %v11287
        %v11290 = vrot.slane %v10479, 7
        %v11291 = vsel %vm5227, %v11290, %v10478
        %v11292 = vrot.slane %v10480, 6
        %v11293 = vsel %vm5230, %v11292, %v11291
        %v11294 = vrot.slane %v10481, 5
        %v11295 = vsel %vm5233, %v11294, %v11293
        %v11296 = vrot.slane %v10482, 4
        %v11297 = vsel %vm5236, %v11296, %v11295
        %v11298 = vrot.slane %v10483, 3
        %v11299 = vsel %vm5239, %v11298, %v11297
        %v11300 = vrot.slane %v10484, 2
        %v11301 = vsel %vm5242, %v11300, %v11299
        %v11302 = vrot.slane %v10485, 1
        %v11303 = vsel %vm5245, %v11302, %v11301
        %v11304 = vrot.slane %v10487, 7
        %v11305 = vsel %vm5227, %v11304, %v10486
        %v11306 = vrot.slane %v10488, 6
        %v11307 = vsel %vm5230, %v11306, %v11305
        %v11308 = vrot.slane %v10489, 5
        %v11309 = vsel %vm5233, %v11308, %v11307
        %v11310 = vrot.slane %v10490, 4
        %v11311 = vsel %vm5236, %v11310, %v11309
        %v11312 = vrot.slane %v10491, 3
        %v11313 = vsel %vm5239, %v11312, %v11311
        %v11314 = vrot.slane %v10492, 2
        %v11315 = vsel %vm5242, %v11314, %v11313
        %v11316 = vrot.slane %v10493, 1
        %v11317 = vsel %vm5245, %v11316, %v11315
        %v11318 = vrot.slane %v10495, 7
        %v11319 = vsel %vm5227, %v11318, %v10494
        %v11320 = vrot.slane %v10496, 6
        %v11321 = vsel %vm5230, %v11320, %v11319
        %v11322 = vrot.slane %v10497, 5
        %v11323 = vsel %vm5233, %v11322, %v11321
        %v11324 = vrot.slane %v10498, 4
        %v11325 = vsel %vm5236, %v11324, %v11323
        %v11326 = vrot.slane %v10499, 3
        %v11327 = vsel %vm5239, %v11326, %v11325
        %v11328 = vrot.slane %v10500, 2
        %v11329 = vsel %vm5242, %v11328, %v11327
        %v11330 = vrot.slane %v10501, 1
        %v11331 = vsel %vm5245, %v11330, %v11329
        %v11332 = vrot.slane %v10503, 7
        %v11333 = vsel %vm5227, %v11332, %v10502
        %v11334 = vrot.slane %v10504, 6
        %v11335 = vsel %vm5230, %v11334, %v11333
        %v11336 = vrot.slane %v10505, 5
        %v11337 = vsel %vm5233, %v11336, %v11335
        %v11338 = vrot.slane %v10506, 4
        %v11339 = vsel %vm5236, %v11338, %v11337
        %v11340 = vrot.slane %v10507, 3
        %v11341 = vsel %vm5239, %v11340, %v11339
        %v11342 = vrot.slane %v10508, 2
        %v11343 = vsel %vm5242, %v11342, %v11341
        %v11344 = vrot.slane %v10509, 1
        %v11345 = vsel %vm5245, %v11344, %v11343
        %v11346 = vrot.slane %v10511, 7
        %v11347 = vsel %vm5227, %v11346, %v10510
        %v11348 = vrot.slane %v10512, 6
        %v11349 = vsel %vm5230, %v11348, %v11347
        %v11350 = vrot.slane %v10513, 5
        %v11351 = vsel %vm5233, %v11350, %v11349
        %v11352 = vrot.slane %v10514, 4
        %v11353 = vsel %vm5236, %v11352, %v11351
        %v11354 = vrot.slane %v10515, 3
        %v11355 = vsel %vm5239, %v11354, %v11353
        %v11356 = vrot.slane %v10516, 2
        %v11357 = vsel %vm5242, %v11356, %v11355
        %v11358 = vrot.slane %v10517, 1
        %v11359 = vsel %vm5245, %v11358, %v11357
        %v11360 = vrot.slane %v10519, 7
        %v11361 = vsel %vm5227, %v11360, %v10518
        %v11362 = vrot.slane %v10520, 6
        %v11363 = vsel %vm5230, %v11362, %v11361
        %v11364 = vrot.slane %v10521, 5
        %v11365 = vsel %vm5233, %v11364, %v11363
        %v11366 = vrot.slane %v10522, 4
        %v11367 = vsel %vm5236, %v11366, %v11365
        %v11368 = vrot.slane %v10523, 3
        %v11369 = vsel %vm5239, %v11368, %v11367
        %v11370 = vrot.slane %v10524, 2
        %v11371 = vsel %vm5242, %v11370, %v11369
        %v11372 = vrot.slane %v10525, 1
        %v11373 = vsel %vm5245, %v11372, %v11371
        %v11374 = vrot.slane %v10527, 7
        %v11375 = vsel %vm5227, %v11374, %v10526
        %v11376 = vrot.slane %v10528, 6
        %v11377 = vsel %vm5230, %v11376, %v11375
        %v11378 = vrot.slane %v10529, 5
        %v11379 = vsel %vm5233, %v11378, %v11377
        %v11380 = vrot.slane %v10530, 4
        %v11381 = vsel %vm5236, %v11380, %v11379
        %v11382 = vrot.slane %v10531, 3
        %v11383 = vsel %vm5239, %v11382, %v11381
        %v11384 = vrot.slane %v10532, 2
        %v11385 = vsel %vm5242, %v11384, %v11383
        %v11386 = vrot.slane %v10533, 1
        %v11387 = vsel %vm5245, %v11386, %v11385
        %v11388 = vrot.slane %v10535, 7
        %v11389 = vsel %vm5227, %v11388, %v10534
        %v11390 = vrot.slane %v10536, 6
        %v11391 = vsel %vm5230, %v11390, %v11389
        %v11392 = vrot.slane %v10537, 5
        %v11393 = vsel %vm5233, %v11392, %v11391
        %v11394 = vrot.slane %v10538, 4
        %v11395 = vsel %vm5236, %v11394, %v11393
        %v11396 = vrot.slane %v10539, 3
        %v11397 = vsel %vm5239, %v11396, %v11395
        %v11398 = vrot.slane %v10540, 2
        %v11399 = vsel %vm5242, %v11398, %v11397
        %v11400 = vrot.slane %v10541, 1
        %v11401 = vsel %vm5245, %v11400, %v11399
        %v11402 = vrot.slane %v10543, 7
        %v11403 = vsel %vm5227, %v11402, %v10542
        %v11404 = vrot.slane %v10544, 6
        %v11405 = vsel %vm5230, %v11404, %v11403
        %v11406 = vrot.slane %v10545, 5
        %v11407 = vsel %vm5233, %v11406, %v11405
        %v11408 = vrot.slane %v10546, 4
        %v11409 = vsel %vm5236, %v11408, %v11407
        %v11410 = vrot.slane %v10547, 3
        %v11411 = vsel %vm5239, %v11410, %v11409
        %v11412 = vrot.slane %v10548, 2
        %v11413 = vsel %vm5242, %v11412, %v11411
        %v11414 = vrot.slane %v10549, 1
        %v11415 = vsel %vm5245, %v11414, %v11413
        %v11416 = vrot.slane %v10551, 7
        %v11417 = vsel %vm5227, %v11416, %v10550
        %v11418 = vrot.slane %v10552, 6
        %v11419 = vsel %vm5230, %v11418, %v11417
        %v11420 = vrot.slane %v10553, 5
        %v11421 = vsel %vm5233, %v11420, %v11419
        %v11422 = vrot.slane %v10554, 4
        %v11423 = vsel %vm5236, %v11422, %v11421
        %v11424 = vrot.slane %v10555, 3
        %v11425 = vsel %vm5239, %v11424, %v11423
        %v11426 = vrot.slane %v10556, 2
        %v11427 = vsel %vm5242, %v11426, %v11425
        %v11428 = vrot.slane %v10557, 1
        %v11429 = vsel %vm5245, %v11428, %v11427
        %v11430 = vrot.slane %v10559, 7
        %v11431 = vsel %vm5227, %v11430, %v10558
        %v11432 = vrot.slane %v10560, 6
        %v11433 = vsel %vm5230, %v11432, %v11431
        %v11434 = vrot.slane %v10561, 5
        %v11435 = vsel %vm5233, %v11434, %v11433
        %v11436 = vrot.slane %v10562, 4
        %v11437 = vsel %vm5236, %v11436, %v11435
        %v11438 = vrot.slane %v10563, 3
        %v11439 = vsel %vm5239, %v11438, %v11437
        %v11440 = vrot.slane %v10564, 2
        %v11441 = vsel %vm5242, %v11440, %v11439
        %v11442 = vrot.slane %v10565, 1
        %v11443 = vsel %vm5245, %v11442, %v11441
        %v11444 = vrot.slane %v10567, 7
        %v11445 = vsel %vm5227, %v11444, %v10566
        %v11446 = vrot.slane %v10568, 6
        %v11447 = vsel %vm5230, %v11446, %v11445
        %v11448 = vrot.slane %v10569, 5
        %v11449 = vsel %vm5233, %v11448, %v11447
        %v11450 = vrot.slane %v10570, 4
        %v11451 = vsel %vm5236, %v11450, %v11449
        %v11452 = vrot.slane %v10571, 3
        %v11453 = vsel %vm5239, %v11452, %v11451
        %v11454 = vrot.slane %v10572, 2
        %v11455 = vsel %vm5242, %v11454, %v11453
        %v11456 = vrot.slane %v10573, 1
        %v11457 = vsel %vm5245, %v11456, %v11455
        %v11458 = vrot.slane %v10575, 7
        %v11459 = vsel %vm5227, %v11458, %v10574
        %v11460 = vrot.slane %v10576, 6
        %v11461 = vsel %vm5230, %v11460, %v11459
        %v11462 = vrot.slane %v10577, 5
        %v11463 = vsel %vm5233, %v11462, %v11461
        %v11464 = vrot.slane %v10578, 4
        %v11465 = vsel %vm5236, %v11464, %v11463
        %v11466 = vrot.slane %v10579, 3
        %v11467 = vsel %vm5239, %v11466, %v11465
        %v11468 = vrot.slane %v10580, 2
        %v11469 = vsel %vm5242, %v11468, %v11467
        %v11470 = vrot.slane %v10581, 1
        %v11471 = vsel %vm5245, %v11470, %v11469
        %v11472 = vrot.slane %v10583, 7
        %v11473 = vsel %vm5227, %v11472, %v10582
        %v11474 = vrot.slane %v10584, 6
        %v11475 = vsel %vm5230, %v11474, %v11473
        %v11476 = vrot.slane %v10585, 5
        %v11477 = vsel %vm5233, %v11476, %v11475
        %v11478 = vrot.slane %v10586, 4
        %v11479 = vsel %vm5236, %v11478, %v11477
        %v11480 = vrot.slane %v10587, 3
        %v11481 = vsel %vm5239, %v11480, %v11479
        %v11482 = vrot.slane %v10588, 2
        %v11483 = vsel %vm5242, %v11482, %v11481
        %v11484 = vrot.slane %v10589, 1
        %v11485 = vsel %vm5245, %v11484, %v11483
        %v11486 = vpack.c.b16 %v10617, %v10603
        %v11487 = vpack.c.b16 %v10645, %v10631
        %v11488 = vpack.c.b16 %v10673, %v10659
        %v11489 = vpack.c.b16 %v10701, %v10687
        %v11490 = vpack.c.b16 %v10729, %v10715
        %v11491 = vpack.c.b16 %v10757, %v10743
        %v11492 = vpack.c.b16 %v10785, %v10771
        %v11493 = vpack.c.b16 %v10813, %v10799
        %v11494 = vpack.c.b16 %v10841, %v10827
        %v11495 = vpack.c.b16 %v10869, %v10855
        %v11496 = vpack.c.b16 %v10897, %v10883
        %v11497 = vpack.c.b16 %v10925, %v10911
        %v11498 = vpack.c.b16 %v10953, %v10939
        %v11499 = vpack.c.b16 %v10981, %v10967
        %v11500 = vpack.c.b16 %v11009, %v10995
        %v11501 = vpack.c.b16 %v11037, %v11023
        %v11502 = vpack.c.b16 %v11065, %v11051
        %v11503 = vpack.c.b16 %v11093, %v11079
        %v11504 = vpack.c.b16 %v11121, %v11107
        %v11505 = vpack.c.b16 %v11149, %v11135
        %v11506 = vpack.c.b16 %v11177, %v11163
        %v11507 = vpack.c.b16 %v11205, %v11191
        %v11508 = vpack.c.b16 %v11233, %v11219
        %v11509 = vpack.c.b16 %v11261, %v11247
        %v11510 = vpack.c.b16 %v11289, %v11275
        %v11511 = vpack.c.b16 %v11317, %v11303
        %v11512 = vpack.c.b16 %v11345, %v11331
        %v11513 = vpack.c.b16 %v11373, %v11359
        %v11514 = vpack.c.b16 %v11401, %v11387
        %v11515 = vpack.c.b16 %v11429, %v11415
        %v11516 = vpack.c.b16 %v11457, %v11443
        %v11517 = vpack.c.b16 %v11485, %v11471
        %v11519 = vsel %vm1705, %v11486, 0
        %v11522 = vsel %vm1705, %v11487, 0
        %v11525 = vsel %vm1705, %v11488, 0
        %v11528 = vsel %vm1705, %v11489, 0
        %v11531 = vsel %vm1705, %v11490, 0
        %v11534 = vsel %vm1705, %v11491, 0
        %v11537 = vsel %vm1705, %v11492, 0
        %v11540 = vsel %vm1705, %v11493, 0
        %v11543 = vsel %vm1705, %v11494, 0
        %v11546 = vsel %vm1705, %v11495, 0
        %v11549 = vsel %vm1705, %v11496, 0
        %v11552 = vsel %vm1705, %v11497, 0
        %v11555 = vsel %vm1705, %v11498, 0
        %v11558 = vsel %vm1705, %v11499, 0
        %v11561 = vsel %vm1705, %v11500, 0
        %v11564 = vsel %vm1705, %v11501, 0
        %v11567 = vsel %vm1705, %v11502, 0
        %v11570 = vsel %vm1705, %v11503, 0
        %v11573 = vsel %vm1705, %v11504, 0
        %v11576 = vsel %vm1705, %v11505, 0
        %v11579 = vsel %vm1705, %v11506, 0
        %v11582 = vsel %vm1705, %v11507, 0
        %v11585 = vsel %vm1705, %v11508, 0
        %v11588 = vsel %vm1705, %v11509, 0
        %v11591 = vsel %vm1705, %v11510, 0
        %v11594 = vsel %vm1705, %v11511, 0
        %v11597 = vsel %vm1705, %v11512, 0
        %v11600 = vsel %vm1705, %v11513, 0
        %v11603 = vsel %vm1705, %v11514, 0
        %v11606 = vsel %vm1705, %v11515, 0
        %v11609 = vsel %vm1705, %v11516, 0
        %v11612 = vsel %vm1705, %v11517, 0
        %11614 = vmatprep.subr.bf16.mxu0 0
        %11615 = vmatpush1.bf16.msra.mxu0 %v6169
        %11616 = vmatprep.subr.bf16.mxu0 0
        %11617 = vmatpush1.bf16.msra.mxu0 %v6170
        %11618 = vmatprep.subr.bf16.mxu0 0
        %11619 = vmatpush1.bf16.msra.mxu0 0
        %11620 = vmatprep.subr.bf16.mxu0 0
        %11621 = vmatpush1.bf16.msra.mxu0 0
        %11622 = vmatprep.subr.bf16.mxu0 0
        %11623 = vmatpush1.bf16.msra.mxu0 0
        %11624 = vmatprep.subr.bf16.mxu0 0
        %11625 = vmatpush1.bf16.msra.mxu0 0
        %11626 = vmatprep.subr.bf16.mxu0 0
        %11627 = vmatpush1.bf16.msra.mxu0 0
        %11628 = vmatprep.subr.bf16.mxu0 0
        %11629 = vmatpush1.bf16.msra.mxu0 0
        %11630 = vmatprep.subr.bf16.mxu0 0
        %11631 = vmatpush1.bf16.msra.mxu0 0
        %11632 = vmatprep.subr.bf16.mxu0 0
        %11633 = vmatpush1.bf16.msra.mxu0 0
        %11634 = vmatprep.subr.bf16.mxu0 0
        %11635 = vmatpush1.bf16.msra.mxu0 0
        %11636 = vmatprep.subr.bf16.mxu0 0
        %11637 = vmatpush1.bf16.msra.mxu0 0
        %11638 = vmatprep.subr.bf16.mxu0 0
        %11639 = vmatpush1.bf16.msra.mxu0 0
        %11640 = vmatprep.subr.bf16.mxu0 0
        %11641 = vmatpush1.bf16.msra.mxu0 0
        %11642 = vmatprep.subr.bf16.mxu0 0
        %11643 = vmatpush1.bf16.msra.mxu0 0
        %11644 = vmatprep.subr.bf16.mxu0 0
        %11645 = vmatpush1.bf16.msra.mxu0 0
        %11646 = vmatprep.mubr.bf16.mxu0 0
        %11647 = vmatmul.mubr.bf16.gmra.mrb[0].mxu0 %v11519
        %v11648 = vpop.f32.mrb[0].mxu0
        %v11649 = vadd.f32 0.0, %v11648
        %v11650 = vpop.f32.mrb[0].mxu0
        %v11651 = vpop.f32.mrb[0].mxu0
        %v11652 = vadd.f32 0.0, %v11651
        %v11653 = vpop.f32.mrb[0].mxu0
        %11654 = vmatprep.mubr.bf16.mxu0 0
        %11655 = vmatmul.mubr.bf16.gmra.mrb[0].mxu0 %v11522
        %v11656 = vpop.f32.mrb[0].mxu0
        %v11657 = vadd.f32 0.0, %v11656
        %v11658 = vpop.f32.mrb[0].mxu0
        %v11659 = vpop.f32.mrb[0].mxu0
        %v11660 = vadd.f32 0.0, %v11659
        %v11661 = vpop.f32.mrb[0].mxu0
        %11662 = vmatprep.mubr.bf16.mxu0 0
        %11663 = vmatmul.mubr.bf16.gmra.mrb[0].mxu0 %v11525
        %v11664 = vpop.f32.mrb[0].mxu0
        %v11665 = vadd.f32 0.0, %v11664
        %v11666 = vpop.f32.mrb[0].mxu0
        %v11667 = vpop.f32.mrb[0].mxu0
        %v11668 = vadd.f32 0.0, %v11667
        %v11669 = vpop.f32.mrb[0].mxu0
        %11670 = vmatprep.mubr.bf16.mxu0 0
        %11671 = vmatmul.mubr.bf16.gmra.mrb[0].mxu0 %v11528
        %v11672 = vpop.f32.mrb[0].mxu0
        %v11673 = vadd.f32 0.0, %v11672
        %v11674 = vpop.f32.mrb[0].mxu0
        %v11675 = vpop.f32.mrb[0].mxu0
        %v11676 = vadd.f32 0.0, %v11675
        %v11677 = vpop.f32.mrb[0].mxu0
        %11678 = vmatprep.mubr.bf16.mxu0 0
        %11679 = vmatmul.mubr.bf16.gmra.mrb[0].mxu0 %v11531
        %v11680 = vpop.f32.mrb[0].mxu0
        %v11681 = vadd.f32 0.0, %v11680
        %v11682 = vpop.f32.mrb[0].mxu0
        %v11683 = vpop.f32.mrb[0].mxu0
        %v11684 = vadd.f32 0.0, %v11683
        %v11685 = vpop.f32.mrb[0].mxu0
        %11686 = vmatprep.mubr.bf16.mxu0 0
        %11687 = vmatmul.mubr.bf16.gmra.mrb[0].mxu0 %v11534
        %v11688 = vpop.f32.mrb[0].mxu0
        %v11689 = vadd.f32 0.0, %v11688
        %v11690 = vpop.f32.mrb[0].mxu0
        %v11691 = vpop.f32.mrb[0].mxu0
        %v11692 = vadd.f32 0.0, %v11691
        %v11693 = vpop.f32.mrb[0].mxu0
        %11694 = vmatprep.mubr.bf16.mxu0 0
        %11695 = vmatmul.mubr.bf16.gmra.mrb[0].mxu0 %v11537
        %v11696 = vpop.f32.mrb[0].mxu0
        %v11697 = vadd.f32 0.0, %v11696
        %v11698 = vpop.f32.mrb[0].mxu0
        %v11699 = vpop.f32.mrb[0].mxu0
        %v11700 = vadd.f32 0.0, %v11699
        %v11701 = vpop.f32.mrb[0].mxu0
        %11702 = vmatprep.mubr.bf16.mxu0 0
        %11703 = vmatmul.mubr.bf16.gmra.mrb[0].mxu0 %v11540
        %v11704 = vpop.f32.mrb[0].mxu0
        %v11705 = vadd.f32 0.0, %v11704
        %v11706 = vpop.f32.mrb[0].mxu0
        %v11707 = vpop.f32.mrb[0].mxu0
        %v11708 = vadd.f32 0.0, %v11707
        %v11709 = vpop.f32.mrb[0].mxu0
        %11710 = vmatprep.mubr.bf16.mxu0 0
        %11711 = vmatmul.mubr.bf16.gmra.mrb[0].mxu0 %v11543
        %v11712 = vpop.f32.mrb[0].mxu0
        %v11713 = vadd.f32 0.0, %v11712
        %v11714 = vpop.f32.mrb[0].mxu0
        %v11715 = vpop.f32.mrb[0].mxu0
        %v11716 = vadd.f32 0.0, %v11715
        %v11717 = vpop.f32.mrb[0].mxu0
        %11718 = vmatprep.mubr.bf16.mxu0 0
        %11719 = vmatmul.mubr.bf16.gmra.mrb[0].mxu0 %v11546
        %v11720 = vpop.f32.mrb[0].mxu0
        %v11721 = vadd.f32 0.0, %v11720
        %v11722 = vpop.f32.mrb[0].mxu0
        %v11723 = vpop.f32.mrb[0].mxu0
        %v11724 = vadd.f32 0.0, %v11723
        %v11725 = vpop.f32.mrb[0].mxu0
        %11726 = vmatprep.mubr.bf16.mxu0 0
        %11727 = vmatmul.mubr.bf16.gmra.mrb[0].mxu0 %v11549
        %v11728 = vpop.f32.mrb[0].mxu0
        %v11729 = vadd.f32 0.0, %v11728
        %v11730 = vpop.f32.mrb[0].mxu0
        %v11731 = vpop.f32.mrb[0].mxu0
        %v11732 = vadd.f32 0.0, %v11731
        %v11733 = vpop.f32.mrb[0].mxu0
        %11734 = vmatprep.mubr.bf16.mxu0 0
        %11735 = vmatmul.mubr.bf16.gmra.mrb[0].mxu0 %v11552
        %v11736 = vpop.f32.mrb[0].mxu0
        %v11737 = vadd.f32 0.0, %v11736
        %v11738 = vpop.f32.mrb[0].mxu0
        %v11739 = vpop.f32.mrb[0].mxu0
        %v11740 = vadd.f32 0.0, %v11739
        %v11741 = vpop.f32.mrb[0].mxu0
        %11742 = vmatprep.mubr.bf16.mxu0 0
        %11743 = vmatmul.mubr.bf16.gmra.mrb[0].mxu0 %v11555
        %v11744 = vpop.f32.mrb[0].mxu0
        %v11745 = vadd.f32 0.0, %v11744
        %v11746 = vpop.f32.mrb[0].mxu0
        %v11747 = vpop.f32.mrb[0].mxu0
        %v11748 = vadd.f32 0.0, %v11747
        %v11749 = vpop.f32.mrb[0].mxu0
        %11750 = vmatprep.mubr.bf16.mxu0 0
        %11751 = vmatmul.mubr.bf16.gmra.mrb[0].mxu0 %v11558
        %v11752 = vpop.f32.mrb[0].mxu0
        %v11753 = vadd.f32 0.0, %v11752
        %v11754 = vpop.f32.mrb[0].mxu0
        %v11755 = vpop.f32.mrb[0].mxu0
        %v11756 = vadd.f32 0.0, %v11755
        %v11757 = vpop.f32.mrb[0].mxu0
        %11758 = vmatprep.mubr.bf16.mxu0 0
        %11759 = vmatmul.mubr.bf16.gmra.mrb[0].mxu0 %v11561
        %v11760 = vpop.f32.mrb[0].mxu0
        %v11761 = vadd.f32 0.0, %v11760
        %v11762 = vpop.f32.mrb[0].mxu0
        %v11763 = vpop.f32.mrb[0].mxu0
        %v11764 = vadd.f32 0.0, %v11763
        %v11765 = vpop.f32.mrb[0].mxu0
        %11766 = vmatprep.mubr.bf16.mxu0 0
        %11767 = vmatmul.mubr.bf16.gmra.mrb[0].mxu0 %v11564
        %v11768 = vpop.f32.mrb[0].mxu0
        %v11769 = vadd.f32 0.0, %v11768
        %v11770 = vpop.f32.mrb[0].mxu0
        %v11771 = vpop.f32.mrb[0].mxu0
        %v11772 = vadd.f32 0.0, %v11771
        %v11773 = vpop.f32.mrb[0].mxu0
        %11774 = vmatprep.mubr.bf16.mxu0 0
        %11775 = vmatmul.mubr.bf16.gmra.mrb[0].mxu0 %v11567
        %v11776 = vpop.f32.mrb[0].mxu0
        %v11777 = vadd.f32 0.0, %v11776
        %v11778 = vpop.f32.mrb[0].mxu0
        %v11779 = vpop.f32.mrb[0].mxu0
        %v11780 = vadd.f32 0.0, %v11779
        %v11781 = vpop.f32.mrb[0].mxu0
        %11782 = vmatprep.mubr.bf16.mxu0 0
        %11783 = vmatmul.mubr.bf16.gmra.mrb[0].mxu0 %v11570
        %v11784 = vpop.f32.mrb[0].mxu0
        %v11785 = vadd.f32 0.0, %v11784
        %v11786 = vpop.f32.mrb[0].mxu0
        %v11787 = vpop.f32.mrb[0].mxu0
        %v11788 = vadd.f32 0.0, %v11787
        %v11789 = vpop.f32.mrb[0].mxu0
        %11790 = vmatprep.mubr.bf16.mxu0 0
        %11791 = vmatmul.mubr.bf16.gmra.mrb[0].mxu0 %v11573
        %v11792 = vpop.f32.mrb[0].mxu0
        %v11793 = vadd.f32 0.0, %v11792
        %v11794 = vpop.f32.mrb[0].mxu0
        %v11795 = vpop.f32.mrb[0].mxu0
        %v11796 = vadd.f32 0.0, %v11795
        %v11797 = vpop.f32.mrb[0].mxu0
        %11798 = vmatprep.mubr.bf16.mxu0 0
        %11799 = vmatmul.mubr.bf16.gmra.mrb[0].mxu0 %v11576
        %v11800 = vpop.f32.mrb[0].mxu0
        %v11801 = vadd.f32 0.0, %v11800
        %v11802 = vpop.f32.mrb[0].mxu0
        %v11803 = vpop.f32.mrb[0].mxu0
        %v11804 = vadd.f32 0.0, %v11803
        %v11805 = vpop.f32.mrb[0].mxu0
        %11806 = vmatprep.mubr.bf16.mxu0 0
        %11807 = vmatmul.mubr.bf16.gmra.mrb[0].mxu0 %v11579
        %v11808 = vpop.f32.mrb[0].mxu0
        %v11809 = vadd.f32 0.0, %v11808
        %v11810 = vpop.f32.mrb[0].mxu0
        %v11811 = vpop.f32.mrb[0].mxu0
        %v11812 = vadd.f32 0.0, %v11811
        %v11813 = vpop.f32.mrb[0].mxu0
        %11814 = vmatprep.mubr.bf16.mxu0 0
        %11815 = vmatmul.mubr.bf16.gmra.mrb[0].mxu0 %v11582
        %v11816 = vpop.f32.mrb[0].mxu0
        %v11817 = vadd.f32 0.0, %v11816
        %v11818 = vpop.f32.mrb[0].mxu0
        %v11819 = vpop.f32.mrb[0].mxu0
        %v11820 = vadd.f32 0.0, %v11819
        %v11821 = vpop.f32.mrb[0].mxu0
        %11822 = vmatprep.mubr.bf16.mxu0 0
        %11823 = vmatmul.mubr.bf16.gmra.mrb[0].mxu0 %v11585
        %v11824 = vpop.f32.mrb[0].mxu0
        %v11825 = vadd.f32 0.0, %v11824
        %v11826 = vpop.f32.mrb[0].mxu0
        %v11827 = vpop.f32.mrb[0].mxu0
        %v11828 = vadd.f32 0.0, %v11827
        %v11829 = vpop.f32.mrb[0].mxu0
        %11830 = vmatprep.mubr.bf16.mxu0 0
        %11831 = vmatmul.mubr.bf16.gmra.mrb[0].mxu0 %v11588
        %v11832 = vpop.f32.mrb[0].mxu0
        %v11833 = vadd.f32 0.0, %v11832
        %v11834 = vpop.f32.mrb[0].mxu0
        %v11835 = vpop.f32.mrb[0].mxu0
        %v11836 = vadd.f32 0.0, %v11835
        %v11837 = vpop.f32.mrb[0].mxu0
        %11838 = vmatprep.mubr.bf16.mxu0 0
        %11839 = vmatmul.mubr.bf16.gmra.mrb[0].mxu0 %v11591
        %v11840 = vpop.f32.mrb[0].mxu0
        %v11841 = vadd.f32 0.0, %v11840
        %v11842 = vpop.f32.mrb[0].mxu0
        %v11843 = vpop.f32.mrb[0].mxu0
        %v11844 = vadd.f32 0.0, %v11843
        %v11845 = vpop.f32.mrb[0].mxu0
        %11846 = vmatprep.mubr.bf16.mxu0 0
        %11847 = vmatmul.mubr.bf16.gmra.mrb[0].mxu0 %v11594
        %v11848 = vpop.f32.mrb[0].mxu0
        %v11849 = vadd.f32 0.0, %v11848
        %v11850 = vpop.f32.mrb[0].mxu0
        %v11851 = vpop.f32.mrb[0].mxu0
        %v11852 = vadd.f32 0.0, %v11851
        %v11853 = vpop.f32.mrb[0].mxu0
        %11854 = vmatprep.mubr.bf16.mxu0 0
        %11855 = vmatmul.mubr.bf16.gmra.mrb[0].mxu0 %v11597
        %v11856 = vpop.f32.mrb[0].mxu0
        %v11857 = vadd.f32 0.0, %v11856
        %v11858 = vpop.f32.mrb[0].mxu0
        %v11859 = vpop.f32.mrb[0].mxu0
        %v11860 = vadd.f32 0.0, %v11859
        %v11861 = vpop.f32.mrb[0].mxu0
        %11862 = vmatprep.mubr.bf16.mxu0 0
        %11863 = vmatmul.mubr.bf16.gmra.mrb[0].mxu0 %v11600
        %v11864 = vpop.f32.mrb[0].mxu0
        %v11865 = vadd.f32 0.0, %v11864
        %v11866 = vpop.f32.mrb[0].mxu0
        %v11867 = vpop.f32.mrb[0].mxu0
        %v11868 = vadd.f32 0.0, %v11867
        %v11869 = vpop.f32.mrb[0].mxu0
        %11870 = vmatprep.mubr.bf16.mxu0 0
        %11871 = vmatmul.mubr.bf16.gmra.mrb[0].mxu0 %v11603
        %v11872 = vpop.f32.mrb[0].mxu0
        %v11873 = vadd.f32 0.0, %v11872
        %v11874 = vpop.f32.mrb[0].mxu0
        %v11875 = vpop.f32.mrb[0].mxu0
        %v11876 = vadd.f32 0.0, %v11875
        %v11877 = vpop.f32.mrb[0].mxu0
        %11878 = vmatprep.mubr.bf16.mxu0 0
        %11879 = vmatmul.mubr.bf16.gmra.mrb[0].mxu0 %v11606
        %v11880 = vpop.f32.mrb[0].mxu0
        %v11881 = vadd.f32 0.0, %v11880
        %v11882 = vpop.f32.mrb[0].mxu0
        %v11883 = vpop.f32.mrb[0].mxu0
        %v11884 = vadd.f32 0.0, %v11883
        %v11885 = vpop.f32.mrb[0].mxu0
        %11886 = vmatprep.mubr.bf16.mxu0 0
        %11887 = vmatmul.mubr.bf16.gmra.mrb[0].mxu0 %v11609
        %v11888 = vpop.f32.mrb[0].mxu0
        %v11889 = vadd.f32 0.0, %v11888
        %v11890 = vpop.f32.mrb[0].mxu0
        %v11891 = vpop.f32.mrb[0].mxu0
        %v11892 = vadd.f32 0.0, %v11891
        %v11893 = vpop.f32.mrb[0].mxu0
        %11894 = vmatprep.mubr.bf16.mxu0 0
        %11895 = vmatmul.mubr.bf16.gmra.mrb[0].mxu0 %v11612
        %v11896 = vpop.f32.mrb[0].mxu0
        %v11897 = vadd.f32 0.0, %v11896
        %v11898 = vpop.f32.mrb[0].mxu0
        %v11899 = vpop.f32.mrb[0].mxu0
        %v11900 = vadd.f32 0.0, %v11899
        %v11901 = vpop.f32.mrb[0].mxu0
        %11902 = vdwg.mxu0
        %v11903 = vadd.f32 %v1513, %v11649
        %v11904 = vadd.f32 %v1514, %v11652
        %v11905 = vadd.f32 %v1515, %v11657
        %v11906 = vadd.f32 %v1516, %v11660
        %v11907 = vadd.f32 %v1517, %v11665
        %v11908 = vadd.f32 %v1518, %v11668
        %v11909 = vadd.f32 %v1519, %v11673
        %v11910 = vadd.f32 %v1520, %v11676
        %v11911 = vadd.f32 %v1521, %v11681
        %v11912 = vadd.f32 %v1522, %v11684
        %v11913 = vadd.f32 %v1523, %v11689
        %v11914 = vadd.f32 %v1524, %v11692
        %v11915 = vadd.f32 %v1525, %v11697
        %v11916 = vadd.f32 %v1526, %v11700
        %v11917 = vadd.f32 %v1527, %v11705
        %v11918 = vadd.f32 %v1528, %v11708
        %v11919 = vadd.f32 %v1529, %v11713
        %v11920 = vadd.f32 %v1530, %v11716
        %v11921 = vadd.f32 %v1531, %v11721
        %v11922 = vadd.f32 %v1532, %v11724
        %v11923 = vadd.f32 %v1533, %v11729
        %v11924 = vadd.f32 %v1534, %v11732
        %v11925 = vadd.f32 %v1535, %v11737
        %v11926 = vadd.f32 %v1536, %v11740
        %v11927 = vadd.f32 %v1537, %v11745
        %v11928 = vadd.f32 %v1538, %v11748
        %v11929 = vadd.f32 %v1539, %v11753
        %v11930 = vadd.f32 %v1540, %v11756
        %v11931 = vadd.f32 %v1541, %v11761
        %v11932 = vadd.f32 %v1542, %v11764
        %v11933 = vadd.f32 %v1543, %v11769
        %v11934 = vadd.f32 %v1544, %v11772
        %v11935 = vadd.f32 %v1545, %v11777
        %v11936 = vadd.f32 %v1546, %v11780
        %v11937 = vadd.f32 %v1547, %v11785
        %v11938 = vadd.f32 %v1548, %v11788
        %v11939 = vadd.f32 %v1549, %v11793
        %v11940 = vadd.f32 %v1550, %v11796
        %v11941 = vadd.f32 %v1551, %v11801
        %v11942 = vadd.f32 %v1552, %v11804
        %v11943 = vadd.f32 %v1553, %v11809
        %v11944 = vadd.f32 %v1554, %v11812
        %v11945 = vadd.f32 %v1555, %v11817
        %v11946 = vadd.f32 %v1556, %v11820
        %v11947 = vadd.f32 %v1557, %v11825
        %v11948 = vadd.f32 %v1558, %v11828
        %v11949 = vadd.f32 %v1559, %v11833
        %v11950 = vadd.f32 %v1560, %v11836
        %v11951 = vadd.f32 %v1561, %v11841
        %v11952 = vadd.f32 %v1562, %v11844
        %v11953 = vadd.f32 %v1563, %v11849
        %v11954 = vadd.f32 %v1564, %v11852
        %v11955 = vadd.f32 %v1565, %v11857
        %v11956 = vadd.f32 %v1566, %v11860
        %v11957 = vadd.f32 %v1567, %v11865
        %v11958 = vadd.f32 %v1568, %v11868
        %v11959 = vadd.f32 %v1569, %v11873
        %v11960 = vadd.f32 %v1570, %v11876
        %v11961 = vadd.f32 %v1571, %v11881
        %v11962 = vadd.f32 %v1572, %v11884
        %v11963 = vadd.f32 %v1573, %v11889
        %v11964 = vadd.f32 %v1574, %v11892
        %v11965 = vadd.f32 %v1575, %v11897
        %v11966 = vadd.f32 %v1576, %v11900
        %v11967 = vmax.f32 %v11903, 0.0
        %v11968 = vmax.f32 %v11904, 0.0
        %v11969 = vmax.f32 %v11905, 0.0
        %v11970 = vmax.f32 %v11906, 0.0
        %v11971 = vmax.f32 %v11907, 0.0
        %v11972 = vmax.f32 %v11908, 0.0
        %v11973 = vmax.f32 %v11909, 0.0
        %v11974 = vmax.f32 %v11910, 0.0
        %v11975 = vmax.f32 %v11911, 0.0
        %v11976 = vmax.f32 %v11912, 0.0
        %v11977 = vmax.f32 %v11913, 0.0
        %v11978 = vmax.f32 %v11914, 0.0
        %v11979 = vmax.f32 %v11915, 0.0
        %v11980 = vmax.f32 %v11916, 0.0
        %v11981 = vmax.f32 %v11917, 0.0
        %v11982 = vmax.f32 %v11918, 0.0
        %v11983 = vmax.f32 %v11919, 0.0
        %v11984 = vmax.f32 %v11920, 0.0
        %v11985 = vmax.f32 %v11921, 0.0
        %v11986 = vmax.f32 %v11922, 0.0
        %v11987 = vmax.f32 %v11923, 0.0
        %v11988 = vmax.f32 %v11924, 0.0
        %v11989 = vmax.f32 %v11925, 0.0
        %v11990 = vmax.f32 %v11926, 0.0
        %v11991 = vmax.f32 %v11927, 0.0
        %v11992 = vmax.f32 %v11928, 0.0
        %v11993 = vmax.f32 %v11929, 0.0
        %v11994 = vmax.f32 %v11930, 0.0
        %v11995 = vmax.f32 %v11931, 0.0
        %v11996 = vmax.f32 %v11932, 0.0
        %v11997 = vmax.f32 %v11933, 0.0
        %v11998 = vmax.f32 %v11934, 0.0
        %v11999 = vmax.f32 %v11935, 0.0
        %v12000 = vmax.f32 %v11936, 0.0
        %v12001 = vmax.f32 %v11937, 0.0
        %v12002 = vmax.f32 %v11938, 0.0
        %v12003 = vmax.f32 %v11939, 0.0
        %v12004 = vmax.f32 %v11940, 0.0
        %v12005 = vmax.f32 %v11941, 0.0
        %v12006 = vmax.f32 %v11942, 0.0
        %v12007 = vmax.f32 %v11943, 0.0
        %v12008 = vmax.f32 %v11944, 0.0
        %v12009 = vmax.f32 %v11945, 0.0
        %v12010 = vmax.f32 %v11946, 0.0
        %v12011 = vmax.f32 %v11947, 0.0
        %v12012 = vmax.f32 %v11948, 0.0
        %v12013 = vmax.f32 %v11949, 0.0
        %v12014 = vmax.f32 %v11950, 0.0
        %v12015 = vmax.f32 %v11951, 0.0
        %v12016 = vmax.f32 %v11952, 0.0
        %v12017 = vmax.f32 %v11953, 0.0
        %v12018 = vmax.f32 %v11954, 0.0
        %v12019 = vmax.f32 %v11955, 0.0
        %v12020 = vmax.f32 %v11956, 0.0
        %v12021 = vmax.f32 %v11957, 0.0
        %v12022 = vmax.f32 %v11958, 0.0
        %v12023 = vmax.f32 %v11959, 0.0
        %v12024 = vmax.f32 %v11960, 0.0
        %v12025 = vmax.f32 %v11961, 0.0
        %v12026 = vmax.f32 %v11962, 0.0
        %v12027 = vmax.f32 %v11963, 0.0
        %v12028 = vmax.f32 %v11964, 0.0
        %v12029 = vmax.f32 %v11965, 0.0
        %v12030 = vmax.f32 %v11966, 0.0
        %v12031 = vmul.f32 %v11967, %v588
        %v12032 = vmul.f32 %v11968, %v595
        %v12033 = vmul.f32 %v11969, %v602
        %v12034 = vmul.f32 %v11970, %v609
        %v12035 = vmul.f32 %v11971, %v616
        %v12036 = vmul.f32 %v11972, %v623
        %v12037 = vmul.f32 %v11973, %v630
        %v12038 = vmul.f32 %v11974, %v637
        %v12039 = vmul.f32 %v11975, %v644
        %v12040 = vmul.f32 %v11976, %v651
        %v12041 = vmul.f32 %v11977, %v658
        %v12042 = vmul.f32 %v11978, %v665
        %v12043 = vmul.f32 %v11979, %v672
        %v12044 = vmul.f32 %v11980, %v679
        %v12045 = vmul.f32 %v11981, %v686
        %v12046 = vmul.f32 %v11982, %v693
        %v12047 = vmul.f32 %v11983, %v700
        %v12048 = vmul.f32 %v11984, %v707
        %v12049 = vmul.f32 %v11985, %v714
        %v12050 = vmul.f32 %v11986, %v721
        %v12051 = vmul.f32 %v11987, %v728
        %v12052 = vmul.f32 %v11988, %v735
        %v12053 = vmul.f32 %v11989, %v742
        %v12054 = vmul.f32 %v11990, %v749
        %v12055 = vmul.f32 %v11991, %v756
        %v12056 = vmul.f32 %v11992, %v763
        %v12057 = vmul.f32 %v11993, %v770
        %v12058 = vmul.f32 %v11994, %v777
        %v12059 = vmul.f32 %v11995, %v784
        %v12060 = vmul.f32 %v11996, %v791
        %v12061 = vmul.f32 %v11997, %v798
        %v12062 = vmul.f32 %v11998, %v805
        %v12063 = vmul.f32 %v11999, %v812
        %v12064 = vmul.f32 %v12000, %v819
        %v12065 = vmul.f32 %v12001, %v826
        %v12066 = vmul.f32 %v12002, %v833
        %v12067 = vmul.f32 %v12003, %v840
        %v12068 = vmul.f32 %v12004, %v847
        %v12069 = vmul.f32 %v12005, %v854
        %v12070 = vmul.f32 %v12006, %v861
        %v12071 = vmul.f32 %v12007, %v868
        %v12072 = vmul.f32 %v12008, %v875
        %v12073 = vmul.f32 %v12009, %v882
        %v12074 = vmul.f32 %v12010, %v889
        %v12075 = vmul.f32 %v12011, %v896
        %v12076 = vmul.f32 %v12012, %v903
        %v12077 = vmul.f32 %v12013, %v910
        %v12078 = vmul.f32 %v12014, %v917
        %v12079 = vmul.f32 %v12015, %v924
        %v12080 = vmul.f32 %v12016, %v931
        %v12081 = vmul.f32 %v12017, %v938
        %v12082 = vmul.f32 %v12018, %v945
        %v12083 = vmul.f32 %v12019, %v952
        %v12084 = vmul.f32 %v12020, %v959
        %v12085 = vmul.f32 %v12021, %v966
        %v12086 = vmul.f32 %v12022, %v973
        %v12087 = vmul.f32 %v12023, %v980
        %v12088 = vmul.f32 %v12024, %v987
        %v12089 = vmul.f32 %v12025, %v994
        %v12090 = vmul.f32 %v12026, %v1001
        %v12091 = vmul.f32 %v12027, %v1008
        %v12092 = vmul.f32 %v12028, %v1015
        %v12093 = vmul.f32 %v12029, %v1022
        %v12094 = vmul.f32 %v12030, %v1029
        %v12095 = vsub.f32 0.0, %v12031
        %v12096 = vsub.f32 0.0, %v12032
        %v12097 = vsub.f32 0.0, %v12033
        %v12098 = vsub.f32 0.0, %v12034
        %v12099 = vsub.f32 0.0, %v12035
        %v12100 = vsub.f32 0.0, %v12036
        %v12101 = vsub.f32 0.0, %v12037
        %v12102 = vsub.f32 0.0, %v12038
        %v12103 = vsub.f32 0.0, %v12039
        %v12104 = vsub.f32 0.0, %v12040
        %v12105 = vsub.f32 0.0, %v12041
        %v12106 = vsub.f32 0.0, %v12042
        %v12107 = vsub.f32 0.0, %v12043
        %v12108 = vsub.f32 0.0, %v12044
        %v12109 = vsub.f32 0.0, %v12045
        %v12110 = vsub.f32 0.0, %v12046
        %v12111 = vsub.f32 0.0, %v12047
        %v12112 = vsub.f32 0.0, %v12048
        %v12113 = vsub.f32 0.0, %v12049
        %v12114 = vsub.f32 0.0, %v12050
        %v12115 = vsub.f32 0.0, %v12051
        %v12116 = vsub.f32 0.0, %v12052
        %v12117 = vsub.f32 0.0, %v12053
        %v12118 = vsub.f32 0.0, %v12054
        %v12119 = vsub.f32 0.0, %v12055
        %v12120 = vsub.f32 0.0, %v12056
        %v12121 = vsub.f32 0.0, %v12057
        %v12122 = vsub.f32 0.0, %v12058
        %v12123 = vsub.f32 0.0, %v12059
        %v12124 = vsub.f32 0.0, %v12060
        %v12125 = vsub.f32 0.0, %v12061
        %v12126 = vsub.f32 0.0, %v12062
        %v12127 = vsub.f32 0.0, %v12063
        %v12128 = vsub.f32 0.0, %v12064
        %v12129 = vsub.f32 0.0, %v12065
        %v12130 = vsub.f32 0.0, %v12066
        %v12131 = vsub.f32 0.0, %v12067
        %v12132 = vsub.f32 0.0, %v12068
        %v12133 = vsub.f32 0.0, %v12069
        %v12134 = vsub.f32 0.0, %v12070
        %v12135 = vsub.f32 0.0, %v12071
        %v12136 = vsub.f32 0.0, %v12072
        %v12137 = vsub.f32 0.0, %v12073
        %v12138 = vsub.f32 0.0, %v12074
        %v12139 = vsub.f32 0.0, %v12075
        %v12140 = vsub.f32 0.0, %v12076
        %v12141 = vsub.f32 0.0, %v12077
        %v12142 = vsub.f32 0.0, %v12078
        %v12143 = vsub.f32 0.0, %v12079
        %v12144 = vsub.f32 0.0, %v12080
        %v12145 = vsub.f32 0.0, %v12081
        %v12146 = vsub.f32 0.0, %v12082
        %v12147 = vsub.f32 0.0, %v12083
        %v12148 = vsub.f32 0.0, %v12084
        %v12149 = vsub.f32 0.0, %v12085
        %v12150 = vsub.f32 0.0, %v12086
        %v12151 = vsub.f32 0.0, %v12087
        %v12152 = vsub.f32 0.0, %v12088
        %v12153 = vsub.f32 0.0, %v12089
        %v12154 = vsub.f32 0.0, %v12090
        %v12155 = vsub.f32 0.0, %v12091
        %v12156 = vsub.f32 0.0, %v12092
        %v12157 = vsub.f32 0.0, %v12093
        %v12158 = vsub.f32 0.0, %v12094
        %v12159 = vmul.f32 %v12095, 1.442695
        %v12160 = vpow.pop %v12159
        %v12161 = vmul.f32 %v12096, 1.442695
        %v12162 = vpow.pop %v12161
        %v12163 = vmul.f32 %v12097, 1.442695
        %v12164 = vpow.pop %v12163
        %v12165 = vmul.f32 %v12098, 1.442695
        %v12166 = vpow.pop %v12165
        %v12167 = vmul.f32 %v12099, 1.442695
        %v12168 = vpow.pop %v12167
        %v12169 = vmul.f32 %v12100, 1.442695
        %v12170 = vpow.pop %v12169
        %v12171 = vmul.f32 %v12101, 1.442695
        %v12172 = vpow.pop %v12171
        %v12173 = vmul.f32 %v12102, 1.442695
        %v12174 = vpow.pop %v12173
        %v12175 = vmul.f32 %v12103, 1.442695
        %v12176 = vpow.pop %v12175
        %v12177 = vmul.f32 %v12104, 1.442695
        %v12178 = vpow.pop %v12177
        %v12179 = vmul.f32 %v12105, 1.442695
        %v12180 = vpow.pop %v12179
        %v12181 = vmul.f32 %v12106, 1.442695
        %v12182 = vpow.pop %v12181
        %v12183 = vmul.f32 %v12107, 1.442695
        %v12184 = vpow.pop %v12183
        %v12185 = vmul.f32 %v12108, 1.442695
        %v12186 = vpow.pop %v12185
        %v12187 = vmul.f32 %v12109, 1.442695
        %v12188 = vpow.pop %v12187
        %v12189 = vmul.f32 %v12110, 1.442695
        %v12190 = vpow.pop %v12189
        %v12191 = vmul.f32 %v12111, 1.442695
        %v12192 = vpow.pop %v12191
        %v12193 = vmul.f32 %v12112, 1.442695
        %v12194 = vpow.pop %v12193
        %v12195 = vmul.f32 %v12113, 1.442695
        %v12196 = vpow.pop %v12195
        %v12197 = vmul.f32 %v12114, 1.442695
        %v12198 = vpow.pop %v12197
        %v12199 = vmul.f32 %v12115, 1.442695
        %v12200 = vpow.pop %v12199
        %v12201 = vmul.f32 %v12116, 1.442695
        %v12202 = vpow.pop %v12201
        %v12203 = vmul.f32 %v12117, 1.442695
        %v12204 = vpow.pop %v12203
        %v12205 = vmul.f32 %v12118, 1.442695
        %v12206 = vpow.pop %v12205
        %v12207 = vmul.f32 %v12119, 1.442695
        %v12208 = vpow.pop %v12207
        %v12209 = vmul.f32 %v12120, 1.442695
        %v12210 = vpow.pop %v12209
        %v12211 = vmul.f32 %v12121, 1.442695
        %v12212 = vpow.pop %v12211
        %v12213 = vmul.f32 %v12122, 1.442695
        %v12214 = vpow.pop %v12213
        %v12215 = vmul.f32 %v12123, 1.442695
        %v12216 = vpow.pop %v12215
        %v12217 = vmul.f32 %v12124, 1.442695
        %v12218 = vpow.pop %v12217
        %v12219 = vmul.f32 %v12125, 1.442695
        %v12220 = vpow.pop %v12219
        %v12221 = vmul.f32 %v12126, 1.442695
        %v12222 = vpow.pop %v12221
        %v12223 = vmul.f32 %v12127, 1.442695
        %v12224 = vpow.pop %v12223
        %v12225 = vmul.f32 %v12128, 1.442695
        %v12226 = vpow.pop %v12225
        %v12227 = vmul.f32 %v12129, 1.442695
        %v12228 = vpow.pop %v12227
        %v12229 = vmul.f32 %v12130, 1.442695
        %v12230 = vpow.pop %v12229
        %v12231 = vmul.f32 %v12131, 1.442695
        %v12232 = vpow.pop %v12231
        %v12233 = vmul.f32 %v12132, 1.442695
        %v12234 = vpow.pop %v12233
        %v12235 = vmul.f32 %v12133, 1.442695
        %v12236 = vpow.pop %v12235
        %v12237 = vmul.f32 %v12134, 1.442695
        %v12238 = vpow.pop %v12237
        %v12239 = vmul.f32 %v12135, 1.442695
        %v12240 = vpow.pop %v12239
        %v12241 = vmul.f32 %v12136, 1.442695
        %v12242 = vpow.pop %v12241
        %v12243 = vmul.f32 %v12137, 1.442695
        %v12244 = vpow.pop %v12243
        %v12245 = vmul.f32 %v12138, 1.442695
        %v12246 = vpow.pop %v12245
        %v12247 = vmul.f32 %v12139, 1.442695
        %v12248 = vpow.pop %v12247
        %v12249 = vmul.f32 %v12140, 1.442695
        %v12250 = vpow.pop %v12249
        %v12251 = vmul.f32 %v12141, 1.442695
        %v12252 = vpow.pop %v12251
        %v12253 = vmul.f32 %v12142, 1.442695
        %v12254 = vpow.pop %v12253
        %v12255 = vmul.f32 %v12143, 1.442695
        %v12256 = vpow.pop %v12255
        %v12257 = vmul.f32 %v12144, 1.442695
        %v12258 = vpow.pop %v12257
        %v12259 = vmul.f32 %v12145, 1.442695
        %v12260 = vpow.pop %v12259
        %v12261 = vmul.f32 %v12146, 1.442695
        %v12262 = vpow.pop %v12261
        %v12263 = vmul.f32 %v12147, 1.442695
        %v12264 = vpow.pop %v12263
        %v12265 = vmul.f32 %v12148, 1.442695
        %v12266 = vpow.pop %v12265
        %v12267 = vmul.f32 %v12149, 1.442695
        %v12268 = vpow.pop %v12267
        %v12269 = vmul.f32 %v12150, 1.442695
        %v12270 = vpow.pop %v12269
        %v12271 = vmul.f32 %v12151, 1.442695
        %v12272 = vpow.pop %v12271
        %v12273 = vmul.f32 %v12152, 1.442695
        %v12274 = vpow.pop %v12273
        %v12275 = vmul.f32 %v12153, 1.442695
        %v12276 = vpow.pop %v12275
        %v12277 = vmul.f32 %v12154, 1.442695
        %v12278 = vpow.pop %v12277
        %v12279 = vmul.f32 %v12155, 1.442695
        %v12280 = vpow.pop %v12279
        %v12281 = vmul.f32 %v12156, 1.442695
        %v12282 = vpow.pop %v12281
        %v12283 = vmul.f32 %v12157, 1.442695
        %v12284 = vpow.pop %v12283
        %v12285 = vmul.f32 %v12158, 1.442695
        %v12286 = vpow.pop %v12285
        %v12287 = vadd.f32 %v12160, 1.0
        %v12288 = vadd.f32 %v12162, 1.0
        %v12289 = vadd.f32 %v12164, 1.0
        %v12290 = vadd.f32 %v12166, 1.0
        %v12291 = vadd.f32 %v12168, 1.0
        %v12292 = vadd.f32 %v12170, 1.0
        %v12293 = vadd.f32 %v12172, 1.0
        %v12294 = vadd.f32 %v12174, 1.0
        %v12295 = vadd.f32 %v12176, 1.0
        %v12296 = vadd.f32 %v12178, 1.0
        %v12297 = vadd.f32 %v12180, 1.0
        %v12298 = vadd.f32 %v12182, 1.0
        %v12299 = vadd.f32 %v12184, 1.0
        %v12300 = vadd.f32 %v12186, 1.0
        %v12301 = vadd.f32 %v12188, 1.0
        %v12302 = vadd.f32 %v12190, 1.0
        %v12303 = vadd.f32 %v12192, 1.0
        %v12304 = vadd.f32 %v12194, 1.0
        %v12305 = vadd.f32 %v12196, 1.0
        %v12306 = vadd.f32 %v12198, 1.0
        %v12307 = vadd.f32 %v12200, 1.0
        %v12308 = vadd.f32 %v12202, 1.0
        %v12309 = vadd.f32 %v12204, 1.0
        %v12310 = vadd.f32 %v12206, 1.0
        %v12311 = vadd.f32 %v12208, 1.0
        %v12312 = vadd.f32 %v12210, 1.0
        %v12313 = vadd.f32 %v12212, 1.0
        %v12314 = vadd.f32 %v12214, 1.0
        %v12315 = vadd.f32 %v12216, 1.0
        %v12316 = vadd.f32 %v12218, 1.0
        %v12317 = vadd.f32 %v12220, 1.0
        %v12318 = vadd.f32 %v12222, 1.0
        %v12319 = vadd.f32 %v12224, 1.0
        %v12320 = vadd.f32 %v12226, 1.0
        %v12321 = vadd.f32 %v12228, 1.0
        %v12322 = vadd.f32 %v12230, 1.0
        %v12323 = vadd.f32 %v12232, 1.0
        %v12324 = vadd.f32 %v12234, 1.0
        %v12325 = vadd.f32 %v12236, 1.0
        %v12326 = vadd.f32 %v12238, 1.0
        %v12327 = vadd.f32 %v12240, 1.0
        %v12328 = vadd.f32 %v12242, 1.0
        %v12329 = vadd.f32 %v12244, 1.0
        %v12330 = vadd.f32 %v12246, 1.0
        %v12331 = vadd.f32 %v12248, 1.0
        %v12332 = vadd.f32 %v12250, 1.0
        %v12333 = vadd.f32 %v12252, 1.0
        %v12334 = vadd.f32 %v12254, 1.0
        %v12335 = vadd.f32 %v12256, 1.0
        %v12336 = vadd.f32 %v12258, 1.0
        %v12337 = vadd.f32 %v12260, 1.0
        %v12338 = vadd.f32 %v12262, 1.0
        %v12339 = vadd.f32 %v12264, 1.0
        %v12340 = vadd.f32 %v12266, 1.0
        %v12341 = vadd.f32 %v12268, 1.0
        %v12342 = vadd.f32 %v12270, 1.0
        %v12343 = vadd.f32 %v12272, 1.0
        %v12344 = vadd.f32 %v12274, 1.0
        %v12345 = vadd.f32 %v12276, 1.0
        %v12346 = vadd.f32 %v12278, 1.0
        %v12347 = vadd.f32 %v12280, 1.0
        %v12348 = vadd.f32 %v12282, 1.0
        %v12349 = vadd.f32 %v12284, 1.0
        %v12350 = vadd.f32 %v12286, 1.0
        %v12351 = vrcp.pop %v12287
        %v12352 = vrcp.pop %v12288
        %v12353 = vrcp.pop %v12289
        %v12354 = vrcp.pop %v12290
        %v12355 = vrcp.pop %v12291
        %v12356 = vrcp.pop %v12292
        %v12357 = vrcp.pop %v12293
        %v12358 = vrcp.pop %v12294
        %v12359 = vrcp.pop %v12295
        %v12360 = vrcp.pop %v12296
        %v12361 = vrcp.pop %v12297
        %v12362 = vrcp.pop %v12298
        %v12363 = vrcp.pop %v12299
        %v12364 = vrcp.pop %v12300
        %v12365 = vrcp.pop %v12301
        %v12366 = vrcp.pop %v12302
        %v12367 = vrcp.pop %v12303
        %v12368 = vrcp.pop %v12304
        %v12369 = vrcp.pop %v12305
        %v12370 = vrcp.pop %v12306
        %v12371 = vrcp.pop %v12307
        %v12372 = vrcp.pop %v12308
        %v12373 = vrcp.pop %v12309
        %v12374 = vrcp.pop %v12310
        %v12375 = vrcp.pop %v12311
        %v12376 = vrcp.pop %v12312
        %v12377 = vrcp.pop %v12313
        %v12378 = vrcp.pop %v12314
        %v12379 = vrcp.pop %v12315
        %v12380 = vrcp.pop %v12316
        %v12381 = vrcp.pop %v12317
        %v12382 = vrcp.pop %v12318
        %v12383 = vrcp.pop %v12319
        %v12384 = vrcp.pop %v12320
        %v12385 = vrcp.pop %v12321
        %v12386 = vrcp.pop %v12322
        %v12387 = vrcp.pop %v12323
        %v12388 = vrcp.pop %v12324
        %v12389 = vrcp.pop %v12325
        %v12390 = vrcp.pop %v12326
        %v12391 = vrcp.pop %v12327
        %v12392 = vrcp.pop %v12328
        %v12393 = vrcp.pop %v12329
        %v12394 = vrcp.pop %v12330
        %v12395 = vrcp.pop %v12331
        %v12396 = vrcp.pop %v12332
        %v12397 = vrcp.pop %v12333
        %v12398 = vrcp.pop %v12334
        %v12399 = vrcp.pop %v12335
        %v12400 = vrcp.pop %v12336
        %v12401 = vrcp.pop %v12337
        %v12402 = vrcp.pop %v12338
        %v12403 = vrcp.pop %v12339
        %v12404 = vrcp.pop %v12340
        %v12405 = vrcp.pop %v12341
        %v12406 = vrcp.pop %v12342
        %v12407 = vrcp.pop %v12343
        %v12408 = vrcp.pop %v12344
        %v12409 = vrcp.pop %v12345
        %v12410 = vrcp.pop %v12346
        %v12411 = vrcp.pop %v12347
        %v12412 = vrcp.pop %v12348
        %v12413 = vrcp.pop %v12349
        %v12414 = vrcp.pop %v12350
        %v12415 = vsel %vm1705, %v12351, 0.0
        %v12416 = vrot.slane %v12415, 4
        %v12417 = vadd.f32 %v12415, %v12416
        %v12418 = vrot.slane %v12417, 2
        %v12419 = vadd.f32 %v12417, %v12418
        %v12420 = vrot.slane %v12419, 1
        %v12421 = vadd.f32 %v12419, %v12420
        %v12422 = vsel %vm1705, %v12352, 0.0
        %v12423 = vrot.slane %v12422, 4
        %v12424 = vadd.f32 %v12422, %v12423
        %v12425 = vrot.slane %v12424, 2
        %v12426 = vadd.f32 %v12424, %v12425
        %v12427 = vrot.slane %v12426, 1
        %v12428 = vadd.f32 %v12426, %v12427
        %v12429 = vsel %vm1705, %v12353, 0.0
        %v12430 = vrot.slane %v12429, 4
        %v12431 = vadd.f32 %v12429, %v12430
        %v12432 = vrot.slane %v12431, 2
        %v12433 = vadd.f32 %v12431, %v12432
        %v12434 = vrot.slane %v12433, 1
        %v12435 = vadd.f32 %v12433, %v12434
        %v12436 = vsel %vm1705, %v12354, 0.0
        %v12437 = vrot.slane %v12436, 4
        %v12438 = vadd.f32 %v12436, %v12437
        %v12439 = vrot.slane %v12438, 2
        %v12440 = vadd.f32 %v12438, %v12439
        %v12441 = vrot.slane %v12440, 1
        %v12442 = vadd.f32 %v12440, %v12441
        %v12443 = vsel %vm1705, %v12355, 0.0
        %v12444 = vrot.slane %v12443, 4
        %v12445 = vadd.f32 %v12443, %v12444
        %v12446 = vrot.slane %v12445, 2
        %v12447 = vadd.f32 %v12445, %v12446
        %v12448 = vrot.slane %v12447, 1
        %v12449 = vadd.f32 %v12447, %v12448
        %v12450 = vsel %vm1705, %v12356, 0.0
        %v12451 = vrot.slane %v12450, 4
        %v12452 = vadd.f32 %v12450, %v12451
        %v12453 = vrot.slane %v12452, 2
        %v12454 = vadd.f32 %v12452, %v12453
        %v12455 = vrot.slane %v12454, 1
        %v12456 = vadd.f32 %v12454, %v12455
        %v12457 = vsel %vm1705, %v12357, 0.0
        %v12458 = vrot.slane %v12457, 4
        %v12459 = vadd.f32 %v12457, %v12458
        %v12460 = vrot.slane %v12459, 2
        %v12461 = vadd.f32 %v12459, %v12460
        %v12462 = vrot.slane %v12461, 1
        %v12463 = vadd.f32 %v12461, %v12462
        %v12464 = vsel %vm1705, %v12358, 0.0
        %v12465 = vrot.slane %v12464, 4
        %v12466 = vadd.f32 %v12464, %v12465
        %v12467 = vrot.slane %v12466, 2
        %v12468 = vadd.f32 %v12466, %v12467
        %v12469 = vrot.slane %v12468, 1
        %v12470 = vadd.f32 %v12468, %v12469
        %v12471 = vsel %vm1705, %v12359, 0.0
        %v12472 = vrot.slane %v12471, 4
        %v12473 = vadd.f32 %v12471, %v12472
        %v12474 = vrot.slane %v12473, 2
        %v12475 = vadd.f32 %v12473, %v12474
        %v12476 = vrot.slane %v12475, 1
        %v12477 = vadd.f32 %v12475, %v12476
        %v12478 = vsel %vm1705, %v12360, 0.0
        %v12479 = vrot.slane %v12478, 4
        %v12480 = vadd.f32 %v12478, %v12479
        %v12481 = vrot.slane %v12480, 2
        %v12482 = vadd.f32 %v12480, %v12481
        %v12483 = vrot.slane %v12482, 1
        %v12484 = vadd.f32 %v12482, %v12483
        %v12485 = vsel %vm1705, %v12361, 0.0
        %v12486 = vrot.slane %v12485, 4
        %v12487 = vadd.f32 %v12485, %v12486
        %v12488 = vrot.slane %v12487, 2
        %v12489 = vadd.f32 %v12487, %v12488
        %v12490 = vrot.slane %v12489, 1
        %v12491 = vadd.f32 %v12489, %v12490
        %v12492 = vsel %vm1705, %v12362, 0.0
        %v12493 = vrot.slane %v12492, 4
        %v12494 = vadd.f32 %v12492, %v12493
        %v12495 = vrot.slane %v12494, 2
        %v12496 = vadd.f32 %v12494, %v12495
        %v12497 = vrot.slane %v12496, 1
        %v12498 = vadd.f32 %v12496, %v12497
        %v12499 = vsel %vm1705, %v12363, 0.0
        %v12500 = vrot.slane %v12499, 4
        %v12501 = vadd.f32 %v12499, %v12500
        %v12502 = vrot.slane %v12501, 2
        %v12503 = vadd.f32 %v12501, %v12502
        %v12504 = vrot.slane %v12503, 1
        %v12505 = vadd.f32 %v12503, %v12504
        %v12506 = vsel %vm1705, %v12364, 0.0
        %v12507 = vrot.slane %v12506, 4
        %v12508 = vadd.f32 %v12506, %v12507
        %v12509 = vrot.slane %v12508, 2
        %v12510 = vadd.f32 %v12508, %v12509
        %v12511 = vrot.slane %v12510, 1
        %v12512 = vadd.f32 %v12510, %v12511
        %v12513 = vsel %vm1705, %v12365, 0.0
        %v12514 = vrot.slane %v12513, 4
        %v12515 = vadd.f32 %v12513, %v12514
        %v12516 = vrot.slane %v12515, 2
        %v12517 = vadd.f32 %v12515, %v12516
        %v12518 = vrot.slane %v12517, 1
        %v12519 = vadd.f32 %v12517, %v12518
        %v12520 = vsel %vm1705, %v12366, 0.0
        %v12521 = vrot.slane %v12520, 4
        %v12522 = vadd.f32 %v12520, %v12521
        %v12523 = vrot.slane %v12522, 2
        %v12524 = vadd.f32 %v12522, %v12523
        %v12525 = vrot.slane %v12524, 1
        %v12526 = vadd.f32 %v12524, %v12525
        %v12527 = vsel %vm1705, %v12367, 0.0
        %v12528 = vrot.slane %v12527, 4
        %v12529 = vadd.f32 %v12527, %v12528
        %v12530 = vrot.slane %v12529, 2
        %v12531 = vadd.f32 %v12529, %v12530
        %v12532 = vrot.slane %v12531, 1
        %v12533 = vadd.f32 %v12531, %v12532
        %v12534 = vsel %vm1705, %v12368, 0.0
        %v12535 = vrot.slane %v12534, 4
        %v12536 = vadd.f32 %v12534, %v12535
        %v12537 = vrot.slane %v12536, 2
        %v12538 = vadd.f32 %v12536, %v12537
        %v12539 = vrot.slane %v12538, 1
        %v12540 = vadd.f32 %v12538, %v12539
        %v12541 = vsel %vm1705, %v12369, 0.0
        %v12542 = vrot.slane %v12541, 4
        %v12543 = vadd.f32 %v12541, %v12542
        %v12544 = vrot.slane %v12543, 2
        %v12545 = vadd.f32 %v12543, %v12544
        %v12546 = vrot.slane %v12545, 1
        %v12547 = vadd.f32 %v12545, %v12546
        %v12548 = vsel %vm1705, %v12370, 0.0
        %v12549 = vrot.slane %v12548, 4
        %v12550 = vadd.f32 %v12548, %v12549
        %v12551 = vrot.slane %v12550, 2
        %v12552 = vadd.f32 %v12550, %v12551
        %v12553 = vrot.slane %v12552, 1
        %v12554 = vadd.f32 %v12552, %v12553
        %v12555 = vsel %vm1705, %v12371, 0.0
        %v12556 = vrot.slane %v12555, 4
        %v12557 = vadd.f32 %v12555, %v12556
        %v12558 = vrot.slane %v12557, 2
        %v12559 = vadd.f32 %v12557, %v12558
        %v12560 = vrot.slane %v12559, 1
        %v12561 = vadd.f32 %v12559, %v12560
        %v12562 = vsel %vm1705, %v12372, 0.0
        %v12563 = vrot.slane %v12562, 4
        %v12564 = vadd.f32 %v12562, %v12563
        %v12565 = vrot.slane %v12564, 2
        %v12566 = vadd.f32 %v12564, %v12565
        %v12567 = vrot.slane %v12566, 1
        %v12568 = vadd.f32 %v12566, %v12567
        %v12569 = vsel %vm1705, %v12373, 0.0
        %v12570 = vrot.slane %v12569, 4
        %v12571 = vadd.f32 %v12569, %v12570
        %v12572 = vrot.slane %v12571, 2
        %v12573 = vadd.f32 %v12571, %v12572
        %v12574 = vrot.slane %v12573, 1
        %v12575 = vadd.f32 %v12573, %v12574
        %v12576 = vsel %vm1705, %v12374, 0.0
        %v12577 = vrot.slane %v12576, 4
        %v12578 = vadd.f32 %v12576, %v12577
        %v12579 = vrot.slane %v12578, 2
        %v12580 = vadd.f32 %v12578, %v12579
        %v12581 = vrot.slane %v12580, 1
        %v12582 = vadd.f32 %v12580, %v12581
        %v12583 = vsel %vm1705, %v12375, 0.0
        %v12584 = vrot.slane %v12583, 4
        %v12585 = vadd.f32 %v12583, %v12584
        %v12586 = vrot.slane %v12585, 2
        %v12587 = vadd.f32 %v12585, %v12586
        %v12588 = vrot.slane %v12587, 1
        %v12589 = vadd.f32 %v12587, %v12588
        %v12590 = vsel %vm1705, %v12376, 0.0
        %v12591 = vrot.slane %v12590, 4
        %v12592 = vadd.f32 %v12590, %v12591
        %v12593 = vrot.slane %v12592, 2
        %v12594 = vadd.f32 %v12592, %v12593
        %v12595 = vrot.slane %v12594, 1
        %v12596 = vadd.f32 %v12594, %v12595
        %v12597 = vsel %vm1705, %v12377, 0.0
        %v12598 = vrot.slane %v12597, 4
        %v12599 = vadd.f32 %v12597, %v12598
        %v12600 = vrot.slane %v12599, 2
        %v12601 = vadd.f32 %v12599, %v12600
        %v12602 = vrot.slane %v12601, 1
        %v12603 = vadd.f32 %v12601, %v12602
        %v12604 = vsel %vm1705, %v12378, 0.0
        %v12605 = vrot.slane %v12604, 4
        %v12606 = vadd.f32 %v12604, %v12605
        %v12607 = vrot.slane %v12606, 2
        %v12608 = vadd.f32 %v12606, %v12607
        %v12609 = vrot.slane %v12608, 1
        %v12610 = vadd.f32 %v12608, %v12609
        %v12611 = vsel %vm1705, %v12379, 0.0
        %v12612 = vrot.slane %v12611, 4
        %v12613 = vadd.f32 %v12611, %v12612
        %v12614 = vrot.slane %v12613, 2
        %v12615 = vadd.f32 %v12613, %v12614
        %v12616 = vrot.slane %v12615, 1
        %v12617 = vadd.f32 %v12615, %v12616
        %v12618 = vsel %vm1705, %v12380, 0.0
        %v12619 = vrot.slane %v12618, 4
        %v12620 = vadd.f32 %v12618, %v12619
        %v12621 = vrot.slane %v12620, 2
        %v12622 = vadd.f32 %v12620, %v12621
        %v12623 = vrot.slane %v12622, 1
        %v12624 = vadd.f32 %v12622, %v12623
        %v12625 = vsel %vm1705, %v12381, 0.0
        %v12626 = vrot.slane %v12625, 4
        %v12627 = vadd.f32 %v12625, %v12626
        %v12628 = vrot.slane %v12627, 2
        %v12629 = vadd.f32 %v12627, %v12628
        %v12630 = vrot.slane %v12629, 1
        %v12631 = vadd.f32 %v12629, %v12630
        %v12632 = vsel %vm1705, %v12382, 0.0
        %v12633 = vrot.slane %v12632, 4
        %v12634 = vadd.f32 %v12632, %v12633
        %v12635 = vrot.slane %v12634, 2
        %v12636 = vadd.f32 %v12634, %v12635
        %v12637 = vrot.slane %v12636, 1
        %v12638 = vadd.f32 %v12636, %v12637
        %v12639 = vsel %vm1705, %v12383, 0.0
        %v12640 = vrot.slane %v12639, 4
        %v12641 = vadd.f32 %v12639, %v12640
        %v12642 = vrot.slane %v12641, 2
        %v12643 = vadd.f32 %v12641, %v12642
        %v12644 = vrot.slane %v12643, 1
        %v12645 = vadd.f32 %v12643, %v12644
        %v12646 = vsel %vm1705, %v12384, 0.0
        %v12647 = vrot.slane %v12646, 4
        %v12648 = vadd.f32 %v12646, %v12647
        %v12649 = vrot.slane %v12648, 2
        %v12650 = vadd.f32 %v12648, %v12649
        %v12651 = vrot.slane %v12650, 1
        %v12652 = vadd.f32 %v12650, %v12651
        %v12653 = vsel %vm1705, %v12385, 0.0
        %v12654 = vrot.slane %v12653, 4
        %v12655 = vadd.f32 %v12653, %v12654
        %v12656 = vrot.slane %v12655, 2
        %v12657 = vadd.f32 %v12655, %v12656
        %v12658 = vrot.slane %v12657, 1
        %v12659 = vadd.f32 %v12657, %v12658
        %v12660 = vsel %vm1705, %v12386, 0.0
        %v12661 = vrot.slane %v12660, 4
        %v12662 = vadd.f32 %v12660, %v12661
        %v12663 = vrot.slane %v12662, 2
        %v12664 = vadd.f32 %v12662, %v12663
        %v12665 = vrot.slane %v12664, 1
        %v12666 = vadd.f32 %v12664, %v12665
        %v12667 = vsel %vm1705, %v12387, 0.0
        %v12668 = vrot.slane %v12667, 4
        %v12669 = vadd.f32 %v12667, %v12668
        %v12670 = vrot.slane %v12669, 2
        %v12671 = vadd.f32 %v12669, %v12670
        %v12672 = vrot.slane %v12671, 1
        %v12673 = vadd.f32 %v12671, %v12672
        %v12674 = vsel %vm1705, %v12388, 0.0
        %v12675 = vrot.slane %v12674, 4
        %v12676 = vadd.f32 %v12674, %v12675
        %v12677 = vrot.slane %v12676, 2
        %v12678 = vadd.f32 %v12676, %v12677
        %v12679 = vrot.slane %v12678, 1
        %v12680 = vadd.f32 %v12678, %v12679
        %v12681 = vsel %vm1705, %v12389, 0.0
        %v12682 = vrot.slane %v12681, 4
        %v12683 = vadd.f32 %v12681, %v12682
        %v12684 = vrot.slane %v12683, 2
        %v12685 = vadd.f32 %v12683, %v12684
        %v12686 = vrot.slane %v12685, 1
        %v12687 = vadd.f32 %v12685, %v12686
        %v12688 = vsel %vm1705, %v12390, 0.0
        %v12689 = vrot.slane %v12688, 4
        %v12690 = vadd.f32 %v12688, %v12689
        %v12691 = vrot.slane %v12690, 2
        %v12692 = vadd.f32 %v12690, %v12691
        %v12693 = vrot.slane %v12692, 1
        %v12694 = vadd.f32 %v12692, %v12693
        %v12695 = vsel %vm1705, %v12391, 0.0
        %v12696 = vrot.slane %v12695, 4
        %v12697 = vadd.f32 %v12695, %v12696
        %v12698 = vrot.slane %v12697, 2
        %v12699 = vadd.f32 %v12697, %v12698
        %v12700 = vrot.slane %v12699, 1
        %v12701 = vadd.f32 %v12699, %v12700
        %v12702 = vsel %vm1705, %v12392, 0.0
        %v12703 = vrot.slane %v12702, 4
        %v12704 = vadd.f32 %v12702, %v12703
        %v12705 = vrot.slane %v12704, 2
        %v12706 = vadd.f32 %v12704, %v12705
        %v12707 = vrot.slane %v12706, 1
        %v12708 = vadd.f32 %v12706, %v12707
        %v12709 = vsel %vm1705, %v12393, 0.0
        %v12710 = vrot.slane %v12709, 4
        %v12711 = vadd.f32 %v12709, %v12710
        %v12712 = vrot.slane %v12711, 2
        %v12713 = vadd.f32 %v12711, %v12712
        %v12714 = vrot.slane %v12713, 1
        %v12715 = vadd.f32 %v12713, %v12714
        %v12716 = vsel %vm1705, %v12394, 0.0
        %v12717 = vrot.slane %v12716, 4
        %v12718 = vadd.f32 %v12716, %v12717
        %v12719 = vrot.slane %v12718, 2
        %v12720 = vadd.f32 %v12718, %v12719
        %v12721 = vrot.slane %v12720, 1
        %v12722 = vadd.f32 %v12720, %v12721
        %v12723 = vsel %vm1705, %v12395, 0.0
        %v12724 = vrot.slane %v12723, 4
        %v12725 = vadd.f32 %v12723, %v12724
        %v12726 = vrot.slane %v12725, 2
        %v12727 = vadd.f32 %v12725, %v12726
        %v12728 = vrot.slane %v12727, 1
        %v12729 = vadd.f32 %v12727, %v12728
        %v12730 = vsel %vm1705, %v12396, 0.0
        %v12731 = vrot.slane %v12730, 4
        %v12732 = vadd.f32 %v12730, %v12731
        %v12733 = vrot.slane %v12732, 2
        %v12734 = vadd.f32 %v12732, %v12733
        %v12735 = vrot.slane %v12734, 1
        %v12736 = vadd.f32 %v12734, %v12735
        %v12737 = vsel %vm1705, %v12397, 0.0
        %v12738 = vrot.slane %v12737, 4
        %v12739 = vadd.f32 %v12737, %v12738
        %v12740 = vrot.slane %v12739, 2
        %v12741 = vadd.f32 %v12739, %v12740
        %v12742 = vrot.slane %v12741, 1
        %v12743 = vadd.f32 %v12741, %v12742
        %v12744 = vsel %vm1705, %v12398, 0.0
        %v12745 = vrot.slane %v12744, 4
        %v12746 = vadd.f32 %v12744, %v12745
        %v12747 = vrot.slane %v12746, 2
        %v12748 = vadd.f32 %v12746, %v12747
        %v12749 = vrot.slane %v12748, 1
        %v12750 = vadd.f32 %v12748, %v12749
        %v12751 = vsel %vm1705, %v12399, 0.0
        %v12752 = vrot.slane %v12751, 4
        %v12753 = vadd.f32 %v12751, %v12752
        %v12754 = vrot.slane %v12753, 2
        %v12755 = vadd.f32 %v12753, %v12754
        %v12756 = vrot.slane %v12755, 1
        %v12757 = vadd.f32 %v12755, %v12756
        %v12758 = vsel %vm1705, %v12400, 0.0
        %v12759 = vrot.slane %v12758, 4
        %v12760 = vadd.f32 %v12758, %v12759
        %v12761 = vrot.slane %v12760, 2
        %v12762 = vadd.f32 %v12760, %v12761
        %v12763 = vrot.slane %v12762, 1
        %v12764 = vadd.f32 %v12762, %v12763
        %v12765 = vsel %vm1705, %v12401, 0.0
        %v12766 = vrot.slane %v12765, 4
        %v12767 = vadd.f32 %v12765, %v12766
        %v12768 = vrot.slane %v12767, 2
        %v12769 = vadd.f32 %v12767, %v12768
        %v12770 = vrot.slane %v12769, 1
        %v12771 = vadd.f32 %v12769, %v12770
        %v12772 = vsel %vm1705, %v12402, 0.0
        %v12773 = vrot.slane %v12772, 4
        %v12774 = vadd.f32 %v12772, %v12773
        %v12775 = vrot.slane %v12774, 2
        %v12776 = vadd.f32 %v12774, %v12775
        %v12777 = vrot.slane %v12776, 1
        %v12778 = vadd.f32 %v12776, %v12777
        %v12779 = vsel %vm1705, %v12403, 0.0
        %v12780 = vrot.slane %v12779, 4
        %v12781 = vadd.f32 %v12779, %v12780
        %v12782 = vrot.slane %v12781, 2
        %v12783 = vadd.f32 %v12781, %v12782
        %v12784 = vrot.slane %v12783, 1
        %v12785 = vadd.f32 %v12783, %v12784
        %v12786 = vsel %vm1705, %v12404, 0.0
        %v12787 = vrot.slane %v12786, 4
        %v12788 = vadd.f32 %v12786, %v12787
        %v12789 = vrot.slane %v12788, 2
        %v12790 = vadd.f32 %v12788, %v12789
        %v12791 = vrot.slane %v12790, 1
        %v12792 = vadd.f32 %v12790, %v12791
        %v12793 = vsel %vm1705, %v12405, 0.0
        %v12794 = vrot.slane %v12793, 4
        %v12795 = vadd.f32 %v12793, %v12794
        %v12796 = vrot.slane %v12795, 2
        %v12797 = vadd.f32 %v12795, %v12796
        %v12798 = vrot.slane %v12797, 1
        %v12799 = vadd.f32 %v12797, %v12798
        %v12800 = vsel %vm1705, %v12406, 0.0
        %v12801 = vrot.slane %v12800, 4
        %v12802 = vadd.f32 %v12800, %v12801
        %v12803 = vrot.slane %v12802, 2
        %v12804 = vadd.f32 %v12802, %v12803
        %v12805 = vrot.slane %v12804, 1
        %v12806 = vadd.f32 %v12804, %v12805
        %v12807 = vsel %vm1705, %v12407, 0.0
        %v12808 = vrot.slane %v12807, 4
        %v12809 = vadd.f32 %v12807, %v12808
        %v12810 = vrot.slane %v12809, 2
        %v12811 = vadd.f32 %v12809, %v12810
        %v12812 = vrot.slane %v12811, 1
        %v12813 = vadd.f32 %v12811, %v12812
        %v12814 = vsel %vm1705, %v12408, 0.0
        %v12815 = vrot.slane %v12814, 4
        %v12816 = vadd.f32 %v12814, %v12815
        %v12817 = vrot.slane %v12816, 2
        %v12818 = vadd.f32 %v12816, %v12817
        %v12819 = vrot.slane %v12818, 1
        %v12820 = vadd.f32 %v12818, %v12819
        %v12821 = vsel %vm1705, %v12409, 0.0
        %v12822 = vrot.slane %v12821, 4
        %v12823 = vadd.f32 %v12821, %v12822
        %v12824 = vrot.slane %v12823, 2
        %v12825 = vadd.f32 %v12823, %v12824
        %v12826 = vrot.slane %v12825, 1
        %v12827 = vadd.f32 %v12825, %v12826
        %v12828 = vsel %vm1705, %v12410, 0.0
        %v12829 = vrot.slane %v12828, 4
        %v12830 = vadd.f32 %v12828, %v12829
        %v12831 = vrot.slane %v12830, 2
        %v12832 = vadd.f32 %v12830, %v12831
        %v12833 = vrot.slane %v12832, 1
        %v12834 = vadd.f32 %v12832, %v12833
        %v12835 = vsel %vm1705, %v12411, 0.0
        %v12836 = vrot.slane %v12835, 4
        %v12837 = vadd.f32 %v12835, %v12836
        %v12838 = vrot.slane %v12837, 2
        %v12839 = vadd.f32 %v12837, %v12838
        %v12840 = vrot.slane %v12839, 1
        %v12841 = vadd.f32 %v12839, %v12840
        %v12842 = vsel %vm1705, %v12412, 0.0
        %v12843 = vrot.slane %v12842, 4
        %v12844 = vadd.f32 %v12842, %v12843
        %v12845 = vrot.slane %v12844, 2
        %v12846 = vadd.f32 %v12844, %v12845
        %v12847 = vrot.slane %v12846, 1
        %v12848 = vadd.f32 %v12846, %v12847
        %v12849 = vsel %vm1705, %v12413, 0.0
        %v12850 = vrot.slane %v12849, 4
        %v12851 = vadd.f32 %v12849, %v12850
        %v12852 = vrot.slane %v12851, 2
        %v12853 = vadd.f32 %v12851, %v12852
        %v12854 = vrot.slane %v12853, 1
        %v12855 = vadd.f32 %v12853, %v12854
        %v12856 = vsel %vm1705, %v12414, 0.0
        %v12857 = vrot.slane %v12856, 4
        %v12858 = vadd.f32 %v12856, %v12857
        %v12859 = vrot.slane %v12858, 2
        %v12860 = vadd.f32 %v12858, %v12859
        %v12861 = vrot.slane %v12860, 1
        %v12862 = vadd.f32 %v12860, %v12861
        %v12863 = vld [vmem:[%s6] sm:$0xf]
        %v12864 = vld [vmem:[%s6 + $0x4] sm:$0xf]
        %v12865 = vpack.c.bf16 %v12421, %v12421
        %v12866 = vpack.c.bf16 %v12428, %v12428
        %v12867 = vpack.c.bf16 %v12435, %v12435
        %v12868 = vpack.c.bf16 %v12442, %v12442
        %v12869 = vpack.c.bf16 %v12449, %v12449
        %v12870 = vpack.c.bf16 %v12456, %v12456
        %v12871 = vpack.c.bf16 %v12463, %v12463
        %v12872 = vpack.c.bf16 %v12470, %v12470
        %v12873 = vpack.c.bf16 %v12477, %v12477
        %v12874 = vpack.c.bf16 %v12484, %v12484
        %v12875 = vpack.c.bf16 %v12491, %v12491
        %v12876 = vpack.c.bf16 %v12498, %v12498
        %v12877 = vpack.c.bf16 %v12505, %v12505
        %v12878 = vpack.c.bf16 %v12512, %v12512
        %v12879 = vpack.c.bf16 %v12519, %v12519
        %v12880 = vpack.c.bf16 %v12526, %v12526
        %v12881 = vpack.c.bf16 %v12533, %v12533
        %v12882 = vpack.c.bf16 %v12540, %v12540
        %v12883 = vpack.c.bf16 %v12547, %v12547
        %v12884 = vpack.c.bf16 %v12554, %v12554
        %v12885 = vpack.c.bf16 %v12561, %v12561
        %v12886 = vpack.c.bf16 %v12568, %v12568
        %v12887 = vpack.c.bf16 %v12575, %v12575
        %v12888 = vpack.c.bf16 %v12582, %v12582
        %v12889 = vpack.c.bf16 %v12589, %v12589
        %v12890 = vpack.c.bf16 %v12596, %v12596
        %v12891 = vpack.c.bf16 %v12603, %v12603
        %v12892 = vpack.c.bf16 %v12610, %v12610
        %v12893 = vpack.c.bf16 %v12617, %v12617
        %v12894 = vpack.c.bf16 %v12624, %v12624
        %v12895 = vpack.c.bf16 %v12631, %v12631
        %v12896 = vpack.c.bf16 %v12638, %v12638
        %v12897 = vpack.c.bf16 %v12645, %v12645
        %v12898 = vpack.c.bf16 %v12652, %v12652
        %v12899 = vpack.c.bf16 %v12659, %v12659
        %v12900 = vpack.c.bf16 %v12666, %v12666
        %v12901 = vpack.c.bf16 %v12673, %v12673
        %v12902 = vpack.c.bf16 %v12680, %v12680
        %v12903 = vpack.c.bf16 %v12687, %v12687
        %v12904 = vpack.c.bf16 %v12694, %v12694
        %v12905 = vpack.c.bf16 %v12701, %v12701
        %v12906 = vpack.c.bf16 %v12708, %v12708
        %v12907 = vpack.c.bf16 %v12715, %v12715
        %v12908 = vpack.c.bf16 %v12722, %v12722
        %v12909 = vpack.c.bf16 %v12729, %v12729
        %v12910 = vpack.c.bf16 %v12736, %v12736
        %v12911 = vpack.c.bf16 %v12743, %v12743
        %v12912 = vpack.c.bf16 %v12750, %v12750
        %v12913 = vpack.c.bf16 %v12757, %v12757
        %v12914 = vpack.c.bf16 %v12764, %v12764
        %v12915 = vpack.c.bf16 %v12771, %v12771
        %v12916 = vpack.c.bf16 %v12778, %v12778
        %v12917 = vpack.c.bf16 %v12785, %v12785
        %v12918 = vpack.c.bf16 %v12792, %v12792
        %v12919 = vpack.c.bf16 %v12799, %v12799
        %v12920 = vpack.c.bf16 %v12806, %v12806
        %v12921 = vpack.c.bf16 %v12813, %v12813
        %v12922 = vpack.c.bf16 %v12820, %v12820
        %v12923 = vpack.c.bf16 %v12827, %v12827
        %v12924 = vpack.c.bf16 %v12834, %v12834
        %v12925 = vpack.c.bf16 %v12841, %v12841
        %v12926 = vpack.c.bf16 %v12848, %v12848
        %v12927 = vpack.c.bf16 %v12855, %v12855
        %v12928 = vpack.c.bf16 %v12862, %v12862
        %v12929 = vld [vmem:[%s7] sm:$0xf]
        %v12930 = vld [vmem:[%s7 + $0x4] sm:$0xf]
        %v12931 = vld [vmem:[%s7 + $0x8] sm:$0xf]
        %v12932 = vld [vmem:[%s7 + $0xc] sm:$0xf]
        %v12997 = vunpack.c.l.b16 %v12865
        %v12998 = vunpack.c.l.b16 %v12866
        %v12999 = vunpack.c.l.b16 %v12867
        %v13000 = vunpack.c.l.b16 %v12868
        %v13001 = vunpack.c.l.b16 %v12869
        %v13002 = vunpack.c.l.b16 %v12870
        %v13003 = vunpack.c.l.b16 %v12871
        %v13004 = vunpack.c.l.b16 %v12872
        %v13005 = vunpack.c.l.b16 %v12873
        %v13006 = vunpack.c.l.b16 %v12874
        %v13007 = vunpack.c.l.b16 %v12875
        %v13008 = vunpack.c.l.b16 %v12876
        %v13009 = vunpack.c.l.b16 %v12877
        %v13010 = vunpack.c.l.b16 %v12878
        %v13011 = vunpack.c.l.b16 %v12879
        %v13012 = vunpack.c.l.b16 %v12880
        %v13013 = vunpack.c.l.b16 %v12881
        %v13014 = vunpack.c.l.b16 %v12882
        %v13015 = vunpack.c.l.b16 %v12883
        %v13016 = vunpack.c.l.b16 %v12884
        %v13017 = vunpack.c.l.b16 %v12885
        %v13018 = vunpack.c.l.b16 %v12886
        %v13019 = vunpack.c.l.b16 %v12887
        %v13020 = vunpack.c.l.b16 %v12888
        %v13021 = vunpack.c.l.b16 %v12889
        %v13022 = vunpack.c.l.b16 %v12890
        %v13023 = vunpack.c.l.b16 %v12891
        %v13024 = vunpack.c.l.b16 %v12892
        %v13025 = vunpack.c.l.b16 %v12893
        %v13026 = vunpack.c.l.b16 %v12894
        %v13027 = vunpack.c.l.b16 %v12895
        %v13028 = vunpack.c.l.b16 %v12896
        %v13029 = vunpack.c.l.b16 %v12897
        %v13030 = vunpack.c.l.b16 %v12898
        %v13031 = vunpack.c.l.b16 %v12899
        %v13032 = vunpack.c.l.b16 %v12900
        %v13033 = vunpack.c.l.b16 %v12901
        %v13034 = vunpack.c.l.b16 %v12902
        %v13035 = vunpack.c.l.b16 %v12903
        %v13036 = vunpack.c.l.b16 %v12904
        %v13037 = vunpack.c.l.b16 %v12905
        %v13038 = vunpack.c.l.b16 %v12906
        %v13039 = vunpack.c.l.b16 %v12907
        %v13040 = vunpack.c.l.b16 %v12908
        %v13041 = vunpack.c.l.b16 %v12909
        %v13042 = vunpack.c.l.b16 %v12910
        %v13043 = vunpack.c.l.b16 %v12911
        %v13044 = vunpack.c.l.b16 %v12912
        %v13045 = vunpack.c.l.b16 %v12913
        %v13046 = vunpack.c.l.b16 %v12914
        %v13047 = vunpack.c.l.b16 %v12915
        %v13048 = vunpack.c.l.b16 %v12916
        %v13049 = vunpack.c.l.b16 %v12917
        %v13050 = vunpack.c.l.b16 %v12918
        %v13051 = vunpack.c.l.b16 %v12919
        %v13052 = vunpack.c.l.b16 %v12920
        %v13053 = vunpack.c.l.b16 %v12921
        %v13054 = vunpack.c.l.b16 %v12922
        %v13055 = vunpack.c.l.b16 %v12923
        %v13056 = vunpack.c.l.b16 %v12924
        %v13057 = vunpack.c.l.b16 %v12925
        %v13058 = vunpack.c.l.b16 %v12926
        %v13059 = vunpack.c.l.b16 %v12927
        %v13060 = vunpack.c.l.b16 %v12928
        %v13061 = vsel %vm5227, %v12998, %v12997
        %v13062 = vsel %vm5230, %v12999, %v13061
        %v13063 = vsel %vm5233, %v13000, %v13062
        %v13064 = vsel %vm5236, %v13001, %v13063
        %v13065 = vsel %vm5239, %v13002, %v13064
        %v13066 = vsel %vm5242, %v13003, %v13065
        %v13067 = vsel %vm5245, %v13004, %v13066
        %v13068 = vsel %vm5227, %v13006, %v13005
        %v13069 = vsel %vm5230, %v13007, %v13068
        %v13070 = vsel %vm5233, %v13008, %v13069
        %v13071 = vsel %vm5236, %v13009, %v13070
        %v13072 = vsel %vm5239, %v13010, %v13071
        %v13073 = vsel %vm5242, %v13011, %v13072
        %v13074 = vsel %vm5245, %v13012, %v13073
        %v13075 = vsel %vm5227, %v13014, %v13013
        %v13076 = vsel %vm5230, %v13015, %v13075
        %v13077 = vsel %vm5233, %v13016, %v13076
        %v13078 = vsel %vm5236, %v13017, %v13077
        %v13079 = vsel %vm5239, %v13018, %v13078
        %v13080 = vsel %vm5242, %v13019, %v13079
        %v13081 = vsel %vm5245, %v13020, %v13080
        %v13082 = vsel %vm5227, %v13022, %v13021
        %v13083 = vsel %vm5230, %v13023, %v13082
        %v13084 = vsel %vm5233, %v13024, %v13083
        %v13085 = vsel %vm5236, %v13025, %v13084
        %v13086 = vsel %vm5239, %v13026, %v13085
        %v13087 = vsel %vm5242, %v13027, %v13086
        %v13088 = vsel %vm5245, %v13028, %v13087
        %v13089 = vsel %vm5227, %v13030, %v13029
        %v13090 = vsel %vm5230, %v13031, %v13089
        %v13091 = vsel %vm5233, %v13032, %v13090
        %v13092 = vsel %vm5236, %v13033, %v13091
        %v13093 = vsel %vm5239, %v13034, %v13092
        %v13094 = vsel %vm5242, %v13035, %v13093
        %v13095 = vsel %vm5245, %v13036, %v13094
        %v13096 = vsel %vm5227, %v13038, %v13037
        %v13097 = vsel %vm5230, %v13039, %v13096
        %v13098 = vsel %vm5233, %v13040, %v13097
        %v13099 = vsel %vm5236, %v13041, %v13098
        %v13100 = vsel %vm5239, %v13042, %v13099
        %v13101 = vsel %vm5242, %v13043, %v13100
        %v13102 = vsel %vm5245, %v13044, %v13101
        %v13103 = vsel %vm5227, %v13046, %v13045
        %v13104 = vsel %vm5230, %v13047, %v13103
        %v13105 = vsel %vm5233, %v13048, %v13104
        %v13106 = vsel %vm5236, %v13049, %v13105
        %v13107 = vsel %vm5239, %v13050, %v13106
        %v13108 = vsel %vm5242, %v13051, %v13107
        %v13109 = vsel %vm5245, %v13052, %v13108
        %v13110 = vsel %vm5227, %v13054, %v13053
        %v13111 = vsel %vm5230, %v13055, %v13110
        %v13112 = vsel %vm5233, %v13056, %v13111
        %v13113 = vsel %vm5236, %v13057, %v13112
        %v13114 = vsel %vm5239, %v13058, %v13113
        %v13115 = vsel %vm5242, %v13059, %v13114
        %v13116 = vsel %vm5245, %v13060, %v13115
        %v13117 = vpack.c.b16 %v13074, %v13067
        %v13118 = vpack.c.b16 %v13088, %v13081
        %v13119 = vpack.c.b16 %v13102, %v13095
        %v13120 = vpack.c.b16 %v13116, %v13109
        %v13125 = vunpack.c.l.b16 %v12929
        %v13126 = vunpack.c.l.b16 %v12930
        %v13127 = vunpack.c.l.b16 %v12931
        %v13128 = vunpack.c.l.b16 %v12932
        %v13129 = vpack.c.b16 %v13126, %v13125
        %v13130 = vpack.c.b16 %v13128, %v13127
        %v13134 = vsel %vm1705, %v13117, 0
        %v13137 = vsel %vm1705, %v13118, 0
        %v13140 = vsel %vm1705, %v13119, 0
        %v13143 = vsel %vm1705, %v13120, 0
        %13145 = vmatprep.subr.bf16.mxu0 0
        %13146 = vmatpush1.bf16.msra.mxu0 %v13129
        %13147 = vmatprep.subr.bf16.mxu0 0
        %13148 = vmatpush1.bf16.msra.mxu0 %v13130
        %13149 = vmatprep.subr.bf16.mxu0 0
        %13150 = vmatpush1.bf16.msra.mxu0 0
        %13151 = vmatprep.subr.bf16.mxu0 0
        %13152 = vmatpush1.bf16.msra.mxu0 0
        %13153 = vmatprep.subr.bf16.mxu0 0
        %13154 = vmatpush1.bf16.msra.mxu0 0
        %13155 = vmatprep.subr.bf16.mxu0 0
        %13156 = vmatpush1.bf16.msra.mxu0 0
        %13157 = vmatprep.subr.bf16.mxu0 0
        %13158 = vmatpush1.bf16.msra.mxu0 0
        %13159 = vmatprep.subr.bf16.mxu0 0
        %13160 = vmatpush1.bf16.msra.mxu0 0
        %13161 = vmatprep.subr.bf16.mxu0 0
        %13162 = vmatpush1.bf16.msra.mxu0 0
        %13163 = vmatprep.subr.bf16.mxu0 0
        %13164 = vmatpush1.bf16.msra.mxu0 0
        %13165 = vmatprep.subr.bf16.mxu0 0
        %13166 = vmatpush1.bf16.msra.mxu0 0
        %13167 = vmatprep.subr.bf16.mxu0 0
        %13168 = vmatpush1.bf16.msra.mxu0 0
        %13169 = vmatprep.subr.bf16.mxu0 0
        %13170 = vmatpush1.bf16.msra.mxu0 0
        %13171 = vmatprep.subr.bf16.mxu0 0
        %13172 = vmatpush1.bf16.msra.mxu0 0
        %13173 = vmatprep.subr.bf16.mxu0 0
        %13174 = vmatpush1.bf16.msra.mxu0 0
        %13175 = vmatprep.subr.bf16.mxu0 0
        %13176 = vmatpush1.bf16.msra.mxu0 0
        %13177 = vmatprep.mubr.bf16.mxu0 0
        %13178 = vmatmul.mubr.bf16.gmra.mrb[0].mxu0 %v13134
        %v13179 = vpop.f32.mrb[0].mxu0
        %v13180 = vadd.f32 0.0, %v13179
        %v13181 = vpop.f32.mrb[0].mxu0
        %v13182 = vpop.f32.mrb[0].mxu0
        %v13183 = vadd.f32 0.0, %v13182
        %v13184 = vpop.f32.mrb[0].mxu0
        %13185 = vmatprep.mubr.bf16.mxu0 0
        %13186 = vmatmul.mubr.bf16.gmra.mrb[0].mxu0 %v13137
        %v13187 = vpop.f32.mrb[0].mxu0
        %v13188 = vadd.f32 0.0, %v13187
        %v13189 = vpop.f32.mrb[0].mxu0
        %v13190 = vpop.f32.mrb[0].mxu0
        %v13191 = vadd.f32 0.0, %v13190
        %v13192 = vpop.f32.mrb[0].mxu0
        %13193 = vmatprep.mubr.bf16.mxu0 0
        %13194 = vmatmul.mubr.bf16.gmra.mrb[0].mxu0 %v13140
        %v13195 = vpop.f32.mrb[0].mxu0
        %v13196 = vadd.f32 0.0, %v13195
        %v13197 = vpop.f32.mrb[0].mxu0
        %v13198 = vpop.f32.mrb[0].mxu0
        %v13199 = vadd.f32 0.0, %v13198
        %v13200 = vpop.f32.mrb[0].mxu0
        %13201 = vmatprep.mubr.bf16.mxu0 0
        %13202 = vmatmul.mubr.bf16.gmra.mrb[0].mxu0 %v13143
        %v13203 = vpop.f32.mrb[0].mxu0
        %v13204 = vadd.f32 0.0, %v13203
        %v13205 = vpop.f32.mrb[0].mxu0
        %v13206 = vpop.f32.mrb[0].mxu0
        %v13207 = vadd.f32 0.0, %v13206
        %v13208 = vpop.f32.mrb[0].mxu0
        %13209 = vdwg.mxu0
        %v13212 = vunpack.c.l.b16 %v12863
        %v13213 = vunpack.c.l.b16 %v12864
        %v13214 = vpack.c.b16 %v13213, %v13212
        %13216 = vmatprep.subr.bf16.mxu0 0
        %13217 = vmatpush1.bf16.msra.mxu0 %v13214
        %13218 = vmatprep.subr.bf16.mxu0 0
        %13219 = vmatpush1.bf16.msra.mxu0 0
        %13220 = vmatprep.subr.bf16.mxu0 0
        %13221 = vmatpush1.bf16.msra.mxu0 0
        %13222 = vmatprep.subr.bf16.mxu0 0
        %13223 = vmatpush1.bf16.msra.mxu0 0
        %13224 = vmatprep.subr.bf16.mxu0 0
        %13225 = vmatpush1.bf16.msra.mxu0 0
        %13226 = vmatprep.subr.bf16.mxu0 0
        %13227 = vmatpush1.bf16.msra.mxu0 0
        %13228 = vmatprep.subr.bf16.mxu0 0
        %13229 = vmatpush1.bf16.msra.mxu0 0
        %13230 = vmatprep.subr.bf16.mxu0 0
        %13231 = vmatpush1.bf16.msra.mxu0 0
        %13232 = vmatprep.subr.bf16.mxu0 0
        %13233 = vmatpush1.bf16.msra.mxu0 0
        %13234 = vmatprep.subr.bf16.mxu0 0
        %13235 = vmatpush1.bf16.msra.mxu0 0
        %13236 = vmatprep.subr.bf16.mxu0 0
        %13237 = vmatpush1.bf16.msra.mxu0 0
        %13238 = vmatprep.subr.bf16.mxu0 0
        %13239 = vmatpush1.bf16.msra.mxu0 0
        %13240 = vmatprep.subr.bf16.mxu0 0
        %13241 = vmatpush1.bf16.msra.mxu0 0
        %13242 = vmatprep.subr.bf16.mxu0 0
        %13243 = vmatpush1.bf16.msra.mxu0 0
        %13244 = vmatprep.subr.bf16.mxu0 0
        %13245 = vmatpush1.bf16.msra.mxu0 0
        %13246 = vmatprep.subr.bf16.mxu0 0
        %13247 = vmatpush1.bf16.msra.mxu0 0
        %13248 = vmatprep.mubr.bf16.mxu0 0
        %13249 = vmatmul.mubr.bf16.gmra.mrb[0].mxu0 %v1046
        %v13250 = vpop.f32.mrb[0].mxu0
        %v13251 = vadd.f32 %v13180, %v13250
        %v13252 = vpop.f32.mrb[0].mxu0
        %v13253 = vpop.f32.mrb[0].mxu0
        %v13254 = vadd.f32 %v13183, %v13253
        %v13255 = vpop.f32.mrb[0].mxu0
        %13256 = vmatprep.mubr.bf16.mxu0 0
        %13257 = vmatmul.mubr.bf16.gmra.mrb[0].mxu0 %v1049
        %v13258 = vpop.f32.mrb[0].mxu0
        %v13259 = vadd.f32 %v13188, %v13258
        %v13260 = vpop.f32.mrb[0].mxu0
        %v13261 = vpop.f32.mrb[0].mxu0
        %v13262 = vadd.f32 %v13191, %v13261
        %v13263 = vpop.f32.mrb[0].mxu0
        %13264 = vmatprep.mubr.bf16.mxu0 0
        %13265 = vmatmul.mubr.bf16.gmra.mrb[0].mxu0 %v1052
        %v13266 = vpop.f32.mrb[0].mxu0
        %v13267 = vadd.f32 %v13196, %v13266
        %v13268 = vpop.f32.mrb[0].mxu0
        %v13269 = vpop.f32.mrb[0].mxu0
        %v13270 = vadd.f32 %v13199, %v13269
        %v13271 = vpop.f32.mrb[0].mxu0
        %13272 = vmatprep.mubr.bf16.mxu0 0
        %13273 = vmatmul.mubr.bf16.gmra.mrb[0].mxu0 %v1055
        %v13274 = vpop.f32.mrb[0].mxu0
        %v13275 = vadd.f32 %v13204, %v13274
        %v13276 = vpop.f32.mrb[0].mxu0
        %v13277 = vpop.f32.mrb[0].mxu0
        %v13278 = vadd.f32 %v13207, %v13277
        %v13279 = vpop.f32.mrb[0].mxu0
        %13280 = vdwg.mxu0
        %v13281 = vld [vmem:[%s8] sm:$0x1]
        %v13283 = vlaneseq
        %v13284 = vshrl.u32 %v13283, 7
        %v13285 = vsub.s32 0, %v13284
        %v13286 = vrot.slane %v13281, %v13285
        %v13288 = vadd.f32 %v13251, %v13286
        %v13289 = vadd.f32 %v13254, %v13286
        %v13290 = vadd.f32 %v13259, %v13286
        %v13291 = vadd.f32 %v13262, %v13286
        %v13292 = vadd.f32 %v13267, %v13286
        %v13293 = vadd.f32 %v13270, %v13286
        %v13294 = vadd.f32 %v13275, %v13286
        %v13295 = vadd.f32 %v13278, %v13286
        %v13296 = vmax.f32 %v13288, 0.0
        %v13297 = vmax.f32 %v13289, 0.0
        %v13298 = vmax.f32 %v13290, 0.0
        %v13299 = vmax.f32 %v13291, 0.0
        %v13300 = vmax.f32 %v13292, 0.0
        %v13301 = vmax.f32 %v13293, 0.0
        %v13302 = vmax.f32 %v13294, 0.0
        %v13303 = vmax.f32 %v13295, 0.0
        %v13304 = vsel %vm1705, %v13296, 0.0
        %v13305 = vrot.slane %v13304, 4
        %v13306 = vadd.f32 %v13304, %v13305
        %v13307 = vrot.slane %v13306, 2
        %v13308 = vadd.f32 %v13306, %v13307
        %v13309 = vrot.slane %v13308, 1
        %v13310 = vadd.f32 %v13308, %v13309
        %v13311 = vsel %vm1705, %v13297, 0.0
        %v13312 = vrot.slane %v13311, 4
        %v13313 = vadd.f32 %v13311, %v13312
        %v13314 = vrot.slane %v13313, 2
        %v13315 = vadd.f32 %v13313, %v13314
        %v13316 = vrot.slane %v13315, 1
        %v13317 = vadd.f32 %v13315, %v13316
        %v13318 = vsel %vm1705, %v13298, 0.0
        %v13319 = vrot.slane %v13318, 4
        %v13320 = vadd.f32 %v13318, %v13319
        %v13321 = vrot.slane %v13320, 2
        %v13322 = vadd.f32 %v13320, %v13321
        %v13323 = vrot.slane %v13322, 1
        %v13324 = vadd.f32 %v13322, %v13323
        %v13325 = vsel %vm1705, %v13299, 0.0
        %v13326 = vrot.slane %v13325, 4
        %v13327 = vadd.f32 %v13325, %v13326
        %v13328 = vrot.slane %v13327, 2
        %v13329 = vadd.f32 %v13327, %v13328
        %v13330 = vrot.slane %v13329, 1
        %v13331 = vadd.f32 %v13329, %v13330
        %v13332 = vsel %vm1705, %v13300, 0.0
        %v13333 = vrot.slane %v13332, 4
        %v13334 = vadd.f32 %v13332, %v13333
        %v13335 = vrot.slane %v13334, 2
        %v13336 = vadd.f32 %v13334, %v13335
        %v13337 = vrot.slane %v13336, 1
        %v13338 = vadd.f32 %v13336, %v13337
        %v13339 = vsel %vm1705, %v13301, 0.0
        %v13340 = vrot.slane %v13339, 4
        %v13341 = vadd.f32 %v13339, %v13340
        %v13342 = vrot.slane %v13341, 2
        %v13343 = vadd.f32 %v13341, %v13342
        %v13344 = vrot.slane %v13343, 1
        %v13345 = vadd.f32 %v13343, %v13344
        %v13346 = vsel %vm1705, %v13302, 0.0
        %v13347 = vrot.slane %v13346, 4
        %v13348 = vadd.f32 %v13346, %v13347
        %v13349 = vrot.slane %v13348, 2
        %v13350 = vadd.f32 %v13348, %v13349
        %v13351 = vrot.slane %v13350, 1
        %v13352 = vadd.f32 %v13350, %v13351
        %v13353 = vsel %vm1705, %v13303, 0.0
        %v13354 = vrot.slane %v13353, 4
        %v13355 = vadd.f32 %v13353, %v13354
        %v13356 = vrot.slane %v13355, 2
        %v13357 = vadd.f32 %v13355, %v13356
        %v13358 = vrot.slane %v13357, 1
        %v13359 = vadd.f32 %v13357, %v13358
        %v13360 = vld [vmem:[%s440] sm:$0xff]
        %13362 = vset.pattern.permute.xlu0 0
        %13363 = vperm.xlu0 %13362, %v13360
        %v13364 = vpop.permute.xlu0 %13363
        %v13365 = vrot.slane %v13364, 1
        %v13366 = vrot.slane %v13364, 2
        %v13367 = vrot.slane %v13364, 3
        %v13368 = vrot.slane %v13364, 4
        %v13369 = vrot.slane %v13364, 5
        %v13370 = vrot.slane %v13364, 6
        %v13371 = vrot.slane %v13364, 7
        %v13380 = vmul.f32 %v13310, %v13364
        %v13381 = vmul.f32 %v13317, %v13365
        %v13382 = vmul.f32 %v13324, %v13366
        %v13383 = vmul.f32 %v13331, %v13367
        %v13384 = vmul.f32 %v13338, %v13368
        %v13385 = vmul.f32 %v13345, %v13369
        %v13386 = vmul.f32 %v13352, %v13370
        %v13387 = vmul.f32 %v13359, %v13371
        %v13396 = vrot.slane %v13381, 7
        %v13397 = vsel %vm5227, %v13396, %v13380
        %v13398 = vrot.slane %v13382, 6
        %v13399 = vsel %vm5230, %v13398, %v13397
        %v13400 = vrot.slane %v13383, 5
        %v13401 = vsel %vm5233, %v13400, %v13399
        %v13402 = vrot.slane %v13384, 4
        %v13403 = vsel %vm5236, %v13402, %v13401
        %v13404 = vrot.slane %v13385, 3
        %v13405 = vsel %vm5239, %v13404, %v13403
        %v13406 = vrot.slane %v13386, 2
        %v13407 = vsel %vm5242, %v13406, %v13405
        %v13408 = vrot.slane %v13387, 1
        %v13409 = vsel %vm5245, %v13408, %v13407
        %13411 = vst.msk [vmem:[%s423] sm:$0xff] %vm1705, %v13409
        %s13412 = sand.u32 %s265, 1
        %s13413 = scalar_lea.sflag [#allocation4], %s13412
        %s13414 = sand.u32 %s265, 1
        %s13415 = smul.addr %s13414, 8
        %s13416 = scalar_lea.vmem [#allocation5], %s13415
        // Predicated region
        $region65: #{tpu_custom_call.1} parent=59 // pred_check
          %p13417 = pneg %p275
        $region66: #{tpu_custom_call.1} parent=59 // pred_check_branch
          %13419 = sbr.rel (%p13417) target = $region68
        $region67: #{tpu_custom_call.1} parent=59 // pred_region
          %s13421 = ssub.s32 128, 128
          %13422 = vsyncadd %s13413, %s13421
          %s13423 = smul.addr %s27, 128
          %s13424 = scalar_lea.hbm %s10, %s13423
          %s13426 = sshll.u32 %s13416, 4
          %s13427 = int_to_ptr.vmem [resolvable:$true] %s13426
          %13429 = dma.vmem_to_hbm [thread:$0]  %s13427, 128, %s13424, %s13413
        $region68: #{tpu_custom_call.1} parent=59 // pred_fallthru
          _
      $region60: #{tpu_custom_call.1} parent=5 // pred_fallthru
        _
      %p13430 = scmp.le.s32.totalorder 2, %s22
      // Predicated region
      $region69: #{tpu_custom_call.1} parent=5 // pred_check
        %p13431 = pneg %p13430
      $region70: #{tpu_custom_call.1} parent=5 // pred_check_branch
        %13433 = sbr.rel (%p13431) target = $region72
      $region71: #{tpu_custom_call.1} parent=5 // pred_region
        %s13434 = ssub.s32 %s22, 2
        // Predicated region
        $region73: #{tpu_custom_call.1} parent=71 // pred_check
          %p13435 = pneg %p281
        $region74: #{tpu_custom_call.1} parent=71 // pred_check_branch
          %13437 = sbr.rel (%p13435) target = $region76
        $region75: #{tpu_custom_call.1} parent=71 // pred_region
          %s13438 = sand.u32 %s266, 1
          %s13439 = scalar_lea.sflag [#allocation4], %s13438
          %s13440 = sand.u32 %s266, 1
          %s13441 = smul.addr %s13440, 8
          %s13442 = scalar_lea.vmem [#allocation5], %s13441
          %13443 = dma.done %s13439, 128
        $region76: #{tpu_custom_call.1} parent=71 // pred_fallthru
          _
      $region72: #{tpu_custom_call.1} parent=5 // pred_fallthru
        _
    $region6: #{tpu_custom_call.1} parent=1 // loop_footer
      %s26 = sadd.s32 1, %s22
    $region7: #{tpu_custom_call.1} parent=1 // loop_footer_branch
      %21 = sbr.rel target = $region3
    $region8: #{tpu_custom_call.1} parent=1 // loop_exit
      _
    %13444 = vsyncpa [#allocation3], 1
    %s13445 = scalar_lea.sflag [#allocation3], 1
    %13446 = vsyncpa %s13445, 1
    %13447 = vsyncpa [#allocation4], 1
    %s13448 = scalar_lea.sflag [#allocation4], 1
    %13449 = vsyncpa %s13448, 1

</llo_original>
